<compile_context>
chip_gen: v7x
topology: tpu7x:2x2x1
jax: 0.10.0
libtpu: 0.0.40
codegen_flags: <defaults>
</compile_context>

<pallas_src>
import math
from functools import partial

import jax
import jax.numpy as jnp
from jax.experimental import pallas as pl
from jax.experimental.pallas import tpu as pltpu

HIDDEN = 128
NUM_LAYERS = 3
FC_HIDDEN = 64
FC_PAD = 128   # lane-dense padded FC hidden width
C_PAD = 128    # lane-dense padded output width (logits sliced to num_classes)

_VMEM = pl.BlockSpec(memory_space=pltpu.MemorySpace.VMEM)


def _pad_to(n, m):
    return max(m, ((n + m - 1) // m) * m)


# ---------------------------------------------------------------------------
# Fused kernel: 3 stacked LSTM layers over time + FC head
# ---------------------------------------------------------------------------
def fused_rnn_kernel(x_ref, wih0_ref, whh0_ref, b0_ref,
                     wih1_ref, whh1_ref, b1_ref,
                     wih2_ref, whh2_ref, b2_ref,
                     wfc1_ref, bfc1_ref, wfc2_ref, bfc2_ref,
                     out_ref, gx_ref):
    """Shapes (BP = padded batch, H = 128, DP = padded input dim):
      x_ref:    (T*BP, DP)   f32   time-major, flattened, batch/lane-padded
      wih0_ref: (DP, 4H)     f32   layer-0 input->gates weights (transposed, padded)
      whh0_ref: (H, 4H)      bf16  layer-0 hidden->gates weights (transposed)
      b0_ref:   (1, 4H)      f32   layer-0 combined bias (b_ih + b_hh)
      wihX_ref: (H, 4H)      bf16  layer-X input(=h below)->gates weights
      whhX_ref: (H, 4H)      bf16  layer-X hidden->gates weights
      bX_ref:   (1, 4H)      f32   layer-X combined bias
      wfc1_ref: (H, FC_PAD)  f32,  bfc1_ref: (1, FC_PAD) f32
      wfc2_ref: (FC_PAD, C_PAD) f32, bfc2_ref: (1, C_PAD) f32 (zero-padded)
      out_ref:  (BP, C_PAD)  f32   padded logits
      gx_ref:   (T*BP, 4H)   f32   VMEM scratch for hoisted input projection
    """
    BP = out_ref.shape[0]
    TB = x_ref.shape[0]
    T = TB // BP
    H = whh0_ref.shape[0]

    # ---- Hoisted layer-0 input projection: one matmul for all timesteps ----
    gx_ref[...] = (jnp.dot(x_ref[...], wih0_ref[...],
                           preferred_element_type=jnp.float32)
                   + b0_ref[...])

    # ---- Weights loaded once; bias broadcasts hoisted (not CSE'd by JAX) ----
    whh0 = whh0_ref[...]
    wih1 = wih1_ref[...]
    whh1 = whh1_ref[...]
    wih2 = wih2_ref[...]
    whh2 = whh2_ref[...]
    b1b = jnp.broadcast_to(b1_ref[...], (BP, 4 * H))
    b2b = jnp.broadcast_to(b2_ref[...], (BP, 4 * H))

    def cell(z, c):
        # PyTorch gate ordering: i, f, g, o ; cell math kept in f32.
        i_g = jax.nn.sigmoid(z[:, 0 * H:1 * H])
        f_g = jax.nn.sigmoid(z[:, 1 * H:2 * H])
        g_g = jnp.tanh(z[:, 2 * H:3 * H])
        o_g = jax.nn.sigmoid(z[:, 3 * H:4 * H])
        c_new = f_g * c + i_g * g_g
        h_new = o_g * jnp.tanh(c_new)
        return h_new, c_new

    def step(t, carry):
        h0, c0, h1, c1, h2, c2 = carry
        start = pl.multiple_of(t * BP, BP)
        gx_t = gx_ref[pl.ds(start, BP), :]                       # (BP, 4H)

        # layer 0: only the recurrent bf16 matmul is on the serial chain
        z0 = gx_t + jnp.dot(h0.astype(jnp.bfloat16), whh0,
                            preferred_element_type=jnp.float32)
        h0, c0 = cell(z0, c0)

        # layer 1: two aligned bf16 dots (no per-step concat materialization)
        z1 = (jnp.dot(h0.astype(jnp.bfloat16), wih1,
                      preferred_element_type=jnp.float32)
              + jnp.dot(h1.astype(jnp.bfloat16), whh1,
                        preferred_element_type=jnp.float32)
              + b1b)
        h1, c1 = cell(z1, c1)

        # layer 2
        z2 = (jnp.dot(h1.astype(jnp.bfloat16), wih2,
                      preferred_element_type=jnp.float32)
              + jnp.dot(h2.astype(jnp.bfloat16), whh2,
                        preferred_element_type=jnp.float32)
              + b2b)
        h2, c2 = cell(z2, c2)

        return (h0, c0, h1, c1, h2, c2)

    zeros = jnp.zeros((BP, H), jnp.float32)
    init = (zeros, zeros, zeros, zeros, zeros, zeros)
    # T is small and static -> fully unrolled so the scheduler can interleave
    # layer-0 of step t+1 under layers 1-2 of step t (wavefront overlap).
    carry = jax.lax.fori_loop(0, T, step, init, unroll=True)
    h_last = carry[4]                                             # top-layer h_T

    # ---- FC head (runs once, kept f32): Linear(128,128pad) -> ReLU -> Linear ----
    a1 = jnp.dot(h_last, wfc1_ref[...],
                 preferred_element_type=jnp.float32) + bfc1_ref[...]
    a1 = jnp.maximum(a1, 0.0)
    out_ref[...] = (jnp.dot(a1, wfc2_ref[...],
                            preferred_element_type=jnp.float32)
                    + bfc2_ref[...])


# ---------------------------------------------------------------------------
# Parameter init (mimics PyTorch U(-1/sqrt(fan), 1/sqrt(fan)))
# ---------------------------------------------------------------------------
def init_params(key, input_size, num_classes):
    params = {}
    k = 1.0 / math.sqrt(HIDDEN)
    keys = jax.random.split(key, NUM_LAYERS * 4 + 4)
    ki = 0
    dp = _pad_to(input_size, 128)

    lstm = []
    for layer in range(NUM_LAYERS):
        d_in = input_size if layer == 0 else HIDDEN
        w_ih = jax.random.uniform(keys[ki], (4 * HIDDEN, d_in), jnp.float32, -k, k); ki += 1
        w_hh = jax.random.uniform(keys[ki], (4 * HIDDEN, HIDDEN), jnp.float32, -k, k); ki += 1
        b_ih = jax.random.uniform(keys[ki], (4 * HIDDEN,), jnp.float32, -k, k); ki += 1
        b_hh = jax.random.uniform(keys[ki], (4 * HIDDEN,), jnp.float32, -k, k); ki += 1
        bias = (b_ih + b_hh).reshape(1, 4 * HIDDEN)
        if layer == 0:
            # pad input dim to 128 lanes (zero rows contribute nothing)
            w_ih_t = jnp.zeros((dp, 4 * HIDDEN), jnp.float32).at[:d_in, :].set(w_ih.T)
            lstm.append({"w_ih_t": w_ih_t,
                         "w_hh_t": w_hh.T.astype(jnp.bfloat16),
                         "bias": bias})
        else:
            lstm.append({"w_ih_t": w_ih.T.astype(jnp.bfloat16),
                         "w_hh_t": w_hh.T.astype(jnp.bfloat16),
                         "bias": bias})
    params["lstm"] = lstm

    k1 = 1.0 / math.sqrt(HIDDEN)
    k2 = 1.0 / math.sqrt(FC_HIDDEN)
    w1 = jax.random.uniform(keys[ki], (FC_HIDDEN, HIDDEN), jnp.float32, -k1, k1); ki += 1
    b1 = jax.random.uniform(keys[ki], (FC_HIDDEN,), jnp.float32, -k1, k1); ki += 1
    w2 = jax.random.uniform(keys[ki], (num_classes, FC_HIDDEN), jnp.float32, -k2, k2); ki += 1
    b2 = jax.random.uniform(keys[ki], (num_classes,), jnp.float32, -k2, k2); ki += 1
    # pad FC hidden 64 -> FC_PAD and classes -> C_PAD so the head is lane-dense
    w1_t_pad = jnp.zeros((HIDDEN, FC_PAD), jnp.float32).at[:, :FC_HIDDEN].set(w1.T)
    b1_pad = jnp.zeros((1, FC_PAD), jnp.float32).at[0, :FC_HIDDEN].set(b1)
    w2_t_pad = jnp.zeros((FC_PAD, C_PAD), jnp.float32).at[:FC_HIDDEN, :num_classes].set(w2.T)
    b2_pad = jnp.zeros((1, C_PAD), jnp.float32).at[0, :num_classes].set(b2)
    params["fc"] = {"w1_t": w1_t_pad, "b1": b1_pad, "w2_t": w2_t_pad, "b2": b2_pad}
    return params


# ---------------------------------------------------------------------------
# Forward wrapper (batch-first input, like the PyTorch module)
# ---------------------------------------------------------------------------
@partial(jax.jit, static_argnums=(2,))
def rnn_forward(x, params, num_classes):
    """x: (B, T, input_size) batch-first -> (B, num_classes) logits."""
    B, T, D = x.shape
    BP = max(8, ((B + 7) // 8) * 8)          # pad batch to f32 sublane tile
    DP = _pad_to(D, 128)                     # pad features to full lane width

    x_tm = jnp.transpose(x, (1, 0, 2)).astype(jnp.float32)       # (T, B, D)
    x_tm = jnp.pad(x_tm, ((0, 0), (0, BP - B), (0, DP - D)))     # (T, BP, DP)
    x2d = x_tm.reshape(T * BP, DP)                               # (T*BP, DP)

    l0, l1, l2 = params["lstm"]
    fc = params["fc"]

    out_pad = pl.pallas_call(
        fused_rnn_kernel,
        out_shape=jax.ShapeDtypeStruct((BP, C_PAD), jnp.float32),
        in_specs=[_VMEM] * 14,
        out_specs=_VMEM,
        scratch_shapes=[pltpu.VMEM((T * BP, 4 * HIDDEN), jnp.float32)],
    )(x2d,
      l0["w_ih_t"], l0["w_hh_t"], l0["bias"],
      l1["w_ih_t"], l1["w_hh_t"], l1["bias"],
      l2["w_ih_t"], l2["w_hh_t"], l2["bias"],
      fc["w1_t"], fc["b1"], fc["w2_t"], fc["b2"])

    return out_pad[:B, :num_classes]


if __name__ == "__main__":
    B, T, INPUT_SIZE, NUM_CLASSES = 2, 8, 32, 10

    key = jax.random.PRNGKey(0)
    kx, kp = jax.random.split(key)
    x = jax.random.normal(kx, (B, T, INPUT_SIZE), dtype=jnp.float32)
    params = init_params(kp, INPUT_SIZE, NUM_CLASSES)

    out = rnn_forward(x, params, NUM_CLASSES)
    out = jax.block_until_ready(out)
    assert out.shape == (B, NUM_CLASSES), out.shape
    assert out.dtype == jnp.float32
    assert bool(jnp.all(jnp.isfinite(out)))
    print("KERNEL_OK")
</pallas_src>

<mosaic_0001>
module attributes {stable_mosaic.version = 11 : i64} {
  func.func @fused_rnn_kernel(%arg0: memref<64x128xf32, #tpu.memory_space<vmem>>, %arg1: memref<128x512xf32, #tpu.memory_space<vmem>>, %arg2: memref<128x512xbf16, #tpu.memory_space<vmem>>, %arg3: memref<1x512xf32, #tpu.memory_space<vmem>>, %arg4: memref<128x512xbf16, #tpu.memory_space<vmem>>, %arg5: memref<128x512xbf16, #tpu.memory_space<vmem>>, %arg6: memref<1x512xf32, #tpu.memory_space<vmem>>, %arg7: memref<128x512xbf16, #tpu.memory_space<vmem>>, %arg8: memref<128x512xbf16, #tpu.memory_space<vmem>>, %arg9: memref<1x512xf32, #tpu.memory_space<vmem>>, %arg10: memref<128x128xf32, #tpu.memory_space<vmem>>, %arg11: memref<1x128xf32, #tpu.memory_space<vmem>>, %arg12: memref<128x128xf32, #tpu.memory_space<vmem>>, %arg13: memref<1x128xf32, #tpu.memory_space<vmem>>, %arg14: memref<8x128xf32, #tpu.memory_space<vmem>>, %arg15: memref<64x512xf32, #tpu.memory_space<vmem>>) attributes {dimension_semantics = [], scalar_prefetch = 0 : i64, scratch_operands = 1 : i64, tpu.core_type = #tpu.core_type<tc>} {
    %c0 = arith.constant 0 : index
    %c0_0 = arith.constant 0 : index
    %0 = vector.load %arg0[%c0, %c0_0] : memref<64x128xf32, #tpu.memory_space<vmem>>, vector<64x128xf32>
    %c0_1 = arith.constant 0 : index
    %c0_2 = arith.constant 0 : index
    %1 = vector.load %arg1[%c0_1, %c0_2] : memref<128x512xf32, #tpu.memory_space<vmem>>, vector<128x512xf32>
    %cst = arith.constant dense<0.000000e+00> : vector<64x512xf32>
    %2 = tpu.matmul %0, %1, %cst {dimension_numbers = #tpu.dot_dimension_numbers<[1], [0], [0], [1], [0, 0, 1, 1], [], []>} : vector<64x128xf32>, vector<128x512xf32>, vector<64x512xf32> -> vector<64x512xf32>
    %c0_3 = arith.constant 0 : index
    %c0_4 = arith.constant 0 : index
    %3 = vector.load %arg3[%c0_3, %c0_4] : memref<1x512xf32, #tpu.memory_space<vmem>>, vector<1x512xf32>
    %4 = vector.broadcast %3 : vector<1x512xf32> to vector<64x512xf32>
    %5 = arith.addf %2, %4 : vector<64x512xf32>
    %c0_5 = arith.constant 0 : index
    %c0_6 = arith.constant 0 : index
    %6 = vector.load %arg15[%c0_5, %c0_6] : memref<64x512xf32, #tpu.memory_space<vmem>>, vector<64x512xf32>
    tpu.vector_store %arg15[%c0_5, %c0_6], %5 {strides = array<i32>} : memref<64x512xf32, #tpu.memory_space<vmem>>, vector<64x512xf32>,
    %c0_7 = arith.constant 0 : index
    %c0_8 = arith.constant 0 : index
    %7 = vector.load %arg2[%c0_7, %c0_8] : memref<128x512xbf16, #tpu.memory_space<vmem>>, vector<128x512xbf16>
    %c0_9 = arith.constant 0 : index
    %c0_10 = arith.constant 0 : index
    %8 = vector.load %arg4[%c0_9, %c0_10] : memref<128x512xbf16, #tpu.memory_space<vmem>>, vector<128x512xbf16>
    %c0_11 = arith.constant 0 : index
    %c0_12 = arith.constant 0 : index
    %9 = vector.load %arg5[%c0_11, %c0_12] : memref<128x512xbf16, #tpu.memory_space<vmem>>, vector<128x512xbf16>
    %c0_13 = arith.constant 0 : index
    %c0_14 = arith.constant 0 : index
    %10 = vector.load %arg7[%c0_13, %c0_14] : memref<128x512xbf16, #tpu.memory_space<vmem>>, vector<128x512xbf16>
    %c0_15 = arith.constant 0 : index
    %c0_16 = arith.constant 0 : index
    %11 = vector.load %arg8[%c0_15, %c0_16] : memref<128x512xbf16, #tpu.memory_space<vmem>>, vector<128x512xbf16>
    %c0_17 = arith.constant 0 : index
    %c0_18 = arith.constant 0 : index
    %12 = vector.load %arg6[%c0_17, %c0_18] : memref<1x512xf32, #tpu.memory_space<vmem>>, vector<1x512xf32>
    %13 = vector.shape_cast %12 : vector<1x512xf32> to vector<1x512xf32>
    %14 = vector.broadcast %13 : vector<1x512xf32> to vector<8x512xf32>
    %c0_19 = arith.constant 0 : index
    %c0_20 = arith.constant 0 : index
    %15 = vector.load %arg9[%c0_19, %c0_20] : memref<1x512xf32, #tpu.memory_space<vmem>>, vector<1x512xf32>
    %16 = vector.shape_cast %15 : vector<1x512xf32> to vector<1x512xf32>
    %17 = vector.broadcast %16 : vector<1x512xf32> to vector<8x512xf32>
    %cst_21 = arith.constant 0.000000e+00 : f32
    %18 = vector.broadcast %cst_21 : f32 to vector<8x128xf32>
    %c0_i32 = arith.constant 0 : i32
    %c8_i32 = arith.constant 8 : i32
    %19 = arith.muli %c0_i32, %c8_i32 : i32
    %20 = tpu.assume_multiple %19, 8 : i32
    %21 = arith.index_cast %20 : i32 to index
    %c0_22 = arith.constant 0 : index
    %22 = vector.load %arg15[%21, %c0_22] : memref<64x512xf32, #tpu.memory_space<vmem>>, vector<8x512xf32>
    %23 = arith.truncf %18 : vector<8x128xf32> to vector<8x128xbf16>
    %cst_23 = arith.constant dense<0.000000e+00> : vector<8x512xf32>
    %24 = tpu.matmul %23, %7, %cst_23 {dimension_numbers = #tpu.dot_dimension_numbers<[1], [0], [0], [1], [0, 0, 1, 1], [], []>} : vector<8x128xbf16>, vector<128x512xbf16>, vector<8x512xf32> -> vector<8x512xf32>
    %25 = arith.addf %22, %24 : vector<8x512xf32>
    %26 = vector.extract_strided_slice %25 {offsets = [0, 0], sizes = [8, 128], strides = [1, 1]} : vector<8x512xf32> to vector<8x128xf32>
    %27 = arith.negf %26 : vector<8x128xf32>
    %28 = math.exp %27 : vector<8x128xf32>
    %cst_24 = arith.constant 1.000000e+00 : f32
    %29 = vector.broadcast %cst_24 : f32 to vector<8x128xf32>
    %30 = arith.addf %29, %28 : vector<8x128xf32>
    %31 = arith.divf %29, %30 : vector<8x128xf32>
    %32 = vector.extract_strided_slice %25 {offsets = [0, 128], sizes = [8, 128], strides = [1, 1]} : vector<8x512xf32> to vector<8x128xf32>
    %33 = arith.negf %32 : vector<8x128xf32>
    %34 = math.exp %33 : vector<8x128xf32>
    %cst_25 = arith.constant 1.000000e+00 : f32
    %35 = vector.broadcast %cst_25 : f32 to vector<8x128xf32>
    %36 = arith.addf %35, %34 : vector<8x128xf32>
    %37 = arith.divf %35, %36 : vector<8x128xf32>
    %38 = vector.extract_strided_slice %25 {offsets = [0, 256], sizes = [8, 128], strides = [1, 1]} : vector<8x512xf32> to vector<8x128xf32>
    %39 = math.tanh %38 : vector<8x128xf32>
    %40 = vector.extract_strided_slice %25 {offsets = [0, 384], sizes = [8, 128], strides = [1, 1]} : vector<8x512xf32> to vector<8x128xf32>
    %41 = arith.negf %40 : vector<8x128xf32>
    %42 = math.exp %41 : vector<8x128xf32>
    %cst_26 = arith.constant 1.000000e+00 : f32
    %43 = vector.broadcast %cst_26 : f32 to vector<8x128xf32>
    %44 = arith.addf %43, %42 : vector<8x128xf32>
    %45 = arith.divf %43, %44 : vector<8x128xf32>
    %46 = arith.mulf %37, %18 : vector<8x128xf32>
    %47 = arith.mulf %31, %39 : vector<8x128xf32>
    %48 = arith.addf %46, %47 : vector<8x128xf32>
    %49 = math.tanh %48 : vector<8x128xf32>
    %50 = arith.mulf %45, %49 : vector<8x128xf32>
    %51 = arith.truncf %50 : vector<8x128xf32> to vector<8x128xbf16>
    %cst_27 = arith.constant dense<0.000000e+00> : vector<8x512xf32>
    %52 = tpu.matmul %51, %8, %cst_27 {dimension_numbers = #tpu.dot_dimension_numbers<[1], [0], [0], [1], [0, 0, 1, 1], [], []>} : vector<8x128xbf16>, vector<128x512xbf16>, vector<8x512xf32> -> vector<8x512xf32>
    %53 = arith.truncf %18 : vector<8x128xf32> to vector<8x128xbf16>
    %cst_28 = arith.constant dense<0.000000e+00> : vector<8x512xf32>
    %54 = tpu.matmul %53, %9, %cst_28 {dimension_numbers = #tpu.dot_dimension_numbers<[1], [0], [0], [1], [0, 0, 1, 1], [], []>} : vector<8x128xbf16>, vector<128x512xbf16>, vector<8x512xf32> -> vector<8x512xf32>
    %55 = arith.addf %52, %54 : vector<8x512xf32>
    %56 = arith.addf %55, %14 : vector<8x512xf32>
    %57 = vector.extract_strided_slice %56 {offsets = [0, 0], sizes = [8, 128], strides = [1, 1]} : vector<8x512xf32> to vector<8x128xf32>
    %58 = arith.negf %57 : vector<8x128xf32>
    %59 = math.exp %58 : vector<8x128xf32>
    %cst_29 = arith.constant 1.000000e+00 : f32
    %60 = vector.broadcast %cst_29 : f32 to vector<8x128xf32>
    %61 = arith.addf %60, %59 : vector<8x128xf32>
    %62 = arith.divf %60, %61 : vector<8x128xf32>
    %63 = vector.extract_strided_slice %56 {offsets = [0, 128], sizes = [8, 128], strides = [1, 1]} : vector<8x512xf32> to vector<8x128xf32>
    %64 = arith.negf %63 : vector<8x128xf32>
    %65 = math.exp %64 : vector<8x128xf32>
    %cst_30 = arith.constant 1.000000e+00 : f32
    %66 = vector.broadcast %cst_30 : f32 to vector<8x128xf32>
    %67 = arith.addf %66, %65 : vector<8x128xf32>
    %68 = arith.divf %66, %67 : vector<8x128xf32>
    %69 = vector.extract_strided_slice %56 {offsets = [0, 256], sizes = [8, 128], strides = [1, 1]} : vector<8x512xf32> to vector<8x128xf32>
    %70 = math.tanh %69 : vector<8x128xf32>
    %71 = vector.extract_strided_slice %56 {offsets = [0, 384], sizes = [8, 128], strides = [1, 1]} : vector<8x512xf32> to vector<8x128xf32>
    %72 = arith.negf %71 : vector<8x128xf32>
    %73 = math.exp %72 : vector<8x128xf32>
    %cst_31 = arith.constant 1.000000e+00 : f32
    %74 = vector.broadcast %cst_31 : f32 to vector<8x128xf32>
    %75 = arith.addf %74, %73 : vector<8x128xf32>
    %76 = arith.divf %74, %75 : vector<8x128xf32>
    %77 = arith.mulf %68, %18 : vector<8x128xf32>
    %78 = arith.mulf %62, %70 : vector<8x128xf32>
    %79 = arith.addf %77, %78 : vector<8x128xf32>
    %80 = math.tanh %79 : vector<8x128xf32>
    %81 = arith.mulf %76, %80 : vector<8x128xf32>
    %82 = arith.truncf %81 : vector<8x128xf32> to vector<8x128xbf16>
    %cst_32 = arith.constant dense<0.000000e+00> : vector<8x512xf32>
    %83 = tpu.matmul %82, %10, %cst_32 {dimension_numbers = #tpu.dot_dimension_numbers<[1], [0], [0], [1], [0, 0, 1, 1], [], []>} : vector<8x128xbf16>, vector<128x512xbf16>, vector<8x512xf32> -> vector<8x512xf32>
    %84 = arith.truncf %18 : vector<8x128xf32> to vector<8x128xbf16>
    %cst_33 = arith.constant dense<0.000000e+00> : vector<8x512xf32>
    %85 = tpu.matmul %84, %11, %cst_33 {dimension_numbers = #tpu.dot_dimension_numbers<[1], [0], [0], [1], [0, 0, 1, 1], [], []>} : vector<8x128xbf16>, vector<128x512xbf16>, vector<8x512xf32> -> vector<8x512xf32>
    %86 = arith.addf %83, %85 : vector<8x512xf32>
    %87 = arith.addf %86, %17 : vector<8x512xf32>
    %88 = vector.extract_strided_slice %87 {offsets = [0, 0], sizes = [8, 128], strides = [1, 1]} : vector<8x512xf32> to vector<8x128xf32>
    %89 = arith.negf %88 : vector<8x128xf32>
    %90 = math.exp %89 : vector<8x128xf32>
    %cst_34 = arith.constant 1.000000e+00 : f32
    %91 = vector.broadcast %cst_34 : f32 to vector<8x128xf32>
    %92 = arith.addf %91, %90 : vector<8x128xf32>
    %93 = arith.divf %91, %92 : vector<8x128xf32>
    %94 = vector.extract_strided_slice %87 {offsets = [0, 128], sizes = [8, 128], strides = [1, 1]} : vector<8x512xf32> to vector<8x128xf32>
    %95 = arith.negf %94 : vector<8x128xf32>
    %96 = math.exp %95 : vector<8x128xf32>
    %cst_35 = arith.constant 1.000000e+00 : f32
    %97 = vector.broadcast %cst_35 : f32 to vector<8x128xf32>
    %98 = arith.addf %97, %96 : vector<8x128xf32>
    %99 = arith.divf %97, %98 : vector<8x128xf32>
    %100 = vector.extract_strided_slice %87 {offsets = [0, 256], sizes = [8, 128], strides = [1, 1]} : vector<8x512xf32> to vector<8x128xf32>
    %101 = math.tanh %100 : vector<8x128xf32>
    %102 = vector.extract_strided_slice %87 {offsets = [0, 384], sizes = [8, 128], strides = [1, 1]} : vector<8x512xf32> to vector<8x128xf32>
    %103 = arith.negf %102 : vector<8x128xf32>
    %104 = math.exp %103 : vector<8x128xf32>
    %cst_36 = arith.constant 1.000000e+00 : f32
    %105 = vector.broadcast %cst_36 : f32 to vector<8x128xf32>
    %106 = arith.addf %105, %104 : vector<8x128xf32>
    %107 = arith.divf %105, %106 : vector<8x128xf32>
    %108 = arith.mulf %99, %18 : vector<8x128xf32>
    %109 = arith.mulf %93, %101 : vector<8x128xf32>
    %110 = arith.addf %108, %109 : vector<8x128xf32>
    %111 = math.tanh %110 : vector<8x128xf32>
    %112 = arith.mulf %107, %111 : vector<8x128xf32>
    %c1_i32 = arith.constant 1 : i32
    %c8_i32_37 = arith.constant 8 : i32
    %113 = arith.muli %c1_i32, %c8_i32_37 : i32
    %114 = tpu.assume_multiple %113, 8 : i32
    %115 = arith.index_cast %114 : i32 to index
    %c0_38 = arith.constant 0 : index
    %116 = vector.load %arg15[%115, %c0_38] : memref<64x512xf32, #tpu.memory_space<vmem>>, vector<8x512xf32>
    %117 = arith.truncf %50 : vector<8x128xf32> to vector<8x128xbf16>
    %cst_39 = arith.constant dense<0.000000e+00> : vector<8x512xf32>
    %118 = tpu.matmul %117, %7, %cst_39 {dimension_numbers = #tpu.dot_dimension_numbers<[1], [0], [0], [1], [0, 0, 1, 1], [], []>} : vector<8x128xbf16>, vector<128x512xbf16>, vector<8x512xf32> -> vector<8x512xf32>
    %119 = arith.addf %116, %118 : vector<8x512xf32>
    %120 = vector.extract_strided_slice %119 {offsets = [0, 0], sizes = [8, 128], strides = [1, 1]} : vector<8x512xf32> to vector<8x128xf32>
    %121 = arith.negf %120 : vector<8x128xf32>
    %122 = math.exp %121 : vector<8x128xf32>
    %cst_40 = arith.constant 1.000000e+00 : f32
    %123 = vector.broadcast %cst_40 : f32 to vector<8x128xf32>
    %124 = arith.addf %123, %122 : vector<8x128xf32>
    %125 = arith.divf %123, %124 : vector<8x128xf32>
    %126 = vector.extract_strided_slice %119 {offsets = [0, 128], sizes = [8, 128], strides = [1, 1]} : vector<8x512xf32> to vector<8x128xf32>
    %127 = arith.negf %126 : vector<8x128xf32>
    %128 = math.exp %127 : vector<8x128xf32>
    %cst_41 = arith.constant 1.000000e+00 : f32
    %129 = vector.broadcast %cst_41 : f32 to vector<8x128xf32>
    %130 = arith.addf %129, %128 : vector<8x128xf32>
    %131 = arith.divf %129, %130 : vector<8x128xf32>
    %132 = vector.extract_strided_slice %119 {offsets = [0, 256], sizes = [8, 128], strides = [1, 1]} : vector<8x512xf32> to vector<8x128xf32>
    %133 = math.tanh %132 : vector<8x128xf32>
    %134 = vector.extract_strided_slice %119 {offsets = [0, 384], sizes = [8, 128], strides = [1, 1]} : vector<8x512xf32> to vector<8x128xf32>
    %135 = arith.negf %134 : vector<8x128xf32>
    %136 = math.exp %135 : vector<8x128xf32>
    %cst_42 = arith.constant 1.000000e+00 : f32
    %137 = vector.broadcast %cst_42 : f32 to vector<8x128xf32>
    %138 = arith.addf %137, %136 : vector<8x128xf32>
    %139 = arith.divf %137, %138 : vector<8x128xf32>
    %140 = arith.mulf %131, %48 : vector<8x128xf32>
    %141 = arith.mulf %125, %133 : vector<8x128xf32>
    %142 = arith.addf %140, %141 : vector<8x128xf32>
    %143 = math.tanh %142 : vector<8x128xf32>
    %144 = arith.mulf %139, %143 : vector<8x128xf32>
    %145 = arith.truncf %144 : vector<8x128xf32> to vector<8x128xbf16>
    %cst_43 = arith.constant dense<0.000000e+00> : vector<8x512xf32>
    %146 = tpu.matmul %145, %8, %cst_43 {dimension_numbers = #tpu.dot_dimension_numbers<[1], [0], [0], [1], [0, 0, 1, 1], [], []>} : vector<8x128xbf16>, vector<128x512xbf16>, vector<8x512xf32> -> vector<8x512xf32>
    %147 = arith.truncf %81 : vector<8x128xf32> to vector<8x128xbf16>
    %cst_44 = arith.constant dense<0.000000e+00> : vector<8x512xf32>
    %148 = tpu.matmul %147, %9, %cst_44 {dimension_numbers = #tpu.dot_dimension_numbers<[1], [0], [0], [1], [0, 0, 1, 1], [], []>} : vector<8x128xbf16>, vector<128x512xbf16>, vector<8x512xf32> -> vector<8x512xf32>
    %149 = arith.addf %146, %148 : vector<8x512xf32>
    %150 = arith.addf %149, %14 : vector<8x512xf32>
    %151 = vector.extract_strided_slice %150 {offsets = [0, 0], sizes = [8, 128], strides = [1, 1]} : vector<8x512xf32> to vector<8x128xf32>
    %152 = arith.negf %151 : vector<8x128xf32>
    %153 = math.exp %152 : vector<8x128xf32>
    %cst_45 = arith.constant 1.000000e+00 : f32
    %154 = vector.broadcast %cst_45 : f32 to vector<8x128xf32>
    %155 = arith.addf %154, %153 : vector<8x128xf32>
    %156 = arith.divf %154, %155 : vector<8x128xf32>
    %157 = vector.extract_strided_slice %150 {offsets = [0, 128], sizes = [8, 128], strides = [1, 1]} : vector<8x512xf32> to vector<8x128xf32>
    %158 = arith.negf %157 : vector<8x128xf32>
    %159 = math.exp %158 : vector<8x128xf32>
    %cst_46 = arith.constant 1.000000e+00 : f32
    %160 = vector.broadcast %cst_46 : f32 to vector<8x128xf32>
    %161 = arith.addf %160, %159 : vector<8x128xf32>
    %162 = arith.divf %160, %161 : vector<8x128xf32>
    %163 = vector.extract_strided_slice %150 {offsets = [0, 256], sizes = [8, 128], strides = [1, 1]} : vector<8x512xf32> to vector<8x128xf32>
    %164 = math.tanh %163 : vector<8x128xf32>
    %165 = vector.extract_strided_slice %150 {offsets = [0, 384], sizes = [8, 128], strides = [1, 1]} : vector<8x512xf32> to vector<8x128xf32>
    %166 = arith.negf %165 : vector<8x128xf32>
    %167 = math.exp %166 : vector<8x128xf32>
    %cst_47 = arith.constant 1.000000e+00 : f32
    %168 = vector.broadcast %cst_47 : f32 to vector<8x128xf32>
    %169 = arith.addf %168, %167 : vector<8x128xf32>
    %170 = arith.divf %168, %169 : vector<8x128xf32>
    %171 = arith.mulf %162, %79 : vector<8x128xf32>
    %172 = arith.mulf %156, %164 : vector<8x128xf32>
    %173 = arith.addf %171, %172 : vector<8x128xf32>
    %174 = math.tanh %173 : vector<8x128xf32>
    %175 = arith.mulf %170, %174 : vector<8x128xf32>
    %176 = arith.truncf %175 : vector<8x128xf32> to vector<8x128xbf16>
    %cst_48 = arith.constant dense<0.000000e+00> : vector<8x512xf32>
    %177 = tpu.matmul %176, %10, %cst_48 {dimension_numbers = #tpu.dot_dimension_numbers<[1], [0], [0], [1], [0, 0, 1, 1], [], []>} : vector<8x128xbf16>, vector<128x512xbf16>, vector<8x512xf32> -> vector<8x512xf32>
    %178 = arith.truncf %112 : vector<8x128xf32> to vector<8x128xbf16>
    %cst_49 = arith.constant dense<0.000000e+00> : vector<8x512xf32>
    %179 = tpu.matmul %178, %11, %cst_49 {dimension_numbers = #tpu.dot_dimension_numbers<[1], [0], [0], [1], [0, 0, 1, 1], [], []>} : vector<8x128xbf16>, vector<128x512xbf16>, vector<8x512xf32> -> vector<8x512xf32>
    %180 = arith.addf %177, %179 : vector<8x512xf32>
    %181 = arith.addf %180, %17 : vector<8x512xf32>
    %182 = vector.extract_strided_slice %181 {offsets = [0, 0], sizes = [8, 128], strides = [1, 1]} : vector<8x512xf32> to vector<8x128xf32>
    %183 = arith.negf %182 : vector<8x128xf32>
    %184 = math.exp %183 : vector<8x128xf32>
    %cst_50 = arith.constant 1.000000e+00 : f32
    %185 = vector.broadcast %cst_50 : f32 to vector<8x128xf32>
    %186 = arith.addf %185, %184 : vector<8x128xf32>
    %187 = arith.divf %185, %186 : vector<8x128xf32>
    %188 = vector.extract_strided_slice %181 {offsets = [0, 128], sizes = [8, 128], strides = [1, 1]} : vector<8x512xf32> to vector<8x128xf32>
    %189 = arith.negf %188 : vector<8x128xf32>
    %190 = math.exp %189 : vector<8x128xf32>
    %cst_51 = arith.constant 1.000000e+00 : f32
    %191 = vector.broadcast %cst_51 : f32 to vector<8x128xf32>
    %192 = arith.addf %191, %190 : vector<8x128xf32>
    %193 = arith.divf %191, %192 : vector<8x128xf32>
    %194 = vector.extract_strided_slice %181 {offsets = [0, 256], sizes = [8, 128], strides = [1, 1]} : vector<8x512xf32> to vector<8x128xf32>
    %195 = math.tanh %194 : vector<8x128xf32>
    %196 = vector.extract_strided_slice %181 {offsets = [0, 384], sizes = [8, 128], strides = [1, 1]} : vector<8x512xf32> to vector<8x128xf32>
    %197 = arith.negf %196 : vector<8x128xf32>
    %198 = math.exp %197 : vector<8x128xf32>
    %cst_52 = arith.constant 1.000000e+00 : f32
    %199 = vector.broadcast %cst_52 : f32 to vector<8x128xf32>
    %200 = arith.addf %199, %198 : vector<8x128xf32>
    %201 = arith.divf %199, %200 : vector<8x128xf32>
    %202 = arith.mulf %193, %110 : vector<8x128xf32>
    %203 = arith.mulf %187, %195 : vector<8x128xf32>
    %204 = arith.addf %202, %203 : vector<8x128xf32>
    %205 = math.tanh %204 : vector<8x128xf32>
    %206 = arith.mulf %201, %205 : vector<8x128xf32>
    %c2_i32 = arith.constant 2 : i32
    %c8_i32_53 = arith.constant 8 : i32
    %207 = arith.muli %c2_i32, %c8_i32_53 : i32
    %208 = tpu.assume_multiple %207, 8 : i32
    %209 = arith.index_cast %208 : i32 to index
    %c0_54 = arith.constant 0 : index
    %210 = vector.load %arg15[%209, %c0_54] : memref<64x512xf32, #tpu.memory_space<vmem>>, vector<8x512xf32>
    %211 = arith.truncf %144 : vector<8x128xf32> to vector<8x128xbf16>
    %cst_55 = arith.constant dense<0.000000e+00> : vector<8x512xf32>
    %212 = tpu.matmul %211, %7, %cst_55 {dimension_numbers = #tpu.dot_dimension_numbers<[1], [0], [0], [1], [0, 0, 1, 1], [], []>} : vector<8x128xbf16>, vector<128x512xbf16>, vector<8x512xf32> -> vector<8x512xf32>
    %213 = arith.addf %210, %212 : vector<8x512xf32>
    %214 = vector.extract_strided_slice %213 {offsets = [0, 0], sizes = [8, 128], strides = [1, 1]} : vector<8x512xf32> to vector<8x128xf32>
    %215 = arith.negf %214 : vector<8x128xf32>
    %216 = math.exp %215 : vector<8x128xf32>
    %cst_56 = arith.constant 1.000000e+00 : f32
    %217 = vector.broadcast %cst_56 : f32 to vector<8x128xf32>
    %218 = arith.addf %217, %216 : vector<8x128xf32>
    %219 = arith.divf %217, %218 : vector<8x128xf32>
    %220 = vector.extract_strided_slice %213 {offsets = [0, 128], sizes = [8, 128], strides = [1, 1]} : vector<8x512xf32> to vector<8x128xf32>
    %221 = arith.negf %220 : vector<8x128xf32>
    %222 = math.exp %221 : vector<8x128xf32>
    %cst_57 = arith.constant 1.000000e+00 : f32
    %223 = vector.broadcast %cst_57 : f32 to vector<8x128xf32>
    %224 = arith.addf %223, %222 : vector<8x128xf32>
    %225 = arith.divf %223, %224 : vector<8x128xf32>
    %226 = vector.extract_strided_slice %213 {offsets = [0, 256], sizes = [8, 128], strides = [1, 1]} : vector<8x512xf32> to vector<8x128xf32>
    %227 = math.tanh %226 : vector<8x128xf32>
    %228 = vector.extract_strided_slice %213 {offsets = [0, 384], sizes = [8, 128], strides = [1, 1]} : vector<8x512xf32> to vector<8x128xf32>
    %229 = arith.negf %228 : vector<8x128xf32>
    %230 = math.exp %229 : vector<8x128xf32>
    %cst_58 = arith.constant 1.000000e+00 : f32
    %231 = vector.broadcast %cst_58 : f32 to vector<8x128xf32>
    %232 = arith.addf %231, %230 : vector<8x128xf32>
    %233 = arith.divf %231, %232 : vector<8x128xf32>
    %234 = arith.mulf %225, %142 : vector<8x128xf32>
    %235 = arith.mulf %219, %227 : vector<8x128xf32>
    %236 = arith.addf %234, %235 : vector<8x128xf32>
    %237 = math.tanh %236 : vector<8x128xf32>
    %238 = arith.mulf %233, %237 : vector<8x128xf32>
    %239 = arith.truncf %238 : vector<8x128xf32> to vector<8x128xbf16>
    %cst_59 = arith.constant dense<0.000000e+00> : vector<8x512xf32>
    %240 = tpu.matmul %239, %8, %cst_59 {dimension_numbers = #tpu.dot_dimension_numbers<[1], [0], [0], [1], [0, 0, 1, 1], [], []>} : vector<8x128xbf16>, vector<128x512xbf16>, vector<8x512xf32> -> vector<8x512xf32>
    %241 = arith.truncf %175 : vector<8x128xf32> to vector<8x128xbf16>
    %cst_60 = arith.constant dense<0.000000e+00> : vector<8x512xf32>
    %242 = tpu.matmul %241, %9, %cst_60 {dimension_numbers = #tpu.dot_dimension_numbers<[1], [0], [0], [1], [0, 0, 1, 1], [], []>} : vector<8x128xbf16>, vector<128x512xbf16>, vector<8x512xf32> -> vector<8x512xf32>
    %243 = arith.addf %240, %242 : vector<8x512xf32>
    %244 = arith.addf %243, %14 : vector<8x512xf32>
    %245 = vector.extract_strided_slice %244 {offsets = [0, 0], sizes = [8, 128], strides = [1, 1]} : vector<8x512xf32> to vector<8x128xf32>
    %246 = arith.negf %245 : vector<8x128xf32>
    %247 = math.exp %246 : vector<8x128xf32>
    %cst_61 = arith.constant 1.000000e+00 : f32
    %248 = vector.broadcast %cst_61 : f32 to vector<8x128xf32>
    %249 = arith.addf %248, %247 : vector<8x128xf32>
    %250 = arith.divf %248, %249 : vector<8x128xf32>
    %251 = vector.extract_strided_slice %244 {offsets = [0, 128], sizes = [8, 128], strides = [1, 1]} : vector<8x512xf32> to vector<8x128xf32>
    %252 = arith.negf %251 : vector<8x128xf32>
    %253 = math.exp %252 : vector<8x128xf32>
    %cst_62 = arith.constant 1.000000e+00 : f32
    %254 = vector.broadcast %cst_62 : f32 to vector<8x128xf32>
    %255 = arith.addf %254, %253 : vector<8x128xf32>
    %256 = arith.divf %254, %255 : vector<8x128xf32>
    %257 = vector.extract_strided_slice %244 {offsets = [0, 256], sizes = [8, 128], strides = [1, 1]} : vector<8x512xf32> to vector<8x128xf32>
    %258 = math.tanh %257 : vector<8x128xf32>
    %259 = vector.extract_strided_slice %244 {offsets = [0, 384], sizes = [8, 128], strides = [1, 1]} : vector<8x512xf32> to vector<8x128xf32>
    %260 = arith.negf %259 : vector<8x128xf32>
    %261 = math.exp %260 : vector<8x128xf32>
    %cst_63 = arith.constant 1.000000e+00 : f32
    %262 = vector.broadcast %cst_63 : f32 to vector<8x128xf32>
    %263 = arith.addf %262, %261 : vector<8x128xf32>
    %264 = arith.divf %262, %263 : vector<8x128xf32>
    %265 = arith.mulf %256, %173 : vector<8x128xf32>
    %266 = arith.mulf %250, %258 : vector<8x128xf32>
    %267 = arith.addf %265, %266 : vector<8x128xf32>
    %268 = math.tanh %267 : vector<8x128xf32>
    %269 = arith.mulf %264, %268 : vector<8x128xf32>
    %270 = arith.truncf %269 : vector<8x128xf32> to vector<8x128xbf16>
    %cst_64 = arith.constant dense<0.000000e+00> : vector<8x512xf32>
    %271 = tpu.matmul %270, %10, %cst_64 {dimension_numbers = #tpu.dot_dimension_numbers<[1], [0], [0], [1], [0, 0, 1, 1], [], []>} : vector<8x128xbf16>, vector<128x512xbf16>, vector<8x512xf32> -> vector<8x512xf32>
    %272 = arith.truncf %206 : vector<8x128xf32> to vector<8x128xbf16>
    %cst_65 = arith.constant dense<0.000000e+00> : vector<8x512xf32>
    %273 = tpu.matmul %272, %11, %cst_65 {dimension_numbers = #tpu.dot_dimension_numbers<[1], [0], [0], [1], [0, 0, 1, 1], [], []>} : vector<8x128xbf16>, vector<128x512xbf16>, vector<8x512xf32> -> vector<8x512xf32>
    %274 = arith.addf %271, %273 : vector<8x512xf32>
    %275 = arith.addf %274, %17 : vector<8x512xf32>
    %276 = vector.extract_strided_slice %275 {offsets = [0, 0], sizes = [8, 128], strides = [1, 1]} : vector<8x512xf32> to vector<8x128xf32>
    %277 = arith.negf %276 : vector<8x128xf32>
    %278 = math.exp %277 : vector<8x128xf32>
    %cst_66 = arith.constant 1.000000e+00 : f32
    %279 = vector.broadcast %cst_66 : f32 to vector<8x128xf32>
    %280 = arith.addf %279, %278 : vector<8x128xf32>
    %281 = arith.divf %279, %280 : vector<8x128xf32>
    %282 = vector.extract_strided_slice %275 {offsets = [0, 128], sizes = [8, 128], strides = [1, 1]} : vector<8x512xf32> to vector<8x128xf32>
    %283 = arith.negf %282 : vector<8x128xf32>
    %284 = math.exp %283 : vector<8x128xf32>
    %cst_67 = arith.constant 1.000000e+00 : f32
    %285 = vector.broadcast %cst_67 : f32 to vector<8x128xf32>
    %286 = arith.addf %285, %284 : vector<8x128xf32>
    %287 = arith.divf %285, %286 : vector<8x128xf32>
    %288 = vector.extract_strided_slice %275 {offsets = [0, 256], sizes = [8, 128], strides = [1, 1]} : vector<8x512xf32> to vector<8x128xf32>
    %289 = math.tanh %288 : vector<8x128xf32>
    %290 = vector.extract_strided_slice %275 {offsets = [0, 384], sizes = [8, 128], strides = [1, 1]} : vector<8x512xf32> to vector<8x128xf32>
    %291 = arith.negf %290 : vector<8x128xf32>
    %292 = math.exp %291 : vector<8x128xf32>
    %cst_68 = arith.constant 1.000000e+00 : f32
    %293 = vector.broadcast %cst_68 : f32 to vector<8x128xf32>
    %294 = arith.addf %293, %292 : vector<8x128xf32>
    %295 = arith.divf %293, %294 : vector<8x128xf32>
    %296 = arith.mulf %287, %204 : vector<8x128xf32>
    %297 = arith.mulf %281, %289 : vector<8x128xf32>
    %298 = arith.addf %296, %297 : vector<8x128xf32>
    %299 = math.tanh %298 : vector<8x128xf32>
    %300 = arith.mulf %295, %299 : vector<8x128xf32>
    %c3_i32 = arith.constant 3 : i32
    %c8_i32_69 = arith.constant 8 : i32
    %301 = arith.muli %c3_i32, %c8_i32_69 : i32
    %302 = tpu.assume_multiple %301, 8 : i32
    %303 = arith.index_cast %302 : i32 to index
    %c0_70 = arith.constant 0 : index
    %304 = vector.load %arg15[%303, %c0_70] : memref<64x512xf32, #tpu.memory_space<vmem>>, vector<8x512xf32>
    %305 = arith.truncf %238 : vector<8x128xf32> to vector<8x128xbf16>
    %cst_71 = arith.constant dense<0.000000e+00> : vector<8x512xf32>
    %306 = tpu.matmul %305, %7, %cst_71 {dimension_numbers = #tpu.dot_dimension_numbers<[1], [0], [0], [1], [0, 0, 1, 1], [], []>} : vector<8x128xbf16>, vector<128x512xbf16>, vector<8x512xf32> -> vector<8x512xf32>
    %307 = arith.addf %304, %306 : vector<8x512xf32>
    %308 = vector.extract_strided_slice %307 {offsets = [0, 0], sizes = [8, 128], strides = [1, 1]} : vector<8x512xf32> to vector<8x128xf32>
    %309 = arith.negf %308 : vector<8x128xf32>
    %310 = math.exp %309 : vector<8x128xf32>
    %cst_72 = arith.constant 1.000000e+00 : f32
    %311 = vector.broadcast %cst_72 : f32 to vector<8x128xf32>
    %312 = arith.addf %311, %310 : vector<8x128xf32>
    %313 = arith.divf %311, %312 : vector<8x128xf32>
    %314 = vector.extract_strided_slice %307 {offsets = [0, 128], sizes = [8, 128], strides = [1, 1]} : vector<8x512xf32> to vector<8x128xf32>
    %315 = arith.negf %314 : vector<8x128xf32>
    %316 = math.exp %315 : vector<8x128xf32>
    %cst_73 = arith.constant 1.000000e+00 : f32
    %317 = vector.broadcast %cst_73 : f32 to vector<8x128xf32>
    %318 = arith.addf %317, %316 : vector<8x128xf32>
    %319 = arith.divf %317, %318 : vector<8x128xf32>
    %320 = vector.extract_strided_slice %307 {offsets = [0, 256], sizes = [8, 128], strides = [1, 1]} : vector<8x512xf32> to vector<8x128xf32>
    %321 = math.tanh %320 : vector<8x128xf32>
    %322 = vector.extract_strided_slice %307 {offsets = [0, 384], sizes = [8, 128], strides = [1, 1]} : vector<8x512xf32> to vector<8x128xf32>
    %323 = arith.negf %322 : vector<8x128xf32>
    %324 = math.exp %323 : vector<8x128xf32>
    %cst_74 = arith.constant 1.000000e+00 : f32
    %325 = vector.broadcast %cst_74 : f32 to vector<8x128xf32>
    %326 = arith.addf %325, %324 : vector<8x128xf32>
    %327 = arith.divf %325, %326 : vector<8x128xf32>
    %328 = arith.mulf %319, %236 : vector<8x128xf32>
    %329 = arith.mulf %313, %321 : vector<8x128xf32>
    %330 = arith.addf %328, %329 : vector<8x128xf32>
    %331 = math.tanh %330 : vector<8x128xf32>
    %332 = arith.mulf %327, %331 : vector<8x128xf32>
    %333 = arith.truncf %332 : vector<8x128xf32> to vector<8x128xbf16>
    %cst_75 = arith.constant dense<0.000000e+00> : vector<8x512xf32>
    %334 = tpu.matmul %333, %8, %cst_75 {dimension_numbers = #tpu.dot_dimension_numbers<[1], [0], [0], [1], [0, 0, 1, 1], [], []>} : vector<8x128xbf16>, vector<128x512xbf16>, vector<8x512xf32> -> vector<8x512xf32>
    %335 = arith.truncf %269 : vector<8x128xf32> to vector<8x128xbf16>
    %cst_76 = arith.constant dense<0.000000e+00> : vector<8x512xf32>
    %336 = tpu.matmul %335, %9, %cst_76 {dimension_numbers = #tpu.dot_dimension_numbers<[1], [0], [0], [1], [0, 0, 1, 1], [], []>} : vector<8x128xbf16>, vector<128x512xbf16>, vector<8x512xf32> -> vector<8x512xf32>
    %337 = arith.addf %334, %336 : vector<8x512xf32>
    %338 = arith.addf %337, %14 : vector<8x512xf32>
    %339 = vector.extract_strided_slice %338 {offsets = [0, 0], sizes = [8, 128], strides = [1, 1]} : vector<8x512xf32> to vector<8x128xf32>
    %340 = arith.negf %339 : vector<8x128xf32>
    %341 = math.exp %340 : vector<8x128xf32>
    %cst_77 = arith.constant 1.000000e+00 : f32
    %342 = vector.broadcast %cst_77 : f32 to vector<8x128xf32>
    %343 = arith.addf %342, %341 : vector<8x128xf32>
    %344 = arith.divf %342, %343 : vector<8x128xf32>
    %345 = vector.extract_strided_slice %338 {offsets = [0, 128], sizes = [8, 128], strides = [1, 1]} : vector<8x512xf32> to vector<8x128xf32>
    %346 = arith.negf %345 : vector<8x128xf32>
    %347 = math.exp %346 : vector<8x128xf32>
    %cst_78 = arith.constant 1.000000e+00 : f32
    %348 = vector.broadcast %cst_78 : f32 to vector<8x128xf32>
    %349 = arith.addf %348, %347 : vector<8x128xf32>
    %350 = arith.divf %348, %349 : vector<8x128xf32>
    %351 = vector.extract_strided_slice %338 {offsets = [0, 256], sizes = [8, 128], strides = [1, 1]} : vector<8x512xf32> to vector<8x128xf32>
    %352 = math.tanh %351 : vector<8x128xf32>
    %353 = vector.extract_strided_slice %338 {offsets = [0, 384], sizes = [8, 128], strides = [1, 1]} : vector<8x512xf32> to vector<8x128xf32>
    %354 = arith.negf %353 : vector<8x128xf32>
    %355 = math.exp %354 : vector<8x128xf32>
    %cst_79 = arith.constant 1.000000e+00 : f32
    %356 = vector.broadcast %cst_79 : f32 to vector<8x128xf32>
    %357 = arith.addf %356, %355 : vector<8x128xf32>
    %358 = arith.divf %356, %357 : vector<8x128xf32>
    %359 = arith.mulf %350, %267 : vector<8x128xf32>
    %360 = arith.mulf %344, %352 : vector<8x128xf32>
    %361 = arith.addf %359, %360 : vector<8x128xf32>
    %362 = math.tanh %361 : vector<8x128xf32>
    %363 = arith.mulf %358, %362 : vector<8x128xf32>
    %364 = arith.truncf %363 : vector<8x128xf32> to vector<8x128xbf16>
    %cst_80 = arith.constant dense<0.000000e+00> : vector<8x512xf32>
    %365 = tpu.matmul %364, %10, %cst_80 {dimension_numbers = #tpu.dot_dimension_numbers<[1], [0], [0], [1], [0, 0, 1, 1], [], []>} : vector<8x128xbf16>, vector<128x512xbf16>, vector<8x512xf32> -> vector<8x512xf32>
    %366 = arith.truncf %300 : vector<8x128xf32> to vector<8x128xbf16>
    %cst_81 = arith.constant dense<0.000000e+00> : vector<8x512xf32>
    %367 = tpu.matmul %366, %11, %cst_81 {dimension_numbers = #tpu.dot_dimension_numbers<[1], [0], [0], [1], [0, 0, 1, 1], [], []>} : vector<8x128xbf16>, vector<128x512xbf16>, vector<8x512xf32> -> vector<8x512xf32>
    %368 = arith.addf %365, %367 : vector<8x512xf32>
    %369 = arith.addf %368, %17 : vector<8x512xf32>
    %370 = vector.extract_strided_slice %369 {offsets = [0, 0], sizes = [8, 128], strides = [1, 1]} : vector<8x512xf32> to vector<8x128xf32>
    %371 = arith.negf %370 : vector<8x128xf32>
    %372 = math.exp %371 : vector<8x128xf32>
    %cst_82 = arith.constant 1.000000e+00 : f32
    %373 = vector.broadcast %cst_82 : f32 to vector<8x128xf32>
    %374 = arith.addf %373, %372 : vector<8x128xf32>
    %375 = arith.divf %373, %374 : vector<8x128xf32>
    %376 = vector.extract_strided_slice %369 {offsets = [0, 128], sizes = [8, 128], strides = [1, 1]} : vector<8x512xf32> to vector<8x128xf32>
    %377 = arith.negf %376 : vector<8x128xf32>
    %378 = math.exp %377 : vector<8x128xf32>
    %cst_83 = arith.constant 1.000000e+00 : f32
    %379 = vector.broadcast %cst_83 : f32 to vector<8x128xf32>
    %380 = arith.addf %379, %378 : vector<8x128xf32>
    %381 = arith.divf %379, %380 : vector<8x128xf32>
    %382 = vector.extract_strided_slice %369 {offsets = [0, 256], sizes = [8, 128], strides = [1, 1]} : vector<8x512xf32> to vector<8x128xf32>
    %383 = math.tanh %382 : vector<8x128xf32>
    %384 = vector.extract_strided_slice %369 {offsets = [0, 384], sizes = [8, 128], strides = [1, 1]} : vector<8x512xf32> to vector<8x128xf32>
    %385 = arith.negf %384 : vector<8x128xf32>
    %386 = math.exp %385 : vector<8x128xf32>
    %cst_84 = arith.constant 1.000000e+00 : f32
    %387 = vector.broadcast %cst_84 : f32 to vector<8x128xf32>
    %388 = arith.addf %387, %386 : vector<8x128xf32>
    %389 = arith.divf %387, %388 : vector<8x128xf32>
    %390 = arith.mulf %381, %298 : vector<8x128xf32>
    %391 = arith.mulf %375, %383 : vector<8x128xf32>
    %392 = arith.addf %390, %391 : vector<8x128xf32>
    %393 = math.tanh %392 : vector<8x128xf32>
    %394 = arith.mulf %389, %393 : vector<8x128xf32>
    %c4_i32 = arith.constant 4 : i32
    %c8_i32_85 = arith.constant 8 : i32
    %395 = arith.muli %c4_i32, %c8_i32_85 : i32
    %396 = tpu.assume_multiple %395, 8 : i32
    %397 = arith.index_cast %396 : i32 to index
    %c0_86 = arith.constant 0 : index
    %398 = vector.load %arg15[%397, %c0_86] : memref<64x512xf32, #tpu.memory_space<vmem>>, vector<8x512xf32>
    %399 = arith.truncf %332 : vector<8x128xf32> to vector<8x128xbf16>
    %cst_87 = arith.constant dense<0.000000e+00> : vector<8x512xf32>
    %400 = tpu.matmul %399, %7, %cst_87 {dimension_numbers = #tpu.dot_dimension_numbers<[1], [0], [0], [1], [0, 0, 1, 1], [], []>} : vector<8x128xbf16>, vector<128x512xbf16>, vector<8x512xf32> -> vector<8x512xf32>
    %401 = arith.addf %398, %400 : vector<8x512xf32>
    %402 = vector.extract_strided_slice %401 {offsets = [0, 0], sizes = [8, 128], strides = [1, 1]} : vector<8x512xf32> to vector<8x128xf32>
    %403 = arith.negf %402 : vector<8x128xf32>
    %404 = math.exp %403 : vector<8x128xf32>
    %cst_88 = arith.constant 1.000000e+00 : f32
    %405 = vector.broadcast %cst_88 : f32 to vector<8x128xf32>
    %406 = arith.addf %405, %404 : vector<8x128xf32>
    %407 = arith.divf %405, %406 : vector<8x128xf32>
    %408 = vector.extract_strided_slice %401 {offsets = [0, 128], sizes = [8, 128], strides = [1, 1]} : vector<8x512xf32> to vector<8x128xf32>
    %409 = arith.negf %408 : vector<8x128xf32>
    %410 = math.exp %409 : vector<8x128xf32>
    %cst_89 = arith.constant 1.000000e+00 : f32
    %411 = vector.broadcast %cst_89 : f32 to vector<8x128xf32>
    %412 = arith.addf %411, %410 : vector<8x128xf32>
    %413 = arith.divf %411, %412 : vector<8x128xf32>
    %414 = vector.extract_strided_slice %401 {offsets = [0, 256], sizes = [8, 128], strides = [1, 1]} : vector<8x512xf32> to vector<8x128xf32>
    %415 = math.tanh %414 : vector<8x128xf32>
    %416 = vector.extract_strided_slice %401 {offsets = [0, 384], sizes = [8, 128], strides = [1, 1]} : vector<8x512xf32> to vector<8x128xf32>
    %417 = arith.negf %416 : vector<8x128xf32>
    %418 = math.exp %417 : vector<8x128xf32>
    %cst_90 = arith.constant 1.000000e+00 : f32
    %419 = vector.broadcast %cst_90 : f32 to vector<8x128xf32>
    %420 = arith.addf %419, %418 : vector<8x128xf32>
    %421 = arith.divf %419, %420 : vector<8x128xf32>
    %422 = arith.mulf %413, %330 : vector<8x128xf32>
    %423 = arith.mulf %407, %415 : vector<8x128xf32>
    %424 = arith.addf %422, %423 : vector<8x128xf32>
    %425 = math.tanh %424 : vector<8x128xf32>
    %426 = arith.mulf %421, %425 : vector<8x128xf32>
    %427 = arith.truncf %426 : vector<8x128xf32> to vector<8x128xbf16>
    %cst_91 = arith.constant dense<0.000000e+00> : vector<8x512xf32>
    %428 = tpu.matmul %427, %8, %cst_91 {dimension_numbers = #tpu.dot_dimension_numbers<[1], [0], [0], [1], [0, 0, 1, 1], [], []>} : vector<8x128xbf16>, vector<128x512xbf16>, vector<8x512xf32> -> vector<8x512xf32>
    %429 = arith.truncf %363 : vector<8x128xf32> to vector<8x128xbf16>
    %cst_92 = arith.constant dense<0.000000e+00> : vector<8x512xf32>
    %430 = tpu.matmul %429, %9, %cst_92 {dimension_numbers = #tpu.dot_dimension_numbers<[1], [0], [0], [1], [0, 0, 1, 1], [], []>} : vector<8x128xbf16>, vector<128x512xbf16>, vector<8x512xf32> -> vector<8x512xf32>
    %431 = arith.addf %428, %430 : vector<8x512xf32>
    %432 = arith.addf %431, %14 : vector<8x512xf32>
    %433 = vector.extract_strided_slice %432 {offsets = [0, 0], sizes = [8, 128], strides = [1, 1]} : vector<8x512xf32> to vector<8x128xf32>
    %434 = arith.negf %433 : vector<8x128xf32>
    %435 = math.exp %434 : vector<8x128xf32>
    %cst_93 = arith.constant 1.000000e+00 : f32
    %436 = vector.broadcast %cst_93 : f32 to vector<8x128xf32>
    %437 = arith.addf %436, %435 : vector<8x128xf32>
    %438 = arith.divf %436, %437 : vector<8x128xf32>
    %439 = vector.extract_strided_slice %432 {offsets = [0, 128], sizes = [8, 128], strides = [1, 1]} : vector<8x512xf32> to vector<8x128xf32>
    %440 = arith.negf %439 : vector<8x128xf32>
    %441 = math.exp %440 : vector<8x128xf32>
    %cst_94 = arith.constant 1.000000e+00 : f32
    %442 = vector.broadcast %cst_94 : f32 to vector<8x128xf32>
    %443 = arith.addf %442, %441 : vector<8x128xf32>
    %444 = arith.divf %442, %443 : vector<8x128xf32>
    %445 = vector.extract_strided_slice %432 {offsets = [0, 256], sizes = [8, 128], strides = [1, 1]} : vector<8x512xf32> to vector<8x128xf32>
    %446 = math.tanh %445 : vector<8x128xf32>
    %447 = vector.extract_strided_slice %432 {offsets = [0, 384], sizes = [8, 128], strides = [1, 1]} : vector<8x512xf32> to vector<8x128xf32>
    %448 = arith.negf %447 : vector<8x128xf32>
    %449 = math.exp %448 : vector<8x128xf32>
    %cst_95 = arith.constant 1.000000e+00 : f32
    %450 = vector.broadcast %cst_95 : f32 to vector<8x128xf32>
    %451 = arith.addf %450, %449 : vector<8x128xf32>
    %452 = arith.divf %450, %451 : vector<8x128xf32>
    %453 = arith.mulf %444, %361 : vector<8x128xf32>
    %454 = arith.mulf %438, %446 : vector<8x128xf32>
    %455 = arith.addf %453, %454 : vector<8x128xf32>
    %456 = math.tanh %455 : vector<8x128xf32>
    %457 = arith.mulf %452, %456 : vector<8x128xf32>
    %458 = arith.truncf %457 : vector<8x128xf32> to vector<8x128xbf16>
    %cst_96 = arith.constant dense<0.000000e+00> : vector<8x512xf32>
    %459 = tpu.matmul %458, %10, %cst_96 {dimension_numbers = #tpu.dot_dimension_numbers<[1], [0], [0], [1], [0, 0, 1, 1], [], []>} : vector<8x128xbf16>, vector<128x512xbf16>, vector<8x512xf32> -> vector<8x512xf32>
    %460 = arith.truncf %394 : vector<8x128xf32> to vector<8x128xbf16>
    %cst_97 = arith.constant dense<0.000000e+00> : vector<8x512xf32>
    %461 = tpu.matmul %460, %11, %cst_97 {dimension_numbers = #tpu.dot_dimension_numbers<[1], [0], [0], [1], [0, 0, 1, 1], [], []>} : vector<8x128xbf16>, vector<128x512xbf16>, vector<8x512xf32> -> vector<8x512xf32>
    %462 = arith.addf %459, %461 : vector<8x512xf32>
    %463 = arith.addf %462, %17 : vector<8x512xf32>
    %464 = vector.extract_strided_slice %463 {offsets = [0, 0], sizes = [8, 128], strides = [1, 1]} : vector<8x512xf32> to vector<8x128xf32>
    %465 = arith.negf %464 : vector<8x128xf32>
    %466 = math.exp %465 : vector<8x128xf32>
    %cst_98 = arith.constant 1.000000e+00 : f32
    %467 = vector.broadcast %cst_98 : f32 to vector<8x128xf32>
    %468 = arith.addf %467, %466 : vector<8x128xf32>
    %469 = arith.divf %467, %468 : vector<8x128xf32>
    %470 = vector.extract_strided_slice %463 {offsets = [0, 128], sizes = [8, 128], strides = [1, 1]} : vector<8x512xf32> to vector<8x128xf32>
    %471 = arith.negf %470 : vector<8x128xf32>
    %472 = math.exp %471 : vector<8x128xf32>
    %cst_99 = arith.constant 1.000000e+00 : f32
    %473 = vector.broadcast %cst_99 : f32 to vector<8x128xf32>
    %474 = arith.addf %473, %472 : vector<8x128xf32>
    %475 = arith.divf %473, %474 : vector<8x128xf32>
    %476 = vector.extract_strided_slice %463 {offsets = [0, 256], sizes = [8, 128], strides = [1, 1]} : vector<8x512xf32> to vector<8x128xf32>
    %477 = math.tanh %476 : vector<8x128xf32>
    %478 = vector.extract_strided_slice %463 {offsets = [0, 384], sizes = [8, 128], strides = [1, 1]} : vector<8x512xf32> to vector<8x128xf32>
    %479 = arith.negf %478 : vector<8x128xf32>
    %480 = math.exp %479 : vector<8x128xf32>
    %cst_100 = arith.constant 1.000000e+00 : f32
    %481 = vector.broadcast %cst_100 : f32 to vector<8x128xf32>
    %482 = arith.addf %481, %480 : vector<8x128xf32>
    %483 = arith.divf %481, %482 : vector<8x128xf32>
    %484 = arith.mulf %475, %392 : vector<8x128xf32>
    %485 = arith.mulf %469, %477 : vector<8x128xf32>
    %486 = arith.addf %484, %485 : vector<8x128xf32>
    %487 = math.tanh %486 : vector<8x128xf32>
    %488 = arith.mulf %483, %487 : vector<8x128xf32>
    %c5_i32 = arith.constant 5 : i32
    %c8_i32_101 = arith.constant 8 : i32
    %489 = arith.muli %c5_i32, %c8_i32_101 : i32
    %490 = tpu.assume_multiple %489, 8 : i32
    %491 = arith.index_cast %490 : i32 to index
    %c0_102 = arith.constant 0 : index
    %492 = vector.load %arg15[%491, %c0_102] : memref<64x512xf32, #tpu.memory_space<vmem>>, vector<8x512xf32>
    %493 = arith.truncf %426 : vector<8x128xf32> to vector<8x128xbf16>
    %cst_103 = arith.constant dense<0.000000e+00> : vector<8x512xf32>
    %494 = tpu.matmul %493, %7, %cst_103 {dimension_numbers = #tpu.dot_dimension_numbers<[1], [0], [0], [1], [0, 0, 1, 1], [], []>} : vector<8x128xbf16>, vector<128x512xbf16>, vector<8x512xf32> -> vector<8x512xf32>
    %495 = arith.addf %492, %494 : vector<8x512xf32>
    %496 = vector.extract_strided_slice %495 {offsets = [0, 0], sizes = [8, 128], strides = [1, 1]} : vector<8x512xf32> to vector<8x128xf32>
    %497 = arith.negf %496 : vector<8x128xf32>
    %498 = math.exp %497 : vector<8x128xf32>
    %cst_104 = arith.constant 1.000000e+00 : f32
    %499 = vector.broadcast %cst_104 : f32 to vector<8x128xf32>
    %500 = arith.addf %499, %498 : vector<8x128xf32>
    %501 = arith.divf %499, %500 : vector<8x128xf32>
    %502 = vector.extract_strided_slice %495 {offsets = [0, 128], sizes = [8, 128], strides = [1, 1]} : vector<8x512xf32> to vector<8x128xf32>
    %503 = arith.negf %502 : vector<8x128xf32>
    %504 = math.exp %503 : vector<8x128xf32>
    %cst_105 = arith.constant 1.000000e+00 : f32
    %505 = vector.broadcast %cst_105 : f32 to vector<8x128xf32>
    %506 = arith.addf %505, %504 : vector<8x128xf32>
    %507 = arith.divf %505, %506 : vector<8x128xf32>
    %508 = vector.extract_strided_slice %495 {offsets = [0, 256], sizes = [8, 128], strides = [1, 1]} : vector<8x512xf32> to vector<8x128xf32>
    %509 = math.tanh %508 : vector<8x128xf32>
    %510 = vector.extract_strided_slice %495 {offsets = [0, 384], sizes = [8, 128], strides = [1, 1]} : vector<8x512xf32> to vector<8x128xf32>
    %511 = arith.negf %510 : vector<8x128xf32>
    %512 = math.exp %511 : vector<8x128xf32>
    %cst_106 = arith.constant 1.000000e+00 : f32
    %513 = vector.broadcast %cst_106 : f32 to vector<8x128xf32>
    %514 = arith.addf %513, %512 : vector<8x128xf32>
    %515 = arith.divf %513, %514 : vector<8x128xf32>
    %516 = arith.mulf %507, %424 : vector<8x128xf32>
    %517 = arith.mulf %501, %509 : vector<8x128xf32>
    %518 = arith.addf %516, %517 : vector<8x128xf32>
    %519 = math.tanh %518 : vector<8x128xf32>
    %520 = arith.mulf %515, %519 : vector<8x128xf32>
    %521 = arith.truncf %520 : vector<8x128xf32> to vector<8x128xbf16>
    %cst_107 = arith.constant dense<0.000000e+00> : vector<8x512xf32>
    %522 = tpu.matmul %521, %8, %cst_107 {dimension_numbers = #tpu.dot_dimension_numbers<[1], [0], [0], [1], [0, 0, 1, 1], [], []>} : vector<8x128xbf16>, vector<128x512xbf16>, vector<8x512xf32> -> vector<8x512xf32>
    %523 = arith.truncf %457 : vector<8x128xf32> to vector<8x128xbf16>
    %cst_108 = arith.constant dense<0.000000e+00> : vector<8x512xf32>
    %524 = tpu.matmul %523, %9, %cst_108 {dimension_numbers = #tpu.dot_dimension_numbers<[1], [0], [0], [1], [0, 0, 1, 1], [], []>} : vector<8x128xbf16>, vector<128x512xbf16>, vector<8x512xf32> -> vector<8x512xf32>
    %525 = arith.addf %522, %524 : vector<8x512xf32>
    %526 = arith.addf %525, %14 : vector<8x512xf32>
    %527 = vector.extract_strided_slice %526 {offsets = [0, 0], sizes = [8, 128], strides = [1, 1]} : vector<8x512xf32> to vector<8x128xf32>
    %528 = arith.negf %527 : vector<8x128xf32>
    %529 = math.exp %528 : vector<8x128xf32>
    %cst_109 = arith.constant 1.000000e+00 : f32
    %530 = vector.broadcast %cst_109 : f32 to vector<8x128xf32>
    %531 = arith.addf %530, %529 : vector<8x128xf32>
    %532 = arith.divf %530, %531 : vector<8x128xf32>
    %533 = vector.extract_strided_slice %526 {offsets = [0, 128], sizes = [8, 128], strides = [1, 1]} : vector<8x512xf32> to vector<8x128xf32>
    %534 = arith.negf %533 : vector<8x128xf32>
    %535 = math.exp %534 : vector<8x128xf32>
    %cst_110 = arith.constant 1.000000e+00 : f32
    %536 = vector.broadcast %cst_110 : f32 to vector<8x128xf32>
    %537 = arith.addf %536, %535 : vector<8x128xf32>
    %538 = arith.divf %536, %537 : vector<8x128xf32>
    %539 = vector.extract_strided_slice %526 {offsets = [0, 256], sizes = [8, 128], strides = [1, 1]} : vector<8x512xf32> to vector<8x128xf32>
    %540 = math.tanh %539 : vector<8x128xf32>
    %541 = vector.extract_strided_slice %526 {offsets = [0, 384], sizes = [8, 128], strides = [1, 1]} : vector<8x512xf32> to vector<8x128xf32>
    %542 = arith.negf %541 : vector<8x128xf32>
    %543 = math.exp %542 : vector<8x128xf32>
    %cst_111 = arith.constant 1.000000e+00 : f32
    %544 = vector.broadcast %cst_111 : f32 to vector<8x128xf32>
    %545 = arith.addf %544, %543 : vector<8x128xf32>
    %546 = arith.divf %544, %545 : vector<8x128xf32>
    %547 = arith.mulf %538, %455 : vector<8x128xf32>
    %548 = arith.mulf %532, %540 : vector<8x128xf32>
    %549 = arith.addf %547, %548 : vector<8x128xf32>
    %550 = math.tanh %549 : vector<8x128xf32>
    %551 = arith.mulf %546, %550 : vector<8x128xf32>
    %552 = arith.truncf %551 : vector<8x128xf32> to vector<8x128xbf16>
    %cst_112 = arith.constant dense<0.000000e+00> : vector<8x512xf32>
    %553 = tpu.matmul %552, %10, %cst_112 {dimension_numbers = #tpu.dot_dimension_numbers<[1], [0], [0], [1], [0, 0, 1, 1], [], []>} : vector<8x128xbf16>, vector<128x512xbf16>, vector<8x512xf32> -> vector<8x512xf32>
    %554 = arith.truncf %488 : vector<8x128xf32> to vector<8x128xbf16>
    %cst_113 = arith.constant dense<0.000000e+00> : vector<8x512xf32>
    %555 = tpu.matmul %554, %11, %cst_113 {dimension_numbers = #tpu.dot_dimension_numbers<[1], [0], [0], [1], [0, 0, 1, 1], [], []>} : vector<8x128xbf16>, vector<128x512xbf16>, vector<8x512xf32> -> vector<8x512xf32>
    %556 = arith.addf %553, %555 : vector<8x512xf32>
    %557 = arith.addf %556, %17 : vector<8x512xf32>
    %558 = vector.extract_strided_slice %557 {offsets = [0, 0], sizes = [8, 128], strides = [1, 1]} : vector<8x512xf32> to vector<8x128xf32>
    %559 = arith.negf %558 : vector<8x128xf32>
    %560 = math.exp %559 : vector<8x128xf32>
    %cst_114 = arith.constant 1.000000e+00 : f32
    %561 = vector.broadcast %cst_114 : f32 to vector<8x128xf32>
    %562 = arith.addf %561, %560 : vector<8x128xf32>
    %563 = arith.divf %561, %562 : vector<8x128xf32>
    %564 = vector.extract_strided_slice %557 {offsets = [0, 128], sizes = [8, 128], strides = [1, 1]} : vector<8x512xf32> to vector<8x128xf32>
    %565 = arith.negf %564 : vector<8x128xf32>
    %566 = math.exp %565 : vector<8x128xf32>
    %cst_115 = arith.constant 1.000000e+00 : f32
    %567 = vector.broadcast %cst_115 : f32 to vector<8x128xf32>
    %568 = arith.addf %567, %566 : vector<8x128xf32>
    %569 = arith.divf %567, %568 : vector<8x128xf32>
    %570 = vector.extract_strided_slice %557 {offsets = [0, 256], sizes = [8, 128], strides = [1, 1]} : vector<8x512xf32> to vector<8x128xf32>
    %571 = math.tanh %570 : vector<8x128xf32>
    %572 = vector.extract_strided_slice %557 {offsets = [0, 384], sizes = [8, 128], strides = [1, 1]} : vector<8x512xf32> to vector<8x128xf32>
    %573 = arith.negf %572 : vector<8x128xf32>
    %574 = math.exp %573 : vector<8x128xf32>
    %cst_116 = arith.constant 1.000000e+00 : f32
    %575 = vector.broadcast %cst_116 : f32 to vector<8x128xf32>
    %576 = arith.addf %575, %574 : vector<8x128xf32>
    %577 = arith.divf %575, %576 : vector<8x128xf32>
    %578 = arith.mulf %569, %486 : vector<8x128xf32>
    %579 = arith.mulf %563, %571 : vector<8x128xf32>
    %580 = arith.addf %578, %579 : vector<8x128xf32>
    %581 = math.tanh %580 : vector<8x128xf32>
    %582 = arith.mulf %577, %581 : vector<8x128xf32>
    %c6_i32 = arith.constant 6 : i32
    %c8_i32_117 = arith.constant 8 : i32
    %583 = arith.muli %c6_i32, %c8_i32_117 : i32
    %584 = tpu.assume_multiple %583, 8 : i32
    %585 = arith.index_cast %584 : i32 to index
    %c0_118 = arith.constant 0 : index
    %586 = vector.load %arg15[%585, %c0_118] : memref<64x512xf32, #tpu.memory_space<vmem>>, vector<8x512xf32>
    %587 = arith.truncf %520 : vector<8x128xf32> to vector<8x128xbf16>
    %cst_119 = arith.constant dense<0.000000e+00> : vector<8x512xf32>
    %588 = tpu.matmul %587, %7, %cst_119 {dimension_numbers = #tpu.dot_dimension_numbers<[1], [0], [0], [1], [0, 0, 1, 1], [], []>} : vector<8x128xbf16>, vector<128x512xbf16>, vector<8x512xf32> -> vector<8x512xf32>
    %589 = arith.addf %586, %588 : vector<8x512xf32>
    %590 = vector.extract_strided_slice %589 {offsets = [0, 0], sizes = [8, 128], strides = [1, 1]} : vector<8x512xf32> to vector<8x128xf32>
    %591 = arith.negf %590 : vector<8x128xf32>
    %592 = math.exp %591 : vector<8x128xf32>
    %cst_120 = arith.constant 1.000000e+00 : f32
    %593 = vector.broadcast %cst_120 : f32 to vector<8x128xf32>
    %594 = arith.addf %593, %592 : vector<8x128xf32>
    %595 = arith.divf %593, %594 : vector<8x128xf32>
    %596 = vector.extract_strided_slice %589 {offsets = [0, 128], sizes = [8, 128], strides = [1, 1]} : vector<8x512xf32> to vector<8x128xf32>
    %597 = arith.negf %596 : vector<8x128xf32>
    %598 = math.exp %597 : vector<8x128xf32>
    %cst_121 = arith.constant 1.000000e+00 : f32
    %599 = vector.broadcast %cst_121 : f32 to vector<8x128xf32>
    %600 = arith.addf %599, %598 : vector<8x128xf32>
    %601 = arith.divf %599, %600 : vector<8x128xf32>
    %602 = vector.extract_strided_slice %589 {offsets = [0, 256], sizes = [8, 128], strides = [1, 1]} : vector<8x512xf32> to vector<8x128xf32>
    %603 = math.tanh %602 : vector<8x128xf32>
    %604 = vector.extract_strided_slice %589 {offsets = [0, 384], sizes = [8, 128], strides = [1, 1]} : vector<8x512xf32> to vector<8x128xf32>
    %605 = arith.negf %604 : vector<8x128xf32>
    %606 = math.exp %605 : vector<8x128xf32>
    %cst_122 = arith.constant 1.000000e+00 : f32
    %607 = vector.broadcast %cst_122 : f32 to vector<8x128xf32>
    %608 = arith.addf %607, %606 : vector<8x128xf32>
    %609 = arith.divf %607, %608 : vector<8x128xf32>
    %610 = arith.mulf %601, %518 : vector<8x128xf32>
    %611 = arith.mulf %595, %603 : vector<8x128xf32>
    %612 = arith.addf %610, %611 : vector<8x128xf32>
    %613 = math.tanh %612 : vector<8x128xf32>
    %614 = arith.mulf %609, %613 : vector<8x128xf32>
    %615 = arith.truncf %614 : vector<8x128xf32> to vector<8x128xbf16>
    %cst_123 = arith.constant dense<0.000000e+00> : vector<8x512xf32>
    %616 = tpu.matmul %615, %8, %cst_123 {dimension_numbers = #tpu.dot_dimension_numbers<[1], [0], [0], [1], [0, 0, 1, 1], [], []>} : vector<8x128xbf16>, vector<128x512xbf16>, vector<8x512xf32> -> vector<8x512xf32>
    %617 = arith.truncf %551 : vector<8x128xf32> to vector<8x128xbf16>
    %cst_124 = arith.constant dense<0.000000e+00> : vector<8x512xf32>
    %618 = tpu.matmul %617, %9, %cst_124 {dimension_numbers = #tpu.dot_dimension_numbers<[1], [0], [0], [1], [0, 0, 1, 1], [], []>} : vector<8x128xbf16>, vector<128x512xbf16>, vector<8x512xf32> -> vector<8x512xf32>
    %619 = arith.addf %616, %618 : vector<8x512xf32>
    %620 = arith.addf %619, %14 : vector<8x512xf32>
    %621 = vector.extract_strided_slice %620 {offsets = [0, 0], sizes = [8, 128], strides = [1, 1]} : vector<8x512xf32> to vector<8x128xf32>
    %622 = arith.negf %621 : vector<8x128xf32>
    %623 = math.exp %622 : vector<8x128xf32>
    %cst_125 = arith.constant 1.000000e+00 : f32
    %624 = vector.broadcast %cst_125 : f32 to vector<8x128xf32>
    %625 = arith.addf %624, %623 : vector<8x128xf32>
    %626 = arith.divf %624, %625 : vector<8x128xf32>
    %627 = vector.extract_strided_slice %620 {offsets = [0, 128], sizes = [8, 128], strides = [1, 1]} : vector<8x512xf32> to vector<8x128xf32>
    %628 = arith.negf %627 : vector<8x128xf32>
    %629 = math.exp %628 : vector<8x128xf32>
    %cst_126 = arith.constant 1.000000e+00 : f32
    %630 = vector.broadcast %cst_126 : f32 to vector<8x128xf32>
    %631 = arith.addf %630, %629 : vector<8x128xf32>
    %632 = arith.divf %630, %631 : vector<8x128xf32>
    %633 = vector.extract_strided_slice %620 {offsets = [0, 256], sizes = [8, 128], strides = [1, 1]} : vector<8x512xf32> to vector<8x128xf32>
    %634 = math.tanh %633 : vector<8x128xf32>
    %635 = vector.extract_strided_slice %620 {offsets = [0, 384], sizes = [8, 128], strides = [1, 1]} : vector<8x512xf32> to vector<8x128xf32>
    %636 = arith.negf %635 : vector<8x128xf32>
    %637 = math.exp %636 : vector<8x128xf32>
    %cst_127 = arith.constant 1.000000e+00 : f32
    %638 = vector.broadcast %cst_127 : f32 to vector<8x128xf32>
    %639 = arith.addf %638, %637 : vector<8x128xf32>
    %640 = arith.divf %638, %639 : vector<8x128xf32>
    %641 = arith.mulf %632, %549 : vector<8x128xf32>
    %642 = arith.mulf %626, %634 : vector<8x128xf32>
    %643 = arith.addf %641, %642 : vector<8x128xf32>
    %644 = math.tanh %643 : vector<8x128xf32>
    %645 = arith.mulf %640, %644 : vector<8x128xf32>
    %646 = arith.truncf %645 : vector<8x128xf32> to vector<8x128xbf16>
    %cst_128 = arith.constant dense<0.000000e+00> : vector<8x512xf32>
    %647 = tpu.matmul %646, %10, %cst_128 {dimension_numbers = #tpu.dot_dimension_numbers<[1], [0], [0], [1], [0, 0, 1, 1], [], []>} : vector<8x128xbf16>, vector<128x512xbf16>, vector<8x512xf32> -> vector<8x512xf32>
    %648 = arith.truncf %582 : vector<8x128xf32> to vector<8x128xbf16>
    %cst_129 = arith.constant dense<0.000000e+00> : vector<8x512xf32>
    %649 = tpu.matmul %648, %11, %cst_129 {dimension_numbers = #tpu.dot_dimension_numbers<[1], [0], [0], [1], [0, 0, 1, 1], [], []>} : vector<8x128xbf16>, vector<128x512xbf16>, vector<8x512xf32> -> vector<8x512xf32>
    %650 = arith.addf %647, %649 : vector<8x512xf32>
    %651 = arith.addf %650, %17 : vector<8x512xf32>
    %652 = vector.extract_strided_slice %651 {offsets = [0, 0], sizes = [8, 128], strides = [1, 1]} : vector<8x512xf32> to vector<8x128xf32>
    %653 = arith.negf %652 : vector<8x128xf32>
    %654 = math.exp %653 : vector<8x128xf32>
    %cst_130 = arith.constant 1.000000e+00 : f32
    %655 = vector.broadcast %cst_130 : f32 to vector<8x128xf32>
    %656 = arith.addf %655, %654 : vector<8x128xf32>
    %657 = arith.divf %655, %656 : vector<8x128xf32>
    %658 = vector.extract_strided_slice %651 {offsets = [0, 128], sizes = [8, 128], strides = [1, 1]} : vector<8x512xf32> to vector<8x128xf32>
    %659 = arith.negf %658 : vector<8x128xf32>
    %660 = math.exp %659 : vector<8x128xf32>
    %cst_131 = arith.constant 1.000000e+00 : f32
    %661 = vector.broadcast %cst_131 : f32 to vector<8x128xf32>
    %662 = arith.addf %661, %660 : vector<8x128xf32>
    %663 = arith.divf %661, %662 : vector<8x128xf32>
    %664 = vector.extract_strided_slice %651 {offsets = [0, 256], sizes = [8, 128], strides = [1, 1]} : vector<8x512xf32> to vector<8x128xf32>
    %665 = math.tanh %664 : vector<8x128xf32>
    %666 = vector.extract_strided_slice %651 {offsets = [0, 384], sizes = [8, 128], strides = [1, 1]} : vector<8x512xf32> to vector<8x128xf32>
    %667 = arith.negf %666 : vector<8x128xf32>
    %668 = math.exp %667 : vector<8x128xf32>
    %cst_132 = arith.constant 1.000000e+00 : f32
    %669 = vector.broadcast %cst_132 : f32 to vector<8x128xf32>
    %670 = arith.addf %669, %668 : vector<8x128xf32>
    %671 = arith.divf %669, %670 : vector<8x128xf32>
    %672 = arith.mulf %663, %580 : vector<8x128xf32>
    %673 = arith.mulf %657, %665 : vector<8x128xf32>
    %674 = arith.addf %672, %673 : vector<8x128xf32>
    %675 = math.tanh %674 : vector<8x128xf32>
    %676 = arith.mulf %671, %675 : vector<8x128xf32>
    %c7_i32 = arith.constant 7 : i32
    %c8_i32_133 = arith.constant 8 : i32
    %677 = arith.muli %c7_i32, %c8_i32_133 : i32
    %678 = tpu.assume_multiple %677, 8 : i32
    %679 = arith.index_cast %678 : i32 to index
    %c0_134 = arith.constant 0 : index
    %680 = vector.load %arg15[%679, %c0_134] : memref<64x512xf32, #tpu.memory_space<vmem>>, vector<8x512xf32>
    %681 = arith.truncf %614 : vector<8x128xf32> to vector<8x128xbf16>
    %cst_135 = arith.constant dense<0.000000e+00> : vector<8x512xf32>
    %682 = tpu.matmul %681, %7, %cst_135 {dimension_numbers = #tpu.dot_dimension_numbers<[1], [0], [0], [1], [0, 0, 1, 1], [], []>} : vector<8x128xbf16>, vector<128x512xbf16>, vector<8x512xf32> -> vector<8x512xf32>
    %683 = arith.addf %680, %682 : vector<8x512xf32>
    %684 = vector.extract_strided_slice %683 {offsets = [0, 0], sizes = [8, 128], strides = [1, 1]} : vector<8x512xf32> to vector<8x128xf32>
    %685 = arith.negf %684 : vector<8x128xf32>
    %686 = math.exp %685 : vector<8x128xf32>
    %cst_136 = arith.constant 1.000000e+00 : f32
    %687 = vector.broadcast %cst_136 : f32 to vector<8x128xf32>
    %688 = arith.addf %687, %686 : vector<8x128xf32>
    %689 = arith.divf %687, %688 : vector<8x128xf32>
    %690 = vector.extract_strided_slice %683 {offsets = [0, 128], sizes = [8, 128], strides = [1, 1]} : vector<8x512xf32> to vector<8x128xf32>
    %691 = arith.negf %690 : vector<8x128xf32>
    %692 = math.exp %691 : vector<8x128xf32>
    %cst_137 = arith.constant 1.000000e+00 : f32
    %693 = vector.broadcast %cst_137 : f32 to vector<8x128xf32>
    %694 = arith.addf %693, %692 : vector<8x128xf32>
    %695 = arith.divf %693, %694 : vector<8x128xf32>
    %696 = vector.extract_strided_slice %683 {offsets = [0, 256], sizes = [8, 128], strides = [1, 1]} : vector<8x512xf32> to vector<8x128xf32>
    %697 = math.tanh %696 : vector<8x128xf32>
    %698 = vector.extract_strided_slice %683 {offsets = [0, 384], sizes = [8, 128], strides = [1, 1]} : vector<8x512xf32> to vector<8x128xf32>
    %699 = arith.negf %698 : vector<8x128xf32>
    %700 = math.exp %699 : vector<8x128xf32>
    %cst_138 = arith.constant 1.000000e+00 : f32
    %701 = vector.broadcast %cst_138 : f32 to vector<8x128xf32>
    %702 = arith.addf %701, %700 : vector<8x128xf32>
    %703 = arith.divf %701, %702 : vector<8x128xf32>
    %704 = arith.mulf %695, %612 : vector<8x128xf32>
    %705 = arith.mulf %689, %697 : vector<8x128xf32>
    %706 = arith.addf %704, %705 : vector<8x128xf32>
    %707 = math.tanh %706 : vector<8x128xf32>
    %708 = arith.mulf %703, %707 : vector<8x128xf32>
    %709 = arith.truncf %708 : vector<8x128xf32> to vector<8x128xbf16>
    %cst_139 = arith.constant dense<0.000000e+00> : vector<8x512xf32>
    %710 = tpu.matmul %709, %8, %cst_139 {dimension_numbers = #tpu.dot_dimension_numbers<[1], [0], [0], [1], [0, 0, 1, 1], [], []>} : vector<8x128xbf16>, vector<128x512xbf16>, vector<8x512xf32> -> vector<8x512xf32>
    %711 = arith.truncf %645 : vector<8x128xf32> to vector<8x128xbf16>
    %cst_140 = arith.constant dense<0.000000e+00> : vector<8x512xf32>
    %712 = tpu.matmul %711, %9, %cst_140 {dimension_numbers = #tpu.dot_dimension_numbers<[1], [0], [0], [1], [0, 0, 1, 1], [], []>} : vector<8x128xbf16>, vector<128x512xbf16>, vector<8x512xf32> -> vector<8x512xf32>
    %713 = arith.addf %710, %712 : vector<8x512xf32>
    %714 = arith.addf %713, %14 : vector<8x512xf32>
    %715 = vector.extract_strided_slice %714 {offsets = [0, 0], sizes = [8, 128], strides = [1, 1]} : vector<8x512xf32> to vector<8x128xf32>
    %716 = arith.negf %715 : vector<8x128xf32>
    %717 = math.exp %716 : vector<8x128xf32>
    %cst_141 = arith.constant 1.000000e+00 : f32
    %718 = vector.broadcast %cst_141 : f32 to vector<8x128xf32>
    %719 = arith.addf %718, %717 : vector<8x128xf32>
    %720 = arith.divf %718, %719 : vector<8x128xf32>
    %721 = vector.extract_strided_slice %714 {offsets = [0, 128], sizes = [8, 128], strides = [1, 1]} : vector<8x512xf32> to vector<8x128xf32>
    %722 = arith.negf %721 : vector<8x128xf32>
    %723 = math.exp %722 : vector<8x128xf32>
    %cst_142 = arith.constant 1.000000e+00 : f32
    %724 = vector.broadcast %cst_142 : f32 to vector<8x128xf32>
    %725 = arith.addf %724, %723 : vector<8x128xf32>
    %726 = arith.divf %724, %725 : vector<8x128xf32>
    %727 = vector.extract_strided_slice %714 {offsets = [0, 256], sizes = [8, 128], strides = [1, 1]} : vector<8x512xf32> to vector<8x128xf32>
    %728 = math.tanh %727 : vector<8x128xf32>
    %729 = vector.extract_strided_slice %714 {offsets = [0, 384], sizes = [8, 128], strides = [1, 1]} : vector<8x512xf32> to vector<8x128xf32>
    %730 = arith.negf %729 : vector<8x128xf32>
    %731 = math.exp %730 : vector<8x128xf32>
    %cst_143 = arith.constant 1.000000e+00 : f32
    %732 = vector.broadcast %cst_143 : f32 to vector<8x128xf32>
    %733 = arith.addf %732, %731 : vector<8x128xf32>
    %734 = arith.divf %732, %733 : vector<8x128xf32>
    %735 = arith.mulf %726, %643 : vector<8x128xf32>
    %736 = arith.mulf %720, %728 : vector<8x128xf32>
    %737 = arith.addf %735, %736 : vector<8x128xf32>
    %738 = math.tanh %737 : vector<8x128xf32>
    %739 = arith.mulf %734, %738 : vector<8x128xf32>
    %740 = arith.truncf %739 : vector<8x128xf32> to vector<8x128xbf16>
    %cst_144 = arith.constant dense<0.000000e+00> : vector<8x512xf32>
    %741 = tpu.matmul %740, %10, %cst_144 {dimension_numbers = #tpu.dot_dimension_numbers<[1], [0], [0], [1], [0, 0, 1, 1], [], []>} : vector<8x128xbf16>, vector<128x512xbf16>, vector<8x512xf32> -> vector<8x512xf32>
    %742 = arith.truncf %676 : vector<8x128xf32> to vector<8x128xbf16>
    %cst_145 = arith.constant dense<0.000000e+00> : vector<8x512xf32>
    %743 = tpu.matmul %742, %11, %cst_145 {dimension_numbers = #tpu.dot_dimension_numbers<[1], [0], [0], [1], [0, 0, 1, 1], [], []>} : vector<8x128xbf16>, vector<128x512xbf16>, vector<8x512xf32> -> vector<8x512xf32>
    %744 = arith.addf %741, %743 : vector<8x512xf32>
    %745 = arith.addf %744, %17 : vector<8x512xf32>
    %746 = vector.extract_strided_slice %745 {offsets = [0, 0], sizes = [8, 128], strides = [1, 1]} : vector<8x512xf32> to vector<8x128xf32>
    %747 = arith.negf %746 : vector<8x128xf32>
    %748 = math.exp %747 : vector<8x128xf32>
    %cst_146 = arith.constant 1.000000e+00 : f32
    %749 = vector.broadcast %cst_146 : f32 to vector<8x128xf32>
    %750 = arith.addf %749, %748 : vector<8x128xf32>
    %751 = arith.divf %749, %750 : vector<8x128xf32>
    %752 = vector.extract_strided_slice %745 {offsets = [0, 128], sizes = [8, 128], strides = [1, 1]} : vector<8x512xf32> to vector<8x128xf32>
    %753 = arith.negf %752 : vector<8x128xf32>
    %754 = math.exp %753 : vector<8x128xf32>
    %cst_147 = arith.constant 1.000000e+00 : f32
    %755 = vector.broadcast %cst_147 : f32 to vector<8x128xf32>
    %756 = arith.addf %755, %754 : vector<8x128xf32>
    %757 = arith.divf %755, %756 : vector<8x128xf32>
    %758 = vector.extract_strided_slice %745 {offsets = [0, 256], sizes = [8, 128], strides = [1, 1]} : vector<8x512xf32> to vector<8x128xf32>
    %759 = math.tanh %758 : vector<8x128xf32>
    %760 = vector.extract_strided_slice %745 {offsets = [0, 384], sizes = [8, 128], strides = [1, 1]} : vector<8x512xf32> to vector<8x128xf32>
    %761 = arith.negf %760 : vector<8x128xf32>
    %762 = math.exp %761 : vector<8x128xf32>
    %cst_148 = arith.constant 1.000000e+00 : f32
    %763 = vector.broadcast %cst_148 : f32 to vector<8x128xf32>
    %764 = arith.addf %763, %762 : vector<8x128xf32>
    %765 = arith.divf %763, %764 : vector<8x128xf32>
    %766 = arith.mulf %757, %674 : vector<8x128xf32>
    %767 = arith.mulf %751, %759 : vector<8x128xf32>
    %768 = arith.addf %766, %767 : vector<8x128xf32>
    %769 = math.tanh %768 : vector<8x128xf32>
    %770 = arith.mulf %765, %769 : vector<8x128xf32>
    %c8_i32_149 = arith.constant 8 : i32
    %c0_150 = arith.constant 0 : index
    %c0_151 = arith.constant 0 : index
    %771 = vector.load %arg10[%c0_150, %c0_151] : memref<128x128xf32, #tpu.memory_space<vmem>>, vector<128x128xf32>
    %cst_152 = arith.constant dense<0.000000e+00> : vector<8x128xf32>
    %772 = tpu.matmul %770, %771, %cst_152 {dimension_numbers = #tpu.dot_dimension_numbers<[1], [0], [0], [1], [0, 0, 1, 1], [], []>} : vector<8x128xf32>, vector<128x128xf32>, vector<8x128xf32> -> vector<8x128xf32>
    %c0_153 = arith.constant 0 : index
    %c0_154 = arith.constant 0 : index
    %773 = vector.load %arg11[%c0_153, %c0_154] : memref<1x128xf32, #tpu.memory_space<vmem>>, vector<1x128xf32>
    %774 = vector.broadcast %773 : vector<1x128xf32> to vector<8x128xf32>
    %775 = arith.addf %772, %774 : vector<8x128xf32>
    %cst_155 = arith.constant 0.000000e+00 : f32
    %776 = vector.broadcast %cst_155 : f32 to vector<8x128xf32>
    %777 = arith.maximumf %775, %776 : vector<8x128xf32>
    %c0_156 = arith.constant 0 : index
    %c0_157 = arith.constant 0 : index
    %778 = vector.load %arg12[%c0_156, %c0_157] : memref<128x128xf32, #tpu.memory_space<vmem>>, vector<128x128xf32>
    %cst_158 = arith.constant dense<0.000000e+00> : vector<8x128xf32>
    %779 = tpu.matmul %777, %778, %cst_158 {dimension_numbers = #tpu.dot_dimension_numbers<[1], [0], [0], [1], [0, 0, 1, 1], [], []>} : vector<8x128xf32>, vector<128x128xf32>, vector<8x128xf32> -> vector<8x128xf32>
    %c0_159 = arith.constant 0 : index
    %c0_160 = arith.constant 0 : index
    %780 = vector.load %arg13[%c0_159, %c0_160] : memref<1x128xf32, #tpu.memory_space<vmem>>, vector<1x128xf32>
    %781 = vector.broadcast %780 : vector<1x128xf32> to vector<8x128xf32>
    %782 = arith.addf %779, %781 : vector<8x128xf32>
    %c0_161 = arith.constant 0 : index
    %c0_162 = arith.constant 0 : index
    %783 = vector.load %arg14[%c0_161, %c0_162] : memref<8x128xf32, #tpu.memory_space<vmem>>, vector<8x128xf32>
    tpu.vector_store %arg14[%c0_161, %c0_162], %782 {strides = array<i32>} : memref<8x128xf32, #tpu.memory_space<vmem>>, vector<8x128xf32>,
    return
  }
}

</mosaic_0001>

<llo_original>
// kernel: rnn_forward.1
$region0: #{rnn_forward.1}
  #allocation0 [shape = 'u32[]', space=smem, size = 0x4, offset = 0x4, fixed_abs, tag = 'smem constant byte address 0x4 - core index']
  #allocation1 [shape = 'u32[144,128]{1,0:T(1,128)}', space=vmem, size = 0x12000, scoped, tag = 'internal scratch']
  #allocation2 [shape = 'f32[64,512]{1,0:T(8,128)}', space=vmem, size = 0x20000, scoped, tag = 'scratch operand']
  %s0 = inlined_call_operand.vmem [shape: f32[64,128], index: 0, kind: input, shape index: {}]
  %s1 = inlined_call_operand.hbm [shape: f32[128,512], index: 1, kind: input, shape index: {}]
  %s2 = inlined_call_operand.hbm [shape: bf16[128,512], index: 2, kind: input, shape index: {}]
  %s3 = inlined_call_operand.vmem [shape: f32[1,512], index: 3, kind: input, shape index: {}]
  %s4 = inlined_call_operand.hbm [shape: bf16[128,512], index: 4, kind: input, shape index: {}]
  %s5 = inlined_call_operand.hbm [shape: bf16[128,512], index: 5, kind: input, shape index: {}]
  %s6 = inlined_call_operand.vmem [shape: f32[1,512], index: 6, kind: input, shape index: {}]
  %s7 = inlined_call_operand.hbm [shape: bf16[128,512], index: 7, kind: input, shape index: {}]
  %s8 = inlined_call_operand.hbm [shape: bf16[128,512], index: 8, kind: input, shape index: {}]
  %s9 = inlined_call_operand.vmem [shape: f32[1,512], index: 9, kind: input, shape index: {}]
  %s10 = inlined_call_operand.hbm [shape: f32[128,128], index: 10, kind: input, shape index: {}]
  %s11 = inlined_call_operand.vmem [shape: f32[1,128], index: 11, kind: input, shape index: {}]
  %s12 = inlined_call_operand.vmem [shape: f32[128,128], index: 12, kind: input, shape index: {}]
  %s13 = inlined_call_operand.vmem [shape: f32[1,128], index: 13, kind: input, shape index: {}]
  %s14 = inlined_call_operand.vmem [shape: f32[8,128], index: 14, kind: output, shape index: {}]
  %s15 = sld [smem:[#allocation0]]
  $region94: #{rnn_forward.1} parent=0
    _
  %s17 = ssub.s32 1, %s15
  %s18 = scalar_select 0, %s17, %s15
  $region1: #{rnn_forward.1} parent=0
    #allocation3 [shape = 'u8[262144]{0}', space=vmem, size = 0x40000, scoped, tag = 'input window, operand 1, single buffered']
    #allocation4 [shape = 's32[1]{0}', space=sflag, size = 0x4, scoped, tag = 'scoped memory for rnn_forward.1']
    #allocation5 [shape = 'u8[131072]{0}', space=vmem, size = 0x20000, scoped, tag = 'input window, operand 2, single buffered']
    #allocation6 [shape = 's32[1]{0}', space=sflag, size = 0x4, scoped, tag = 'scoped memory for rnn_forward.1']
    #allocation7 [shape = 'u8[131072]{0}', space=vmem, size = 0x20000, scoped, tag = 'input window, operand 4, single buffered']
    #allocation8 [shape = 'u8[131072]{0}', space=vmem, size = 0x20000, scoped, tag = 'input window, operand 5, single buffered']
    #allocation9 [shape = 's32[1]{0}', space=sflag, size = 0x4, scoped, tag = 'scoped memory for rnn_forward.1']
    #allocation10 [shape = 'u8[131072]{0}', space=vmem, size = 0x20000, scoped, tag = 'input window, operand 7, single buffered']
    #allocation11 [shape = 'u8[131072]{0}', space=vmem, size = 0x20000, scoped, tag = 'input window, operand 8, single buffered']
    #allocation12 [shape = 's32[1]{0}', space=sflag, size = 0x4, scoped, tag = 'scoped memory for rnn_forward.1']
    #allocation13 [shape = 'u8[65536]{0}', space=vmem, size = 0x10000, scoped, tag = 'input window, operand 10, single buffered']
    %19 = vsyncpa [#allocation4], 0
    %20 = vsyncpa [#allocation6], 0
    %21 = vsyncpa [#allocation9], 0
    %22 = vsyncpa [#allocation12], 0
    // Predicated region
    $region2: #{rnn_forward.1} parent=1 // pred_check
      _
    $region3: #{rnn_forward.1} parent=1 // pred_check_branch
      %24 = sbr.rel (0) target = $region5
    $region4: #{rnn_forward.1} parent=1 // pred_region
      _
    $region5: #{rnn_forward.1} parent=1 // pred_fallthru
      _
    // Predicated region
    $region6: #{rnn_forward.1} parent=1 // pred_check
      _
    $region7: #{rnn_forward.1} parent=1 // pred_check_branch
      %26 = sbr.rel (0) target = $region9
    $region8: #{rnn_forward.1} parent=1 // pred_region
      %s28 = ssub.s32 8192, 8192
      %29 = vsyncadd [#allocation4], %s28
      %s30 = sshll.u32 [#allocation3], 4
      %s31 = int_to_ptr.vmem [resolvable:$true] %s30
      %36 = dma.hbm_to_vmem [thread:$0]  %s1, 8192, %s31, [#allocation4], 512, 512, 32
    $region9: #{rnn_forward.1} parent=1 // pred_fallthru
      _
    // Predicated region
    $region10: #{rnn_forward.1} parent=1 // pred_check
      _
    $region11: #{rnn_forward.1} parent=1 // pred_check_branch
      %38 = sbr.rel (0) target = $region13
    $region12: #{rnn_forward.1} parent=1 // pred_region
      %s40 = ssub.s32 4096, 4096
      %41 = vsyncadd [#allocation6], %s40
      %s42 = sshll.u32 [#allocation5], 4
      %s43 = int_to_ptr.vmem [resolvable:$true] %s42
      %48 = dma.hbm_to_vmem [thread:$0]  %s2, 4096, %s43, [#allocation6], 256, 256, 16
    $region13: #{rnn_forward.1} parent=1 // pred_fallthru
      _
    // Predicated region
    $region14: #{rnn_forward.1} parent=1 // pred_check
      _
    $region15: #{rnn_forward.1} parent=1 // pred_check_branch
      %50 = sbr.rel (0) target = $region17
    $region16: #{rnn_forward.1} parent=1 // pred_region
      _
    $region17: #{rnn_forward.1} parent=1 // pred_fallthru
      _
    // Predicated region
    $region18: #{rnn_forward.1} parent=1 // pred_check
      _
    $region19: #{rnn_forward.1} parent=1 // pred_check_branch
      %52 = sbr.rel (0) target = $region21
    $region20: #{rnn_forward.1} parent=1 // pred_region
      %s54 = ssub.s32 4096, 4096
      %55 = vsyncadd [#allocation6], %s54
      %s56 = sshll.u32 [#allocation7], 4
      %s57 = int_to_ptr.vmem [resolvable:$true] %s56
      %62 = dma.hbm_to_vmem [thread:$0]  %s4, 4096, %s57, [#allocation6], 256, 256, 16
    $region21: #{rnn_forward.1} parent=1 // pred_fallthru
      _
    // Predicated region
    $region22: #{rnn_forward.1} parent=1 // pred_check
      _
    $region23: #{rnn_forward.1} parent=1 // pred_check_branch
      %64 = sbr.rel (0) target = $region25
    $region24: #{rnn_forward.1} parent=1 // pred_region
      %s66 = ssub.s32 4096, 4096
      %67 = vsyncadd [#allocation9], %s66
      %s68 = sshll.u32 [#allocation8], 4
      %s69 = int_to_ptr.vmem [resolvable:$true] %s68
      %74 = dma.hbm_to_vmem [thread:$0]  %s5, 4096, %s69, [#allocation9], 256, 256, 16
    $region25: #{rnn_forward.1} parent=1 // pred_fallthru
      _
    // Predicated region
    $region26: #{rnn_forward.1} parent=1 // pred_check
      _
    $region27: #{rnn_forward.1} parent=1 // pred_check_branch
      %76 = sbr.rel (0) target = $region29
    $region28: #{rnn_forward.1} parent=1 // pred_region
      _
    $region29: #{rnn_forward.1} parent=1 // pred_fallthru
      _
    // Predicated region
    $region30: #{rnn_forward.1} parent=1 // pred_check
      _
    $region31: #{rnn_forward.1} parent=1 // pred_check_branch
      %78 = sbr.rel (0) target = $region33
    $region32: #{rnn_forward.1} parent=1 // pred_region
      %s80 = ssub.s32 4096, 4096
      %81 = vsyncadd [#allocation9], %s80
      %s82 = sshll.u32 [#allocation10], 4
      %s83 = int_to_ptr.vmem [resolvable:$true] %s82
      %88 = dma.hbm_to_vmem [thread:$0]  %s7, 4096, %s83, [#allocation9], 256, 256, 16
    $region33: #{rnn_forward.1} parent=1 // pred_fallthru
      _
    // Predicated region
    $region34: #{rnn_forward.1} parent=1 // pred_check
      _
    $region35: #{rnn_forward.1} parent=1 // pred_check_branch
      %90 = sbr.rel (0) target = $region37
    $region36: #{rnn_forward.1} parent=1 // pred_region
      %s92 = ssub.s32 4096, 4096
      %93 = vsyncadd [#allocation12], %s92
      %s94 = sshll.u32 [#allocation11], 4
      %s95 = int_to_ptr.vmem [resolvable:$true] %s94
      %100 = dma.hbm_to_vmem [thread:$0]  %s8, 4096, %s95, [#allocation12], 256, 256, 16
    $region37: #{rnn_forward.1} parent=1 // pred_fallthru
      _
    // Predicated region
    $region38: #{rnn_forward.1} parent=1 // pred_check
      _
    $region39: #{rnn_forward.1} parent=1 // pred_check_branch
      %102 = sbr.rel (0) target = $region41
    $region40: #{rnn_forward.1} parent=1 // pred_region
      _
    $region41: #{rnn_forward.1} parent=1 // pred_fallthru
      _
    // Predicated region
    $region42: #{rnn_forward.1} parent=1 // pred_check
      _
    $region43: #{rnn_forward.1} parent=1 // pred_check_branch
      %104 = sbr.rel (0) target = $region45
    $region44: #{rnn_forward.1} parent=1 // pred_region
      %s106 = ssub.s32 2048, 2048
      %107 = vsyncadd [#allocation12], %s106
      %s108 = sshll.u32 [#allocation13], 4
      %s109 = int_to_ptr.vmem [resolvable:$true] %s108
      %114 = dma.hbm_to_vmem [thread:$0]  %s10, 2048, %s109, [#allocation12], 128, 128, 8
    $region45: #{rnn_forward.1} parent=1 // pred_fallthru
      _
    // Predicated region
    $region46: #{rnn_forward.1} parent=1 // pred_check
      _
    $region47: #{rnn_forward.1} parent=1 // pred_check_branch
      %116 = sbr.rel (0) target = $region49
    $region48: #{rnn_forward.1} parent=1 // pred_region
      _
    $region49: #{rnn_forward.1} parent=1 // pred_fallthru
      _
    // Predicated region
    $region50: #{rnn_forward.1} parent=1 // pred_check
      _
    $region51: #{rnn_forward.1} parent=1 // pred_check_branch
      %118 = sbr.rel (0) target = $region53
    $region52: #{rnn_forward.1} parent=1 // pred_region
      _
    $region53: #{rnn_forward.1} parent=1 // pred_fallthru
      _
    // Predicated region
    $region54: #{rnn_forward.1} parent=1 // pred_check
      _
    $region55: #{rnn_forward.1} parent=1 // pred_check_branch
      %120 = sbr.rel (0) target = $region57
    $region56: #{rnn_forward.1} parent=1 // pred_region
      _
    $region57: #{rnn_forward.1} parent=1 // pred_fallthru
      _
    // Predicated region
    $region58: #{rnn_forward.1} parent=1 // pred_check
      _
    $region59: #{rnn_forward.1} parent=1 // pred_check_branch
      %122 = sbr.rel (0) target = $region61
    $region60: #{rnn_forward.1} parent=1 // pred_region
      %123 = dma.done [#allocation4], 8192
    $region61: #{rnn_forward.1} parent=1 // pred_fallthru
      _
    // Predicated region
    $region62: #{rnn_forward.1} parent=1 // pred_check
      _
    $region63: #{rnn_forward.1} parent=1 // pred_check_branch
      %125 = sbr.rel (0) target = $region65
    $region64: #{rnn_forward.1} parent=1 // pred_region
      %126 = dma.done [#allocation6], 4096
    $region65: #{rnn_forward.1} parent=1 // pred_fallthru
      _
    // Predicated region
    $region66: #{rnn_forward.1} parent=1 // pred_check
      _
    $region67: #{rnn_forward.1} parent=1 // pred_check_branch
      %128 = sbr.rel (0) target = $region69
    $region68: #{rnn_forward.1} parent=1 // pred_region
      %129 = dma.done [#allocation6], 4096
    $region69: #{rnn_forward.1} parent=1 // pred_fallthru
      _
    // Predicated region
    $region70: #{rnn_forward.1} parent=1 // pred_check
      _
    $region71: #{rnn_forward.1} parent=1 // pred_check_branch
      %131 = sbr.rel (0) target = $region73
    $region72: #{rnn_forward.1} parent=1 // pred_region
      %132 = dma.done [#allocation9], 4096
    $region73: #{rnn_forward.1} parent=1 // pred_fallthru
      _
    // Predicated region
    $region74: #{rnn_forward.1} parent=1 // pred_check
      _
    $region75: #{rnn_forward.1} parent=1 // pred_check_branch
      %134 = sbr.rel (0) target = $region77
    $region76: #{rnn_forward.1} parent=1 // pred_region
      %135 = dma.done [#allocation9], 4096
    $region77: #{rnn_forward.1} parent=1 // pred_fallthru
      _
    // Predicated region
    $region78: #{rnn_forward.1} parent=1 // pred_check
      _
    $region79: #{rnn_forward.1} parent=1 // pred_check_branch
      %137 = sbr.rel (0) target = $region81
    $region80: #{rnn_forward.1} parent=1 // pred_region
      %138 = dma.done [#allocation12], 4096
    $region81: #{rnn_forward.1} parent=1 // pred_fallthru
      _
    // Predicated region
    $region82: #{rnn_forward.1} parent=1 // pred_check
      _
    $region83: #{rnn_forward.1} parent=1 // pred_check_branch
      %140 = sbr.rel (0) target = $region85
    $region84: #{rnn_forward.1} parent=1 // pred_region
      %141 = dma.done [#allocation12], 2048
    $region85: #{rnn_forward.1} parent=1 // pred_fallthru
      _
    %v143 = vld [vmem:[%s0] sm:$0xff]
    %v144 = vld [vmem:[%s0 + $0x8] sm:$0xff]
    %v145 = vld [vmem:[%s0 + $0x10] sm:$0xff]
    %v146 = vld [vmem:[%s0 + $0x18] sm:$0xff]
    %v147 = vld [vmem:[%s0 + $0x20] sm:$0xff]
    %v148 = vld [vmem:[%s0 + $0x28] sm:$0xff]
    %v149 = vld [vmem:[%s0 + $0x30] sm:$0xff]
    %v150 = vld [vmem:[%s0 + $0x38] sm:$0xff]
    %v151 = vld [vmem:[#allocation3] sm:$0xff]
    %v152 = vld [vmem:[#allocation3 + $0x8] sm:$0xff]
    %v153 = vld [vmem:[#allocation3 + $0x10] sm:$0xff]
    %v154 = vld [vmem:[#allocation3 + $0x18] sm:$0xff]
    %v155 = vld [vmem:[#allocation3 + $0x20] sm:$0xff]
    %v156 = vld [vmem:[#allocation3 + $0x28] sm:$0xff]
    %v157 = vld [vmem:[#allocation3 + $0x30] sm:$0xff]
    %v158 = vld [vmem:[#allocation3 + $0x38] sm:$0xff]
    %v159 = vld [vmem:[#allocation3 + $0x40] sm:$0xff]
    %v160 = vld [vmem:[#allocation3 + $0x48] sm:$0xff]
    %v161 = vld [vmem:[#allocation3 + $0x50] sm:$0xff]
    %v162 = vld [vmem:[#allocation3 + $0x58] sm:$0xff]
    %v163 = vld [vmem:[#allocation3 + $0x60] sm:$0xff]
    %v164 = vld [vmem:[#allocation3 + $0x68] sm:$0xff]
    %v165 = vld [vmem:[#allocation3 + $0x70] sm:$0xff]
    %v166 = vld [vmem:[#allocation3 + $0x78] sm:$0xff]
    %v167 = vld [vmem:[#allocation3 + $0x80] sm:$0xff]
    %v168 = vld [vmem:[#allocation3 + $0x88] sm:$0xff]
    %v169 = vld [vmem:[#allocation3 + $0x90] sm:$0xff]
    %v170 = vld [vmem:[#allocation3 + $0x98] sm:$0xff]
    %v171 = vld [vmem:[#allocation3 + $0xa0] sm:$0xff]
    %v172 = vld [vmem:[#allocation3 + $0xa8] sm:$0xff]
    %v173 = vld [vmem:[#allocation3 + $0xb0] sm:$0xff]
    %v174 = vld [vmem:[#allocation3 + $0xb8] sm:$0xff]
    %v175 = vld [vmem:[#allocation3 + $0xc0] sm:$0xff]
    %v176 = vld [vmem:[#allocation3 + $0xc8] sm:$0xff]
    %v177 = vld [vmem:[#allocation3 + $0xd0] sm:$0xff]
    %v178 = vld [vmem:[#allocation3 + $0xd8] sm:$0xff]
    %v179 = vld [vmem:[#allocation3 + $0xe0] sm:$0xff]
    %v180 = vld [vmem:[#allocation3 + $0xe8] sm:$0xff]
    %v181 = vld [vmem:[#allocation3 + $0xf0] sm:$0xff]
    %v182 = vld [vmem:[#allocation3 + $0xf8] sm:$0xff]
    %v183 = vld [vmem:[#allocation3 + $0x100] sm:$0xff]
    %v184 = vld [vmem:[#allocation3 + $0x108] sm:$0xff]
    %v185 = vld [vmem:[#allocation3 + $0x110] sm:$0xff]
    %v186 = vld [vmem:[#allocation3 + $0x118] sm:$0xff]
    %v187 = vld [vmem:[#allocation3 + $0x120] sm:$0xff]
    %v188 = vld [vmem:[#allocation3 + $0x128] sm:$0xff]
    %v189 = vld [vmem:[#allocation3 + $0x130] sm:$0xff]
    %v190 = vld [vmem:[#allocation3 + $0x138] sm:$0xff]
    %v191 = vld [vmem:[#allocation3 + $0x140] sm:$0xff]
    %v192 = vld [vmem:[#allocation3 + $0x148] sm:$0xff]
    %v193 = vld [vmem:[#allocation3 + $0x150] sm:$0xff]
    %v194 = vld [vmem:[#allocation3 + $0x158] sm:$0xff]
    %v195 = vld [vmem:[#allocation3 + $0x160] sm:$0xff]
    %v196 = vld [vmem:[#allocation3 + $0x168] sm:$0xff]
    %v197 = vld [vmem:[#allocation3 + $0x170] sm:$0xff]
    %v198 = vld [vmem:[#allocation3 + $0x178] sm:$0xff]
    %v199 = vld [vmem:[#allocation3 + $0x180] sm:$0xff]
    %v200 = vld [vmem:[#allocation3 + $0x188] sm:$0xff]
    %v201 = vld [vmem:[#allocation3 + $0x190] sm:$0xff]
    %v202 = vld [vmem:[#allocation3 + $0x198] sm:$0xff]
    %v203 = vld [vmem:[#allocation3 + $0x1a0] sm:$0xff]
    %v204 = vld [vmem:[#allocation3 + $0x1a8] sm:$0xff]
    %v205 = vld [vmem:[#allocation3 + $0x1b0] sm:$0xff]
    %v206 = vld [vmem:[#allocation3 + $0x1b8] sm:$0xff]
    %v207 = vld [vmem:[#allocation3 + $0x1c0] sm:$0xff]
    %v208 = vld [vmem:[#allocation3 + $0x1c8] sm:$0xff]
    %v209 = vld [vmem:[#allocation3 + $0x1d0] sm:$0xff]
    %v210 = vld [vmem:[#allocation3 + $0x1d8] sm:$0xff]
    %v211 = vld [vmem:[#allocation3 + $0x1e0] sm:$0xff]
    %v212 = vld [vmem:[#allocation3 + $0x1e8] sm:$0xff]
    %v213 = vld [vmem:[#allocation3 + $0x1f0] sm:$0xff]
    %v214 = vld [vmem:[#allocation3 + $0x1f8] sm:$0xff]
    %v215 = vld [vmem:[%s3] sm:$0xf]
    %v217 = vlaneseq
    %v218 = vshrl.u32 %v217, 7
    %v219 = vsub.s32 0, %v218
    %v220 = vrot.slane %v215, %v219
    %v221 = vlaneseq
    %v222 = vshrl.u32 %v221, 7
    %v223 = vsub.s32 1, %v222
    %v224 = vrot.slane %v215, %v223
    %v225 = vlaneseq
    %v226 = vshrl.u32 %v225, 7
    %v227 = vsub.s32 2, %v226
    %v228 = vrot.slane %v215, %v227
    %v229 = vlaneseq
    %v230 = vshrl.u32 %v229, 7
    %v231 = vsub.s32 3, %v230
    %v232 = vrot.slane %v215, %v231
    %237 = vmatprep.subr.mxu0 %v152
    %238 = vmatpush1.msra.mxu0 %v151
    %239 = vmatprep.subr.mxu0 %v156
    %240 = vmatpush1.msra.mxu0 %v155
    %241 = vmatprep.subr.mxu0 %v160
    %242 = vmatpush1.msra.mxu0 %v159
    %243 = vmatprep.subr.mxu0 %v164
    %244 = vmatpush1.msra.mxu0 %v163
    %245 = vmatprep.subr.mxu0 %v168
    %246 = vmatpush1.msra.mxu0 %v167
    %247 = vmatprep.subr.mxu0 %v172
    %248 = vmatpush1.msra.mxu0 %v171
    %249 = vmatprep.subr.mxu0 %v176
    %250 = vmatpush1.msra.mxu0 %v175
    %251 = vmatprep.subr.mxu0 %v180
    %252 = vmatpush1.msra.mxu0 %v179
    %253 = vmatprep.subr.mxu0 %v184
    %254 = vmatpush1.msra.mxu0 %v183
    %255 = vmatprep.subr.mxu0 %v188
    %256 = vmatpush1.msra.mxu0 %v187
    %257 = vmatprep.subr.mxu0 %v192
    %258 = vmatpush1.msra.mxu0 %v191
    %259 = vmatprep.subr.mxu0 %v196
    %260 = vmatpush1.msra.mxu0 %v195
    %261 = vmatprep.subr.mxu0 %v200
    %262 = vmatpush1.msra.mxu0 %v199
    %263 = vmatprep.subr.mxu0 %v204
    %264 = vmatpush1.msra.mxu0 %v203
    %265 = vmatprep.subr.mxu0 %v208
    %266 = vmatpush1.msra.mxu0 %v207
    %267 = vmatprep.subr.mxu0 %v212
    %268 = vmatpush1.msra.mxu0 %v211
    %269 = vmatprep.subr.mxu0 0.0
    %270 = vmatpush1.msra.mxu0 0.0
    %271 = vmatprep.subr.mxu0 0.0
    %272 = vmatpush1.msra.mxu0 0.0
    %273 = vmatprep.subr.mxu0 0.0
    %274 = vmatpush1.msra.mxu0 0.0
    %275 = vmatprep.subr.mxu0 0.0
    %276 = vmatpush1.msra.mxu0 0.0
    %277 = vmatprep.subr.mxu0 0.0
    %278 = vmatpush1.msra.mxu0 0.0
    %279 = vmatprep.subr.mxu0 0.0
    %280 = vmatpush1.msra.mxu0 0.0
    %281 = vmatprep.subr.mxu0 0.0
    %282 = vmatpush1.msra.mxu0 0.0
    %283 = vmatprep.subr.mxu0 0.0
    %284 = vmatpush1.msra.mxu0 0.0
    %285 = vmatprep.subr.mxu0 0.0
    %286 = vmatpush1.msra.mxu0 0.0
    %287 = vmatprep.subr.mxu0 0.0
    %288 = vmatpush1.msra.mxu0 0.0
    %289 = vmatprep.subr.mxu0 0.0
    %290 = vmatpush1.msra.mxu0 0.0
    %291 = vmatprep.subr.mxu0 0.0
    %292 = vmatpush1.msra.mxu0 0.0
    %293 = vmatprep.subr.mxu0 0.0
    %294 = vmatpush1.msra.mxu0 0.0
    %295 = vmatprep.subr.mxu0 0.0
    %296 = vmatpush1.msra.mxu0 0.0
    %297 = vmatprep.subr.mxu0 0.0
    %298 = vmatpush1.msra.mxu0 0.0
    %299 = vmatprep.subr.mxu0 0.0
    %300 = vmatpush1.msra.mxu0 0.0
    %301 = vmatprep.mubr.f32.mxu0 0.0
    %302 = vmatmul.mubr.f32.gmra.mrb[0].mxu0 %v143
    %v303 = vpop.f32.mrb[0].mxu0
    %v304 = vadd.f32 %v220, %v303
    %v305 = vpop.f32.mrb[0].mxu0
    %v306 = vadd.f32 %v224, %v305
    %307 = vmatprep.mubr.f32.mxu0 0.0
    %308 = vmatmul.mubr.f32.gmra.mrb[0].mxu0 %v144
    %v309 = vpop.f32.mrb[0].mxu0
    %v310 = vadd.f32 %v220, %v309
    %v311 = vpop.f32.mrb[0].mxu0
    %v312 = vadd.f32 %v224, %v311
    %313 = vmatprep.mubr.f32.mxu0 0.0
    %314 = vmatmul.mubr.f32.gmra.mrb[0].mxu0 %v145
    %v315 = vpop.f32.mrb[0].mxu0
    %v316 = vadd.f32 %v220, %v315
    %v317 = vpop.f32.mrb[0].mxu0
    %v318 = vadd.f32 %v224, %v317
    %319 = vmatprep.mubr.f32.mxu0 0.0
    %320 = vmatmul.mubr.f32.gmra.mrb[0].mxu0 %v146
    %v321 = vpop.f32.mrb[0].mxu0
    %v322 = vadd.f32 %v220, %v321
    %v323 = vpop.f32.mrb[0].mxu0
    %v324 = vadd.f32 %v224, %v323
    %325 = vmatprep.mubr.f32.mxu0 0.0
    %326 = vmatmul.mubr.f32.gmra.mrb[0].mxu0 %v147
    %v327 = vpop.f32.mrb[0].mxu0
    %v328 = vadd.f32 %v220, %v327
    %v329 = vpop.f32.mrb[0].mxu0
    %v330 = vadd.f32 %v224, %v329
    %331 = vmatprep.mubr.f32.mxu0 0.0
    %332 = vmatmul.mubr.f32.gmra.mrb[0].mxu0 %v148
    %v333 = vpop.f32.mrb[0].mxu0
    %v334 = vadd.f32 %v220, %v333
    %v335 = vpop.f32.mrb[0].mxu0
    %v336 = vadd.f32 %v224, %v335
    %337 = vmatprep.mubr.f32.mxu0 0.0
    %338 = vmatmul.mubr.f32.gmra.mrb[0].mxu0 %v149
    %v339 = vpop.f32.mrb[0].mxu0
    %v340 = vadd.f32 %v220, %v339
    %v341 = vpop.f32.mrb[0].mxu0
    %v342 = vadd.f32 %v224, %v341
    %343 = vmatprep.mubr.f32.mxu0 0.0
    %344 = vmatmul.mubr.f32.gmra.mrb[0].mxu0 %v150
    %v345 = vpop.f32.mrb[0].mxu0
    %v346 = vadd.f32 %v220, %v345
    %v347 = vpop.f32.mrb[0].mxu0
    %v348 = vadd.f32 %v224, %v347
    %349 = vdwg.mxu0
    %350 = vmatprep.subr.mxu0 %v154
    %351 = vmatpush1.msra.mxu0 %v153
    %352 = vmatprep.subr.mxu0 %v158
    %353 = vmatpush1.msra.mxu0 %v157
    %354 = vmatprep.subr.mxu0 %v162
    %355 = vmatpush1.msra.mxu0 %v161
    %356 = vmatprep.subr.mxu0 %v166
    %357 = vmatpush1.msra.mxu0 %v165
    %358 = vmatprep.subr.mxu0 %v170
    %359 = vmatpush1.msra.mxu0 %v169
    %360 = vmatprep.subr.mxu0 %v174
    %361 = vmatpush1.msra.mxu0 %v173
    %362 = vmatprep.subr.mxu0 %v178
    %363 = vmatpush1.msra.mxu0 %v177
    %364 = vmatprep.subr.mxu0 %v182
    %365 = vmatpush1.msra.mxu0 %v181
    %366 = vmatprep.subr.mxu0 %v186
    %367 = vmatpush1.msra.mxu0 %v185
    %368 = vmatprep.subr.mxu0 %v190
    %369 = vmatpush1.msra.mxu0 %v189
    %370 = vmatprep.subr.mxu0 %v194
    %371 = vmatpush1.msra.mxu0 %v193
    %372 = vmatprep.subr.mxu0 %v198
    %373 = vmatpush1.msra.mxu0 %v197
    %374 = vmatprep.subr.mxu0 %v202
    %375 = vmatpush1.msra.mxu0 %v201
    %376 = vmatprep.subr.mxu0 %v206
    %377 = vmatpush1.msra.mxu0 %v205
    %378 = vmatprep.subr.mxu0 %v210
    %379 = vmatpush1.msra.mxu0 %v209
    %380 = vmatprep.subr.mxu0 %v214
    %381 = vmatpush1.msra.mxu0 %v213
    %382 = vmatprep.subr.mxu0 0.0
    %383 = vmatpush1.msra.mxu0 0.0
    %384 = vmatprep.subr.mxu0 0.0
    %385 = vmatpush1.msra.mxu0 0.0
    %386 = vmatprep.subr.mxu0 0.0
    %387 = vmatpush1.msra.mxu0 0.0
    %388 = vmatprep.subr.mxu0 0.0
    %389 = vmatpush1.msra.mxu0 0.0
    %390 = vmatprep.subr.mxu0 0.0
    %391 = vmatpush1.msra.mxu0 0.0
    %392 = vmatprep.subr.mxu0 0.0
    %393 = vmatpush1.msra.mxu0 0.0
    %394 = vmatprep.subr.mxu0 0.0
    %395 = vmatpush1.msra.mxu0 0.0
    %396 = vmatprep.subr.mxu0 0.0
    %397 = vmatpush1.msra.mxu0 0.0
    %398 = vmatprep.subr.mxu0 0.0
    %399 = vmatpush1.msra.mxu0 0.0
    %400 = vmatprep.subr.mxu0 0.0
    %401 = vmatpush1.msra.mxu0 0.0
    %402 = vmatprep.subr.mxu0 0.0
    %403 = vmatpush1.msra.mxu0 0.0
    %404 = vmatprep.subr.mxu0 0.0
    %405 = vmatpush1.msra.mxu0 0.0
    %406 = vmatprep.subr.mxu0 0.0
    %407 = vmatpush1.msra.mxu0 0.0
    %408 = vmatprep.subr.mxu0 0.0
    %409 = vmatpush1.msra.mxu0 0.0
    %410 = vmatprep.subr.mxu0 0.0
    %411 = vmatpush1.msra.mxu0 0.0
    %412 = vmatprep.subr.mxu0 0.0
    %413 = vmatpush1.msra.mxu0 0.0
    %414 = vmatprep.mubr.f32.mxu0 0.0
    %415 = vmatmul.mubr.f32.gmra.mrb[0].mxu0 %v143
    %v416 = vpop.f32.mrb[0].mxu0
    %v417 = vadd.f32 %v228, %v416
    %v418 = vpop.f32.mrb[0].mxu0
    %v419 = vadd.f32 %v232, %v418
    %420 = vmatprep.mubr.f32.mxu0 0.0
    %421 = vmatmul.mubr.f32.gmra.mrb[0].mxu0 %v144
    %v422 = vpop.f32.mrb[0].mxu0
    %v423 = vadd.f32 %v228, %v422
    %v424 = vpop.f32.mrb[0].mxu0
    %v425 = vadd.f32 %v232, %v424
    %426 = vmatprep.mubr.f32.mxu0 0.0
    %427 = vmatmul.mubr.f32.gmra.mrb[0].mxu0 %v145
    %v428 = vpop.f32.mrb[0].mxu0
    %v429 = vadd.f32 %v228, %v428
    %v430 = vpop.f32.mrb[0].mxu0
    %v431 = vadd.f32 %v232, %v430
    %432 = vmatprep.mubr.f32.mxu0 0.0
    %433 = vmatmul.mubr.f32.gmra.mrb[0].mxu0 %v146
    %v434 = vpop.f32.mrb[0].mxu0
    %v435 = vadd.f32 %v228, %v434
    %v436 = vpop.f32.mrb[0].mxu0
    %v437 = vadd.f32 %v232, %v436
    %438 = vmatprep.mubr.f32.mxu0 0.0
    %439 = vmatmul.mubr.f32.gmra.mrb[0].mxu0 %v147
    %v440 = vpop.f32.mrb[0].mxu0
    %v441 = vadd.f32 %v228, %v440
    %v442 = vpop.f32.mrb[0].mxu0
    %v443 = vadd.f32 %v232, %v442
    %444 = vmatprep.mubr.f32.mxu0 0.0
    %445 = vmatmul.mubr.f32.gmra.mrb[0].mxu0 %v148
    %v446 = vpop.f32.mrb[0].mxu0
    %v447 = vadd.f32 %v228, %v446
    %v448 = vpop.f32.mrb[0].mxu0
    %v449 = vadd.f32 %v232, %v448
    %450 = vmatprep.mubr.f32.mxu0 0.0
    %451 = vmatmul.mubr.f32.gmra.mrb[0].mxu0 %v149
    %v452 = vpop.f32.mrb[0].mxu0
    %v453 = vadd.f32 %v228, %v452
    %v454 = vpop.f32.mrb[0].mxu0
    %v455 = vadd.f32 %v232, %v454
    %456 = vmatprep.mubr.f32.mxu0 0.0
    %457 = vmatmul.mubr.f32.gmra.mrb[0].mxu0 %v150
    %v458 = vpop.f32.mrb[0].mxu0
    %v459 = vadd.f32 %v228, %v458
    %v460 = vpop.f32.mrb[0].mxu0
    %v461 = vadd.f32 %v232, %v460
    %462 = vdwg.mxu0
    %463 = vst [vmem:[#allocation2] sm:$0xff] %v304
    %464 = vst [vmem:[#allocation2 + $0x8] sm:$0xff] %v306
    %465 = vst [vmem:[#allocation2 + $0x10] sm:$0xff] %v417
    %466 = vst [vmem:[#allocation2 + $0x18] sm:$0xff] %v419
    %467 = vst [vmem:[#allocation2 + $0x20] sm:$0xff] %v310
    %468 = vst [vmem:[#allocation2 + $0x28] sm:$0xff] %v312
    %469 = vst [vmem:[#allocation2 + $0x30] sm:$0xff] %v423
    %470 = vst [vmem:[#allocation2 + $0x38] sm:$0xff] %v425
    %471 = vst [vmem:[#allocation2 + $0x40] sm:$0xff] %v316
    %472 = vst [vmem:[#allocation2 + $0x48] sm:$0xff] %v318
    %473 = vst [vmem:[#allocation2 + $0x50] sm:$0xff] %v429
    %474 = vst [vmem:[#allocation2 + $0x58] sm:$0xff] %v431
    %475 = vst [vmem:[#allocation2 + $0x60] sm:$0xff] %v322
    %476 = vst [vmem:[#allocation2 + $0x68] sm:$0xff] %v324
    %477 = vst [vmem:[#allocation2 + $0x70] sm:$0xff] %v435
    %478 = vst [vmem:[#allocation2 + $0x78] sm:$0xff] %v437
    %479 = vst [vmem:[#allocation2 + $0x80] sm:$0xff] %v328
    %480 = vst [vmem:[#allocation2 + $0x88] sm:$0xff] %v330
    %481 = vst [vmem:[#allocation2 + $0x90] sm:$0xff] %v441
    %482 = vst [vmem:[#allocation2 + $0x98] sm:$0xff] %v443
    %483 = vst [vmem:[#allocation2 + $0xa0] sm:$0xff] %v334
    %484 = vst [vmem:[#allocation2 + $0xa8] sm:$0xff] %v336
    %485 = vst [vmem:[#allocation2 + $0xb0] sm:$0xff] %v447
    %486 = vst [vmem:[#allocation2 + $0xb8] sm:$0xff] %v449
    %487 = vst [vmem:[#allocation2 + $0xc0] sm:$0xff] %v340
    %488 = vst [vmem:[#allocation2 + $0xc8] sm:$0xff] %v342
    %489 = vst [vmem:[#allocation2 + $0xd0] sm:$0xff] %v453
    %490 = vst [vmem:[#allocation2 + $0xd8] sm:$0xff] %v455
    %491 = vst [vmem:[#allocation2 + $0xe0] sm:$0xff] %v346
    %492 = vst [vmem:[#allocation2 + $0xe8] sm:$0xff] %v348
    %493 = vst [vmem:[#allocation2 + $0xf0] sm:$0xff] %v459
    %494 = vst [vmem:[#allocation2 + $0xf8] sm:$0xff] %v461
    %v495 = vld [vmem:[#allocation5] sm:$0xff]
    %v496 = vld [vmem:[#allocation5 + $0x8] sm:$0xff]
    %v497 = vld [vmem:[#allocation5 + $0x10] sm:$0xff]
    %v498 = vld [vmem:[#allocation5 + $0x18] sm:$0xff]
    %v499 = vld [vmem:[#allocation5 + $0x20] sm:$0xff]
    %v500 = vld [vmem:[#allocation5 + $0x28] sm:$0xff]
    %v501 = vld [vmem:[#allocation5 + $0x30] sm:$0xff]
    %v502 = vld [vmem:[#allocation5 + $0x38] sm:$0xff]
    %v503 = vld [vmem:[#allocation5 + $0x40] sm:$0xff]
    %v504 = vld [vmem:[#allocation5 + $0x48] sm:$0xff]
    %v505 = vld [vmem:[#allocation5 + $0x50] sm:$0xff]
    %v506 = vld [vmem:[#allocation5 + $0x58] sm:$0xff]
    %v507 = vld [vmem:[#allocation5 + $0x60] sm:$0xff]
    %v508 = vld [vmem:[#allocation5 + $0x68] sm:$0xff]
    %v509 = vld [vmem:[#allocation5 + $0x70] sm:$0xff]
    %v510 = vld [vmem:[#allocation5 + $0x78] sm:$0xff]
    %v511 = vld [vmem:[#allocation5 + $0x80] sm:$0xff]
    %v512 = vld [vmem:[#allocation5 + $0x88] sm:$0xff]
    %v513 = vld [vmem:[#allocation5 + $0x90] sm:$0xff]
    %v514 = vld [vmem:[#allocation5 + $0x98] sm:$0xff]
    %v515 = vld [vmem:[#allocation5 + $0xa0] sm:$0xff]
    %v516 = vld [vmem:[#allocation5 + $0xa8] sm:$0xff]
    %v517 = vld [vmem:[#allocation5 + $0xb0] sm:$0xff]
    %v518 = vld [vmem:[#allocation5 + $0xb8] sm:$0xff]
    %v519 = vld [vmem:[#allocation5 + $0xc0] sm:$0xff]
    %v520 = vld [vmem:[#allocation5 + $0xc8] sm:$0xff]
    %v521 = vld [vmem:[#allocation5 + $0xd0] sm:$0xff]
    %v522 = vld [vmem:[#allocation5 + $0xd8] sm:$0xff]
    %v523 = vld [vmem:[#allocation5 + $0xe0] sm:$0xff]
    %v524 = vld [vmem:[#allocation5 + $0xe8] sm:$0xff]
    %v525 = vld [vmem:[#allocation5 + $0xf0] sm:$0xff]
    %v526 = vld [vmem:[#allocation5 + $0xf8] sm:$0xff]
    %v527 = vld [vmem:[#allocation7] sm:$0xff]
    %v528 = vld [vmem:[#allocation7 + $0x8] sm:$0xff]
    %v529 = vld [vmem:[#allocation7 + $0x10] sm:$0xff]
    %v530 = vld [vmem:[#allocation7 + $0x18] sm:$0xff]
    %v531 = vld [vmem:[#allocation7 + $0x20] sm:$0xff]
    %v532 = vld [vmem:[#allocation7 + $0x28] sm:$0xff]
    %v533 = vld [vmem:[#allocation7 + $0x30] sm:$0xff]
    %v534 = vld [vmem:[#allocation7 + $0x38] sm:$0xff]
    %v535 = vld [vmem:[#allocation7 + $0x40] sm:$0xff]
    %v536 = vld [vmem:[#allocation7 + $0x48] sm:$0xff]
    %v537 = vld [vmem:[#allocation7 + $0x50] sm:$0xff]
    %v538 = vld [vmem:[#allocation7 + $0x58] sm:$0xff]
    %v539 = vld [vmem:[#allocation7 + $0x60] sm:$0xff]
    %v540 = vld [vmem:[#allocation7 + $0x68] sm:$0xff]
    %v541 = vld [vmem:[#allocation7 + $0x70] sm:$0xff]
    %v542 = vld [vmem:[#allocation7 + $0x78] sm:$0xff]
    %v543 = vld [vmem:[#allocation7 + $0x80] sm:$0xff]
    %v544 = vld [vmem:[#allocation7 + $0x88] sm:$0xff]
    %v545 = vld [vmem:[#allocation7 + $0x90] sm:$0xff]
    %v546 = vld [vmem:[#allocation7 + $0x98] sm:$0xff]
    %v547 = vld [vmem:[#allocation7 + $0xa0] sm:$0xff]
    %v548 = vld [vmem:[#allocation7 + $0xa8] sm:$0xff]
    %v549 = vld [vmem:[#allocation7 + $0xb0] sm:$0xff]
    %v550 = vld [vmem:[#allocation7 + $0xb8] sm:$0xff]
    %v551 = vld [vmem:[#allocation7 + $0xc0] sm:$0xff]
    %v552 = vld [vmem:[#allocation7 + $0xc8] sm:$0xff]
    %v553 = vld [vmem:[#allocation7 + $0xd0] sm:$0xff]
    %v554 = vld [vmem:[#allocation7 + $0xd8] sm:$0xff]
    %v555 = vld [vmem:[#allocation7 + $0xe0] sm:$0xff]
    %v556 = vld [vmem:[#allocation7 + $0xe8] sm:$0xff]
    %v557 = vld [vmem:[#allocation7 + $0xf0] sm:$0xff]
    %v558 = vld [vmem:[#allocation7 + $0xf8] sm:$0xff]
    %v559 = vld [vmem:[#allocation8] sm:$0xff]
    %v560 = vld [vmem:[#allocation8 + $0x8] sm:$0xff]
    %v561 = vld [vmem:[#allocation8 + $0x10] sm:$0xff]
    %v562 = vld [vmem:[#allocation8 + $0x18] sm:$0xff]
    %v563 = vld [vmem:[#allocation8 + $0x20] sm:$0xff]
    %v564 = vld [vmem:[#allocation8 + $0x28] sm:$0xff]
    %v565 = vld [vmem:[#allocation8 + $0x30] sm:$0xff]
    %v566 = vld [vmem:[#allocation8 + $0x38] sm:$0xff]
    %v567 = vld [vmem:[#allocation8 + $0x40] sm:$0xff]
    %v568 = vld [vmem:[#allocation8 + $0x48] sm:$0xff]
    %v569 = vld [vmem:[#allocation8 + $0x50] sm:$0xff]
    %v570 = vld [vmem:[#allocation8 + $0x58] sm:$0xff]
    %v571 = vld [vmem:[#allocation8 + $0x60] sm:$0xff]
    %v572 = vld [vmem:[#allocation8 + $0x68] sm:$0xff]
    %v573 = vld [vmem:[#allocation8 + $0x70] sm:$0xff]
    %v574 = vld [vmem:[#allocation8 + $0x78] sm:$0xff]
    %v575 = vld [vmem:[#allocation8 + $0x80] sm:$0xff]
    %v576 = vld [vmem:[#allocation8 + $0x88] sm:$0xff]
    %v577 = vld [vmem:[#allocation8 + $0x90] sm:$0xff]
    %v578 = vld [vmem:[#allocation8 + $0x98] sm:$0xff]
    %v579 = vld [vmem:[#allocation8 + $0xa0] sm:$0xff]
    %v580 = vld [vmem:[#allocation8 + $0xa8] sm:$0xff]
    %v581 = vld [vmem:[#allocation8 + $0xb0] sm:$0xff]
    %v582 = vld [vmem:[#allocation8 + $0xb8] sm:$0xff]
    %v583 = vld [vmem:[#allocation8 + $0xc0] sm:$0xff]
    %v584 = vld [vmem:[#allocation8 + $0xc8] sm:$0xff]
    %v585 = vld [vmem:[#allocation8 + $0xd0] sm:$0xff]
    %v586 = vld [vmem:[#allocation8 + $0xd8] sm:$0xff]
    %v587 = vld [vmem:[#allocation8 + $0xe0] sm:$0xff]
    %v588 = vld [vmem:[#allocation8 + $0xe8] sm:$0xff]
    %v589 = vld [vmem:[#allocation8 + $0xf0] sm:$0xff]
    %v590 = vld [vmem:[#allocation8 + $0xf8] sm:$0xff]
    %v591 = vld [vmem:[#allocation10] sm:$0xff]
    %v592 = vld [vmem:[#allocation10 + $0x8] sm:$0xff]
    %v593 = vld [vmem:[#allocation10 + $0x10] sm:$0xff]
    %v594 = vld [vmem:[#allocation10 + $0x18] sm:$0xff]
    %v595 = vld [vmem:[#allocation10 + $0x20] sm:$0xff]
    %v596 = vld [vmem:[#allocation10 + $0x28] sm:$0xff]
    %v597 = vld [vmem:[#allocation10 + $0x30] sm:$0xff]
    %v598 = vld [vmem:[#allocation10 + $0x38] sm:$0xff]
    %v599 = vld [vmem:[#allocation10 + $0x40] sm:$0xff]
    %v600 = vld [vmem:[#allocation10 + $0x48] sm:$0xff]
    %v601 = vld [vmem:[#allocation10 + $0x50] sm:$0xff]
    %v602 = vld [vmem:[#allocation10 + $0x58] sm:$0xff]
    %v603 = vld [vmem:[#allocation10 + $0x60] sm:$0xff]
    %v604 = vld [vmem:[#allocation10 + $0x68] sm:$0xff]
    %v605 = vld [vmem:[#allocation10 + $0x70] sm:$0xff]
    %v606 = vld [vmem:[#allocation10 + $0x78] sm:$0xff]
    %v607 = vld [vmem:[#allocation10 + $0x80] sm:$0xff]
    %v608 = vld [vmem:[#allocation10 + $0x88] sm:$0xff]
    %v609 = vld [vmem:[#allocation10 + $0x90] sm:$0xff]
    %v610 = vld [vmem:[#allocation10 + $0x98] sm:$0xff]
    %v611 = vld [vmem:[#allocation10 + $0xa0] sm:$0xff]
    %v612 = vld [vmem:[#allocation10 + $0xa8] sm:$0xff]
    %v613 = vld [vmem:[#allocation10 + $0xb0] sm:$0xff]
    %v614 = vld [vmem:[#allocation10 + $0xb8] sm:$0xff]
    %v615 = vld [vmem:[#allocation10 + $0xc0] sm:$0xff]
    %v616 = vld [vmem:[#allocation10 + $0xc8] sm:$0xff]
    %v617 = vld [vmem:[#allocation10 + $0xd0] sm:$0xff]
    %v618 = vld [vmem:[#allocation10 + $0xd8] sm:$0xff]
    %v619 = vld [vmem:[#allocation10 + $0xe0] sm:$0xff]
    %v620 = vld [vmem:[#allocation10 + $0xe8] sm:$0xff]
    %v621 = vld [vmem:[#allocation10 + $0xf0] sm:$0xff]
    %v622 = vld [vmem:[#allocation10 + $0xf8] sm:$0xff]
    %v623 = vld [vmem:[#allocation11] sm:$0xff]
    %v624 = vld [vmem:[#allocation11 + $0x8] sm:$0xff]
    %v625 = vld [vmem:[#allocation11 + $0x10] sm:$0xff]
    %v626 = vld [vmem:[#allocation11 + $0x18] sm:$0xff]
    %v627 = vld [vmem:[#allocation11 + $0x20] sm:$0xff]
    %v628 = vld [vmem:[#allocation11 + $0x28] sm:$0xff]
    %v629 = vld [vmem:[#allocation11 + $0x30] sm:$0xff]
    %v630 = vld [vmem:[#allocation11 + $0x38] sm:$0xff]
    %v631 = vld [vmem:[#allocation11 + $0x40] sm:$0xff]
    %v632 = vld [vmem:[#allocation11 + $0x48] sm:$0xff]
    %v633 = vld [vmem:[#allocation11 + $0x50] sm:$0xff]
    %v634 = vld [vmem:[#allocation11 + $0x58] sm:$0xff]
    %v635 = vld [vmem:[#allocation11 + $0x60] sm:$0xff]
    %v636 = vld [vmem:[#allocation11 + $0x68] sm:$0xff]
    %v637 = vld [vmem:[#allocation11 + $0x70] sm:$0xff]
    %v638 = vld [vmem:[#allocation11 + $0x78] sm:$0xff]
    %v639 = vld [vmem:[#allocation11 + $0x80] sm:$0xff]
    %v640 = vld [vmem:[#allocation11 + $0x88] sm:$0xff]
    %v641 = vld [vmem:[#allocation11 + $0x90] sm:$0xff]
    %v642 = vld [vmem:[#allocation11 + $0x98] sm:$0xff]
    %v643 = vld [vmem:[#allocation11 + $0xa0] sm:$0xff]
    %v644 = vld [vmem:[#allocation11 + $0xa8] sm:$0xff]
    %v645 = vld [vmem:[#allocation11 + $0xb0] sm:$0xff]
    %v646 = vld [vmem:[#allocation11 + $0xb8] sm:$0xff]
    %v647 = vld [vmem:[#allocation11 + $0xc0] sm:$0xff]
    %v648 = vld [vmem:[#allocation11 + $0xc8] sm:$0xff]
    %v649 = vld [vmem:[#allocation11 + $0xd0] sm:$0xff]
    %v650 = vld [vmem:[#allocation11 + $0xd8] sm:$0xff]
    %v651 = vld [vmem:[#allocation11 + $0xe0] sm:$0xff]
    %v652 = vld [vmem:[#allocation11 + $0xe8] sm:$0xff]
    %v653 = vld [vmem:[#allocation11 + $0xf0] sm:$0xff]
    %v654 = vld [vmem:[#allocation11 + $0xf8] sm:$0xff]
    %v655 = vld [vmem:[%s6] sm:$0xf]
    %v657 = vlaneseq
    %v658 = vshrl.u32 %v657, 7
    %v659 = vsub.s32 0, %v658
    %v660 = vrot.slane %v655, %v659
    %v661 = vlaneseq
    %v662 = vshrl.u32 %v661, 7
    %v663 = vsub.s32 1, %v662
    %v664 = vrot.slane %v655, %v663
    %v665 = vlaneseq
    %v666 = vshrl.u32 %v665, 7
    %v667 = vsub.s32 2, %v666
    %v668 = vrot.slane %v655, %v667
    %v669 = vlaneseq
    %v670 = vshrl.u32 %v669, 7
    %v671 = vsub.s32 3, %v670
    %v672 = vrot.slane %v655, %v671
    %v677 = vld [vmem:[%s9] sm:$0xf]
    %v679 = vlaneseq
    %v680 = vshrl.u32 %v679, 7
    %v681 = vsub.s32 0, %v680
    %v682 = vrot.slane %v677, %v681
    %v683 = vlaneseq
    %v684 = vshrl.u32 %v683, 7
    %v685 = vsub.s32 1, %v684
    %v686 = vrot.slane %v677, %v685
    %v687 = vlaneseq
    %v688 = vshrl.u32 %v687, 7
    %v689 = vsub.s32 2, %v688
    %v690 = vrot.slane %v677, %v689
    %v691 = vlaneseq
    %v692 = vshrl.u32 %v691, 7
    %v693 = vsub.s32 3, %v692
    %v694 = vrot.slane %v677, %v693
    %s699 = smul.u32 0, 4
    %s700 = smul.addr %s699, 8
    %s701 = scalar_lea.vmem [#allocation2], %s700
    %v702 = vld [vmem:[%s701] sm:$0xff]
    %v703 = vld [vmem:[%s701 + $0x8] sm:$0xff]
    %v704 = vld [vmem:[%s701 + $0x10] sm:$0xff]
    %v705 = vld [vmem:[%s701 + $0x18] sm:$0xff]
    %v738 = vunpack.c.l.b16 %v495
    %v739 = vunpack.c.h.b16 %v495
    %v740 = vunpack.c.l.b16 %v496
    %v741 = vunpack.c.h.b16 %v496
    %v742 = vunpack.c.l.b16 %v497
    %v743 = vunpack.c.h.b16 %v497
    %v744 = vunpack.c.l.b16 %v498
    %v745 = vunpack.c.h.b16 %v498
    %v746 = vunpack.c.l.b16 %v499
    %v747 = vunpack.c.h.b16 %v499
    %v748 = vunpack.c.l.b16 %v500
    %v749 = vunpack.c.h.b16 %v500
    %v750 = vunpack.c.l.b16 %v501
    %v751 = vunpack.c.h.b16 %v501
    %v752 = vunpack.c.l.b16 %v502
    %v753 = vunpack.c.h.b16 %v502
    %v754 = vunpack.c.l.b16 %v503
    %v755 = vunpack.c.h.b16 %v503
    %v756 = vunpack.c.l.b16 %v504
    %v757 = vunpack.c.h.b16 %v504
    %v758 = vunpack.c.l.b16 %v505
    %v759 = vunpack.c.h.b16 %v505
    %v760 = vunpack.c.l.b16 %v506
    %v761 = vunpack.c.h.b16 %v506
    %v762 = vunpack.c.l.b16 %v507
    %v763 = vunpack.c.h.b16 %v507
    %v764 = vunpack.c.l.b16 %v508
    %v765 = vunpack.c.h.b16 %v508
    %v766 = vunpack.c.l.b16 %v509
    %v767 = vunpack.c.h.b16 %v509
    %v768 = vunpack.c.l.b16 %v510
    %v769 = vunpack.c.h.b16 %v510
    %v770 = vunpack.c.l.b16 %v511
    %v771 = vunpack.c.h.b16 %v511
    %v772 = vunpack.c.l.b16 %v512
    %v773 = vunpack.c.h.b16 %v512
    %v774 = vunpack.c.l.b16 %v513
    %v775 = vunpack.c.h.b16 %v513
    %v776 = vunpack.c.l.b16 %v514
    %v777 = vunpack.c.h.b16 %v514
    %v778 = vunpack.c.l.b16 %v515
    %v779 = vunpack.c.h.b16 %v515
    %v780 = vunpack.c.l.b16 %v516
    %v781 = vunpack.c.h.b16 %v516
    %v782 = vunpack.c.l.b16 %v517
    %v783 = vunpack.c.h.b16 %v517
    %v784 = vunpack.c.l.b16 %v518
    %v785 = vunpack.c.h.b16 %v518
    %v786 = vunpack.c.l.b16 %v519
    %v787 = vunpack.c.h.b16 %v519
    %v788 = vunpack.c.l.b16 %v520
    %v789 = vunpack.c.h.b16 %v520
    %v790 = vunpack.c.l.b16 %v521
    %v791 = vunpack.c.h.b16 %v521
    %v792 = vunpack.c.l.b16 %v522
    %v793 = vunpack.c.h.b16 %v522
    %v794 = vunpack.c.l.b16 %v523
    %v795 = vunpack.c.h.b16 %v523
    %v796 = vunpack.c.l.b16 %v524
    %v797 = vunpack.c.h.b16 %v524
    %v798 = vunpack.c.l.b16 %v525
    %v799 = vunpack.c.h.b16 %v525
    %v800 = vunpack.c.l.b16 %v526
    %v801 = vunpack.c.h.b16 %v526
    %v802 = vpack.c.b16 %v742, %v738
    %v803 = vpack.c.b16 %v743, %v739
    %v804 = vpack.c.b16 %v744, %v740
    %v805 = vpack.c.b16 %v745, %v741
    %v806 = vpack.c.b16 %v750, %v746
    %v807 = vpack.c.b16 %v751, %v747
    %v808 = vpack.c.b16 %v752, %v748
    %v809 = vpack.c.b16 %v753, %v749
    %v810 = vpack.c.b16 %v758, %v754
    %v811 = vpack.c.b16 %v759, %v755
    %v812 = vpack.c.b16 %v760, %v756
    %v813 = vpack.c.b16 %v761, %v757
    %v814 = vpack.c.b16 %v766, %v762
    %v815 = vpack.c.b16 %v767, %v763
    %v816 = vpack.c.b16 %v768, %v764
    %v817 = vpack.c.b16 %v769, %v765
    %v818 = vpack.c.b16 %v774, %v770
    %v819 = vpack.c.b16 %v775, %v771
    %v820 = vpack.c.b16 %v776, %v772
    %v821 = vpack.c.b16 %v777, %v773
    %v822 = vpack.c.b16 %v782, %v778
    %v823 = vpack.c.b16 %v783, %v779
    %v824 = vpack.c.b16 %v784, %v780
    %v825 = vpack.c.b16 %v785, %v781
    %v826 = vpack.c.b16 %v790, %v786
    %v827 = vpack.c.b16 %v791, %v787
    %v828 = vpack.c.b16 %v792, %v788
    %v829 = vpack.c.b16 %v793, %v789
    %v830 = vpack.c.b16 %v798, %v794
    %v831 = vpack.c.b16 %v799, %v795
    %v832 = vpack.c.b16 %v800, %v796
    %v833 = vpack.c.b16 %v801, %v797
    %866 = vmatprep.subr.bf16.mxu0 %v803
    %867 = vmatpush1.bf16.msra.mxu0 %v802
    %868 = vmatprep.subr.bf16.mxu0 %v807
    %869 = vmatpush1.bf16.msra.mxu0 %v806
    %870 = vmatprep.subr.bf16.mxu0 %v811
    %871 = vmatpush1.bf16.msra.mxu0 %v810
    %872 = vmatprep.subr.bf16.mxu0 %v815
    %873 = vmatpush1.bf16.msra.mxu0 %v814
    %874 = vmatprep.subr.bf16.mxu0 %v819
    %875 = vmatpush1.bf16.msra.mxu0 %v818
    %876 = vmatprep.subr.bf16.mxu0 %v823
    %877 = vmatpush1.bf16.msra.mxu0 %v822
    %878 = vmatprep.subr.bf16.mxu0 %v827
    %879 = vmatpush1.bf16.msra.mxu0 %v826
    %880 = vmatprep.subr.bf16.mxu0 %v831
    %881 = vmatpush1.bf16.msra.mxu0 %v830
    %882 = vmatprep.subr.bf16.mxu0 0
    %883 = vmatpush1.bf16.msra.mxu0 0
    %884 = vmatprep.subr.bf16.mxu0 0
    %885 = vmatpush1.bf16.msra.mxu0 0
    %886 = vmatprep.subr.bf16.mxu0 0
    %887 = vmatpush1.bf16.msra.mxu0 0
    %888 = vmatprep.subr.bf16.mxu0 0
    %889 = vmatpush1.bf16.msra.mxu0 0
    %890 = vmatprep.subr.bf16.mxu0 0
    %891 = vmatpush1.bf16.msra.mxu0 0
    %892 = vmatprep.subr.bf16.mxu0 0
    %893 = vmatpush1.bf16.msra.mxu0 0
    %894 = vmatprep.subr.bf16.mxu0 0
    %895 = vmatpush1.bf16.msra.mxu0 0
    %896 = vmatprep.subr.bf16.mxu0 0
    %897 = vmatpush1.bf16.msra.mxu0 0
    %898 = vmatprep.mubr.bf16.mxu0 0
    %899 = vmatmul.mubr.bf16.gmra.mrb[0].mxu0 0
    %v900 = vpop.f32.mrb[0].mxu0
    %v901 = vadd.f32 0.0, %v900
    %v902 = vpop.f32.mrb[0].mxu0
    %v903 = vadd.f32 0.0, %v902
    %v904 = vpop.f32.mrb[0].mxu0
    %v905 = vpop.f32.mrb[0].mxu0
    %906 = vdwg.mxu0
    %907 = vmatprep.subr.bf16.mxu0 %v805
    %908 = vmatpush1.bf16.msra.mxu0 %v804
    %909 = vmatprep.subr.bf16.mxu0 %v809
    %910 = vmatpush1.bf16.msra.mxu0 %v808
    %911 = vmatprep.subr.bf16.mxu0 %v813
    %912 = vmatpush1.bf16.msra.mxu0 %v812
    %913 = vmatprep.subr.bf16.mxu0 %v817
    %914 = vmatpush1.bf16.msra.mxu0 %v816
    %915 = vmatprep.subr.bf16.mxu0 %v821
    %916 = vmatpush1.bf16.msra.mxu0 %v820
    %917 = vmatprep.subr.bf16.mxu0 %v825
    %918 = vmatpush1.bf16.msra.mxu0 %v824
    %919 = vmatprep.subr.bf16.mxu0 %v829
    %920 = vmatpush1.bf16.msra.mxu0 %v828
    %921 = vmatprep.subr.bf16.mxu0 %v833
    %922 = vmatpush1.bf16.msra.mxu0 %v832
    %923 = vmatprep.subr.bf16.mxu0 0
    %924 = vmatpush1.bf16.msra.mxu0 0
    %925 = vmatprep.subr.bf16.mxu0 0
    %926 = vmatpush1.bf16.msra.mxu0 0
    %927 = vmatprep.subr.bf16.mxu0 0
    %928 = vmatpush1.bf16.msra.mxu0 0
    %929 = vmatprep.subr.bf16.mxu0 0
    %930 = vmatpush1.bf16.msra.mxu0 0
    %931 = vmatprep.subr.bf16.mxu0 0
    %932 = vmatpush1.bf16.msra.mxu0 0
    %933 = vmatprep.subr.bf16.mxu0 0
    %934 = vmatpush1.bf16.msra.mxu0 0
    %935 = vmatprep.subr.bf16.mxu0 0
    %936 = vmatpush1.bf16.msra.mxu0 0
    %937 = vmatprep.subr.bf16.mxu0 0
    %938 = vmatpush1.bf16.msra.mxu0 0
    %939 = vmatprep.mubr.bf16.mxu0 0
    %940 = vmatmul.mubr.bf16.gmra.mrb[0].mxu0 0
    %v941 = vpop.f32.mrb[0].mxu0
    %v942 = vadd.f32 0.0, %v941
    %v943 = vpop.f32.mrb[0].mxu0
    %v944 = vadd.f32 0.0, %v943
    %v945 = vpop.f32.mrb[0].mxu0
    %v946 = vpop.f32.mrb[0].mxu0
    %947 = vdwg.mxu0
    %v948 = vadd.f32 %v702, %v901
    %v949 = vadd.f32 %v703, %v903
    %v950 = vadd.f32 %v704, %v942
    %v951 = vadd.f32 %v705, %v944
    %v952 = vxor.u32 %v948, 2147483648
    %v953 = vmul.f32 %v952, 1.442695
    %v954 = vpow.pop %v953
    %v955 = vadd.f32 %v954, 1.0
    %v956 = vrcp.pop %v955
    %v957 = vmul.f32 1.0, %v956
    %v958 = vxor.u32 %v949, 2147483648
    %v959 = vmul.f32 %v958, 1.442695
    %v960 = vpow.pop %v959
    %v961 = vadd.f32 %v960, 1.0
    %v962 = vrcp.pop %v961
    %v963 = vmul.f32 1.0, %v962
    %v964 = vtanh.pop %v950
    %v965 = vxor.u32 %v951, 2147483648
    %v966 = vmul.f32 %v965, 1.442695
    %v967 = vpow.pop %v966
    %v968 = vadd.f32 %v967, 1.0
    %v969 = vrcp.pop %v968
    %v970 = vmul.f32 1.0, %v969
    %v971 = vmul.f32 %v963, 0.0
    %v972 = vmul.f32 %v957, %v964
    %v973 = vadd.f32 %v971, %v972
    %v974 = vtanh.pop %v973
    %v975 = vmul.f32 %v970, %v974
    %v976 = vpack.c.bf16 %v975, %v975
    %v1009 = vunpack.c.l.b16 %v559
    %v1010 = vunpack.c.h.b16 %v559
    %v1011 = vunpack.c.l.b16 %v560
    %v1012 = vunpack.c.h.b16 %v560
    %v1013 = vunpack.c.l.b16 %v561
    %v1014 = vunpack.c.h.b16 %v561
    %v1015 = vunpack.c.l.b16 %v562
    %v1016 = vunpack.c.h.b16 %v562
    %v1017 = vunpack.c.l.b16 %v563
    %v1018 = vunpack.c.h.b16 %v563
    %v1019 = vunpack.c.l.b16 %v564
    %v1020 = vunpack.c.h.b16 %v564
    %v1021 = vunpack.c.l.b16 %v565
    %v1022 = vunpack.c.h.b16 %v565
    %v1023 = vunpack.c.l.b16 %v566
    %v1024 = vunpack.c.h.b16 %v566
    %v1025 = vunpack.c.l.b16 %v567
    %v1026 = vunpack.c.h.b16 %v567
    %v1027 = vunpack.c.l.b16 %v568
    %v1028 = vunpack.c.h.b16 %v568
    %v1029 = vunpack.c.l.b16 %v569
    %v1030 = vunpack.c.h.b16 %v569
    %v1031 = vunpack.c.l.b16 %v570
    %v1032 = vunpack.c.h.b16 %v570
    %v1033 = vunpack.c.l.b16 %v571
    %v1034 = vunpack.c.h.b16 %v571
    %v1035 = vunpack.c.l.b16 %v572
    %v1036 = vunpack.c.h.b16 %v572
    %v1037 = vunpack.c.l.b16 %v573
    %v1038 = vunpack.c.h.b16 %v573
    %v1039 = vunpack.c.l.b16 %v574
    %v1040 = vunpack.c.h.b16 %v574
    %v1041 = vunpack.c.l.b16 %v575
    %v1042 = vunpack.c.h.b16 %v575
    %v1043 = vunpack.c.l.b16 %v576
    %v1044 = vunpack.c.h.b16 %v576
    %v1045 = vunpack.c.l.b16 %v577
    %v1046 = vunpack.c.h.b16 %v577
    %v1047 = vunpack.c.l.b16 %v578
    %v1048 = vunpack.c.h.b16 %v578
    %v1049 = vunpack.c.l.b16 %v579
    %v1050 = vunpack.c.h.b16 %v579
    %v1051 = vunpack.c.l.b16 %v580
    %v1052 = vunpack.c.h.b16 %v580
    %v1053 = vunpack.c.l.b16 %v581
    %v1054 = vunpack.c.h.b16 %v581
    %v1055 = vunpack.c.l.b16 %v582
    %v1056 = vunpack.c.h.b16 %v582
    %v1057 = vunpack.c.l.b16 %v583
    %v1058 = vunpack.c.h.b16 %v583
    %v1059 = vunpack.c.l.b16 %v584
    %v1060 = vunpack.c.h.b16 %v584
    %v1061 = vunpack.c.l.b16 %v585
    %v1062 = vunpack.c.h.b16 %v585
    %v1063 = vunpack.c.l.b16 %v586
    %v1064 = vunpack.c.h.b16 %v586
    %v1065 = vunpack.c.l.b16 %v587
    %v1066 = vunpack.c.h.b16 %v587
    %v1067 = vunpack.c.l.b16 %v588
    %v1068 = vunpack.c.h.b16 %v588
    %v1069 = vunpack.c.l.b16 %v589
    %v1070 = vunpack.c.h.b16 %v589
    %v1071 = vunpack.c.l.b16 %v590
    %v1072 = vunpack.c.h.b16 %v590
    %v1073 = vpack.c.b16 %v1013, %v1009
    %v1074 = vpack.c.b16 %v1014, %v1010
    %v1075 = vpack.c.b16 %v1015, %v1011
    %v1076 = vpack.c.b16 %v1016, %v1012
    %v1077 = vpack.c.b16 %v1021, %v1017
    %v1078 = vpack.c.b16 %v1022, %v1018
    %v1079 = vpack.c.b16 %v1023, %v1019
    %v1080 = vpack.c.b16 %v1024, %v1020
    %v1081 = vpack.c.b16 %v1029, %v1025
    %v1082 = vpack.c.b16 %v1030, %v1026
    %v1083 = vpack.c.b16 %v1031, %v1027
    %v1084 = vpack.c.b16 %v1032, %v1028
    %v1085 = vpack.c.b16 %v1037, %v1033
    %v1086 = vpack.c.b16 %v1038, %v1034
    %v1087 = vpack.c.b16 %v1039, %v1035
    %v1088 = vpack.c.b16 %v1040, %v1036
    %v1089 = vpack.c.b16 %v1045, %v1041
    %v1090 = vpack.c.b16 %v1046, %v1042
    %v1091 = vpack.c.b16 %v1047, %v1043
    %v1092 = vpack.c.b16 %v1048, %v1044
    %v1093 = vpack.c.b16 %v1053, %v1049
    %v1094 = vpack.c.b16 %v1054, %v1050
    %v1095 = vpack.c.b16 %v1055, %v1051
    %v1096 = vpack.c.b16 %v1056, %v1052
    %v1097 = vpack.c.b16 %v1061, %v1057
    %v1098 = vpack.c.b16 %v1062, %v1058
    %v1099 = vpack.c.b16 %v1063, %v1059
    %v1100 = vpack.c.b16 %v1064, %v1060
    %v1101 = vpack.c.b16 %v1069, %v1065
    %v1102 = vpack.c.b16 %v1070, %v1066
    %v1103 = vpack.c.b16 %v1071, %v1067
    %v1104 = vpack.c.b16 %v1072, %v1068
    %1137 = vmatprep.subr.bf16.mxu0 %v1074
    %1138 = vmatpush1.bf16.msra.mxu0 %v1073
    %1139 = vmatprep.subr.bf16.mxu0 %v1078
    %1140 = vmatpush1.bf16.msra.mxu0 %v1077
    %1141 = vmatprep.subr.bf16.mxu0 %v1082
    %1142 = vmatpush1.bf16.msra.mxu0 %v1081
    %1143 = vmatprep.subr.bf16.mxu0 %v1086
    %1144 = vmatpush1.bf16.msra.mxu0 %v1085
    %1145 = vmatprep.subr.bf16.mxu0 %v1090
    %1146 = vmatpush1.bf16.msra.mxu0 %v1089
    %1147 = vmatprep.subr.bf16.mxu0 %v1094
    %1148 = vmatpush1.bf16.msra.mxu0 %v1093
    %1149 = vmatprep.subr.bf16.mxu0 %v1098
    %1150 = vmatpush1.bf16.msra.mxu0 %v1097
    %1151 = vmatprep.subr.bf16.mxu0 %v1102
    %1152 = vmatpush1.bf16.msra.mxu0 %v1101
    %1153 = vmatprep.subr.bf16.mxu0 0
    %1154 = vmatpush1.bf16.msra.mxu0 0
    %1155 = vmatprep.subr.bf16.mxu0 0
    %1156 = vmatpush1.bf16.msra.mxu0 0
    %1157 = vmatprep.subr.bf16.mxu0 0
    %1158 = vmatpush1.bf16.msra.mxu0 0
    %1159 = vmatprep.subr.bf16.mxu0 0
    %1160 = vmatpush1.bf16.msra.mxu0 0
    %1161 = vmatprep.subr.bf16.mxu0 0
    %1162 = vmatpush1.bf16.msra.mxu0 0
    %1163 = vmatprep.subr.bf16.mxu0 0
    %1164 = vmatpush1.bf16.msra.mxu0 0
    %1165 = vmatprep.subr.bf16.mxu0 0
    %1166 = vmatpush1.bf16.msra.mxu0 0
    %1167 = vmatprep.subr.bf16.mxu0 0
    %1168 = vmatpush1.bf16.msra.mxu0 0
    %1169 = vmatprep.mubr.bf16.mxu0 0
    %1170 = vmatmul.mubr.bf16.gmra.mrb[0].mxu0 0
    %v1171 = vpop.f32.mrb[0].mxu0
    %v1172 = vadd.f32 0.0, %v1171
    %v1173 = vpop.f32.mrb[0].mxu0
    %v1174 = vadd.f32 0.0, %v1173
    %v1175 = vpop.f32.mrb[0].mxu0
    %v1176 = vpop.f32.mrb[0].mxu0
    %1177 = vdwg.mxu0
    %1178 = vmatprep.subr.bf16.mxu0 %v1076
    %1179 = vmatpush1.bf16.msra.mxu0 %v1075
    %1180 = vmatprep.subr.bf16.mxu0 %v1080
    %1181 = vmatpush1.bf16.msra.mxu0 %v1079
    %1182 = vmatprep.subr.bf16.mxu0 %v1084
    %1183 = vmatpush1.bf16.msra.mxu0 %v1083
    %1184 = vmatprep.subr.bf16.mxu0 %v1088
    %1185 = vmatpush1.bf16.msra.mxu0 %v1087
    %1186 = vmatprep.subr.bf16.mxu0 %v1092
    %1187 = vmatpush1.bf16.msra.mxu0 %v1091
    %1188 = vmatprep.subr.bf16.mxu0 %v1096
    %1189 = vmatpush1.bf16.msra.mxu0 %v1095
    %1190 = vmatprep.subr.bf16.mxu0 %v1100
    %1191 = vmatpush1.bf16.msra.mxu0 %v1099
    %1192 = vmatprep.subr.bf16.mxu0 %v1104
    %1193 = vmatpush1.bf16.msra.mxu0 %v1103
    %1194 = vmatprep.subr.bf16.mxu0 0
    %1195 = vmatpush1.bf16.msra.mxu0 0
    %1196 = vmatprep.subr.bf16.mxu0 0
    %1197 = vmatpush1.bf16.msra.mxu0 0
    %1198 = vmatprep.subr.bf16.mxu0 0
    %1199 = vmatpush1.bf16.msra.mxu0 0
    %1200 = vmatprep.subr.bf16.mxu0 0
    %1201 = vmatpush1.bf16.msra.mxu0 0
    %1202 = vmatprep.subr.bf16.mxu0 0
    %1203 = vmatpush1.bf16.msra.mxu0 0
    %1204 = vmatprep.subr.bf16.mxu0 0
    %1205 = vmatpush1.bf16.msra.mxu0 0
    %1206 = vmatprep.subr.bf16.mxu0 0
    %1207 = vmatpush1.bf16.msra.mxu0 0
    %1208 = vmatprep.subr.bf16.mxu0 0
    %1209 = vmatpush1.bf16.msra.mxu0 0
    %1210 = vmatprep.mubr.bf16.mxu0 0
    %1211 = vmatmul.mubr.bf16.gmra.mrb[0].mxu0 0
    %v1212 = vpop.f32.mrb[0].mxu0
    %v1213 = vadd.f32 0.0, %v1212
    %v1214 = vpop.f32.mrb[0].mxu0
    %v1215 = vadd.f32 0.0, %v1214
    %v1216 = vpop.f32.mrb[0].mxu0
    %v1217 = vpop.f32.mrb[0].mxu0
    %1218 = vdwg.mxu0
    %v1251 = vunpack.c.l.b16 %v527
    %v1252 = vunpack.c.h.b16 %v527
    %v1253 = vunpack.c.l.b16 %v528
    %v1254 = vunpack.c.h.b16 %v528
    %v1255 = vunpack.c.l.b16 %v529
    %v1256 = vunpack.c.h.b16 %v529
    %v1257 = vunpack.c.l.b16 %v530
    %v1258 = vunpack.c.h.b16 %v530
    %v1259 = vunpack.c.l.b16 %v531
    %v1260 = vunpack.c.h.b16 %v531
    %v1261 = vunpack.c.l.b16 %v532
    %v1262 = vunpack.c.h.b16 %v532
    %v1263 = vunpack.c.l.b16 %v533
    %v1264 = vunpack.c.h.b16 %v533
    %v1265 = vunpack.c.l.b16 %v534
    %v1266 = vunpack.c.h.b16 %v534
    %v1267 = vunpack.c.l.b16 %v535
    %v1268 = vunpack.c.h.b16 %v535
    %v1269 = vunpack.c.l.b16 %v536
    %v1270 = vunpack.c.h.b16 %v536
    %v1271 = vunpack.c.l.b16 %v537
    %v1272 = vunpack.c.h.b16 %v537
    %v1273 = vunpack.c.l.b16 %v538
    %v1274 = vunpack.c.h.b16 %v538
    %v1275 = vunpack.c.l.b16 %v539
    %v1276 = vunpack.c.h.b16 %v539
    %v1277 = vunpack.c.l.b16 %v540
    %v1278 = vunpack.c.h.b16 %v540
    %v1279 = vunpack.c.l.b16 %v541
    %v1280 = vunpack.c.h.b16 %v541
    %v1281 = vunpack.c.l.b16 %v542
    %v1282 = vunpack.c.h.b16 %v542
    %v1283 = vunpack.c.l.b16 %v543
    %v1284 = vunpack.c.h.b16 %v543
    %v1285 = vunpack.c.l.b16 %v544
    %v1286 = vunpack.c.h.b16 %v544
    %v1287 = vunpack.c.l.b16 %v545
    %v1288 = vunpack.c.h.b16 %v545
    %v1289 = vunpack.c.l.b16 %v546
    %v1290 = vunpack.c.h.b16 %v546
    %v1291 = vunpack.c.l.b16 %v547
    %v1292 = vunpack.c.h.b16 %v547
    %v1293 = vunpack.c.l.b16 %v548
    %v1294 = vunpack.c.h.b16 %v548
    %v1295 = vunpack.c.l.b16 %v549
    %v1296 = vunpack.c.h.b16 %v549
    %v1297 = vunpack.c.l.b16 %v550
    %v1298 = vunpack.c.h.b16 %v550
    %v1299 = vunpack.c.l.b16 %v551
    %v1300 = vunpack.c.h.b16 %v551
    %v1301 = vunpack.c.l.b16 %v552
    %v1302 = vunpack.c.h.b16 %v552
    %v1303 = vunpack.c.l.b16 %v553
    %v1304 = vunpack.c.h.b16 %v553
    %v1305 = vunpack.c.l.b16 %v554
    %v1306 = vunpack.c.h.b16 %v554
    %v1307 = vunpack.c.l.b16 %v555
    %v1308 = vunpack.c.h.b16 %v555
    %v1309 = vunpack.c.l.b16 %v556
    %v1310 = vunpack.c.h.b16 %v556
    %v1311 = vunpack.c.l.b16 %v557
    %v1312 = vunpack.c.h.b16 %v557
    %v1313 = vunpack.c.l.b16 %v558
    %v1314 = vunpack.c.h.b16 %v558
    %v1315 = vpack.c.b16 %v1255, %v1251
    %v1316 = vpack.c.b16 %v1256, %v1252
    %v1317 = vpack.c.b16 %v1257, %v1253
    %v1318 = vpack.c.b16 %v1258, %v1254
    %v1319 = vpack.c.b16 %v1263, %v1259
    %v1320 = vpack.c.b16 %v1264, %v1260
    %v1321 = vpack.c.b16 %v1265, %v1261
    %v1322 = vpack.c.b16 %v1266, %v1262
    %v1323 = vpack.c.b16 %v1271, %v1267
    %v1324 = vpack.c.b16 %v1272, %v1268
    %v1325 = vpack.c.b16 %v1273, %v1269
    %v1326 = vpack.c.b16 %v1274, %v1270
    %v1327 = vpack.c.b16 %v1279, %v1275
    %v1328 = vpack.c.b16 %v1280, %v1276
    %v1329 = vpack.c.b16 %v1281, %v1277
    %v1330 = vpack.c.b16 %v1282, %v1278
    %v1331 = vpack.c.b16 %v1287, %v1283
    %v1332 = vpack.c.b16 %v1288, %v1284
    %v1333 = vpack.c.b16 %v1289, %v1285
    %v1334 = vpack.c.b16 %v1290, %v1286
    %v1335 = vpack.c.b16 %v1295, %v1291
    %v1336 = vpack.c.b16 %v1296, %v1292
    %v1337 = vpack.c.b16 %v1297, %v1293
    %v1338 = vpack.c.b16 %v1298, %v1294
    %v1339 = vpack.c.b16 %v1303, %v1299
    %v1340 = vpack.c.b16 %v1304, %v1300
    %v1341 = vpack.c.b16 %v1305, %v1301
    %v1342 = vpack.c.b16 %v1306, %v1302
    %v1343 = vpack.c.b16 %v1311, %v1307
    %v1344 = vpack.c.b16 %v1312, %v1308
    %v1345 = vpack.c.b16 %v1313, %v1309
    %v1346 = vpack.c.b16 %v1314, %v1310
    %1379 = vmatprep.subr.bf16.mxu0 %v1316
    %1380 = vmatpush1.bf16.msra.mxu0 %v1315
    %1381 = vmatprep.subr.bf16.mxu0 %v1320
    %1382 = vmatpush1.bf16.msra.mxu0 %v1319
    %1383 = vmatprep.subr.bf16.mxu0 %v1324
    %1384 = vmatpush1.bf16.msra.mxu0 %v1323
    %1385 = vmatprep.subr.bf16.mxu0 %v1328
    %1386 = vmatpush1.bf16.msra.mxu0 %v1327
    %1387 = vmatprep.subr.bf16.mxu0 %v1332
    %1388 = vmatpush1.bf16.msra.mxu0 %v1331
    %1389 = vmatprep.subr.bf16.mxu0 %v1336
    %1390 = vmatpush1.bf16.msra.mxu0 %v1335
    %1391 = vmatprep.subr.bf16.mxu0 %v1340
    %1392 = vmatpush1.bf16.msra.mxu0 %v1339
    %1393 = vmatprep.subr.bf16.mxu0 %v1344
    %1394 = vmatpush1.bf16.msra.mxu0 %v1343
    %1395 = vmatprep.subr.bf16.mxu0 0
    %1396 = vmatpush1.bf16.msra.mxu0 0
    %1397 = vmatprep.subr.bf16.mxu0 0
    %1398 = vmatpush1.bf16.msra.mxu0 0
    %1399 = vmatprep.subr.bf16.mxu0 0
    %1400 = vmatpush1.bf16.msra.mxu0 0
    %1401 = vmatprep.subr.bf16.mxu0 0
    %1402 = vmatpush1.bf16.msra.mxu0 0
    %1403 = vmatprep.subr.bf16.mxu0 0
    %1404 = vmatpush1.bf16.msra.mxu0 0
    %1405 = vmatprep.subr.bf16.mxu0 0
    %1406 = vmatpush1.bf16.msra.mxu0 0
    %1407 = vmatprep.subr.bf16.mxu0 0
    %1408 = vmatpush1.bf16.msra.mxu0 0
    %1409 = vmatprep.subr.bf16.mxu0 0
    %1410 = vmatpush1.bf16.msra.mxu0 0
    %1411 = vmatprep.mubr.bf16.mxu0 0
    %1412 = vmatmul.mubr.bf16.gmra.mrb[0].mxu0 %v976
    %v1413 = vpop.f32.mrb[0].mxu0
    %v1414 = vadd.f32 %v1172, %v1413
    %v1415 = vpop.f32.mrb[0].mxu0
    %v1416 = vadd.f32 %v1174, %v1415
    %v1417 = vpop.f32.mrb[0].mxu0
    %v1418 = vpop.f32.mrb[0].mxu0
    %1419 = vdwg.mxu0
    %1420 = vmatprep.subr.bf16.mxu0 %v1318
    %1421 = vmatpush1.bf16.msra.mxu0 %v1317
    %1422 = vmatprep.subr.bf16.mxu0 %v1322
    %1423 = vmatpush1.bf16.msra.mxu0 %v1321
    %1424 = vmatprep.subr.bf16.mxu0 %v1326
    %1425 = vmatpush1.bf16.msra.mxu0 %v1325
    %1426 = vmatprep.subr.bf16.mxu0 %v1330
    %1427 = vmatpush1.bf16.msra.mxu0 %v1329
    %1428 = vmatprep.subr.bf16.mxu0 %v1334
    %1429 = vmatpush1.bf16.msra.mxu0 %v1333
    %1430 = vmatprep.subr.bf16.mxu0 %v1338
    %1431 = vmatpush1.bf16.msra.mxu0 %v1337
    %1432 = vmatprep.subr.bf16.mxu0 %v1342
    %1433 = vmatpush1.bf16.msra.mxu0 %v1341
    %1434 = vmatprep.subr.bf16.mxu0 %v1346
    %1435 = vmatpush1.bf16.msra.mxu0 %v1345
    %1436 = vmatprep.subr.bf16.mxu0 0
    %1437 = vmatpush1.bf16.msra.mxu0 0
    %1438 = vmatprep.subr.bf16.mxu0 0
    %1439 = vmatpush1.bf16.msra.mxu0 0
    %1440 = vmatprep.subr.bf16.mxu0 0
    %1441 = vmatpush1.bf16.msra.mxu0 0
    %1442 = vmatprep.subr.bf16.mxu0 0
    %1443 = vmatpush1.bf16.msra.mxu0 0
    %1444 = vmatprep.subr.bf16.mxu0 0
    %1445 = vmatpush1.bf16.msra.mxu0 0
    %1446 = vmatprep.subr.bf16.mxu0 0
    %1447 = vmatpush1.bf16.msra.mxu0 0
    %1448 = vmatprep.subr.bf16.mxu0 0
    %1449 = vmatpush1.bf16.msra.mxu0 0
    %1450 = vmatprep.subr.bf16.mxu0 0
    %1451 = vmatpush1.bf16.msra.mxu0 0
    %1452 = vmatprep.mubr.bf16.mxu0 0
    %1453 = vmatmul.mubr.bf16.gmra.mrb[0].mxu0 %v976
    %v1454 = vpop.f32.mrb[0].mxu0
    %v1455 = vadd.f32 %v1213, %v1454
    %v1456 = vpop.f32.mrb[0].mxu0
    %v1457 = vadd.f32 %v1215, %v1456
    %v1458 = vpop.f32.mrb[0].mxu0
    %v1459 = vpop.f32.mrb[0].mxu0
    %1460 = vdwg.mxu0
    %v1461 = vadd.f32 %v1414, %v660
    %v1462 = vadd.f32 %v1416, %v664
    %v1463 = vadd.f32 %v1455, %v668
    %v1464 = vadd.f32 %v1457, %v672
    %v1465 = vxor.u32 %v1461, 2147483648
    %v1466 = vmul.f32 %v1465, 1.442695
    %v1467 = vpow.pop %v1466
    %v1468 = vadd.f32 %v1467, 1.0
    %v1469 = vrcp.pop %v1468
    %v1470 = vmul.f32 1.0, %v1469
    %v1471 = vxor.u32 %v1462, 2147483648
    %v1472 = vmul.f32 %v1471, 1.442695
    %v1473 = vpow.pop %v1472
    %v1474 = vadd.f32 %v1473, 1.0
    %v1475 = vrcp.pop %v1474
    %v1476 = vmul.f32 1.0, %v1475
    %v1477 = vtanh.pop %v1463
    %v1478 = vxor.u32 %v1464, 2147483648
    %v1479 = vmul.f32 %v1478, 1.442695
    %v1480 = vpow.pop %v1479
    %v1481 = vadd.f32 %v1480, 1.0
    %v1482 = vrcp.pop %v1481
    %v1483 = vmul.f32 1.0, %v1482
    %v1484 = vmul.f32 %v1476, 0.0
    %v1485 = vmul.f32 %v1470, %v1477
    %v1486 = vadd.f32 %v1484, %v1485
    %v1487 = vtanh.pop %v1486
    %v1488 = vmul.f32 %v1483, %v1487
    %v1489 = vpack.c.bf16 %v1488, %v1488
    %v1522 = vunpack.c.l.b16 %v623
    %v1523 = vunpack.c.h.b16 %v623
    %v1524 = vunpack.c.l.b16 %v624
    %v1525 = vunpack.c.h.b16 %v624
    %v1526 = vunpack.c.l.b16 %v625
    %v1527 = vunpack.c.h.b16 %v625
    %v1528 = vunpack.c.l.b16 %v626
    %v1529 = vunpack.c.h.b16 %v626
    %v1530 = vunpack.c.l.b16 %v627
    %v1531 = vunpack.c.h.b16 %v627
    %v1532 = vunpack.c.l.b16 %v628
    %v1533 = vunpack.c.h.b16 %v628
    %v1534 = vunpack.c.l.b16 %v629
    %v1535 = vunpack.c.h.b16 %v629
    %v1536 = vunpack.c.l.b16 %v630
    %v1537 = vunpack.c.h.b16 %v630
    %v1538 = vunpack.c.l.b16 %v631
    %v1539 = vunpack.c.h.b16 %v631
    %v1540 = vunpack.c.l.b16 %v632
    %v1541 = vunpack.c.h.b16 %v632
    %v1542 = vunpack.c.l.b16 %v633
    %v1543 = vunpack.c.h.b16 %v633
    %v1544 = vunpack.c.l.b16 %v634
    %v1545 = vunpack.c.h.b16 %v634
    %v1546 = vunpack.c.l.b16 %v635
    %v1547 = vunpack.c.h.b16 %v635
    %v1548 = vunpack.c.l.b16 %v636
    %v1549 = vunpack.c.h.b16 %v636
    %v1550 = vunpack.c.l.b16 %v637
    %v1551 = vunpack.c.h.b16 %v637
    %v1552 = vunpack.c.l.b16 %v638
    %v1553 = vunpack.c.h.b16 %v638
    %v1554 = vunpack.c.l.b16 %v639
    %v1555 = vunpack.c.h.b16 %v639
    %v1556 = vunpack.c.l.b16 %v640
    %v1557 = vunpack.c.h.b16 %v640
    %v1558 = vunpack.c.l.b16 %v641
    %v1559 = vunpack.c.h.b16 %v641
    %v1560 = vunpack.c.l.b16 %v642
    %v1561 = vunpack.c.h.b16 %v642
    %v1562 = vunpack.c.l.b16 %v643
    %v1563 = vunpack.c.h.b16 %v643
    %v1564 = vunpack.c.l.b16 %v644
    %v1565 = vunpack.c.h.b16 %v644
    %v1566 = vunpack.c.l.b16 %v645
    %v1567 = vunpack.c.h.b16 %v645
    %v1568 = vunpack.c.l.b16 %v646
    %v1569 = vunpack.c.h.b16 %v646
    %v1570 = vunpack.c.l.b16 %v647
    %v1571 = vunpack.c.h.b16 %v647
    %v1572 = vunpack.c.l.b16 %v648
    %v1573 = vunpack.c.h.b16 %v648
    %v1574 = vunpack.c.l.b16 %v649
    %v1575 = vunpack.c.h.b16 %v649
    %v1576 = vunpack.c.l.b16 %v650
    %v1577 = vunpack.c.h.b16 %v650
    %v1578 = vunpack.c.l.b16 %v651
    %v1579 = vunpack.c.h.b16 %v651
    %v1580 = vunpack.c.l.b16 %v652
    %v1581 = vunpack.c.h.b16 %v652
    %v1582 = vunpack.c.l.b16 %v653
    %v1583 = vunpack.c.h.b16 %v653
    %v1584 = vunpack.c.l.b16 %v654
    %v1585 = vunpack.c.h.b16 %v654
    %v1586 = vpack.c.b16 %v1526, %v1522
    %v1587 = vpack.c.b16 %v1527, %v1523
    %v1588 = vpack.c.b16 %v1528, %v1524
    %v1589 = vpack.c.b16 %v1529, %v1525
    %v1590 = vpack.c.b16 %v1534, %v1530
    %v1591 = vpack.c.b16 %v1535, %v1531
    %v1592 = vpack.c.b16 %v1536, %v1532
    %v1593 = vpack.c.b16 %v1537, %v1533
    %v1594 = vpack.c.b16 %v1542, %v1538
    %v1595 = vpack.c.b16 %v1543, %v1539
    %v1596 = vpack.c.b16 %v1544, %v1540
    %v1597 = vpack.c.b16 %v1545, %v1541
    %v1598 = vpack.c.b16 %v1550, %v1546
    %v1599 = vpack.c.b16 %v1551, %v1547
    %v1600 = vpack.c.b16 %v1552, %v1548
    %v1601 = vpack.c.b16 %v1553, %v1549
    %v1602 = vpack.c.b16 %v1558, %v1554
    %v1603 = vpack.c.b16 %v1559, %v1555
    %v1604 = vpack.c.b16 %v1560, %v1556
    %v1605 = vpack.c.b16 %v1561, %v1557
    %v1606 = vpack.c.b16 %v1566, %v1562
    %v1607 = vpack.c.b16 %v1567, %v1563
    %v1608 = vpack.c.b16 %v1568, %v1564
    %v1609 = vpack.c.b16 %v1569, %v1565
    %v1610 = vpack.c.b16 %v1574, %v1570
    %v1611 = vpack.c.b16 %v1575, %v1571
    %v1612 = vpack.c.b16 %v1576, %v1572
    %v1613 = vpack.c.b16 %v1577, %v1573
    %v1614 = vpack.c.b16 %v1582, %v1578
    %v1615 = vpack.c.b16 %v1583, %v1579
    %v1616 = vpack.c.b16 %v1584, %v1580
    %v1617 = vpack.c.b16 %v1585, %v1581
    %1650 = vmatprep.subr.bf16.mxu0 %v1587
    %1651 = vmatpush1.bf16.msra.mxu0 %v1586
    %1652 = vmatprep.subr.bf16.mxu0 %v1591
    %1653 = vmatpush1.bf16.msra.mxu0 %v1590
    %1654 = vmatprep.subr.bf16.mxu0 %v1595
    %1655 = vmatpush1.bf16.msra.mxu0 %v1594
    %1656 = vmatprep.subr.bf16.mxu0 %v1599
    %1657 = vmatpush1.bf16.msra.mxu0 %v1598
    %1658 = vmatprep.subr.bf16.mxu0 %v1603
    %1659 = vmatpush1.bf16.msra.mxu0 %v1602
    %1660 = vmatprep.subr.bf16.mxu0 %v1607
    %1661 = vmatpush1.bf16.msra.mxu0 %v1606
    %1662 = vmatprep.subr.bf16.mxu0 %v1611
    %1663 = vmatpush1.bf16.msra.mxu0 %v1610
    %1664 = vmatprep.subr.bf16.mxu0 %v1615
    %1665 = vmatpush1.bf16.msra.mxu0 %v1614
    %1666 = vmatprep.subr.bf16.mxu0 0
    %1667 = vmatpush1.bf16.msra.mxu0 0
    %1668 = vmatprep.subr.bf16.mxu0 0
    %1669 = vmatpush1.bf16.msra.mxu0 0
    %1670 = vmatprep.subr.bf16.mxu0 0
    %1671 = vmatpush1.bf16.msra.mxu0 0
    %1672 = vmatprep.subr.bf16.mxu0 0
    %1673 = vmatpush1.bf16.msra.mxu0 0
    %1674 = vmatprep.subr.bf16.mxu0 0
    %1675 = vmatpush1.bf16.msra.mxu0 0
    %1676 = vmatprep.subr.bf16.mxu0 0
    %1677 = vmatpush1.bf16.msra.mxu0 0
    %1678 = vmatprep.subr.bf16.mxu0 0
    %1679 = vmatpush1.bf16.msra.mxu0 0
    %1680 = vmatprep.subr.bf16.mxu0 0
    %1681 = vmatpush1.bf16.msra.mxu0 0
    %1682 = vmatprep.mubr.bf16.mxu0 0
    %1683 = vmatmul.mubr.bf16.gmra.mrb[0].mxu0 0
    %v1684 = vpop.f32.mrb[0].mxu0
    %v1685 = vadd.f32 0.0, %v1684
    %v1686 = vpop.f32.mrb[0].mxu0
    %v1687 = vadd.f32 0.0, %v1686
    %v1688 = vpop.f32.mrb[0].mxu0
    %v1689 = vpop.f32.mrb[0].mxu0
    %1690 = vdwg.mxu0
    %1691 = vmatprep.subr.bf16.mxu0 %v1589
    %1692 = vmatpush1.bf16.msra.mxu0 %v1588
    %1693 = vmatprep.subr.bf16.mxu0 %v1593
    %1694 = vmatpush1.bf16.msra.mxu0 %v1592
    %1695 = vmatprep.subr.bf16.mxu0 %v1597
    %1696 = vmatpush1.bf16.msra.mxu0 %v1596
    %1697 = vmatprep.subr.bf16.mxu0 %v1601
    %1698 = vmatpush1.bf16.msra.mxu0 %v1600
    %1699 = vmatprep.subr.bf16.mxu0 %v1605
    %1700 = vmatpush1.bf16.msra.mxu0 %v1604
    %1701 = vmatprep.subr.bf16.mxu0 %v1609
    %1702 = vmatpush1.bf16.msra.mxu0 %v1608
    %1703 = vmatprep.subr.bf16.mxu0 %v1613
    %1704 = vmatpush1.bf16.msra.mxu0 %v1612
    %1705 = vmatprep.subr.bf16.mxu0 %v1617
    %1706 = vmatpush1.bf16.msra.mxu0 %v1616
    %1707 = vmatprep.subr.bf16.mxu0 0
    %1708 = vmatpush1.bf16.msra.mxu0 0
    %1709 = vmatprep.subr.bf16.mxu0 0
    %1710 = vmatpush1.bf16.msra.mxu0 0
    %1711 = vmatprep.subr.bf16.mxu0 0
    %1712 = vmatpush1.bf16.msra.mxu0 0
    %1713 = vmatprep.subr.bf16.mxu0 0
    %1714 = vmatpush1.bf16.msra.mxu0 0
    %1715 = vmatprep.subr.bf16.mxu0 0
    %1716 = vmatpush1.bf16.msra.mxu0 0
    %1717 = vmatprep.subr.bf16.mxu0 0
    %1718 = vmatpush1.bf16.msra.mxu0 0
    %1719 = vmatprep.subr.bf16.mxu0 0
    %1720 = vmatpush1.bf16.msra.mxu0 0
    %1721 = vmatprep.subr.bf16.mxu0 0
    %1722 = vmatpush1.bf16.msra.mxu0 0
    %1723 = vmatprep.mubr.bf16.mxu0 0
    %1724 = vmatmul.mubr.bf16.gmra.mrb[0].mxu0 0
    %v1725 = vpop.f32.mrb[0].mxu0
    %v1726 = vadd.f32 0.0, %v1725
    %v1727 = vpop.f32.mrb[0].mxu0
    %v1728 = vadd.f32 0.0, %v1727
    %v1729 = vpop.f32.mrb[0].mxu0
    %v1730 = vpop.f32.mrb[0].mxu0
    %1731 = vdwg.mxu0
    %v1764 = vunpack.c.l.b16 %v591
    %v1765 = vunpack.c.h.b16 %v591
    %v1766 = vunpack.c.l.b16 %v592
    %v1767 = vunpack.c.h.b16 %v592
    %v1768 = vunpack.c.l.b16 %v593
    %v1769 = vunpack.c.h.b16 %v593
    %v1770 = vunpack.c.l.b16 %v594
    %v1771 = vunpack.c.h.b16 %v594
    %v1772 = vunpack.c.l.b16 %v595
    %v1773 = vunpack.c.h.b16 %v595
    %v1774 = vunpack.c.l.b16 %v596
    %v1775 = vunpack.c.h.b16 %v596
    %v1776 = vunpack.c.l.b16 %v597
    %v1777 = vunpack.c.h.b16 %v597
    %v1778 = vunpack.c.l.b16 %v598
    %v1779 = vunpack.c.h.b16 %v598
    %v1780 = vunpack.c.l.b16 %v599
    %v1781 = vunpack.c.h.b16 %v599
    %v1782 = vunpack.c.l.b16 %v600
    %v1783 = vunpack.c.h.b16 %v600
    %v1784 = vunpack.c.l.b16 %v601
    %v1785 = vunpack.c.h.b16 %v601
    %v1786 = vunpack.c.l.b16 %v602
    %v1787 = vunpack.c.h.b16 %v602
    %v1788 = vunpack.c.l.b16 %v603
    %v1789 = vunpack.c.h.b16 %v603
    %v1790 = vunpack.c.l.b16 %v604
    %v1791 = vunpack.c.h.b16 %v604
    %v1792 = vunpack.c.l.b16 %v605
    %v1793 = vunpack.c.h.b16 %v605
    %v1794 = vunpack.c.l.b16 %v606
    %v1795 = vunpack.c.h.b16 %v606
    %v1796 = vunpack.c.l.b16 %v607
    %v1797 = vunpack.c.h.b16 %v607
    %v1798 = vunpack.c.l.b16 %v608
    %v1799 = vunpack.c.h.b16 %v608
    %v1800 = vunpack.c.l.b16 %v609
    %v1801 = vunpack.c.h.b16 %v609
    %v1802 = vunpack.c.l.b16 %v610
    %v1803 = vunpack.c.h.b16 %v610
    %v1804 = vunpack.c.l.b16 %v611
    %v1805 = vunpack.c.h.b16 %v611
    %v1806 = vunpack.c.l.b16 %v612
    %v1807 = vunpack.c.h.b16 %v612
    %v1808 = vunpack.c.l.b16 %v613
    %v1809 = vunpack.c.h.b16 %v613
    %v1810 = vunpack.c.l.b16 %v614
    %v1811 = vunpack.c.h.b16 %v614
    %v1812 = vunpack.c.l.b16 %v615
    %v1813 = vunpack.c.h.b16 %v615
    %v1814 = vunpack.c.l.b16 %v616
    %v1815 = vunpack.c.h.b16 %v616
    %v1816 = vunpack.c.l.b16 %v617
    %v1817 = vunpack.c.h.b16 %v617
    %v1818 = vunpack.c.l.b16 %v618
    %v1819 = vunpack.c.h.b16 %v618
    %v1820 = vunpack.c.l.b16 %v619
    %v1821 = vunpack.c.h.b16 %v619
    %v1822 = vunpack.c.l.b16 %v620
    %v1823 = vunpack.c.h.b16 %v620
    %v1824 = vunpack.c.l.b16 %v621
    %v1825 = vunpack.c.h.b16 %v621
    %v1826 = vunpack.c.l.b16 %v622
    %v1827 = vunpack.c.h.b16 %v622
    %v1828 = vpack.c.b16 %v1768, %v1764
    %v1829 = vpack.c.b16 %v1769, %v1765
    %v1830 = vpack.c.b16 %v1770, %v1766
    %v1831 = vpack.c.b16 %v1771, %v1767
    %v1832 = vpack.c.b16 %v1776, %v1772
    %v1833 = vpack.c.b16 %v1777, %v1773
    %v1834 = vpack.c.b16 %v1778, %v1774
    %v1835 = vpack.c.b16 %v1779, %v1775
    %v1836 = vpack.c.b16 %v1784, %v1780
    %v1837 = vpack.c.b16 %v1785, %v1781
    %v1838 = vpack.c.b16 %v1786, %v1782
    %v1839 = vpack.c.b16 %v1787, %v1783
    %v1840 = vpack.c.b16 %v1792, %v1788
    %v1841 = vpack.c.b16 %v1793, %v1789
    %v1842 = vpack.c.b16 %v1794, %v1790
    %v1843 = vpack.c.b16 %v1795, %v1791
    %v1844 = vpack.c.b16 %v1800, %v1796
    %v1845 = vpack.c.b16 %v1801, %v1797
    %v1846 = vpack.c.b16 %v1802, %v1798
    %v1847 = vpack.c.b16 %v1803, %v1799
    %v1848 = vpack.c.b16 %v1808, %v1804
    %v1849 = vpack.c.b16 %v1809, %v1805
    %v1850 = vpack.c.b16 %v1810, %v1806
    %v1851 = vpack.c.b16 %v1811, %v1807
    %v1852 = vpack.c.b16 %v1816, %v1812
    %v1853 = vpack.c.b16 %v1817, %v1813
    %v1854 = vpack.c.b16 %v1818, %v1814
    %v1855 = vpack.c.b16 %v1819, %v1815
    %v1856 = vpack.c.b16 %v1824, %v1820
    %v1857 = vpack.c.b16 %v1825, %v1821
    %v1858 = vpack.c.b16 %v1826, %v1822
    %v1859 = vpack.c.b16 %v1827, %v1823
    %1892 = vmatprep.subr.bf16.mxu0 %v1829
    %1893 = vmatpush1.bf16.msra.mxu0 %v1828
    %1894 = vmatprep.subr.bf16.mxu0 %v1833
    %1895 = vmatpush1.bf16.msra.mxu0 %v1832
    %1896 = vmatprep.subr.bf16.mxu0 %v1837
    %1897 = vmatpush1.bf16.msra.mxu0 %v1836
    %1898 = vmatprep.subr.bf16.mxu0 %v1841
    %1899 = vmatpush1.bf16.msra.mxu0 %v1840
    %1900 = vmatprep.subr.bf16.mxu0 %v1845
    %1901 = vmatpush1.bf16.msra.mxu0 %v1844
    %1902 = vmatprep.subr.bf16.mxu0 %v1849
    %1903 = vmatpush1.bf16.msra.mxu0 %v1848
    %1904 = vmatprep.subr.bf16.mxu0 %v1853
    %1905 = vmatpush1.bf16.msra.mxu0 %v1852
    %1906 = vmatprep.subr.bf16.mxu0 %v1857
    %1907 = vmatpush1.bf16.msra.mxu0 %v1856
    %1908 = vmatprep.subr.bf16.mxu0 0
    %1909 = vmatpush1.bf16.msra.mxu0 0
    %1910 = vmatprep.subr.bf16.mxu0 0
    %1911 = vmatpush1.bf16.msra.mxu0 0
    %1912 = vmatprep.subr.bf16.mxu0 0
    %1913 = vmatpush1.bf16.msra.mxu0 0
    %1914 = vmatprep.subr.bf16.mxu0 0
    %1915 = vmatpush1.bf16.msra.mxu0 0
    %1916 = vmatprep.subr.bf16.mxu0 0
    %1917 = vmatpush1.bf16.msra.mxu0 0
    %1918 = vmatprep.subr.bf16.mxu0 0
    %1919 = vmatpush1.bf16.msra.mxu0 0
    %1920 = vmatprep.subr.bf16.mxu0 0
    %1921 = vmatpush1.bf16.msra.mxu0 0
    %1922 = vmatprep.subr.bf16.mxu0 0
    %1923 = vmatpush1.bf16.msra.mxu0 0
    %1924 = vmatprep.mubr.bf16.mxu0 0
    %1925 = vmatmul.mubr.bf16.gmra.mrb[0].mxu0 %v1489
    %v1926 = vpop.f32.mrb[0].mxu0
    %v1927 = vadd.f32 %v1685, %v1926
    %v1928 = vpop.f32.mrb[0].mxu0
    %v1929 = vadd.f32 %v1687, %v1928
    %v1930 = vpop.f32.mrb[0].mxu0
    %v1931 = vpop.f32.mrb[0].mxu0
    %1932 = vdwg.mxu0
    %1933 = vmatprep.subr.bf16.mxu0 %v1831
    %1934 = vmatpush1.bf16.msra.mxu0 %v1830
    %1935 = vmatprep.subr.bf16.mxu0 %v1835
    %1936 = vmatpush1.bf16.msra.mxu0 %v1834
    %1937 = vmatprep.subr.bf16.mxu0 %v1839
    %1938 = vmatpush1.bf16.msra.mxu0 %v1838
    %1939 = vmatprep.subr.bf16.mxu0 %v1843
    %1940 = vmatpush1.bf16.msra.mxu0 %v1842
    %1941 = vmatprep.subr.bf16.mxu0 %v1847
    %1942 = vmatpush1.bf16.msra.mxu0 %v1846
    %1943 = vmatprep.subr.bf16.mxu0 %v1851
    %1944 = vmatpush1.bf16.msra.mxu0 %v1850
    %1945 = vmatprep.subr.bf16.mxu0 %v1855
    %1946 = vmatpush1.bf16.msra.mxu0 %v1854
    %1947 = vmatprep.subr.bf16.mxu0 %v1859
    %1948 = vmatpush1.bf16.msra.mxu0 %v1858
    %1949 = vmatprep.subr.bf16.mxu0 0
    %1950 = vmatpush1.bf16.msra.mxu0 0
    %1951 = vmatprep.subr.bf16.mxu0 0
    %1952 = vmatpush1.bf16.msra.mxu0 0
    %1953 = vmatprep.subr.bf16.mxu0 0
    %1954 = vmatpush1.bf16.msra.mxu0 0
    %1955 = vmatprep.subr.bf16.mxu0 0
    %1956 = vmatpush1.bf16.msra.mxu0 0
    %1957 = vmatprep.subr.bf16.mxu0 0
    %1958 = vmatpush1.bf16.msra.mxu0 0
    %1959 = vmatprep.subr.bf16.mxu0 0
    %1960 = vmatpush1.bf16.msra.mxu0 0
    %1961 = vmatprep.subr.bf16.mxu0 0
    %1962 = vmatpush1.bf16.msra.mxu0 0
    %1963 = vmatprep.subr.bf16.mxu0 0
    %1964 = vmatpush1.bf16.msra.mxu0 0
    %1965 = vmatprep.mubr.bf16.mxu0 0
    %1966 = vmatmul.mubr.bf16.gmra.mrb[0].mxu0 %v1489
    %v1967 = vpop.f32.mrb[0].mxu0
    %v1968 = vadd.f32 %v1726, %v1967
    %v1969 = vpop.f32.mrb[0].mxu0
    %v1970 = vadd.f32 %v1728, %v1969
    %v1971 = vpop.f32.mrb[0].mxu0
    %v1972 = vpop.f32.mrb[0].mxu0
    %1973 = vdwg.mxu0
    %v1974 = vadd.f32 %v1927, %v682
    %v1975 = vadd.f32 %v1929, %v686
    %v1976 = vadd.f32 %v1968, %v690
    %v1977 = vadd.f32 %v1970, %v694
    %v1978 = vxor.u32 %v1974, 2147483648
    %v1979 = vmul.f32 %v1978, 1.442695
    %v1980 = vpow.pop %v1979
    %v1981 = vadd.f32 %v1980, 1.0
    %v1982 = vrcp.pop %v1981
    %v1983 = vmul.f32 1.0, %v1982
    %v1984 = vxor.u32 %v1975, 2147483648
    %v1985 = vmul.f32 %v1984, 1.442695
    %v1986 = vpow.pop %v1985
    %v1987 = vadd.f32 %v1986, 1.0
    %v1988 = vrcp.pop %v1987
    %v1989 = vmul.f32 1.0, %v1988
    %v1990 = vtanh.pop %v1976
    %v1991 = vxor.u32 %v1977, 2147483648
    %v1992 = vmul.f32 %v1991, 1.442695
    %v1993 = vpow.pop %v1992
    %v1994 = vadd.f32 %v1993, 1.0
    %v1995 = vrcp.pop %v1994
    %v1996 = vmul.f32 1.0, %v1995
    %v1997 = vmul.f32 %v1989, 0.0
    %v1998 = vmul.f32 %v1983, %v1990
    %v1999 = vadd.f32 %v1997, %v1998
    %v2000 = vtanh.pop %v1999
    %v2001 = vmul.f32 %v1996, %v2000
    %s2002 = smul.u32 1, 4
    %s2003 = smul.addr %s2002, 8
    %s2004 = scalar_lea.vmem [#allocation2], %s2003
    %v2005 = vld [vmem:[%s2004] sm:$0xff]
    %v2006 = vld [vmem:[%s2004 + $0x8] sm:$0xff]
    %v2007 = vld [vmem:[%s2004 + $0x10] sm:$0xff]
    %v2008 = vld [vmem:[%s2004 + $0x18] sm:$0xff]
    %2009 = vmatprep.subr.bf16.mxu0 %v803
    %2010 = vmatpush1.bf16.msra.mxu0 %v802
    %2011 = vmatprep.subr.bf16.mxu0 %v807
    %2012 = vmatpush1.bf16.msra.mxu0 %v806
    %2013 = vmatprep.subr.bf16.mxu0 %v811
    %2014 = vmatpush1.bf16.msra.mxu0 %v810
    %2015 = vmatprep.subr.bf16.mxu0 %v815
    %2016 = vmatpush1.bf16.msra.mxu0 %v814
    %2017 = vmatprep.subr.bf16.mxu0 %v819
    %2018 = vmatpush1.bf16.msra.mxu0 %v818
    %2019 = vmatprep.subr.bf16.mxu0 %v823
    %2020 = vmatpush1.bf16.msra.mxu0 %v822
    %2021 = vmatprep.subr.bf16.mxu0 %v827
    %2022 = vmatpush1.bf16.msra.mxu0 %v826
    %2023 = vmatprep.subr.bf16.mxu0 %v831
    %2024 = vmatpush1.bf16.msra.mxu0 %v830
    %2025 = vmatprep.subr.bf16.mxu0 0
    %2026 = vmatpush1.bf16.msra.mxu0 0
    %2027 = vmatprep.subr.bf16.mxu0 0
    %2028 = vmatpush1.bf16.msra.mxu0 0
    %2029 = vmatprep.subr.bf16.mxu0 0
    %2030 = vmatpush1.bf16.msra.mxu0 0
    %2031 = vmatprep.subr.bf16.mxu0 0
    %2032 = vmatpush1.bf16.msra.mxu0 0
    %2033 = vmatprep.subr.bf16.mxu0 0
    %2034 = vmatpush1.bf16.msra.mxu0 0
    %2035 = vmatprep.subr.bf16.mxu0 0
    %2036 = vmatpush1.bf16.msra.mxu0 0
    %2037 = vmatprep.subr.bf16.mxu0 0
    %2038 = vmatpush1.bf16.msra.mxu0 0
    %2039 = vmatprep.subr.bf16.mxu0 0
    %2040 = vmatpush1.bf16.msra.mxu0 0
    %2041 = vmatprep.mubr.bf16.mxu0 0
    %2042 = vmatmul.mubr.bf16.gmra.mrb[0].mxu0 %v976
    %v2043 = vpop.f32.mrb[0].mxu0
    %v2044 = vadd.f32 0.0, %v2043
    %v2045 = vpop.f32.mrb[0].mxu0
    %v2046 = vadd.f32 0.0, %v2045
    %v2047 = vpop.f32.mrb[0].mxu0
    %v2048 = vpop.f32.mrb[0].mxu0
    %2049 = vdwg.mxu0
    %2050 = vmatprep.subr.bf16.mxu0 %v805
    %2051 = vmatpush1.bf16.msra.mxu0 %v804
    %2052 = vmatprep.subr.bf16.mxu0 %v809
    %2053 = vmatpush1.bf16.msra.mxu0 %v808
    %2054 = vmatprep.subr.bf16.mxu0 %v813
    %2055 = vmatpush1.bf16.msra.mxu0 %v812
    %2056 = vmatprep.subr.bf16.mxu0 %v817
    %2057 = vmatpush1.bf16.msra.mxu0 %v816
    %2058 = vmatprep.subr.bf16.mxu0 %v821
    %2059 = vmatpush1.bf16.msra.mxu0 %v820
    %2060 = vmatprep.subr.bf16.mxu0 %v825
    %2061 = vmatpush1.bf16.msra.mxu0 %v824
    %2062 = vmatprep.subr.bf16.mxu0 %v829
    %2063 = vmatpush1.bf16.msra.mxu0 %v828
    %2064 = vmatprep.subr.bf16.mxu0 %v833
    %2065 = vmatpush1.bf16.msra.mxu0 %v832
    %2066 = vmatprep.subr.bf16.mxu0 0
    %2067 = vmatpush1.bf16.msra.mxu0 0
    %2068 = vmatprep.subr.bf16.mxu0 0
    %2069 = vmatpush1.bf16.msra.mxu0 0
    %2070 = vmatprep.subr.bf16.mxu0 0
    %2071 = vmatpush1.bf16.msra.mxu0 0
    %2072 = vmatprep.subr.bf16.mxu0 0
    %2073 = vmatpush1.bf16.msra.mxu0 0
    %2074 = vmatprep.subr.bf16.mxu0 0
    %2075 = vmatpush1.bf16.msra.mxu0 0
    %2076 = vmatprep.subr.bf16.mxu0 0
    %2077 = vmatpush1.bf16.msra.mxu0 0
    %2078 = vmatprep.subr.bf16.mxu0 0
    %2079 = vmatpush1.bf16.msra.mxu0 0
    %2080 = vmatprep.subr.bf16.mxu0 0
    %2081 = vmatpush1.bf16.msra.mxu0 0
    %2082 = vmatprep.mubr.bf16.mxu0 0
    %2083 = vmatmul.mubr.bf16.gmra.mrb[0].mxu0 %v976
    %v2084 = vpop.f32.mrb[0].mxu0
    %v2085 = vadd.f32 0.0, %v2084
    %v2086 = vpop.f32.mrb[0].mxu0
    %v2087 = vadd.f32 0.0, %v2086
    %v2088 = vpop.f32.mrb[0].mxu0
    %v2089 = vpop.f32.mrb[0].mxu0
    %2090 = vdwg.mxu0
    %v2091 = vadd.f32 %v2005, %v2044
    %v2092 = vadd.f32 %v2006, %v2046
    %v2093 = vadd.f32 %v2007, %v2085
    %v2094 = vadd.f32 %v2008, %v2087
    %v2095 = vxor.u32 %v2091, 2147483648
    %v2096 = vmul.f32 %v2095, 1.442695
    %v2097 = vpow.pop %v2096
    %v2098 = vadd.f32 %v2097, 1.0
    %v2099 = vrcp.pop %v2098
    %v2100 = vmul.f32 1.0, %v2099
    %v2101 = vxor.u32 %v2092, 2147483648
    %v2102 = vmul.f32 %v2101, 1.442695
    %v2103 = vpow.pop %v2102
    %v2104 = vadd.f32 %v2103, 1.0
    %v2105 = vrcp.pop %v2104
    %v2106 = vmul.f32 1.0, %v2105
    %v2107 = vtanh.pop %v2093
    %v2108 = vxor.u32 %v2094, 2147483648
    %v2109 = vmul.f32 %v2108, 1.442695
    %v2110 = vpow.pop %v2109
    %v2111 = vadd.f32 %v2110, 1.0
    %v2112 = vrcp.pop %v2111
    %v2113 = vmul.f32 1.0, %v2112
    %v2114 = vmul.f32 %v2106, %v973
    %v2115 = vmul.f32 %v2100, %v2107
    %v2116 = vadd.f32 %v2114, %v2115
    %v2117 = vtanh.pop %v2116
    %v2118 = vmul.f32 %v2113, %v2117
    %v2119 = vpack.c.bf16 %v2118, %v2118
    %2120 = vmatprep.subr.bf16.mxu0 %v1074
    %2121 = vmatpush1.bf16.msra.mxu0 %v1073
    %2122 = vmatprep.subr.bf16.mxu0 %v1078
    %2123 = vmatpush1.bf16.msra.mxu0 %v1077
    %2124 = vmatprep.subr.bf16.mxu0 %v1082
    %2125 = vmatpush1.bf16.msra.mxu0 %v1081
    %2126 = vmatprep.subr.bf16.mxu0 %v1086
    %2127 = vmatpush1.bf16.msra.mxu0 %v1085
    %2128 = vmatprep.subr.bf16.mxu0 %v1090
    %2129 = vmatpush1.bf16.msra.mxu0 %v1089
    %2130 = vmatprep.subr.bf16.mxu0 %v1094
    %2131 = vmatpush1.bf16.msra.mxu0 %v1093
    %2132 = vmatprep.subr.bf16.mxu0 %v1098
    %2133 = vmatpush1.bf16.msra.mxu0 %v1097
    %2134 = vmatprep.subr.bf16.mxu0 %v1102
    %2135 = vmatpush1.bf16.msra.mxu0 %v1101
    %2136 = vmatprep.subr.bf16.mxu0 0
    %2137 = vmatpush1.bf16.msra.mxu0 0
    %2138 = vmatprep.subr.bf16.mxu0 0
    %2139 = vmatpush1.bf16.msra.mxu0 0
    %2140 = vmatprep.subr.bf16.mxu0 0
    %2141 = vmatpush1.bf16.msra.mxu0 0
    %2142 = vmatprep.subr.bf16.mxu0 0
    %2143 = vmatpush1.bf16.msra.mxu0 0
    %2144 = vmatprep.subr.bf16.mxu0 0
    %2145 = vmatpush1.bf16.msra.mxu0 0
    %2146 = vmatprep.subr.bf16.mxu0 0
    %2147 = vmatpush1.bf16.msra.mxu0 0
    %2148 = vmatprep.subr.bf16.mxu0 0
    %2149 = vmatpush1.bf16.msra.mxu0 0
    %2150 = vmatprep.subr.bf16.mxu0 0
    %2151 = vmatpush1.bf16.msra.mxu0 0
    %2152 = vmatprep.mubr.bf16.mxu0 0
    %2153 = vmatmul.mubr.bf16.gmra.mrb[0].mxu0 %v1489
    %v2154 = vpop.f32.mrb[0].mxu0
    %v2155 = vadd.f32 0.0, %v2154
    %v2156 = vpop.f32.mrb[0].mxu0
    %v2157 = vadd.f32 0.0, %v2156
    %v2158 = vpop.f32.mrb[0].mxu0
    %v2159 = vpop.f32.mrb[0].mxu0
    %2160 = vdwg.mxu0
    %2161 = vmatprep.subr.bf16.mxu0 %v1076
    %2162 = vmatpush1.bf16.msra.mxu0 %v1075
    %2163 = vmatprep.subr.bf16.mxu0 %v1080
    %2164 = vmatpush1.bf16.msra.mxu0 %v1079
    %2165 = vmatprep.subr.bf16.mxu0 %v1084
    %2166 = vmatpush1.bf16.msra.mxu0 %v1083
    %2167 = vmatprep.subr.bf16.mxu0 %v1088
    %2168 = vmatpush1.bf16.msra.mxu0 %v1087
    %2169 = vmatprep.subr.bf16.mxu0 %v1092
    %2170 = vmatpush1.bf16.msra.mxu0 %v1091
    %2171 = vmatprep.subr.bf16.mxu0 %v1096
    %2172 = vmatpush1.bf16.msra.mxu0 %v1095
    %2173 = vmatprep.subr.bf16.mxu0 %v1100
    %2174 = vmatpush1.bf16.msra.mxu0 %v1099
    %2175 = vmatprep.subr.bf16.mxu0 %v1104
    %2176 = vmatpush1.bf16.msra.mxu0 %v1103
    %2177 = vmatprep.subr.bf16.mxu0 0
    %2178 = vmatpush1.bf16.msra.mxu0 0
    %2179 = vmatprep.subr.bf16.mxu0 0
    %2180 = vmatpush1.bf16.msra.mxu0 0
    %2181 = vmatprep.subr.bf16.mxu0 0
    %2182 = vmatpush1.bf16.msra.mxu0 0
    %2183 = vmatprep.subr.bf16.mxu0 0
    %2184 = vmatpush1.bf16.msra.mxu0 0
    %2185 = vmatprep.subr.bf16.mxu0 0
    %2186 = vmatpush1.bf16.msra.mxu0 0
    %2187 = vmatprep.subr.bf16.mxu0 0
    %2188 = vmatpush1.bf16.msra.mxu0 0
    %2189 = vmatprep.subr.bf16.mxu0 0
    %2190 = vmatpush1.bf16.msra.mxu0 0
    %2191 = vmatprep.subr.bf16.mxu0 0
    %2192 = vmatpush1.bf16.msra.mxu0 0
    %2193 = vmatprep.mubr.bf16.mxu0 0
    %2194 = vmatmul.mubr.bf16.gmra.mrb[0].mxu0 %v1489
    %v2195 = vpop.f32.mrb[0].mxu0
    %v2196 = vadd.f32 0.0, %v2195
    %v2197 = vpop.f32.mrb[0].mxu0
    %v2198 = vadd.f32 0.0, %v2197
    %v2199 = vpop.f32.mrb[0].mxu0
    %v2200 = vpop.f32.mrb[0].mxu0
    %2201 = vdwg.mxu0
    %2202 = vmatprep.subr.bf16.mxu0 %v1316
    %2203 = vmatpush1.bf16.msra.mxu0 %v1315
    %2204 = vmatprep.subr.bf16.mxu0 %v1320
    %2205 = vmatpush1.bf16.msra.mxu0 %v1319
    %2206 = vmatprep.subr.bf16.mxu0 %v1324
    %2207 = vmatpush1.bf16.msra.mxu0 %v1323
    %2208 = vmatprep.subr.bf16.mxu0 %v1328
    %2209 = vmatpush1.bf16.msra.mxu0 %v1327
    %2210 = vmatprep.subr.bf16.mxu0 %v1332
    %2211 = vmatpush1.bf16.msra.mxu0 %v1331
    %2212 = vmatprep.subr.bf16.mxu0 %v1336
    %2213 = vmatpush1.bf16.msra.mxu0 %v1335
    %2214 = vmatprep.subr.bf16.mxu0 %v1340
    %2215 = vmatpush1.bf16.msra.mxu0 %v1339
    %2216 = vmatprep.subr.bf16.mxu0 %v1344
    %2217 = vmatpush1.bf16.msra.mxu0 %v1343
    %2218 = vmatprep.subr.bf16.mxu0 0
    %2219 = vmatpush1.bf16.msra.mxu0 0
    %2220 = vmatprep.subr.bf16.mxu0 0
    %2221 = vmatpush1.bf16.msra.mxu0 0
    %2222 = vmatprep.subr.bf16.mxu0 0
    %2223 = vmatpush1.bf16.msra.mxu0 0
    %2224 = vmatprep.subr.bf16.mxu0 0
    %2225 = vmatpush1.bf16.msra.mxu0 0
    %2226 = vmatprep.subr.bf16.mxu0 0
    %2227 = vmatpush1.bf16.msra.mxu0 0
    %2228 = vmatprep.subr.bf16.mxu0 0
    %2229 = vmatpush1.bf16.msra.mxu0 0
    %2230 = vmatprep.subr.bf16.mxu0 0
    %2231 = vmatpush1.bf16.msra.mxu0 0
    %2232 = vmatprep.subr.bf16.mxu0 0
    %2233 = vmatpush1.bf16.msra.mxu0 0
    %2234 = vmatprep.mubr.bf16.mxu0 0
    %2235 = vmatmul.mubr.bf16.gmra.mrb[0].mxu0 %v2119
    %v2236 = vpop.f32.mrb[0].mxu0
    %v2237 = vadd.f32 %v2155, %v2236
    %v2238 = vpop.f32.mrb[0].mxu0
    %v2239 = vadd.f32 %v2157, %v2238
    %v2240 = vpop.f32.mrb[0].mxu0
    %v2241 = vpop.f32.mrb[0].mxu0
    %2242 = vdwg.mxu0
    %2243 = vmatprep.subr.bf16.mxu0 %v1318
    %2244 = vmatpush1.bf16.msra.mxu0 %v1317
    %2245 = vmatprep.subr.bf16.mxu0 %v1322
    %2246 = vmatpush1.bf16.msra.mxu0 %v1321
    %2247 = vmatprep.subr.bf16.mxu0 %v1326
    %2248 = vmatpush1.bf16.msra.mxu0 %v1325
    %2249 = vmatprep.subr.bf16.mxu0 %v1330
    %2250 = vmatpush1.bf16.msra.mxu0 %v1329
    %2251 = vmatprep.subr.bf16.mxu0 %v1334
    %2252 = vmatpush1.bf16.msra.mxu0 %v1333
    %2253 = vmatprep.subr.bf16.mxu0 %v1338
    %2254 = vmatpush1.bf16.msra.mxu0 %v1337
    %2255 = vmatprep.subr.bf16.mxu0 %v1342
    %2256 = vmatpush1.bf16.msra.mxu0 %v1341
    %2257 = vmatprep.subr.bf16.mxu0 %v1346
    %2258 = vmatpush1.bf16.msra.mxu0 %v1345
    %2259 = vmatprep.subr.bf16.mxu0 0
    %2260 = vmatpush1.bf16.msra.mxu0 0
    %2261 = vmatprep.subr.bf16.mxu0 0
    %2262 = vmatpush1.bf16.msra.mxu0 0
    %2263 = vmatprep.subr.bf16.mxu0 0
    %2264 = vmatpush1.bf16.msra.mxu0 0
    %2265 = vmatprep.subr.bf16.mxu0 0
    %2266 = vmatpush1.bf16.msra.mxu0 0
    %2267 = vmatprep.subr.bf16.mxu0 0
    %2268 = vmatpush1.bf16.msra.mxu0 0
    %2269 = vmatprep.subr.bf16.mxu0 0
    %2270 = vmatpush1.bf16.msra.mxu0 0
    %2271 = vmatprep.subr.bf16.mxu0 0
    %2272 = vmatpush1.bf16.msra.mxu0 0
    %2273 = vmatprep.subr.bf16.mxu0 0
    %2274 = vmatpush1.bf16.msra.mxu0 0
    %2275 = vmatprep.mubr.bf16.mxu0 0
    %2276 = vmatmul.mubr.bf16.gmra.mrb[0].mxu0 %v2119
    %v2277 = vpop.f32.mrb[0].mxu0
    %v2278 = vadd.f32 %v2196, %v2277
    %v2279 = vpop.f32.mrb[0].mxu0
    %v2280 = vadd.f32 %v2198, %v2279
    %v2281 = vpop.f32.mrb[0].mxu0
    %v2282 = vpop.f32.mrb[0].mxu0
    %2283 = vdwg.mxu0
    %v2284 = vadd.f32 %v2237, %v660
    %v2285 = vadd.f32 %v2239, %v664
    %v2286 = vadd.f32 %v2278, %v668
    %v2287 = vadd.f32 %v2280, %v672
    %v2288 = vxor.u32 %v2284, 2147483648
    %v2289 = vmul.f32 %v2288, 1.442695
    %v2290 = vpow.pop %v2289
    %v2291 = vadd.f32 %v2290, 1.0
    %v2292 = vrcp.pop %v2291
    %v2293 = vmul.f32 1.0, %v2292
    %v2294 = vxor.u32 %v2285, 2147483648
    %v2295 = vmul.f32 %v2294, 1.442695
    %v2296 = vpow.pop %v2295
    %v2297 = vadd.f32 %v2296, 1.0
    %v2298 = vrcp.pop %v2297
    %v2299 = vmul.f32 1.0, %v2298
    %v2300 = vtanh.pop %v2286
    %v2301 = vxor.u32 %v2287, 2147483648
    %v2302 = vmul.f32 %v2301, 1.442695
    %v2303 = vpow.pop %v2302
    %v2304 = vadd.f32 %v2303, 1.0
    %v2305 = vrcp.pop %v2304
    %v2306 = vmul.f32 1.0, %v2305
    %v2307 = vmul.f32 %v2299, %v1486
    %v2308 = vmul.f32 %v2293, %v2300
    %v2309 = vadd.f32 %v2307, %v2308
    %v2310 = vtanh.pop %v2309
    %v2311 = vmul.f32 %v2306, %v2310
    %v2312 = vpack.c.bf16 %v2311, %v2311
    %v2313 = vpack.c.bf16 %v2001, %v2001
    %2314 = vmatprep.subr.bf16.mxu0 %v1587
    %2315 = vmatpush1.bf16.msra.mxu0 %v1586
    %2316 = vmatprep.subr.bf16.mxu0 %v1591
    %2317 = vmatpush1.bf16.msra.mxu0 %v1590
    %2318 = vmatprep.subr.bf16.mxu0 %v1595
    %2319 = vmatpush1.bf16.msra.mxu0 %v1594
    %2320 = vmatprep.subr.bf16.mxu0 %v1599
    %2321 = vmatpush1.bf16.msra.mxu0 %v1598
    %2322 = vmatprep.subr.bf16.mxu0 %v1603
    %2323 = vmatpush1.bf16.msra.mxu0 %v1602
    %2324 = vmatprep.subr.bf16.mxu0 %v1607
    %2325 = vmatpush1.bf16.msra.mxu0 %v1606
    %2326 = vmatprep.subr.bf16.mxu0 %v1611
    %2327 = vmatpush1.bf16.msra.mxu0 %v1610
    %2328 = vmatprep.subr.bf16.mxu0 %v1615
    %2329 = vmatpush1.bf16.msra.mxu0 %v1614
    %2330 = vmatprep.subr.bf16.mxu0 0
    %2331 = vmatpush1.bf16.msra.mxu0 0
    %2332 = vmatprep.subr.bf16.mxu0 0
    %2333 = vmatpush1.bf16.msra.mxu0 0
    %2334 = vmatprep.subr.bf16.mxu0 0
    %2335 = vmatpush1.bf16.msra.mxu0 0
    %2336 = vmatprep.subr.bf16.mxu0 0
    %2337 = vmatpush1.bf16.msra.mxu0 0
    %2338 = vmatprep.subr.bf16.mxu0 0
    %2339 = vmatpush1.bf16.msra.mxu0 0
    %2340 = vmatprep.subr.bf16.mxu0 0
    %2341 = vmatpush1.bf16.msra.mxu0 0
    %2342 = vmatprep.subr.bf16.mxu0 0
    %2343 = vmatpush1.bf16.msra.mxu0 0
    %2344 = vmatprep.subr.bf16.mxu0 0
    %2345 = vmatpush1.bf16.msra.mxu0 0
    %2346 = vmatprep.mubr.bf16.mxu0 0
    %2347 = vmatmul.mubr.bf16.gmra.mrb[0].mxu0 %v2313
    %v2348 = vpop.f32.mrb[0].mxu0
    %v2349 = vadd.f32 0.0, %v2348
    %v2350 = vpop.f32.mrb[0].mxu0
    %v2351 = vadd.f32 0.0, %v2350
    %v2352 = vpop.f32.mrb[0].mxu0
    %v2353 = vpop.f32.mrb[0].mxu0
    %2354 = vdwg.mxu0
    %2355 = vmatprep.subr.bf16.mxu0 %v1589
    %2356 = vmatpush1.bf16.msra.mxu0 %v1588
    %2357 = vmatprep.subr.bf16.mxu0 %v1593
    %2358 = vmatpush1.bf16.msra.mxu0 %v1592
    %2359 = vmatprep.subr.bf16.mxu0 %v1597
    %2360 = vmatpush1.bf16.msra.mxu0 %v1596
    %2361 = vmatprep.subr.bf16.mxu0 %v1601
    %2362 = vmatpush1.bf16.msra.mxu0 %v1600
    %2363 = vmatprep.subr.bf16.mxu0 %v1605
    %2364 = vmatpush1.bf16.msra.mxu0 %v1604
    %2365 = vmatprep.subr.bf16.mxu0 %v1609
    %2366 = vmatpush1.bf16.msra.mxu0 %v1608
    %2367 = vmatprep.subr.bf16.mxu0 %v1613
    %2368 = vmatpush1.bf16.msra.mxu0 %v1612
    %2369 = vmatprep.subr.bf16.mxu0 %v1617
    %2370 = vmatpush1.bf16.msra.mxu0 %v1616
    %2371 = vmatprep.subr.bf16.mxu0 0
    %2372 = vmatpush1.bf16.msra.mxu0 0
    %2373 = vmatprep.subr.bf16.mxu0 0
    %2374 = vmatpush1.bf16.msra.mxu0 0
    %2375 = vmatprep.subr.bf16.mxu0 0
    %2376 = vmatpush1.bf16.msra.mxu0 0
    %2377 = vmatprep.subr.bf16.mxu0 0
    %2378 = vmatpush1.bf16.msra.mxu0 0
    %2379 = vmatprep.subr.bf16.mxu0 0
    %2380 = vmatpush1.bf16.msra.mxu0 0
    %2381 = vmatprep.subr.bf16.mxu0 0
    %2382 = vmatpush1.bf16.msra.mxu0 0
    %2383 = vmatprep.subr.bf16.mxu0 0
    %2384 = vmatpush1.bf16.msra.mxu0 0
    %2385 = vmatprep.subr.bf16.mxu0 0
    %2386 = vmatpush1.bf16.msra.mxu0 0
    %2387 = vmatprep.mubr.bf16.mxu0 0
    %2388 = vmatmul.mubr.bf16.gmra.mrb[0].mxu0 %v2313
    %v2389 = vpop.f32.mrb[0].mxu0
    %v2390 = vadd.f32 0.0, %v2389
    %v2391 = vpop.f32.mrb[0].mxu0
    %v2392 = vadd.f32 0.0, %v2391
    %v2393 = vpop.f32.mrb[0].mxu0
    %v2394 = vpop.f32.mrb[0].mxu0
    %2395 = vdwg.mxu0
    %2396 = vmatprep.subr.bf16.mxu0 %v1829
    %2397 = vmatpush1.bf16.msra.mxu0 %v1828
    %2398 = vmatprep.subr.bf16.mxu0 %v1833
    %2399 = vmatpush1.bf16.msra.mxu0 %v1832
    %2400 = vmatprep.subr.bf16.mxu0 %v1837
    %2401 = vmatpush1.bf16.msra.mxu0 %v1836
    %2402 = vmatprep.subr.bf16.mxu0 %v1841
    %2403 = vmatpush1.bf16.msra.mxu0 %v1840
    %2404 = vmatprep.subr.bf16.mxu0 %v1845
    %2405 = vmatpush1.bf16.msra.mxu0 %v1844
    %2406 = vmatprep.subr.bf16.mxu0 %v1849
    %2407 = vmatpush1.bf16.msra.mxu0 %v1848
    %2408 = vmatprep.subr.bf16.mxu0 %v1853
    %2409 = vmatpush1.bf16.msra.mxu0 %v1852
    %2410 = vmatprep.subr.bf16.mxu0 %v1857
    %2411 = vmatpush1.bf16.msra.mxu0 %v1856
    %2412 = vmatprep.subr.bf16.mxu0 0
    %2413 = vmatpush1.bf16.msra.mxu0 0
    %2414 = vmatprep.subr.bf16.mxu0 0
    %2415 = vmatpush1.bf16.msra.mxu0 0
    %2416 = vmatprep.subr.bf16.mxu0 0
    %2417 = vmatpush1.bf16.msra.mxu0 0
    %2418 = vmatprep.subr.bf16.mxu0 0
    %2419 = vmatpush1.bf16.msra.mxu0 0
    %2420 = vmatprep.subr.bf16.mxu0 0
    %2421 = vmatpush1.bf16.msra.mxu0 0
    %2422 = vmatprep.subr.bf16.mxu0 0
    %2423 = vmatpush1.bf16.msra.mxu0 0
    %2424 = vmatprep.subr.bf16.mxu0 0
    %2425 = vmatpush1.bf16.msra.mxu0 0
    %2426 = vmatprep.subr.bf16.mxu0 0
    %2427 = vmatpush1.bf16.msra.mxu0 0
    %2428 = vmatprep.mubr.bf16.mxu0 0
    %2429 = vmatmul.mubr.bf16.gmra.mrb[0].mxu0 %v2312
    %v2430 = vpop.f32.mrb[0].mxu0
    %v2431 = vadd.f32 %v2349, %v2430
    %v2432 = vpop.f32.mrb[0].mxu0
    %v2433 = vadd.f32 %v2351, %v2432
    %v2434 = vpop.f32.mrb[0].mxu0
    %v2435 = vpop.f32.mrb[0].mxu0
    %2436 = vdwg.mxu0
    %2437 = vmatprep.subr.bf16.mxu0 %v1831
    %2438 = vmatpush1.bf16.msra.mxu0 %v1830
    %2439 = vmatprep.subr.bf16.mxu0 %v1835
    %2440 = vmatpush1.bf16.msra.mxu0 %v1834
    %2441 = vmatprep.subr.bf16.mxu0 %v1839
    %2442 = vmatpush1.bf16.msra.mxu0 %v1838
    %2443 = vmatprep.subr.bf16.mxu0 %v1843
    %2444 = vmatpush1.bf16.msra.mxu0 %v1842
    %2445 = vmatprep.subr.bf16.mxu0 %v1847
    %2446 = vmatpush1.bf16.msra.mxu0 %v1846
    %2447 = vmatprep.subr.bf16.mxu0 %v1851
    %2448 = vmatpush1.bf16.msra.mxu0 %v1850
    %2449 = vmatprep.subr.bf16.mxu0 %v1855
    %2450 = vmatpush1.bf16.msra.mxu0 %v1854
    %2451 = vmatprep.subr.bf16.mxu0 %v1859
    %2452 = vmatpush1.bf16.msra.mxu0 %v1858
    %2453 = vmatprep.subr.bf16.mxu0 0
    %2454 = vmatpush1.bf16.msra.mxu0 0
    %2455 = vmatprep.subr.bf16.mxu0 0
    %2456 = vmatpush1.bf16.msra.mxu0 0
    %2457 = vmatprep.subr.bf16.mxu0 0
    %2458 = vmatpush1.bf16.msra.mxu0 0
    %2459 = vmatprep.subr.bf16.mxu0 0
    %2460 = vmatpush1.bf16.msra.mxu0 0
    %2461 = vmatprep.subr.bf16.mxu0 0
    %2462 = vmatpush1.bf16.msra.mxu0 0
    %2463 = vmatprep.subr.bf16.mxu0 0
    %2464 = vmatpush1.bf16.msra.mxu0 0
    %2465 = vmatprep.subr.bf16.mxu0 0
    %2466 = vmatpush1.bf16.msra.mxu0 0
    %2467 = vmatprep.subr.bf16.mxu0 0
    %2468 = vmatpush1.bf16.msra.mxu0 0
    %2469 = vmatprep.mubr.bf16.mxu0 0
    %2470 = vmatmul.mubr.bf16.gmra.mrb[0].mxu0 %v2312
    %v2471 = vpop.f32.mrb[0].mxu0
    %v2472 = vadd.f32 %v2390, %v2471
    %v2473 = vpop.f32.mrb[0].mxu0
    %v2474 = vadd.f32 %v2392, %v2473
    %v2475 = vpop.f32.mrb[0].mxu0
    %v2476 = vpop.f32.mrb[0].mxu0
    %2477 = vdwg.mxu0
    %v2478 = vadd.f32 %v2431, %v682
    %v2479 = vadd.f32 %v2433, %v686
    %v2480 = vadd.f32 %v2472, %v690
    %v2481 = vadd.f32 %v2474, %v694
    %v2482 = vxor.u32 %v2478, 2147483648
    %v2483 = vmul.f32 %v2482, 1.442695
    %v2484 = vpow.pop %v2483
    %v2485 = vadd.f32 %v2484, 1.0
    %v2486 = vrcp.pop %v2485
    %v2487 = vmul.f32 1.0, %v2486
    %v2488 = vxor.u32 %v2479, 2147483648
    %v2489 = vmul.f32 %v2488, 1.442695
    %v2490 = vpow.pop %v2489
    %v2491 = vadd.f32 %v2490, 1.0
    %v2492 = vrcp.pop %v2491
    %v2493 = vmul.f32 1.0, %v2492
    %v2494 = vtanh.pop %v2480
    %v2495 = vxor.u32 %v2481, 2147483648
    %v2496 = vmul.f32 %v2495, 1.442695
    %v2497 = vpow.pop %v2496
    %v2498 = vadd.f32 %v2497, 1.0
    %v2499 = vrcp.pop %v2498
    %v2500 = vmul.f32 1.0, %v2499
    %v2501 = vmul.f32 %v2493, %v1999
    %v2502 = vmul.f32 %v2487, %v2494
    %v2503 = vadd.f32 %v2501, %v2502
    %v2504 = vtanh.pop %v2503
    %v2505 = vmul.f32 %v2500, %v2504
    %s2506 = smul.u32 2, 4
    %s2507 = smul.addr %s2506, 8
    %s2508 = scalar_lea.vmem [#allocation2], %s2507
    %v2509 = vld [vmem:[%s2508] sm:$0xff]
    %v2510 = vld [vmem:[%s2508 + $0x8] sm:$0xff]
    %v2511 = vld [vmem:[%s2508 + $0x10] sm:$0xff]
    %v2512 = vld [vmem:[%s2508 + $0x18] sm:$0xff]
    %2513 = vmatprep.subr.bf16.mxu0 %v803
    %2514 = vmatpush1.bf16.msra.mxu0 %v802
    %2515 = vmatprep.subr.bf16.mxu0 %v807
    %2516 = vmatpush1.bf16.msra.mxu0 %v806
    %2517 = vmatprep.subr.bf16.mxu0 %v811
    %2518 = vmatpush1.bf16.msra.mxu0 %v810
    %2519 = vmatprep.subr.bf16.mxu0 %v815
    %2520 = vmatpush1.bf16.msra.mxu0 %v814
    %2521 = vmatprep.subr.bf16.mxu0 %v819
    %2522 = vmatpush1.bf16.msra.mxu0 %v818
    %2523 = vmatprep.subr.bf16.mxu0 %v823
    %2524 = vmatpush1.bf16.msra.mxu0 %v822
    %2525 = vmatprep.subr.bf16.mxu0 %v827
    %2526 = vmatpush1.bf16.msra.mxu0 %v826
    %2527 = vmatprep.subr.bf16.mxu0 %v831
    %2528 = vmatpush1.bf16.msra.mxu0 %v830
    %2529 = vmatprep.subr.bf16.mxu0 0
    %2530 = vmatpush1.bf16.msra.mxu0 0
    %2531 = vmatprep.subr.bf16.mxu0 0
    %2532 = vmatpush1.bf16.msra.mxu0 0
    %2533 = vmatprep.subr.bf16.mxu0 0
    %2534 = vmatpush1.bf16.msra.mxu0 0
    %2535 = vmatprep.subr.bf16.mxu0 0
    %2536 = vmatpush1.bf16.msra.mxu0 0
    %2537 = vmatprep.subr.bf16.mxu0 0
    %2538 = vmatpush1.bf16.msra.mxu0 0
    %2539 = vmatprep.subr.bf16.mxu0 0
    %2540 = vmatpush1.bf16.msra.mxu0 0
    %2541 = vmatprep.subr.bf16.mxu0 0
    %2542 = vmatpush1.bf16.msra.mxu0 0
    %2543 = vmatprep.subr.bf16.mxu0 0
    %2544 = vmatpush1.bf16.msra.mxu0 0
    %2545 = vmatprep.mubr.bf16.mxu0 0
    %2546 = vmatmul.mubr.bf16.gmra.mrb[0].mxu0 %v2119
    %v2547 = vpop.f32.mrb[0].mxu0
    %v2548 = vadd.f32 0.0, %v2547
    %v2549 = vpop.f32.mrb[0].mxu0
    %v2550 = vadd.f32 0.0, %v2549
    %v2551 = vpop.f32.mrb[0].mxu0
    %v2552 = vpop.f32.mrb[0].mxu0
    %2553 = vdwg.mxu0
    %2554 = vmatprep.subr.bf16.mxu0 %v805
    %2555 = vmatpush1.bf16.msra.mxu0 %v804
    %2556 = vmatprep.subr.bf16.mxu0 %v809
    %2557 = vmatpush1.bf16.msra.mxu0 %v808
    %2558 = vmatprep.subr.bf16.mxu0 %v813
    %2559 = vmatpush1.bf16.msra.mxu0 %v812
    %2560 = vmatprep.subr.bf16.mxu0 %v817
    %2561 = vmatpush1.bf16.msra.mxu0 %v816
    %2562 = vmatprep.subr.bf16.mxu0 %v821
    %2563 = vmatpush1.bf16.msra.mxu0 %v820
    %2564 = vmatprep.subr.bf16.mxu0 %v825
    %2565 = vmatpush1.bf16.msra.mxu0 %v824
    %2566 = vmatprep.subr.bf16.mxu0 %v829
    %2567 = vmatpush1.bf16.msra.mxu0 %v828
    %2568 = vmatprep.subr.bf16.mxu0 %v833
    %2569 = vmatpush1.bf16.msra.mxu0 %v832
    %2570 = vmatprep.subr.bf16.mxu0 0
    %2571 = vmatpush1.bf16.msra.mxu0 0
    %2572 = vmatprep.subr.bf16.mxu0 0
    %2573 = vmatpush1.bf16.msra.mxu0 0
    %2574 = vmatprep.subr.bf16.mxu0 0
    %2575 = vmatpush1.bf16.msra.mxu0 0
    %2576 = vmatprep.subr.bf16.mxu0 0
    %2577 = vmatpush1.bf16.msra.mxu0 0
    %2578 = vmatprep.subr.bf16.mxu0 0
    %2579 = vmatpush1.bf16.msra.mxu0 0
    %2580 = vmatprep.subr.bf16.mxu0 0
    %2581 = vmatpush1.bf16.msra.mxu0 0
    %2582 = vmatprep.subr.bf16.mxu0 0
    %2583 = vmatpush1.bf16.msra.mxu0 0
    %2584 = vmatprep.subr.bf16.mxu0 0
    %2585 = vmatpush1.bf16.msra.mxu0 0
    %2586 = vmatprep.mubr.bf16.mxu0 0
    %2587 = vmatmul.mubr.bf16.gmra.mrb[0].mxu0 %v2119
    %v2588 = vpop.f32.mrb[0].mxu0
    %v2589 = vadd.f32 0.0, %v2588
    %v2590 = vpop.f32.mrb[0].mxu0
    %v2591 = vadd.f32 0.0, %v2590
    %v2592 = vpop.f32.mrb[0].mxu0
    %v2593 = vpop.f32.mrb[0].mxu0
    %2594 = vdwg.mxu0
    %v2595 = vadd.f32 %v2509, %v2548
    %v2596 = vadd.f32 %v2510, %v2550
    %v2597 = vadd.f32 %v2511, %v2589
    %v2598 = vadd.f32 %v2512, %v2591
    %v2599 = vxor.u32 %v2595, 2147483648
    %v2600 = vmul.f32 %v2599, 1.442695
    %v2601 = vpow.pop %v2600
    %v2602 = vadd.f32 %v2601, 1.0
    %v2603 = vrcp.pop %v2602
    %v2604 = vmul.f32 1.0, %v2603
    %v2605 = vxor.u32 %v2596, 2147483648
    %v2606 = vmul.f32 %v2605, 1.442695
    %v2607 = vpow.pop %v2606
    %v2608 = vadd.f32 %v2607, 1.0
    %v2609 = vrcp.pop %v2608
    %v2610 = vmul.f32 1.0, %v2609
    %v2611 = vtanh.pop %v2597
    %v2612 = vxor.u32 %v2598, 2147483648
    %v2613 = vmul.f32 %v2612, 1.442695
    %v2614 = vpow.pop %v2613
    %v2615 = vadd.f32 %v2614, 1.0
    %v2616 = vrcp.pop %v2615
    %v2617 = vmul.f32 1.0, %v2616
    %v2618 = vmul.f32 %v2610, %v2116
    %v2619 = vmul.f32 %v2604, %v2611
    %v2620 = vadd.f32 %v2618, %v2619
    %v2621 = vtanh.pop %v2620
    %v2622 = vmul.f32 %v2617, %v2621
    %v2623 = vpack.c.bf16 %v2622, %v2622
    %2624 = vmatprep.subr.bf16.mxu0 %v1074
    %2625 = vmatpush1.bf16.msra.mxu0 %v1073
    %2626 = vmatprep.subr.bf16.mxu0 %v1078
    %2627 = vmatpush1.bf16.msra.mxu0 %v1077
    %2628 = vmatprep.subr.bf16.mxu0 %v1082
    %2629 = vmatpush1.bf16.msra.mxu0 %v1081
    %2630 = vmatprep.subr.bf16.mxu0 %v1086
    %2631 = vmatpush1.bf16.msra.mxu0 %v1085
    %2632 = vmatprep.subr.bf16.mxu0 %v1090
    %2633 = vmatpush1.bf16.msra.mxu0 %v1089
    %2634 = vmatprep.subr.bf16.mxu0 %v1094
    %2635 = vmatpush1.bf16.msra.mxu0 %v1093
    %2636 = vmatprep.subr.bf16.mxu0 %v1098
    %2637 = vmatpush1.bf16.msra.mxu0 %v1097
    %2638 = vmatprep.subr.bf16.mxu0 %v1102
    %2639 = vmatpush1.bf16.msra.mxu0 %v1101
    %2640 = vmatprep.subr.bf16.mxu0 0
    %2641 = vmatpush1.bf16.msra.mxu0 0
    %2642 = vmatprep.subr.bf16.mxu0 0
    %2643 = vmatpush1.bf16.msra.mxu0 0
    %2644 = vmatprep.subr.bf16.mxu0 0
    %2645 = vmatpush1.bf16.msra.mxu0 0
    %2646 = vmatprep.subr.bf16.mxu0 0
    %2647 = vmatpush1.bf16.msra.mxu0 0
    %2648 = vmatprep.subr.bf16.mxu0 0
    %2649 = vmatpush1.bf16.msra.mxu0 0
    %2650 = vmatprep.subr.bf16.mxu0 0
    %2651 = vmatpush1.bf16.msra.mxu0 0
    %2652 = vmatprep.subr.bf16.mxu0 0
    %2653 = vmatpush1.bf16.msra.mxu0 0
    %2654 = vmatprep.subr.bf16.mxu0 0
    %2655 = vmatpush1.bf16.msra.mxu0 0
    %2656 = vmatprep.mubr.bf16.mxu0 0
    %2657 = vmatmul.mubr.bf16.gmra.mrb[0].mxu0 %v2312
    %v2658 = vpop.f32.mrb[0].mxu0
    %v2659 = vadd.f32 0.0, %v2658
    %v2660 = vpop.f32.mrb[0].mxu0
    %v2661 = vadd.f32 0.0, %v2660
    %v2662 = vpop.f32.mrb[0].mxu0
    %v2663 = vpop.f32.mrb[0].mxu0
    %2664 = vdwg.mxu0
    %2665 = vmatprep.subr.bf16.mxu0 %v1076
    %2666 = vmatpush1.bf16.msra.mxu0 %v1075
    %2667 = vmatprep.subr.bf16.mxu0 %v1080
    %2668 = vmatpush1.bf16.msra.mxu0 %v1079
    %2669 = vmatprep.subr.bf16.mxu0 %v1084
    %2670 = vmatpush1.bf16.msra.mxu0 %v1083
    %2671 = vmatprep.subr.bf16.mxu0 %v1088
    %2672 = vmatpush1.bf16.msra.mxu0 %v1087
    %2673 = vmatprep.subr.bf16.mxu0 %v1092
    %2674 = vmatpush1.bf16.msra.mxu0 %v1091
    %2675 = vmatprep.subr.bf16.mxu0 %v1096
    %2676 = vmatpush1.bf16.msra.mxu0 %v1095
    %2677 = vmatprep.subr.bf16.mxu0 %v1100
    %2678 = vmatpush1.bf16.msra.mxu0 %v1099
    %2679 = vmatprep.subr.bf16.mxu0 %v1104
    %2680 = vmatpush1.bf16.msra.mxu0 %v1103
    %2681 = vmatprep.subr.bf16.mxu0 0
    %2682 = vmatpush1.bf16.msra.mxu0 0
    %2683 = vmatprep.subr.bf16.mxu0 0
    %2684 = vmatpush1.bf16.msra.mxu0 0
    %2685 = vmatprep.subr.bf16.mxu0 0
    %2686 = vmatpush1.bf16.msra.mxu0 0
    %2687 = vmatprep.subr.bf16.mxu0 0
    %2688 = vmatpush1.bf16.msra.mxu0 0
    %2689 = vmatprep.subr.bf16.mxu0 0
    %2690 = vmatpush1.bf16.msra.mxu0 0
    %2691 = vmatprep.subr.bf16.mxu0 0
    %2692 = vmatpush1.bf16.msra.mxu0 0
    %2693 = vmatprep.subr.bf16.mxu0 0
    %2694 = vmatpush1.bf16.msra.mxu0 0
    %2695 = vmatprep.subr.bf16.mxu0 0
    %2696 = vmatpush1.bf16.msra.mxu0 0
    %2697 = vmatprep.mubr.bf16.mxu0 0
    %2698 = vmatmul.mubr.bf16.gmra.mrb[0].mxu0 %v2312
    %v2699 = vpop.f32.mrb[0].mxu0
    %v2700 = vadd.f32 0.0, %v2699
    %v2701 = vpop.f32.mrb[0].mxu0
    %v2702 = vadd.f32 0.0, %v2701
    %v2703 = vpop.f32.mrb[0].mxu0
    %v2704 = vpop.f32.mrb[0].mxu0
    %2705 = vdwg.mxu0
    %2706 = vmatprep.subr.bf16.mxu0 %v1316
    %2707 = vmatpush1.bf16.msra.mxu0 %v1315
    %2708 = vmatprep.subr.bf16.mxu0 %v1320
    %2709 = vmatpush1.bf16.msra.mxu0 %v1319
    %2710 = vmatprep.subr.bf16.mxu0 %v1324
    %2711 = vmatpush1.bf16.msra.mxu0 %v1323
    %2712 = vmatprep.subr.bf16.mxu0 %v1328
    %2713 = vmatpush1.bf16.msra.mxu0 %v1327
    %2714 = vmatprep.subr.bf16.mxu0 %v1332
    %2715 = vmatpush1.bf16.msra.mxu0 %v1331
    %2716 = vmatprep.subr.bf16.mxu0 %v1336
    %2717 = vmatpush1.bf16.msra.mxu0 %v1335
    %2718 = vmatprep.subr.bf16.mxu0 %v1340
    %2719 = vmatpush1.bf16.msra.mxu0 %v1339
    %2720 = vmatprep.subr.bf16.mxu0 %v1344
    %2721 = vmatpush1.bf16.msra.mxu0 %v1343
    %2722 = vmatprep.subr.bf16.mxu0 0
    %2723 = vmatpush1.bf16.msra.mxu0 0
    %2724 = vmatprep.subr.bf16.mxu0 0
    %2725 = vmatpush1.bf16.msra.mxu0 0
    %2726 = vmatprep.subr.bf16.mxu0 0
    %2727 = vmatpush1.bf16.msra.mxu0 0
    %2728 = vmatprep.subr.bf16.mxu0 0
    %2729 = vmatpush1.bf16.msra.mxu0 0
    %2730 = vmatprep.subr.bf16.mxu0 0
    %2731 = vmatpush1.bf16.msra.mxu0 0
    %2732 = vmatprep.subr.bf16.mxu0 0
    %2733 = vmatpush1.bf16.msra.mxu0 0
    %2734 = vmatprep.subr.bf16.mxu0 0
    %2735 = vmatpush1.bf16.msra.mxu0 0
    %2736 = vmatprep.subr.bf16.mxu0 0
    %2737 = vmatpush1.bf16.msra.mxu0 0
    %2738 = vmatprep.mubr.bf16.mxu0 0
    %2739 = vmatmul.mubr.bf16.gmra.mrb[0].mxu0 %v2623
    %v2740 = vpop.f32.mrb[0].mxu0
    %v2741 = vadd.f32 %v2659, %v2740
    %v2742 = vpop.f32.mrb[0].mxu0
    %v2743 = vadd.f32 %v2661, %v2742
    %v2744 = vpop.f32.mrb[0].mxu0
    %v2745 = vpop.f32.mrb[0].mxu0
    %2746 = vdwg.mxu0
    %2747 = vmatprep.subr.bf16.mxu0 %v1318
    %2748 = vmatpush1.bf16.msra.mxu0 %v1317
    %2749 = vmatprep.subr.bf16.mxu0 %v1322
    %2750 = vmatpush1.bf16.msra.mxu0 %v1321
    %2751 = vmatprep.subr.bf16.mxu0 %v1326
    %2752 = vmatpush1.bf16.msra.mxu0 %v1325
    %2753 = vmatprep.subr.bf16.mxu0 %v1330
    %2754 = vmatpush1.bf16.msra.mxu0 %v1329
    %2755 = vmatprep.subr.bf16.mxu0 %v1334
    %2756 = vmatpush1.bf16.msra.mxu0 %v1333
    %2757 = vmatprep.subr.bf16.mxu0 %v1338
    %2758 = vmatpush1.bf16.msra.mxu0 %v1337
    %2759 = vmatprep.subr.bf16.mxu0 %v1342
    %2760 = vmatpush1.bf16.msra.mxu0 %v1341
    %2761 = vmatprep.subr.bf16.mxu0 %v1346
    %2762 = vmatpush1.bf16.msra.mxu0 %v1345
    %2763 = vmatprep.subr.bf16.mxu0 0
    %2764 = vmatpush1.bf16.msra.mxu0 0
    %2765 = vmatprep.subr.bf16.mxu0 0
    %2766 = vmatpush1.bf16.msra.mxu0 0
    %2767 = vmatprep.subr.bf16.mxu0 0
    %2768 = vmatpush1.bf16.msra.mxu0 0
    %2769 = vmatprep.subr.bf16.mxu0 0
    %2770 = vmatpush1.bf16.msra.mxu0 0
    %2771 = vmatprep.subr.bf16.mxu0 0
    %2772 = vmatpush1.bf16.msra.mxu0 0
    %2773 = vmatprep.subr.bf16.mxu0 0
    %2774 = vmatpush1.bf16.msra.mxu0 0
    %2775 = vmatprep.subr.bf16.mxu0 0
    %2776 = vmatpush1.bf16.msra.mxu0 0
    %2777 = vmatprep.subr.bf16.mxu0 0
    %2778 = vmatpush1.bf16.msra.mxu0 0
    %2779 = vmatprep.mubr.bf16.mxu0 0
    %2780 = vmatmul.mubr.bf16.gmra.mrb[0].mxu0 %v2623
    %v2781 = vpop.f32.mrb[0].mxu0
    %v2782 = vadd.f32 %v2700, %v2781
    %v2783 = vpop.f32.mrb[0].mxu0
    %v2784 = vadd.f32 %v2702, %v2783
    %v2785 = vpop.f32.mrb[0].mxu0
    %v2786 = vpop.f32.mrb[0].mxu0
    %2787 = vdwg.mxu0
    %v2788 = vadd.f32 %v2741, %v660
    %v2789 = vadd.f32 %v2743, %v664
    %v2790 = vadd.f32 %v2782, %v668
    %v2791 = vadd.f32 %v2784, %v672
    %v2792 = vxor.u32 %v2788, 2147483648
    %v2793 = vmul.f32 %v2792, 1.442695
    %v2794 = vpow.pop %v2793
    %v2795 = vadd.f32 %v2794, 1.0
    %v2796 = vrcp.pop %v2795
    %v2797 = vmul.f32 1.0, %v2796
    %v2798 = vxor.u32 %v2789, 2147483648
    %v2799 = vmul.f32 %v2798, 1.442695
    %v2800 = vpow.pop %v2799
    %v2801 = vadd.f32 %v2800, 1.0
    %v2802 = vrcp.pop %v2801
    %v2803 = vmul.f32 1.0, %v2802
    %v2804 = vtanh.pop %v2790
    %v2805 = vxor.u32 %v2791, 2147483648
    %v2806 = vmul.f32 %v2805, 1.442695
    %v2807 = vpow.pop %v2806
    %v2808 = vadd.f32 %v2807, 1.0
    %v2809 = vrcp.pop %v2808
    %v2810 = vmul.f32 1.0, %v2809
    %v2811 = vmul.f32 %v2803, %v2309
    %v2812 = vmul.f32 %v2797, %v2804
    %v2813 = vadd.f32 %v2811, %v2812
    %v2814 = vtanh.pop %v2813
    %v2815 = vmul.f32 %v2810, %v2814
    %v2816 = vpack.c.bf16 %v2815, %v2815
    %v2817 = vpack.c.bf16 %v2505, %v2505
    %2818 = vmatprep.subr.bf16.mxu0 %v1587
    %2819 = vmatpush1.bf16.msra.mxu0 %v1586
    %2820 = vmatprep.subr.bf16.mxu0 %v1591
    %2821 = vmatpush1.bf16.msra.mxu0 %v1590
    %2822 = vmatprep.subr.bf16.mxu0 %v1595
    %2823 = vmatpush1.bf16.msra.mxu0 %v1594
    %2824 = vmatprep.subr.bf16.mxu0 %v1599
    %2825 = vmatpush1.bf16.msra.mxu0 %v1598
    %2826 = vmatprep.subr.bf16.mxu0 %v1603
    %2827 = vmatpush1.bf16.msra.mxu0 %v1602
    %2828 = vmatprep.subr.bf16.mxu0 %v1607
    %2829 = vmatpush1.bf16.msra.mxu0 %v1606
    %2830 = vmatprep.subr.bf16.mxu0 %v1611
    %2831 = vmatpush1.bf16.msra.mxu0 %v1610
    %2832 = vmatprep.subr.bf16.mxu0 %v1615
    %2833 = vmatpush1.bf16.msra.mxu0 %v1614
    %2834 = vmatprep.subr.bf16.mxu0 0
    %2835 = vmatpush1.bf16.msra.mxu0 0
    %2836 = vmatprep.subr.bf16.mxu0 0
    %2837 = vmatpush1.bf16.msra.mxu0 0
    %2838 = vmatprep.subr.bf16.mxu0 0
    %2839 = vmatpush1.bf16.msra.mxu0 0
    %2840 = vmatprep.subr.bf16.mxu0 0
    %2841 = vmatpush1.bf16.msra.mxu0 0
    %2842 = vmatprep.subr.bf16.mxu0 0
    %2843 = vmatpush1.bf16.msra.mxu0 0
    %2844 = vmatprep.subr.bf16.mxu0 0
    %2845 = vmatpush1.bf16.msra.mxu0 0
    %2846 = vmatprep.subr.bf16.mxu0 0
    %2847 = vmatpush1.bf16.msra.mxu0 0
    %2848 = vmatprep.subr.bf16.mxu0 0
    %2849 = vmatpush1.bf16.msra.mxu0 0
    %2850 = vmatprep.mubr.bf16.mxu0 0
    %2851 = vmatmul.mubr.bf16.gmra.mrb[0].mxu0 %v2817
    %v2852 = vpop.f32.mrb[0].mxu0
    %v2853 = vadd.f32 0.0, %v2852
    %v2854 = vpop.f32.mrb[0].mxu0
    %v2855 = vadd.f32 0.0, %v2854
    %v2856 = vpop.f32.mrb[0].mxu0
    %v2857 = vpop.f32.mrb[0].mxu0
    %2858 = vdwg.mxu0
    %2859 = vmatprep.subr.bf16.mxu0 %v1589
    %2860 = vmatpush1.bf16.msra.mxu0 %v1588
    %2861 = vmatprep.subr.bf16.mxu0 %v1593
    %2862 = vmatpush1.bf16.msra.mxu0 %v1592
    %2863 = vmatprep.subr.bf16.mxu0 %v1597
    %2864 = vmatpush1.bf16.msra.mxu0 %v1596
    %2865 = vmatprep.subr.bf16.mxu0 %v1601
    %2866 = vmatpush1.bf16.msra.mxu0 %v1600
    %2867 = vmatprep.subr.bf16.mxu0 %v1605
    %2868 = vmatpush1.bf16.msra.mxu0 %v1604
    %2869 = vmatprep.subr.bf16.mxu0 %v1609
    %2870 = vmatpush1.bf16.msra.mxu0 %v1608
    %2871 = vmatprep.subr.bf16.mxu0 %v1613
    %2872 = vmatpush1.bf16.msra.mxu0 %v1612
    %2873 = vmatprep.subr.bf16.mxu0 %v1617
    %2874 = vmatpush1.bf16.msra.mxu0 %v1616
    %2875 = vmatprep.subr.bf16.mxu0 0
    %2876 = vmatpush1.bf16.msra.mxu0 0
    %2877 = vmatprep.subr.bf16.mxu0 0
    %2878 = vmatpush1.bf16.msra.mxu0 0
    %2879 = vmatprep.subr.bf16.mxu0 0
    %2880 = vmatpush1.bf16.msra.mxu0 0
    %2881 = vmatprep.subr.bf16.mxu0 0
    %2882 = vmatpush1.bf16.msra.mxu0 0
    %2883 = vmatprep.subr.bf16.mxu0 0
    %2884 = vmatpush1.bf16.msra.mxu0 0
    %2885 = vmatprep.subr.bf16.mxu0 0
    %2886 = vmatpush1.bf16.msra.mxu0 0
    %2887 = vmatprep.subr.bf16.mxu0 0
    %2888 = vmatpush1.bf16.msra.mxu0 0
    %2889 = vmatprep.subr.bf16.mxu0 0
    %2890 = vmatpush1.bf16.msra.mxu0 0
    %2891 = vmatprep.mubr.bf16.mxu0 0
    %2892 = vmatmul.mubr.bf16.gmra.mrb[0].mxu0 %v2817
    %v2893 = vpop.f32.mrb[0].mxu0
    %v2894 = vadd.f32 0.0, %v2893
    %v2895 = vpop.f32.mrb[0].mxu0
    %v2896 = vadd.f32 0.0, %v2895
    %v2897 = vpop.f32.mrb[0].mxu0
    %v2898 = vpop.f32.mrb[0].mxu0
    %2899 = vdwg.mxu0
    %2900 = vmatprep.subr.bf16.mxu0 %v1829
    %2901 = vmatpush1.bf16.msra.mxu0 %v1828
    %2902 = vmatprep.subr.bf16.mxu0 %v1833
    %2903 = vmatpush1.bf16.msra.mxu0 %v1832
    %2904 = vmatprep.subr.bf16.mxu0 %v1837
    %2905 = vmatpush1.bf16.msra.mxu0 %v1836
    %2906 = vmatprep.subr.bf16.mxu0 %v1841
    %2907 = vmatpush1.bf16.msra.mxu0 %v1840
    %2908 = vmatprep.subr.bf16.mxu0 %v1845
    %2909 = vmatpush1.bf16.msra.mxu0 %v1844
    %2910 = vmatprep.subr.bf16.mxu0 %v1849
    %2911 = vmatpush1.bf16.msra.mxu0 %v1848
    %2912 = vmatprep.subr.bf16.mxu0 %v1853
    %2913 = vmatpush1.bf16.msra.mxu0 %v1852
    %2914 = vmatprep.subr.bf16.mxu0 %v1857
    %2915 = vmatpush1.bf16.msra.mxu0 %v1856
    %2916 = vmatprep.subr.bf16.mxu0 0
    %2917 = vmatpush1.bf16.msra.mxu0 0
    %2918 = vmatprep.subr.bf16.mxu0 0
    %2919 = vmatpush1.bf16.msra.mxu0 0
    %2920 = vmatprep.subr.bf16.mxu0 0
    %2921 = vmatpush1.bf16.msra.mxu0 0
    %2922 = vmatprep.subr.bf16.mxu0 0
    %2923 = vmatpush1.bf16.msra.mxu0 0
    %2924 = vmatprep.subr.bf16.mxu0 0
    %2925 = vmatpush1.bf16.msra.mxu0 0
    %2926 = vmatprep.subr.bf16.mxu0 0
    %2927 = vmatpush1.bf16.msra.mxu0 0
    %2928 = vmatprep.subr.bf16.mxu0 0
    %2929 = vmatpush1.bf16.msra.mxu0 0
    %2930 = vmatprep.subr.bf16.mxu0 0
    %2931 = vmatpush1.bf16.msra.mxu0 0
    %2932 = vmatprep.mubr.bf16.mxu0 0
    %2933 = vmatmul.mubr.bf16.gmra.mrb[0].mxu0 %v2816
    %v2934 = vpop.f32.mrb[0].mxu0
    %v2935 = vadd.f32 %v2853, %v2934
    %v2936 = vpop.f32.mrb[0].mxu0
    %v2937 = vadd.f32 %v2855, %v2936
    %v2938 = vpop.f32.mrb[0].mxu0
    %v2939 = vpop.f32.mrb[0].mxu0
    %2940 = vdwg.mxu0
    %2941 = vmatprep.subr.bf16.mxu0 %v1831
    %2942 = vmatpush1.bf16.msra.mxu0 %v1830
    %2943 = vmatprep.subr.bf16.mxu0 %v1835
    %2944 = vmatpush1.bf16.msra.mxu0 %v1834
    %2945 = vmatprep.subr.bf16.mxu0 %v1839
    %2946 = vmatpush1.bf16.msra.mxu0 %v1838
    %2947 = vmatprep.subr.bf16.mxu0 %v1843
    %2948 = vmatpush1.bf16.msra.mxu0 %v1842
    %2949 = vmatprep.subr.bf16.mxu0 %v1847
    %2950 = vmatpush1.bf16.msra.mxu0 %v1846
    %2951 = vmatprep.subr.bf16.mxu0 %v1851
    %2952 = vmatpush1.bf16.msra.mxu0 %v1850
    %2953 = vmatprep.subr.bf16.mxu0 %v1855
    %2954 = vmatpush1.bf16.msra.mxu0 %v1854
    %2955 = vmatprep.subr.bf16.mxu0 %v1859
    %2956 = vmatpush1.bf16.msra.mxu0 %v1858
    %2957 = vmatprep.subr.bf16.mxu0 0
    %2958 = vmatpush1.bf16.msra.mxu0 0
    %2959 = vmatprep.subr.bf16.mxu0 0
    %2960 = vmatpush1.bf16.msra.mxu0 0
    %2961 = vmatprep.subr.bf16.mxu0 0
    %2962 = vmatpush1.bf16.msra.mxu0 0
    %2963 = vmatprep.subr.bf16.mxu0 0
    %2964 = vmatpush1.bf16.msra.mxu0 0
    %2965 = vmatprep.subr.bf16.mxu0 0
    %2966 = vmatpush1.bf16.msra.mxu0 0
    %2967 = vmatprep.subr.bf16.mxu0 0
    %2968 = vmatpush1.bf16.msra.mxu0 0
    %2969 = vmatprep.subr.bf16.mxu0 0
    %2970 = vmatpush1.bf16.msra.mxu0 0
    %2971 = vmatprep.subr.bf16.mxu0 0
    %2972 = vmatpush1.bf16.msra.mxu0 0
    %2973 = vmatprep.mubr.bf16.mxu0 0
    %2974 = vmatmul.mubr.bf16.gmra.mrb[0].mxu0 %v2816
    %v2975 = vpop.f32.mrb[0].mxu0
    %v2976 = vadd.f32 %v2894, %v2975
    %v2977 = vpop.f32.mrb[0].mxu0
    %v2978 = vadd.f32 %v2896, %v2977
    %v2979 = vpop.f32.mrb[0].mxu0
    %v2980 = vpop.f32.mrb[0].mxu0
    %2981 = vdwg.mxu0
    %v2982 = vadd.f32 %v2935, %v682
    %v2983 = vadd.f32 %v2937, %v686
    %v2984 = vadd.f32 %v2976, %v690
    %v2985 = vadd.f32 %v2978, %v694
    %v2986 = vxor.u32 %v2982, 2147483648
    %v2987 = vmul.f32 %v2986, 1.442695
    %v2988 = vpow.pop %v2987
    %v2989 = vadd.f32 %v2988, 1.0
    %v2990 = vrcp.pop %v2989
    %v2991 = vmul.f32 1.0, %v2990
    %v2992 = vxor.u32 %v2983, 2147483648
    %v2993 = vmul.f32 %v2992, 1.442695
    %v2994 = vpow.pop %v2993
    %v2995 = vadd.f32 %v2994, 1.0
    %v2996 = vrcp.pop %v2995
    %v2997 = vmul.f32 1.0, %v2996
    %v2998 = vtanh.pop %v2984
    %v2999 = vxor.u32 %v2985, 2147483648
    %v3000 = vmul.f32 %v2999, 1.442695
    %v3001 = vpow.pop %v3000
    %v3002 = vadd.f32 %v3001, 1.0
    %v3003 = vrcp.pop %v3002
    %v3004 = vmul.f32 1.0, %v3003
    %v3005 = vmul.f32 %v2997, %v2503
    %v3006 = vmul.f32 %v2991, %v2998
    %v3007 = vadd.f32 %v3005, %v3006
    %v3008 = vtanh.pop %v3007
    %v3009 = vmul.f32 %v3004, %v3008
    %s3010 = smul.u32 3, 4
    %s3011 = smul.addr %s3010, 8
    %s3012 = scalar_lea.vmem [#allocation2], %s3011
    %v3013 = vld [vmem:[%s3012] sm:$0xff]
    %v3014 = vld [vmem:[%s3012 + $0x8] sm:$0xff]
    %v3015 = vld [vmem:[%s3012 + $0x10] sm:$0xff]
    %v3016 = vld [vmem:[%s3012 + $0x18] sm:$0xff]
    %3017 = vmatprep.subr.bf16.mxu0 %v803
    %3018 = vmatpush1.bf16.msra.mxu0 %v802
    %3019 = vmatprep.subr.bf16.mxu0 %v807
    %3020 = vmatpush1.bf16.msra.mxu0 %v806
    %3021 = vmatprep.subr.bf16.mxu0 %v811
    %3022 = vmatpush1.bf16.msra.mxu0 %v810
    %3023 = vmatprep.subr.bf16.mxu0 %v815
    %3024 = vmatpush1.bf16.msra.mxu0 %v814
    %3025 = vmatprep.subr.bf16.mxu0 %v819
    %3026 = vmatpush1.bf16.msra.mxu0 %v818
    %3027 = vmatprep.subr.bf16.mxu0 %v823
    %3028 = vmatpush1.bf16.msra.mxu0 %v822
    %3029 = vmatprep.subr.bf16.mxu0 %v827
    %3030 = vmatpush1.bf16.msra.mxu0 %v826
    %3031 = vmatprep.subr.bf16.mxu0 %v831
    %3032 = vmatpush1.bf16.msra.mxu0 %v830
    %3033 = vmatprep.subr.bf16.mxu0 0
    %3034 = vmatpush1.bf16.msra.mxu0 0
    %3035 = vmatprep.subr.bf16.mxu0 0
    %3036 = vmatpush1.bf16.msra.mxu0 0
    %3037 = vmatprep.subr.bf16.mxu0 0
    %3038 = vmatpush1.bf16.msra.mxu0 0
    %3039 = vmatprep.subr.bf16.mxu0 0
    %3040 = vmatpush1.bf16.msra.mxu0 0
    %3041 = vmatprep.subr.bf16.mxu0 0
    %3042 = vmatpush1.bf16.msra.mxu0 0
    %3043 = vmatprep.subr.bf16.mxu0 0
    %3044 = vmatpush1.bf16.msra.mxu0 0
    %3045 = vmatprep.subr.bf16.mxu0 0
    %3046 = vmatpush1.bf16.msra.mxu0 0
    %3047 = vmatprep.subr.bf16.mxu0 0
    %3048 = vmatpush1.bf16.msra.mxu0 0
    %3049 = vmatprep.mubr.bf16.mxu0 0
    %3050 = vmatmul.mubr.bf16.gmra.mrb[0].mxu0 %v2623
    %v3051 = vpop.f32.mrb[0].mxu0
    %v3052 = vadd.f32 0.0, %v3051
    %v3053 = vpop.f32.mrb[0].mxu0
    %v3054 = vadd.f32 0.0, %v3053
    %v3055 = vpop.f32.mrb[0].mxu0
    %v3056 = vpop.f32.mrb[0].mxu0
    %3057 = vdwg.mxu0
    %3058 = vmatprep.subr.bf16.mxu0 %v805
    %3059 = vmatpush1.bf16.msra.mxu0 %v804
    %3060 = vmatprep.subr.bf16.mxu0 %v809
    %3061 = vmatpush1.bf16.msra.mxu0 %v808
    %3062 = vmatprep.subr.bf16.mxu0 %v813
    %3063 = vmatpush1.bf16.msra.mxu0 %v812
    %3064 = vmatprep.subr.bf16.mxu0 %v817
    %3065 = vmatpush1.bf16.msra.mxu0 %v816
    %3066 = vmatprep.subr.bf16.mxu0 %v821
    %3067 = vmatpush1.bf16.msra.mxu0 %v820
    %3068 = vmatprep.subr.bf16.mxu0 %v825
    %3069 = vmatpush1.bf16.msra.mxu0 %v824
    %3070 = vmatprep.subr.bf16.mxu0 %v829
    %3071 = vmatpush1.bf16.msra.mxu0 %v828
    %3072 = vmatprep.subr.bf16.mxu0 %v833
    %3073 = vmatpush1.bf16.msra.mxu0 %v832
    %3074 = vmatprep.subr.bf16.mxu0 0
    %3075 = vmatpush1.bf16.msra.mxu0 0
    %3076 = vmatprep.subr.bf16.mxu0 0
    %3077 = vmatpush1.bf16.msra.mxu0 0
    %3078 = vmatprep.subr.bf16.mxu0 0
    %3079 = vmatpush1.bf16.msra.mxu0 0
    %3080 = vmatprep.subr.bf16.mxu0 0
    %3081 = vmatpush1.bf16.msra.mxu0 0
    %3082 = vmatprep.subr.bf16.mxu0 0
    %3083 = vmatpush1.bf16.msra.mxu0 0
    %3084 = vmatprep.subr.bf16.mxu0 0
    %3085 = vmatpush1.bf16.msra.mxu0 0
    %3086 = vmatprep.subr.bf16.mxu0 0
    %3087 = vmatpush1.bf16.msra.mxu0 0
    %3088 = vmatprep.subr.bf16.mxu0 0
    %3089 = vmatpush1.bf16.msra.mxu0 0
    %3090 = vmatprep.mubr.bf16.mxu0 0
    %3091 = vmatmul.mubr.bf16.gmra.mrb[0].mxu0 %v2623
    %v3092 = vpop.f32.mrb[0].mxu0
    %v3093 = vadd.f32 0.0, %v3092
    %v3094 = vpop.f32.mrb[0].mxu0
    %v3095 = vadd.f32 0.0, %v3094
    %v3096 = vpop.f32.mrb[0].mxu0
    %v3097 = vpop.f32.mrb[0].mxu0
    %3098 = vdwg.mxu0
    %v3099 = vadd.f32 %v3013, %v3052
    %v3100 = vadd.f32 %v3014, %v3054
    %v3101 = vadd.f32 %v3015, %v3093
    %v3102 = vadd.f32 %v3016, %v3095
    %v3103 = vxor.u32 %v3099, 2147483648
    %v3104 = vmul.f32 %v3103, 1.442695
    %v3105 = vpow.pop %v3104
    %v3106 = vadd.f32 %v3105, 1.0
    %v3107 = vrcp.pop %v3106
    %v3108 = vmul.f32 1.0, %v3107
    %v3109 = vxor.u32 %v3100, 2147483648
    %v3110 = vmul.f32 %v3109, 1.442695
    %v3111 = vpow.pop %v3110
    %v3112 = vadd.f32 %v3111, 1.0
    %v3113 = vrcp.pop %v3112
    %v3114 = vmul.f32 1.0, %v3113
    %v3115 = vtanh.pop %v3101
    %v3116 = vxor.u32 %v3102, 2147483648
    %v3117 = vmul.f32 %v3116, 1.442695
    %v3118 = vpow.pop %v3117
    %v3119 = vadd.f32 %v3118, 1.0
    %v3120 = vrcp.pop %v3119
    %v3121 = vmul.f32 1.0, %v3120
    %v3122 = vmul.f32 %v3114, %v2620
    %v3123 = vmul.f32 %v3108, %v3115
    %v3124 = vadd.f32 %v3122, %v3123
    %v3125 = vtanh.pop %v3124
    %v3126 = vmul.f32 %v3121, %v3125
    %v3127 = vpack.c.bf16 %v3126, %v3126
    %3128 = vmatprep.subr.bf16.mxu0 %v1074
    %3129 = vmatpush1.bf16.msra.mxu0 %v1073
    %3130 = vmatprep.subr.bf16.mxu0 %v1078
    %3131 = vmatpush1.bf16.msra.mxu0 %v1077
    %3132 = vmatprep.subr.bf16.mxu0 %v1082
    %3133 = vmatpush1.bf16.msra.mxu0 %v1081
    %3134 = vmatprep.subr.bf16.mxu0 %v1086
    %3135 = vmatpush1.bf16.msra.mxu0 %v1085
    %3136 = vmatprep.subr.bf16.mxu0 %v1090
    %3137 = vmatpush1.bf16.msra.mxu0 %v1089
    %3138 = vmatprep.subr.bf16.mxu0 %v1094
    %3139 = vmatpush1.bf16.msra.mxu0 %v1093
    %3140 = vmatprep.subr.bf16.mxu0 %v1098
    %3141 = vmatpush1.bf16.msra.mxu0 %v1097
    %3142 = vmatprep.subr.bf16.mxu0 %v1102
    %3143 = vmatpush1.bf16.msra.mxu0 %v1101
    %3144 = vmatprep.subr.bf16.mxu0 0
    %3145 = vmatpush1.bf16.msra.mxu0 0
    %3146 = vmatprep.subr.bf16.mxu0 0
    %3147 = vmatpush1.bf16.msra.mxu0 0
    %3148 = vmatprep.subr.bf16.mxu0 0
    %3149 = vmatpush1.bf16.msra.mxu0 0
    %3150 = vmatprep.subr.bf16.mxu0 0
    %3151 = vmatpush1.bf16.msra.mxu0 0
    %3152 = vmatprep.subr.bf16.mxu0 0
    %3153 = vmatpush1.bf16.msra.mxu0 0
    %3154 = vmatprep.subr.bf16.mxu0 0
    %3155 = vmatpush1.bf16.msra.mxu0 0
    %3156 = vmatprep.subr.bf16.mxu0 0
    %3157 = vmatpush1.bf16.msra.mxu0 0
    %3158 = vmatprep.subr.bf16.mxu0 0
    %3159 = vmatpush1.bf16.msra.mxu0 0
    %3160 = vmatprep.mubr.bf16.mxu0 0
    %3161 = vmatmul.mubr.bf16.gmra.mrb[0].mxu0 %v2816
    %v3162 = vpop.f32.mrb[0].mxu0
    %v3163 = vadd.f32 0.0, %v3162
    %v3164 = vpop.f32.mrb[0].mxu0
    %v3165 = vadd.f32 0.0, %v3164
    %v3166 = vpop.f32.mrb[0].mxu0
    %v3167 = vpop.f32.mrb[0].mxu0
    %3168 = vdwg.mxu0
    %3169 = vmatprep.subr.bf16.mxu0 %v1076
    %3170 = vmatpush1.bf16.msra.mxu0 %v1075
    %3171 = vmatprep.subr.bf16.mxu0 %v1080
    %3172 = vmatpush1.bf16.msra.mxu0 %v1079
    %3173 = vmatprep.subr.bf16.mxu0 %v1084
    %3174 = vmatpush1.bf16.msra.mxu0 %v1083
    %3175 = vmatprep.subr.bf16.mxu0 %v1088
    %3176 = vmatpush1.bf16.msra.mxu0 %v1087
    %3177 = vmatprep.subr.bf16.mxu0 %v1092
    %3178 = vmatpush1.bf16.msra.mxu0 %v1091
    %3179 = vmatprep.subr.bf16.mxu0 %v1096
    %3180 = vmatpush1.bf16.msra.mxu0 %v1095
    %3181 = vmatprep.subr.bf16.mxu0 %v1100
    %3182 = vmatpush1.bf16.msra.mxu0 %v1099
    %3183 = vmatprep.subr.bf16.mxu0 %v1104
    %3184 = vmatpush1.bf16.msra.mxu0 %v1103
    %3185 = vmatprep.subr.bf16.mxu0 0
    %3186 = vmatpush1.bf16.msra.mxu0 0
    %3187 = vmatprep.subr.bf16.mxu0 0
    %3188 = vmatpush1.bf16.msra.mxu0 0
    %3189 = vmatprep.subr.bf16.mxu0 0
    %3190 = vmatpush1.bf16.msra.mxu0 0
    %3191 = vmatprep.subr.bf16.mxu0 0
    %3192 = vmatpush1.bf16.msra.mxu0 0
    %3193 = vmatprep.subr.bf16.mxu0 0
    %3194 = vmatpush1.bf16.msra.mxu0 0
    %3195 = vmatprep.subr.bf16.mxu0 0
    %3196 = vmatpush1.bf16.msra.mxu0 0
    %3197 = vmatprep.subr.bf16.mxu0 0
    %3198 = vmatpush1.bf16.msra.mxu0 0
    %3199 = vmatprep.subr.bf16.mxu0 0
    %3200 = vmatpush1.bf16.msra.mxu0 0
    %3201 = vmatprep.mubr.bf16.mxu0 0
    %3202 = vmatmul.mubr.bf16.gmra.mrb[0].mxu0 %v2816
    %v3203 = vpop.f32.mrb[0].mxu0
    %v3204 = vadd.f32 0.0, %v3203
    %v3205 = vpop.f32.mrb[0].mxu0
    %v3206 = vadd.f32 0.0, %v3205
    %v3207 = vpop.f32.mrb[0].mxu0
    %v3208 = vpop.f32.mrb[0].mxu0
    %3209 = vdwg.mxu0
    %3210 = vmatprep.subr.bf16.mxu0 %v1316
    %3211 = vmatpush1.bf16.msra.mxu0 %v1315
    %3212 = vmatprep.subr.bf16.mxu0 %v1320
    %3213 = vmatpush1.bf16.msra.mxu0 %v1319
    %3214 = vmatprep.subr.bf16.mxu0 %v1324
    %3215 = vmatpush1.bf16.msra.mxu0 %v1323
    %3216 = vmatprep.subr.bf16.mxu0 %v1328
    %3217 = vmatpush1.bf16.msra.mxu0 %v1327
    %3218 = vmatprep.subr.bf16.mxu0 %v1332
    %3219 = vmatpush1.bf16.msra.mxu0 %v1331
    %3220 = vmatprep.subr.bf16.mxu0 %v1336
    %3221 = vmatpush1.bf16.msra.mxu0 %v1335
    %3222 = vmatprep.subr.bf16.mxu0 %v1340
    %3223 = vmatpush1.bf16.msra.mxu0 %v1339
    %3224 = vmatprep.subr.bf16.mxu0 %v1344
    %3225 = vmatpush1.bf16.msra.mxu0 %v1343
    %3226 = vmatprep.subr.bf16.mxu0 0
    %3227 = vmatpush1.bf16.msra.mxu0 0
    %3228 = vmatprep.subr.bf16.mxu0 0
    %3229 = vmatpush1.bf16.msra.mxu0 0
    %3230 = vmatprep.subr.bf16.mxu0 0
    %3231 = vmatpush1.bf16.msra.mxu0 0
    %3232 = vmatprep.subr.bf16.mxu0 0
    %3233 = vmatpush1.bf16.msra.mxu0 0
    %3234 = vmatprep.subr.bf16.mxu0 0
    %3235 = vmatpush1.bf16.msra.mxu0 0
    %3236 = vmatprep.subr.bf16.mxu0 0
    %3237 = vmatpush1.bf16.msra.mxu0 0
    %3238 = vmatprep.subr.bf16.mxu0 0
    %3239 = vmatpush1.bf16.msra.mxu0 0
    %3240 = vmatprep.subr.bf16.mxu0 0
    %3241 = vmatpush1.bf16.msra.mxu0 0
    %3242 = vmatprep.mubr.bf16.mxu0 0
    %3243 = vmatmul.mubr.bf16.gmra.mrb[0].mxu0 %v3127
    %v3244 = vpop.f32.mrb[0].mxu0
    %v3245 = vadd.f32 %v3163, %v3244
    %v3246 = vpop.f32.mrb[0].mxu0
    %v3247 = vadd.f32 %v3165, %v3246
    %v3248 = vpop.f32.mrb[0].mxu0
    %v3249 = vpop.f32.mrb[0].mxu0
    %3250 = vdwg.mxu0
    %3251 = vmatprep.subr.bf16.mxu0 %v1318
    %3252 = vmatpush1.bf16.msra.mxu0 %v1317
    %3253 = vmatprep.subr.bf16.mxu0 %v1322
    %3254 = vmatpush1.bf16.msra.mxu0 %v1321
    %3255 = vmatprep.subr.bf16.mxu0 %v1326
    %3256 = vmatpush1.bf16.msra.mxu0 %v1325
    %3257 = vmatprep.subr.bf16.mxu0 %v1330
    %3258 = vmatpush1.bf16.msra.mxu0 %v1329
    %3259 = vmatprep.subr.bf16.mxu0 %v1334
    %3260 = vmatpush1.bf16.msra.mxu0 %v1333
    %3261 = vmatprep.subr.bf16.mxu0 %v1338
    %3262 = vmatpush1.bf16.msra.mxu0 %v1337
    %3263 = vmatprep.subr.bf16.mxu0 %v1342
    %3264 = vmatpush1.bf16.msra.mxu0 %v1341
    %3265 = vmatprep.subr.bf16.mxu0 %v1346
    %3266 = vmatpush1.bf16.msra.mxu0 %v1345
    %3267 = vmatprep.subr.bf16.mxu0 0
    %3268 = vmatpush1.bf16.msra.mxu0 0
    %3269 = vmatprep.subr.bf16.mxu0 0
    %3270 = vmatpush1.bf16.msra.mxu0 0
    %3271 = vmatprep.subr.bf16.mxu0 0
    %3272 = vmatpush1.bf16.msra.mxu0 0
    %3273 = vmatprep.subr.bf16.mxu0 0
    %3274 = vmatpush1.bf16.msra.mxu0 0
    %3275 = vmatprep.subr.bf16.mxu0 0
    %3276 = vmatpush1.bf16.msra.mxu0 0
    %3277 = vmatprep.subr.bf16.mxu0 0
    %3278 = vmatpush1.bf16.msra.mxu0 0
    %3279 = vmatprep.subr.bf16.mxu0 0
    %3280 = vmatpush1.bf16.msra.mxu0 0
    %3281 = vmatprep.subr.bf16.mxu0 0
    %3282 = vmatpush1.bf16.msra.mxu0 0
    %3283 = vmatprep.mubr.bf16.mxu0 0
    %3284 = vmatmul.mubr.bf16.gmra.mrb[0].mxu0 %v3127
    %v3285 = vpop.f32.mrb[0].mxu0
    %v3286 = vadd.f32 %v3204, %v3285
    %v3287 = vpop.f32.mrb[0].mxu0
    %v3288 = vadd.f32 %v3206, %v3287
    %v3289 = vpop.f32.mrb[0].mxu0
    %v3290 = vpop.f32.mrb[0].mxu0
    %3291 = vdwg.mxu0
    %v3292 = vadd.f32 %v3245, %v660
    %v3293 = vadd.f32 %v3247, %v664
    %v3294 = vadd.f32 %v3286, %v668
    %v3295 = vadd.f32 %v3288, %v672
    %v3296 = vxor.u32 %v3292, 2147483648
    %v3297 = vmul.f32 %v3296, 1.442695
    %v3298 = vpow.pop %v3297
    %v3299 = vadd.f32 %v3298, 1.0
    %v3300 = vrcp.pop %v3299
    %v3301 = vmul.f32 1.0, %v3300
    %v3302 = vxor.u32 %v3293, 2147483648
    %v3303 = vmul.f32 %v3302, 1.442695
    %v3304 = vpow.pop %v3303
    %v3305 = vadd.f32 %v3304, 1.0
    %v3306 = vrcp.pop %v3305
    %v3307 = vmul.f32 1.0, %v3306
    %v3308 = vtanh.pop %v3294
    %v3309 = vxor.u32 %v3295, 2147483648
    %v3310 = vmul.f32 %v3309, 1.442695
    %v3311 = vpow.pop %v3310
    %v3312 = vadd.f32 %v3311, 1.0
    %v3313 = vrcp.pop %v3312
    %v3314 = vmul.f32 1.0, %v3313
    %v3315 = vmul.f32 %v3307, %v2813
    %v3316 = vmul.f32 %v3301, %v3308
    %v3317 = vadd.f32 %v3315, %v3316
    %v3318 = vtanh.pop %v3317
    %v3319 = vmul.f32 %v3314, %v3318
    %v3320 = vpack.c.bf16 %v3319, %v3319
    %v3321 = vpack.c.bf16 %v3009, %v3009
    %3322 = vmatprep.subr.bf16.mxu0 %v1587
    %3323 = vmatpush1.bf16.msra.mxu0 %v1586
    %3324 = vmatprep.subr.bf16.mxu0 %v1591
    %3325 = vmatpush1.bf16.msra.mxu0 %v1590
    %3326 = vmatprep.subr.bf16.mxu0 %v1595
    %3327 = vmatpush1.bf16.msra.mxu0 %v1594
    %3328 = vmatprep.subr.bf16.mxu0 %v1599
    %3329 = vmatpush1.bf16.msra.mxu0 %v1598
    %3330 = vmatprep.subr.bf16.mxu0 %v1603
    %3331 = vmatpush1.bf16.msra.mxu0 %v1602
    %3332 = vmatprep.subr.bf16.mxu0 %v1607
    %3333 = vmatpush1.bf16.msra.mxu0 %v1606
    %3334 = vmatprep.subr.bf16.mxu0 %v1611
    %3335 = vmatpush1.bf16.msra.mxu0 %v1610
    %3336 = vmatprep.subr.bf16.mxu0 %v1615
    %3337 = vmatpush1.bf16.msra.mxu0 %v1614
    %3338 = vmatprep.subr.bf16.mxu0 0
    %3339 = vmatpush1.bf16.msra.mxu0 0
    %3340 = vmatprep.subr.bf16.mxu0 0
    %3341 = vmatpush1.bf16.msra.mxu0 0
    %3342 = vmatprep.subr.bf16.mxu0 0
    %3343 = vmatpush1.bf16.msra.mxu0 0
    %3344 = vmatprep.subr.bf16.mxu0 0
    %3345 = vmatpush1.bf16.msra.mxu0 0
    %3346 = vmatprep.subr.bf16.mxu0 0
    %3347 = vmatpush1.bf16.msra.mxu0 0
    %3348 = vmatprep.subr.bf16.mxu0 0
    %3349 = vmatpush1.bf16.msra.mxu0 0
    %3350 = vmatprep.subr.bf16.mxu0 0
    %3351 = vmatpush1.bf16.msra.mxu0 0
    %3352 = vmatprep.subr.bf16.mxu0 0
    %3353 = vmatpush1.bf16.msra.mxu0 0
    %3354 = vmatprep.mubr.bf16.mxu0 0
    %3355 = vmatmul.mubr.bf16.gmra.mrb[0].mxu0 %v3321
    %v3356 = vpop.f32.mrb[0].mxu0
    %v3357 = vadd.f32 0.0, %v3356
    %v3358 = vpop.f32.mrb[0].mxu0
    %v3359 = vadd.f32 0.0, %v3358
    %v3360 = vpop.f32.mrb[0].mxu0
    %v3361 = vpop.f32.mrb[0].mxu0
    %3362 = vdwg.mxu0
    %3363 = vmatprep.subr.bf16.mxu0 %v1589
    %3364 = vmatpush1.bf16.msra.mxu0 %v1588
    %3365 = vmatprep.subr.bf16.mxu0 %v1593
    %3366 = vmatpush1.bf16.msra.mxu0 %v1592
    %3367 = vmatprep.subr.bf16.mxu0 %v1597
    %3368 = vmatpush1.bf16.msra.mxu0 %v1596
    %3369 = vmatprep.subr.bf16.mxu0 %v1601
    %3370 = vmatpush1.bf16.msra.mxu0 %v1600
    %3371 = vmatprep.subr.bf16.mxu0 %v1605
    %3372 = vmatpush1.bf16.msra.mxu0 %v1604
    %3373 = vmatprep.subr.bf16.mxu0 %v1609
    %3374 = vmatpush1.bf16.msra.mxu0 %v1608
    %3375 = vmatprep.subr.bf16.mxu0 %v1613
    %3376 = vmatpush1.bf16.msra.mxu0 %v1612
    %3377 = vmatprep.subr.bf16.mxu0 %v1617
    %3378 = vmatpush1.bf16.msra.mxu0 %v1616
    %3379 = vmatprep.subr.bf16.mxu0 0
    %3380 = vmatpush1.bf16.msra.mxu0 0
    %3381 = vmatprep.subr.bf16.mxu0 0
    %3382 = vmatpush1.bf16.msra.mxu0 0
    %3383 = vmatprep.subr.bf16.mxu0 0
    %3384 = vmatpush1.bf16.msra.mxu0 0
    %3385 = vmatprep.subr.bf16.mxu0 0
    %3386 = vmatpush1.bf16.msra.mxu0 0
    %3387 = vmatprep.subr.bf16.mxu0 0
    %3388 = vmatpush1.bf16.msra.mxu0 0
    %3389 = vmatprep.subr.bf16.mxu0 0
    %3390 = vmatpush1.bf16.msra.mxu0 0
    %3391 = vmatprep.subr.bf16.mxu0 0
    %3392 = vmatpush1.bf16.msra.mxu0 0
    %3393 = vmatprep.subr.bf16.mxu0 0
    %3394 = vmatpush1.bf16.msra.mxu0 0
    %3395 = vmatprep.mubr.bf16.mxu0 0
    %3396 = vmatmul.mubr.bf16.gmra.mrb[0].mxu0 %v3321
    %v3397 = vpop.f32.mrb[0].mxu0
    %v3398 = vadd.f32 0.0, %v3397
    %v3399 = vpop.f32.mrb[0].mxu0
    %v3400 = vadd.f32 0.0, %v3399
    %v3401 = vpop.f32.mrb[0].mxu0
    %v3402 = vpop.f32.mrb[0].mxu0
    %3403 = vdwg.mxu0
    %3404 = vmatprep.subr.bf16.mxu0 %v1829
    %3405 = vmatpush1.bf16.msra.mxu0 %v1828
    %3406 = vmatprep.subr.bf16.mxu0 %v1833
    %3407 = vmatpush1.bf16.msra.mxu0 %v1832
    %3408 = vmatprep.subr.bf16.mxu0 %v1837
    %3409 = vmatpush1.bf16.msra.mxu0 %v1836
    %3410 = vmatprep.subr.bf16.mxu0 %v1841
    %3411 = vmatpush1.bf16.msra.mxu0 %v1840
    %3412 = vmatprep.subr.bf16.mxu0 %v1845
    %3413 = vmatpush1.bf16.msra.mxu0 %v1844
    %3414 = vmatprep.subr.bf16.mxu0 %v1849
    %3415 = vmatpush1.bf16.msra.mxu0 %v1848
    %3416 = vmatprep.subr.bf16.mxu0 %v1853
    %3417 = vmatpush1.bf16.msra.mxu0 %v1852
    %3418 = vmatprep.subr.bf16.mxu0 %v1857
    %3419 = vmatpush1.bf16.msra.mxu0 %v1856
    %3420 = vmatprep.subr.bf16.mxu0 0
    %3421 = vmatpush1.bf16.msra.mxu0 0
    %3422 = vmatprep.subr.bf16.mxu0 0
    %3423 = vmatpush1.bf16.msra.mxu0 0
    %3424 = vmatprep.subr.bf16.mxu0 0
    %3425 = vmatpush1.bf16.msra.mxu0 0
    %3426 = vmatprep.subr.bf16.mxu0 0
    %3427 = vmatpush1.bf16.msra.mxu0 0
    %3428 = vmatprep.subr.bf16.mxu0 0
    %3429 = vmatpush1.bf16.msra.mxu0 0
    %3430 = vmatprep.subr.bf16.mxu0 0
    %3431 = vmatpush1.bf16.msra.mxu0 0
    %3432 = vmatprep.subr.bf16.mxu0 0
    %3433 = vmatpush1.bf16.msra.mxu0 0
    %3434 = vmatprep.subr.bf16.mxu0 0
    %3435 = vmatpush1.bf16.msra.mxu0 0
    %3436 = vmatprep.mubr.bf16.mxu0 0
    %3437 = vmatmul.mubr.bf16.gmra.mrb[0].mxu0 %v3320
    %v3438 = vpop.f32.mrb[0].mxu0
    %v3439 = vadd.f32 %v3357, %v3438
    %v3440 = vpop.f32.mrb[0].mxu0
    %v3441 = vadd.f32 %v3359, %v3440
    %v3442 = vpop.f32.mrb[0].mxu0
    %v3443 = vpop.f32.mrb[0].mxu0
    %3444 = vdwg.mxu0
    %3445 = vmatprep.subr.bf16.mxu0 %v1831
    %3446 = vmatpush1.bf16.msra.mxu0 %v1830
    %3447 = vmatprep.subr.bf16.mxu0 %v1835
    %3448 = vmatpush1.bf16.msra.mxu0 %v1834
    %3449 = vmatprep.subr.bf16.mxu0 %v1839
    %3450 = vmatpush1.bf16.msra.mxu0 %v1838
    %3451 = vmatprep.subr.bf16.mxu0 %v1843
    %3452 = vmatpush1.bf16.msra.mxu0 %v1842
    %3453 = vmatprep.subr.bf16.mxu0 %v1847
    %3454 = vmatpush1.bf16.msra.mxu0 %v1846
    %3455 = vmatprep.subr.bf16.mxu0 %v1851
    %3456 = vmatpush1.bf16.msra.mxu0 %v1850
    %3457 = vmatprep.subr.bf16.mxu0 %v1855
    %3458 = vmatpush1.bf16.msra.mxu0 %v1854
    %3459 = vmatprep.subr.bf16.mxu0 %v1859
    %3460 = vmatpush1.bf16.msra.mxu0 %v1858
    %3461 = vmatprep.subr.bf16.mxu0 0
    %3462 = vmatpush1.bf16.msra.mxu0 0
    %3463 = vmatprep.subr.bf16.mxu0 0
    %3464 = vmatpush1.bf16.msra.mxu0 0
    %3465 = vmatprep.subr.bf16.mxu0 0
    %3466 = vmatpush1.bf16.msra.mxu0 0
    %3467 = vmatprep.subr.bf16.mxu0 0
    %3468 = vmatpush1.bf16.msra.mxu0 0
    %3469 = vmatprep.subr.bf16.mxu0 0
    %3470 = vmatpush1.bf16.msra.mxu0 0
    %3471 = vmatprep.subr.bf16.mxu0 0
    %3472 = vmatpush1.bf16.msra.mxu0 0
    %3473 = vmatprep.subr.bf16.mxu0 0
    %3474 = vmatpush1.bf16.msra.mxu0 0
    %3475 = vmatprep.subr.bf16.mxu0 0
    %3476 = vmatpush1.bf16.msra.mxu0 0
    %3477 = vmatprep.mubr.bf16.mxu0 0
    %3478 = vmatmul.mubr.bf16.gmra.mrb[0].mxu0 %v3320
    %v3479 = vpop.f32.mrb[0].mxu0
    %v3480 = vadd.f32 %v3398, %v3479
    %v3481 = vpop.f32.mrb[0].mxu0
    %v3482 = vadd.f32 %v3400, %v3481
    %v3483 = vpop.f32.mrb[0].mxu0
    %v3484 = vpop.f32.mrb[0].mxu0
    %3485 = vdwg.mxu0
    %v3486 = vadd.f32 %v3439, %v682
    %v3487 = vadd.f32 %v3441, %v686
    %v3488 = vadd.f32 %v3480, %v690
    %v3489 = vadd.f32 %v3482, %v694
    %v3490 = vxor.u32 %v3486, 2147483648
    %v3491 = vmul.f32 %v3490, 1.442695
    %v3492 = vpow.pop %v3491
    %v3493 = vadd.f32 %v3492, 1.0
    %v3494 = vrcp.pop %v3493
    %v3495 = vmul.f32 1.0, %v3494
    %v3496 = vxor.u32 %v3487, 2147483648
    %v3497 = vmul.f32 %v3496, 1.442695
    %v3498 = vpow.pop %v3497
    %v3499 = vadd.f32 %v3498, 1.0
    %v3500 = vrcp.pop %v3499
    %v3501 = vmul.f32 1.0, %v3500
    %v3502 = vtanh.pop %v3488
    %v3503 = vxor.u32 %v3489, 2147483648
    %v3504 = vmul.f32 %v3503, 1.442695
    %v3505 = vpow.pop %v3504
    %v3506 = vadd.f32 %v3505, 1.0
    %v3507 = vrcp.pop %v3506
    %v3508 = vmul.f32 1.0, %v3507
    %v3509 = vmul.f32 %v3501, %v3007
    %v3510 = vmul.f32 %v3495, %v3502
    %v3511 = vadd.f32 %v3509, %v3510
    %v3512 = vtanh.pop %v3511
    %v3513 = vmul.f32 %v3508, %v3512
    %s3514 = smul.u32 4, 4
    %s3515 = smul.addr %s3514, 8
    %s3516 = scalar_lea.vmem [#allocation2], %s3515
    %v3517 = vld [vmem:[%s3516] sm:$0xff]
    %v3518 = vld [vmem:[%s3516 + $0x8] sm:$0xff]
    %v3519 = vld [vmem:[%s3516 + $0x10] sm:$0xff]
    %v3520 = vld [vmem:[%s3516 + $0x18] sm:$0xff]
    %3521 = vmatprep.subr.bf16.mxu0 %v803
    %3522 = vmatpush1.bf16.msra.mxu0 %v802
    %3523 = vmatprep.subr.bf16.mxu0 %v807
    %3524 = vmatpush1.bf16.msra.mxu0 %v806
    %3525 = vmatprep.subr.bf16.mxu0 %v811
    %3526 = vmatpush1.bf16.msra.mxu0 %v810
    %3527 = vmatprep.subr.bf16.mxu0 %v815
    %3528 = vmatpush1.bf16.msra.mxu0 %v814
    %3529 = vmatprep.subr.bf16.mxu0 %v819
    %3530 = vmatpush1.bf16.msra.mxu0 %v818
    %3531 = vmatprep.subr.bf16.mxu0 %v823
    %3532 = vmatpush1.bf16.msra.mxu0 %v822
    %3533 = vmatprep.subr.bf16.mxu0 %v827
    %3534 = vmatpush1.bf16.msra.mxu0 %v826
    %3535 = vmatprep.subr.bf16.mxu0 %v831
    %3536 = vmatpush1.bf16.msra.mxu0 %v830
    %3537 = vmatprep.subr.bf16.mxu0 0
    %3538 = vmatpush1.bf16.msra.mxu0 0
    %3539 = vmatprep.subr.bf16.mxu0 0
    %3540 = vmatpush1.bf16.msra.mxu0 0
    %3541 = vmatprep.subr.bf16.mxu0 0
    %3542 = vmatpush1.bf16.msra.mxu0 0
    %3543 = vmatprep.subr.bf16.mxu0 0
    %3544 = vmatpush1.bf16.msra.mxu0 0
    %3545 = vmatprep.subr.bf16.mxu0 0
    %3546 = vmatpush1.bf16.msra.mxu0 0
    %3547 = vmatprep.subr.bf16.mxu0 0
    %3548 = vmatpush1.bf16.msra.mxu0 0
    %3549 = vmatprep.subr.bf16.mxu0 0
    %3550 = vmatpush1.bf16.msra.mxu0 0
    %3551 = vmatprep.subr.bf16.mxu0 0
    %3552 = vmatpush1.bf16.msra.mxu0 0
    %3553 = vmatprep.mubr.bf16.mxu0 0
    %3554 = vmatmul.mubr.bf16.gmra.mrb[0].mxu0 %v3127
    %v3555 = vpop.f32.mrb[0].mxu0
    %v3556 = vadd.f32 0.0, %v3555
    %v3557 = vpop.f32.mrb[0].mxu0
    %v3558 = vadd.f32 0.0, %v3557
    %v3559 = vpop.f32.mrb[0].mxu0
    %v3560 = vpop.f32.mrb[0].mxu0
    %3561 = vdwg.mxu0
    %3562 = vmatprep.subr.bf16.mxu0 %v805
    %3563 = vmatpush1.bf16.msra.mxu0 %v804
    %3564 = vmatprep.subr.bf16.mxu0 %v809
    %3565 = vmatpush1.bf16.msra.mxu0 %v808
    %3566 = vmatprep.subr.bf16.mxu0 %v813
    %3567 = vmatpush1.bf16.msra.mxu0 %v812
    %3568 = vmatprep.subr.bf16.mxu0 %v817
    %3569 = vmatpush1.bf16.msra.mxu0 %v816
    %3570 = vmatprep.subr.bf16.mxu0 %v821
    %3571 = vmatpush1.bf16.msra.mxu0 %v820
    %3572 = vmatprep.subr.bf16.mxu0 %v825
    %3573 = vmatpush1.bf16.msra.mxu0 %v824
    %3574 = vmatprep.subr.bf16.mxu0 %v829
    %3575 = vmatpush1.bf16.msra.mxu0 %v828
    %3576 = vmatprep.subr.bf16.mxu0 %v833
    %3577 = vmatpush1.bf16.msra.mxu0 %v832
    %3578 = vmatprep.subr.bf16.mxu0 0
    %3579 = vmatpush1.bf16.msra.mxu0 0
    %3580 = vmatprep.subr.bf16.mxu0 0
    %3581 = vmatpush1.bf16.msra.mxu0 0
    %3582 = vmatprep.subr.bf16.mxu0 0
    %3583 = vmatpush1.bf16.msra.mxu0 0
    %3584 = vmatprep.subr.bf16.mxu0 0
    %3585 = vmatpush1.bf16.msra.mxu0 0
    %3586 = vmatprep.subr.bf16.mxu0 0
    %3587 = vmatpush1.bf16.msra.mxu0 0
    %3588 = vmatprep.subr.bf16.mxu0 0
    %3589 = vmatpush1.bf16.msra.mxu0 0
    %3590 = vmatprep.subr.bf16.mxu0 0
    %3591 = vmatpush1.bf16.msra.mxu0 0
    %3592 = vmatprep.subr.bf16.mxu0 0
    %3593 = vmatpush1.bf16.msra.mxu0 0
    %3594 = vmatprep.mubr.bf16.mxu0 0
    %3595 = vmatmul.mubr.bf16.gmra.mrb[0].mxu0 %v3127
    %v3596 = vpop.f32.mrb[0].mxu0
    %v3597 = vadd.f32 0.0, %v3596
    %v3598 = vpop.f32.mrb[0].mxu0
    %v3599 = vadd.f32 0.0, %v3598
    %v3600 = vpop.f32.mrb[0].mxu0
    %v3601 = vpop.f32.mrb[0].mxu0
    %3602 = vdwg.mxu0
    %v3603 = vadd.f32 %v3517, %v3556
    %v3604 = vadd.f32 %v3518, %v3558
    %v3605 = vadd.f32 %v3519, %v3597
    %v3606 = vadd.f32 %v3520, %v3599
    %v3607 = vxor.u32 %v3603, 2147483648
    %v3608 = vmul.f32 %v3607, 1.442695
    %v3609 = vpow.pop %v3608
    %v3610 = vadd.f32 %v3609, 1.0
    %v3611 = vrcp.pop %v3610
    %v3612 = vmul.f32 1.0, %v3611
    %v3613 = vxor.u32 %v3604, 2147483648
    %v3614 = vmul.f32 %v3613, 1.442695
    %v3615 = vpow.pop %v3614
    %v3616 = vadd.f32 %v3615, 1.0
    %v3617 = vrcp.pop %v3616
    %v3618 = vmul.f32 1.0, %v3617
    %v3619 = vtanh.pop %v3605
    %v3620 = vxor.u32 %v3606, 2147483648
    %v3621 = vmul.f32 %v3620, 1.442695
    %v3622 = vpow.pop %v3621
    %v3623 = vadd.f32 %v3622, 1.0
    %v3624 = vrcp.pop %v3623
    %v3625 = vmul.f32 1.0, %v3624
    %v3626 = vmul.f32 %v3618, %v3124
    %v3627 = vmul.f32 %v3612, %v3619
    %v3628 = vadd.f32 %v3626, %v3627
    %v3629 = vtanh.pop %v3628
    %v3630 = vmul.f32 %v3625, %v3629
    %v3631 = vpack.c.bf16 %v3630, %v3630
    %3632 = vmatprep.subr.bf16.mxu0 %v1074
    %3633 = vmatpush1.bf16.msra.mxu0 %v1073
    %3634 = vmatprep.subr.bf16.mxu0 %v1078
    %3635 = vmatpush1.bf16.msra.mxu0 %v1077
    %3636 = vmatprep.subr.bf16.mxu0 %v1082
    %3637 = vmatpush1.bf16.msra.mxu0 %v1081
    %3638 = vmatprep.subr.bf16.mxu0 %v1086
    %3639 = vmatpush1.bf16.msra.mxu0 %v1085
    %3640 = vmatprep.subr.bf16.mxu0 %v1090
    %3641 = vmatpush1.bf16.msra.mxu0 %v1089
    %3642 = vmatprep.subr.bf16.mxu0 %v1094
    %3643 = vmatpush1.bf16.msra.mxu0 %v1093
    %3644 = vmatprep.subr.bf16.mxu0 %v1098
    %3645 = vmatpush1.bf16.msra.mxu0 %v1097
    %3646 = vmatprep.subr.bf16.mxu0 %v1102
    %3647 = vmatpush1.bf16.msra.mxu0 %v1101
    %3648 = vmatprep.subr.bf16.mxu0 0
    %3649 = vmatpush1.bf16.msra.mxu0 0
    %3650 = vmatprep.subr.bf16.mxu0 0
    %3651 = vmatpush1.bf16.msra.mxu0 0
    %3652 = vmatprep.subr.bf16.mxu0 0
    %3653 = vmatpush1.bf16.msra.mxu0 0
    %3654 = vmatprep.subr.bf16.mxu0 0
    %3655 = vmatpush1.bf16.msra.mxu0 0
    %3656 = vmatprep.subr.bf16.mxu0 0
    %3657 = vmatpush1.bf16.msra.mxu0 0
    %3658 = vmatprep.subr.bf16.mxu0 0
    %3659 = vmatpush1.bf16.msra.mxu0 0
    %3660 = vmatprep.subr.bf16.mxu0 0
    %3661 = vmatpush1.bf16.msra.mxu0 0
    %3662 = vmatprep.subr.bf16.mxu0 0
    %3663 = vmatpush1.bf16.msra.mxu0 0
    %3664 = vmatprep.mubr.bf16.mxu0 0
    %3665 = vmatmul.mubr.bf16.gmra.mrb[0].mxu0 %v3320
    %v3666 = vpop.f32.mrb[0].mxu0
    %v3667 = vadd.f32 0.0, %v3666
    %v3668 = vpop.f32.mrb[0].mxu0
    %v3669 = vadd.f32 0.0, %v3668
    %v3670 = vpop.f32.mrb[0].mxu0
    %v3671 = vpop.f32.mrb[0].mxu0
    %3672 = vdwg.mxu0
    %3673 = vmatprep.subr.bf16.mxu0 %v1076
    %3674 = vmatpush1.bf16.msra.mxu0 %v1075
    %3675 = vmatprep.subr.bf16.mxu0 %v1080
    %3676 = vmatpush1.bf16.msra.mxu0 %v1079
    %3677 = vmatprep.subr.bf16.mxu0 %v1084
    %3678 = vmatpush1.bf16.msra.mxu0 %v1083
    %3679 = vmatprep.subr.bf16.mxu0 %v1088
    %3680 = vmatpush1.bf16.msra.mxu0 %v1087
    %3681 = vmatprep.subr.bf16.mxu0 %v1092
    %3682 = vmatpush1.bf16.msra.mxu0 %v1091
    %3683 = vmatprep.subr.bf16.mxu0 %v1096
    %3684 = vmatpush1.bf16.msra.mxu0 %v1095
    %3685 = vmatprep.subr.bf16.mxu0 %v1100
    %3686 = vmatpush1.bf16.msra.mxu0 %v1099
    %3687 = vmatprep.subr.bf16.mxu0 %v1104
    %3688 = vmatpush1.bf16.msra.mxu0 %v1103
    %3689 = vmatprep.subr.bf16.mxu0 0
    %3690 = vmatpush1.bf16.msra.mxu0 0
    %3691 = vmatprep.subr.bf16.mxu0 0
    %3692 = vmatpush1.bf16.msra.mxu0 0
    %3693 = vmatprep.subr.bf16.mxu0 0
    %3694 = vmatpush1.bf16.msra.mxu0 0
    %3695 = vmatprep.subr.bf16.mxu0 0
    %3696 = vmatpush1.bf16.msra.mxu0 0
    %3697 = vmatprep.subr.bf16.mxu0 0
    %3698 = vmatpush1.bf16.msra.mxu0 0
    %3699 = vmatprep.subr.bf16.mxu0 0
    %3700 = vmatpush1.bf16.msra.mxu0 0
    %3701 = vmatprep.subr.bf16.mxu0 0
    %3702 = vmatpush1.bf16.msra.mxu0 0
    %3703 = vmatprep.subr.bf16.mxu0 0
    %3704 = vmatpush1.bf16.msra.mxu0 0
    %3705 = vmatprep.mubr.bf16.mxu0 0
    %3706 = vmatmul.mubr.bf16.gmra.mrb[0].mxu0 %v3320
    %v3707 = vpop.f32.mrb[0].mxu0
    %v3708 = vadd.f32 0.0, %v3707
    %v3709 = vpop.f32.mrb[0].mxu0
    %v3710 = vadd.f32 0.0, %v3709
    %v3711 = vpop.f32.mrb[0].mxu0
    %v3712 = vpop.f32.mrb[0].mxu0
    %3713 = vdwg.mxu0
    %3714 = vmatprep.subr.bf16.mxu0 %v1316
    %3715 = vmatpush1.bf16.msra.mxu0 %v1315
    %3716 = vmatprep.subr.bf16.mxu0 %v1320
    %3717 = vmatpush1.bf16.msra.mxu0 %v1319
    %3718 = vmatprep.subr.bf16.mxu0 %v1324
    %3719 = vmatpush1.bf16.msra.mxu0 %v1323
    %3720 = vmatprep.subr.bf16.mxu0 %v1328
    %3721 = vmatpush1.bf16.msra.mxu0 %v1327
    %3722 = vmatprep.subr.bf16.mxu0 %v1332
    %3723 = vmatpush1.bf16.msra.mxu0 %v1331
    %3724 = vmatprep.subr.bf16.mxu0 %v1336
    %3725 = vmatpush1.bf16.msra.mxu0 %v1335
    %3726 = vmatprep.subr.bf16.mxu0 %v1340
    %3727 = vmatpush1.bf16.msra.mxu0 %v1339
    %3728 = vmatprep.subr.bf16.mxu0 %v1344
    %3729 = vmatpush1.bf16.msra.mxu0 %v1343
    %3730 = vmatprep.subr.bf16.mxu0 0
    %3731 = vmatpush1.bf16.msra.mxu0 0
    %3732 = vmatprep.subr.bf16.mxu0 0
    %3733 = vmatpush1.bf16.msra.mxu0 0
    %3734 = vmatprep.subr.bf16.mxu0 0
    %3735 = vmatpush1.bf16.msra.mxu0 0
    %3736 = vmatprep.subr.bf16.mxu0 0
    %3737 = vmatpush1.bf16.msra.mxu0 0
    %3738 = vmatprep.subr.bf16.mxu0 0
    %3739 = vmatpush1.bf16.msra.mxu0 0
    %3740 = vmatprep.subr.bf16.mxu0 0
    %3741 = vmatpush1.bf16.msra.mxu0 0
    %3742 = vmatprep.subr.bf16.mxu0 0
    %3743 = vmatpush1.bf16.msra.mxu0 0
    %3744 = vmatprep.subr.bf16.mxu0 0
    %3745 = vmatpush1.bf16.msra.mxu0 0
    %3746 = vmatprep.mubr.bf16.mxu0 0
    %3747 = vmatmul.mubr.bf16.gmra.mrb[0].mxu0 %v3631
    %v3748 = vpop.f32.mrb[0].mxu0
    %v3749 = vadd.f32 %v3667, %v3748
    %v3750 = vpop.f32.mrb[0].mxu0
    %v3751 = vadd.f32 %v3669, %v3750
    %v3752 = vpop.f32.mrb[0].mxu0
    %v3753 = vpop.f32.mrb[0].mxu0
    %3754 = vdwg.mxu0
    %3755 = vmatprep.subr.bf16.mxu0 %v1318
    %3756 = vmatpush1.bf16.msra.mxu0 %v1317
    %3757 = vmatprep.subr.bf16.mxu0 %v1322
    %3758 = vmatpush1.bf16.msra.mxu0 %v1321
    %3759 = vmatprep.subr.bf16.mxu0 %v1326
    %3760 = vmatpush1.bf16.msra.mxu0 %v1325
    %3761 = vmatprep.subr.bf16.mxu0 %v1330
    %3762 = vmatpush1.bf16.msra.mxu0 %v1329
    %3763 = vmatprep.subr.bf16.mxu0 %v1334
    %3764 = vmatpush1.bf16.msra.mxu0 %v1333
    %3765 = vmatprep.subr.bf16.mxu0 %v1338
    %3766 = vmatpush1.bf16.msra.mxu0 %v1337
    %3767 = vmatprep.subr.bf16.mxu0 %v1342
    %3768 = vmatpush1.bf16.msra.mxu0 %v1341
    %3769 = vmatprep.subr.bf16.mxu0 %v1346
    %3770 = vmatpush1.bf16.msra.mxu0 %v1345
    %3771 = vmatprep.subr.bf16.mxu0 0
    %3772 = vmatpush1.bf16.msra.mxu0 0
    %3773 = vmatprep.subr.bf16.mxu0 0
    %3774 = vmatpush1.bf16.msra.mxu0 0
    %3775 = vmatprep.subr.bf16.mxu0 0
    %3776 = vmatpush1.bf16.msra.mxu0 0
    %3777 = vmatprep.subr.bf16.mxu0 0
    %3778 = vmatpush1.bf16.msra.mxu0 0
    %3779 = vmatprep.subr.bf16.mxu0 0
    %3780 = vmatpush1.bf16.msra.mxu0 0
    %3781 = vmatprep.subr.bf16.mxu0 0
    %3782 = vmatpush1.bf16.msra.mxu0 0
    %3783 = vmatprep.subr.bf16.mxu0 0
    %3784 = vmatpush1.bf16.msra.mxu0 0
    %3785 = vmatprep.subr.bf16.mxu0 0
    %3786 = vmatpush1.bf16.msra.mxu0 0
    %3787 = vmatprep.mubr.bf16.mxu0 0
    %3788 = vmatmul.mubr.bf16.gmra.mrb[0].mxu0 %v3631
    %v3789 = vpop.f32.mrb[0].mxu0
    %v3790 = vadd.f32 %v3708, %v3789
    %v3791 = vpop.f32.mrb[0].mxu0
    %v3792 = vadd.f32 %v3710, %v3791
    %v3793 = vpop.f32.mrb[0].mxu0
    %v3794 = vpop.f32.mrb[0].mxu0
    %3795 = vdwg.mxu0
    %v3796 = vadd.f32 %v3749, %v660
    %v3797 = vadd.f32 %v3751, %v664
    %v3798 = vadd.f32 %v3790, %v668
    %v3799 = vadd.f32 %v3792, %v672
    %v3800 = vxor.u32 %v3796, 2147483648
    %v3801 = vmul.f32 %v3800, 1.442695
    %v3802 = vpow.pop %v3801
    %v3803 = vadd.f32 %v3802, 1.0
    %v3804 = vrcp.pop %v3803
    %v3805 = vmul.f32 1.0, %v3804
    %v3806 = vxor.u32 %v3797, 2147483648
    %v3807 = vmul.f32 %v3806, 1.442695
    %v3808 = vpow.pop %v3807
    %v3809 = vadd.f32 %v3808, 1.0
    %v3810 = vrcp.pop %v3809
    %v3811 = vmul.f32 1.0, %v3810
    %v3812 = vtanh.pop %v3798
    %v3813 = vxor.u32 %v3799, 2147483648
    %v3814 = vmul.f32 %v3813, 1.442695
    %v3815 = vpow.pop %v3814
    %v3816 = vadd.f32 %v3815, 1.0
    %v3817 = vrcp.pop %v3816
    %v3818 = vmul.f32 1.0, %v3817
    %v3819 = vmul.f32 %v3811, %v3317
    %v3820 = vmul.f32 %v3805, %v3812
    %v3821 = vadd.f32 %v3819, %v3820
    %v3822 = vtanh.pop %v3821
    %v3823 = vmul.f32 %v3818, %v3822
    %v3824 = vpack.c.bf16 %v3823, %v3823
    %v3825 = vpack.c.bf16 %v3513, %v3513
    %3826 = vmatprep.subr.bf16.mxu0 %v1587
    %3827 = vmatpush1.bf16.msra.mxu0 %v1586
    %3828 = vmatprep.subr.bf16.mxu0 %v1591
    %3829 = vmatpush1.bf16.msra.mxu0 %v1590
    %3830 = vmatprep.subr.bf16.mxu0 %v1595
    %3831 = vmatpush1.bf16.msra.mxu0 %v1594
    %3832 = vmatprep.subr.bf16.mxu0 %v1599
    %3833 = vmatpush1.bf16.msra.mxu0 %v1598
    %3834 = vmatprep.subr.bf16.mxu0 %v1603
    %3835 = vmatpush1.bf16.msra.mxu0 %v1602
    %3836 = vmatprep.subr.bf16.mxu0 %v1607
    %3837 = vmatpush1.bf16.msra.mxu0 %v1606
    %3838 = vmatprep.subr.bf16.mxu0 %v1611
    %3839 = vmatpush1.bf16.msra.mxu0 %v1610
    %3840 = vmatprep.subr.bf16.mxu0 %v1615
    %3841 = vmatpush1.bf16.msra.mxu0 %v1614
    %3842 = vmatprep.subr.bf16.mxu0 0
    %3843 = vmatpush1.bf16.msra.mxu0 0
    %3844 = vmatprep.subr.bf16.mxu0 0
    %3845 = vmatpush1.bf16.msra.mxu0 0
    %3846 = vmatprep.subr.bf16.mxu0 0
    %3847 = vmatpush1.bf16.msra.mxu0 0
    %3848 = vmatprep.subr.bf16.mxu0 0
    %3849 = vmatpush1.bf16.msra.mxu0 0
    %3850 = vmatprep.subr.bf16.mxu0 0
    %3851 = vmatpush1.bf16.msra.mxu0 0
    %3852 = vmatprep.subr.bf16.mxu0 0
    %3853 = vmatpush1.bf16.msra.mxu0 0
    %3854 = vmatprep.subr.bf16.mxu0 0
    %3855 = vmatpush1.bf16.msra.mxu0 0
    %3856 = vmatprep.subr.bf16.mxu0 0
    %3857 = vmatpush1.bf16.msra.mxu0 0
    %3858 = vmatprep.mubr.bf16.mxu0 0
    %3859 = vmatmul.mubr.bf16.gmra.mrb[0].mxu0 %v3825
    %v3860 = vpop.f32.mrb[0].mxu0
    %v3861 = vadd.f32 0.0, %v3860
    %v3862 = vpop.f32.mrb[0].mxu0
    %v3863 = vadd.f32 0.0, %v3862
    %v3864 = vpop.f32.mrb[0].mxu0
    %v3865 = vpop.f32.mrb[0].mxu0
    %3866 = vdwg.mxu0
    %3867 = vmatprep.subr.bf16.mxu0 %v1589
    %3868 = vmatpush1.bf16.msra.mxu0 %v1588
    %3869 = vmatprep.subr.bf16.mxu0 %v1593
    %3870 = vmatpush1.bf16.msra.mxu0 %v1592
    %3871 = vmatprep.subr.bf16.mxu0 %v1597
    %3872 = vmatpush1.bf16.msra.mxu0 %v1596
    %3873 = vmatprep.subr.bf16.mxu0 %v1601
    %3874 = vmatpush1.bf16.msra.mxu0 %v1600
    %3875 = vmatprep.subr.bf16.mxu0 %v1605
    %3876 = vmatpush1.bf16.msra.mxu0 %v1604
    %3877 = vmatprep.subr.bf16.mxu0 %v1609
    %3878 = vmatpush1.bf16.msra.mxu0 %v1608
    %3879 = vmatprep.subr.bf16.mxu0 %v1613
    %3880 = vmatpush1.bf16.msra.mxu0 %v1612
    %3881 = vmatprep.subr.bf16.mxu0 %v1617
    %3882 = vmatpush1.bf16.msra.mxu0 %v1616
    %3883 = vmatprep.subr.bf16.mxu0 0
    %3884 = vmatpush1.bf16.msra.mxu0 0
    %3885 = vmatprep.subr.bf16.mxu0 0
    %3886 = vmatpush1.bf16.msra.mxu0 0
    %3887 = vmatprep.subr.bf16.mxu0 0
    %3888 = vmatpush1.bf16.msra.mxu0 0
    %3889 = vmatprep.subr.bf16.mxu0 0
    %3890 = vmatpush1.bf16.msra.mxu0 0
    %3891 = vmatprep.subr.bf16.mxu0 0
    %3892 = vmatpush1.bf16.msra.mxu0 0
    %3893 = vmatprep.subr.bf16.mxu0 0
    %3894 = vmatpush1.bf16.msra.mxu0 0
    %3895 = vmatprep.subr.bf16.mxu0 0
    %3896 = vmatpush1.bf16.msra.mxu0 0
    %3897 = vmatprep.subr.bf16.mxu0 0
    %3898 = vmatpush1.bf16.msra.mxu0 0
    %3899 = vmatprep.mubr.bf16.mxu0 0
    %3900 = vmatmul.mubr.bf16.gmra.mrb[0].mxu0 %v3825
    %v3901 = vpop.f32.mrb[0].mxu0
    %v3902 = vadd.f32 0.0, %v3901
    %v3903 = vpop.f32.mrb[0].mxu0
    %v3904 = vadd.f32 0.0, %v3903
    %v3905 = vpop.f32.mrb[0].mxu0
    %v3906 = vpop.f32.mrb[0].mxu0
    %3907 = vdwg.mxu0
    %3908 = vmatprep.subr.bf16.mxu0 %v1829
    %3909 = vmatpush1.bf16.msra.mxu0 %v1828
    %3910 = vmatprep.subr.bf16.mxu0 %v1833
    %3911 = vmatpush1.bf16.msra.mxu0 %v1832
    %3912 = vmatprep.subr.bf16.mxu0 %v1837
    %3913 = vmatpush1.bf16.msra.mxu0 %v1836
    %3914 = vmatprep.subr.bf16.mxu0 %v1841
    %3915 = vmatpush1.bf16.msra.mxu0 %v1840
    %3916 = vmatprep.subr.bf16.mxu0 %v1845
    %3917 = vmatpush1.bf16.msra.mxu0 %v1844
    %3918 = vmatprep.subr.bf16.mxu0 %v1849
    %3919 = vmatpush1.bf16.msra.mxu0 %v1848
    %3920 = vmatprep.subr.bf16.mxu0 %v1853
    %3921 = vmatpush1.bf16.msra.mxu0 %v1852
    %3922 = vmatprep.subr.bf16.mxu0 %v1857
    %3923 = vmatpush1.bf16.msra.mxu0 %v1856
    %3924 = vmatprep.subr.bf16.mxu0 0
    %3925 = vmatpush1.bf16.msra.mxu0 0
    %3926 = vmatprep.subr.bf16.mxu0 0
    %3927 = vmatpush1.bf16.msra.mxu0 0
    %3928 = vmatprep.subr.bf16.mxu0 0
    %3929 = vmatpush1.bf16.msra.mxu0 0
    %3930 = vmatprep.subr.bf16.mxu0 0
    %3931 = vmatpush1.bf16.msra.mxu0 0
    %3932 = vmatprep.subr.bf16.mxu0 0
    %3933 = vmatpush1.bf16.msra.mxu0 0
    %3934 = vmatprep.subr.bf16.mxu0 0
    %3935 = vmatpush1.bf16.msra.mxu0 0
    %3936 = vmatprep.subr.bf16.mxu0 0
    %3937 = vmatpush1.bf16.msra.mxu0 0
    %3938 = vmatprep.subr.bf16.mxu0 0
    %3939 = vmatpush1.bf16.msra.mxu0 0
    %3940 = vmatprep.mubr.bf16.mxu0 0
    %3941 = vmatmul.mubr.bf16.gmra.mrb[0].mxu0 %v3824
    %v3942 = vpop.f32.mrb[0].mxu0
    %v3943 = vadd.f32 %v3861, %v3942
    %v3944 = vpop.f32.mrb[0].mxu0
    %v3945 = vadd.f32 %v3863, %v3944
    %v3946 = vpop.f32.mrb[0].mxu0
    %v3947 = vpop.f32.mrb[0].mxu0
    %3948 = vdwg.mxu0
    %3949 = vmatprep.subr.bf16.mxu0 %v1831
    %3950 = vmatpush1.bf16.msra.mxu0 %v1830
    %3951 = vmatprep.subr.bf16.mxu0 %v1835
    %3952 = vmatpush1.bf16.msra.mxu0 %v1834
    %3953 = vmatprep.subr.bf16.mxu0 %v1839
    %3954 = vmatpush1.bf16.msra.mxu0 %v1838
    %3955 = vmatprep.subr.bf16.mxu0 %v1843
    %3956 = vmatpush1.bf16.msra.mxu0 %v1842
    %3957 = vmatprep.subr.bf16.mxu0 %v1847
    %3958 = vmatpush1.bf16.msra.mxu0 %v1846
    %3959 = vmatprep.subr.bf16.mxu0 %v1851
    %3960 = vmatpush1.bf16.msra.mxu0 %v1850
    %3961 = vmatprep.subr.bf16.mxu0 %v1855
    %3962 = vmatpush1.bf16.msra.mxu0 %v1854
    %3963 = vmatprep.subr.bf16.mxu0 %v1859
    %3964 = vmatpush1.bf16.msra.mxu0 %v1858
    %3965 = vmatprep.subr.bf16.mxu0 0
    %3966 = vmatpush1.bf16.msra.mxu0 0
    %3967 = vmatprep.subr.bf16.mxu0 0
    %3968 = vmatpush1.bf16.msra.mxu0 0
    %3969 = vmatprep.subr.bf16.mxu0 0
    %3970 = vmatpush1.bf16.msra.mxu0 0
    %3971 = vmatprep.subr.bf16.mxu0 0
    %3972 = vmatpush1.bf16.msra.mxu0 0
    %3973 = vmatprep.subr.bf16.mxu0 0
    %3974 = vmatpush1.bf16.msra.mxu0 0
    %3975 = vmatprep.subr.bf16.mxu0 0
    %3976 = vmatpush1.bf16.msra.mxu0 0
    %3977 = vmatprep.subr.bf16.mxu0 0
    %3978 = vmatpush1.bf16.msra.mxu0 0
    %3979 = vmatprep.subr.bf16.mxu0 0
    %3980 = vmatpush1.bf16.msra.mxu0 0
    %3981 = vmatprep.mubr.bf16.mxu0 0
    %3982 = vmatmul.mubr.bf16.gmra.mrb[0].mxu0 %v3824
    %v3983 = vpop.f32.mrb[0].mxu0
    %v3984 = vadd.f32 %v3902, %v3983
    %v3985 = vpop.f32.mrb[0].mxu0
    %v3986 = vadd.f32 %v3904, %v3985
    %v3987 = vpop.f32.mrb[0].mxu0
    %v3988 = vpop.f32.mrb[0].mxu0
    %3989 = vdwg.mxu0
    %v3990 = vadd.f32 %v3943, %v682
    %v3991 = vadd.f32 %v3945, %v686
    %v3992 = vadd.f32 %v3984, %v690
    %v3993 = vadd.f32 %v3986, %v694
    %v3994 = vxor.u32 %v3990, 2147483648
    %v3995 = vmul.f32 %v3994, 1.442695
    %v3996 = vpow.pop %v3995
    %v3997 = vadd.f32 %v3996, 1.0
    %v3998 = vrcp.pop %v3997
    %v3999 = vmul.f32 1.0, %v3998
    %v4000 = vxor.u32 %v3991, 2147483648
    %v4001 = vmul.f32 %v4000, 1.442695
    %v4002 = vpow.pop %v4001
    %v4003 = vadd.f32 %v4002, 1.0
    %v4004 = vrcp.pop %v4003
    %v4005 = vmul.f32 1.0, %v4004
    %v4006 = vtanh.pop %v3992
    %v4007 = vxor.u32 %v3993, 2147483648
    %v4008 = vmul.f32 %v4007, 1.442695
    %v4009 = vpow.pop %v4008
    %v4010 = vadd.f32 %v4009, 1.0
    %v4011 = vrcp.pop %v4010
    %v4012 = vmul.f32 1.0, %v4011
    %v4013 = vmul.f32 %v4005, %v3511
    %v4014 = vmul.f32 %v3999, %v4006
    %v4015 = vadd.f32 %v4013, %v4014
    %v4016 = vtanh.pop %v4015
    %v4017 = vmul.f32 %v4012, %v4016
    %s4018 = smul.u32 5, 4
    %s4019 = smul.addr %s4018, 8
    %s4020 = scalar_lea.vmem [#allocation2], %s4019
    %v4021 = vld [vmem:[%s4020] sm:$0xff]
    %v4022 = vld [vmem:[%s4020 + $0x8] sm:$0xff]
    %v4023 = vld [vmem:[%s4020 + $0x10] sm:$0xff]
    %v4024 = vld [vmem:[%s4020 + $0x18] sm:$0xff]
    %4025 = vmatprep.subr.bf16.mxu0 %v803
    %4026 = vmatpush1.bf16.msra.mxu0 %v802
    %4027 = vmatprep.subr.bf16.mxu0 %v807
    %4028 = vmatpush1.bf16.msra.mxu0 %v806
    %4029 = vmatprep.subr.bf16.mxu0 %v811
    %4030 = vmatpush1.bf16.msra.mxu0 %v810
    %4031 = vmatprep.subr.bf16.mxu0 %v815
    %4032 = vmatpush1.bf16.msra.mxu0 %v814
    %4033 = vmatprep.subr.bf16.mxu0 %v819
    %4034 = vmatpush1.bf16.msra.mxu0 %v818
    %4035 = vmatprep.subr.bf16.mxu0 %v823
    %4036 = vmatpush1.bf16.msra.mxu0 %v822
    %4037 = vmatprep.subr.bf16.mxu0 %v827
    %4038 = vmatpush1.bf16.msra.mxu0 %v826
    %4039 = vmatprep.subr.bf16.mxu0 %v831
    %4040 = vmatpush1.bf16.msra.mxu0 %v830
    %4041 = vmatprep.subr.bf16.mxu0 0
    %4042 = vmatpush1.bf16.msra.mxu0 0
    %4043 = vmatprep.subr.bf16.mxu0 0
    %4044 = vmatpush1.bf16.msra.mxu0 0
    %4045 = vmatprep.subr.bf16.mxu0 0
    %4046 = vmatpush1.bf16.msra.mxu0 0
    %4047 = vmatprep.subr.bf16.mxu0 0
    %4048 = vmatpush1.bf16.msra.mxu0 0
    %4049 = vmatprep.subr.bf16.mxu0 0
    %4050 = vmatpush1.bf16.msra.mxu0 0
    %4051 = vmatprep.subr.bf16.mxu0 0
    %4052 = vmatpush1.bf16.msra.mxu0 0
    %4053 = vmatprep.subr.bf16.mxu0 0
    %4054 = vmatpush1.bf16.msra.mxu0 0
    %4055 = vmatprep.subr.bf16.mxu0 0
    %4056 = vmatpush1.bf16.msra.mxu0 0
    %4057 = vmatprep.mubr.bf16.mxu0 0
    %4058 = vmatmul.mubr.bf16.gmra.mrb[0].mxu0 %v3631
    %v4059 = vpop.f32.mrb[0].mxu0
    %v4060 = vadd.f32 0.0, %v4059
    %v4061 = vpop.f32.mrb[0].mxu0
    %v4062 = vadd.f32 0.0, %v4061
    %v4063 = vpop.f32.mrb[0].mxu0
    %v4064 = vpop.f32.mrb[0].mxu0
    %4065 = vdwg.mxu0
    %4066 = vmatprep.subr.bf16.mxu0 %v805
    %4067 = vmatpush1.bf16.msra.mxu0 %v804
    %4068 = vmatprep.subr.bf16.mxu0 %v809
    %4069 = vmatpush1.bf16.msra.mxu0 %v808
    %4070 = vmatprep.subr.bf16.mxu0 %v813
    %4071 = vmatpush1.bf16.msra.mxu0 %v812
    %4072 = vmatprep.subr.bf16.mxu0 %v817
    %4073 = vmatpush1.bf16.msra.mxu0 %v816
    %4074 = vmatprep.subr.bf16.mxu0 %v821
    %4075 = vmatpush1.bf16.msra.mxu0 %v820
    %4076 = vmatprep.subr.bf16.mxu0 %v825
    %4077 = vmatpush1.bf16.msra.mxu0 %v824
    %4078 = vmatprep.subr.bf16.mxu0 %v829
    %4079 = vmatpush1.bf16.msra.mxu0 %v828
    %4080 = vmatprep.subr.bf16.mxu0 %v833
    %4081 = vmatpush1.bf16.msra.mxu0 %v832
    %4082 = vmatprep.subr.bf16.mxu0 0
    %4083 = vmatpush1.bf16.msra.mxu0 0
    %4084 = vmatprep.subr.bf16.mxu0 0
    %4085 = vmatpush1.bf16.msra.mxu0 0
    %4086 = vmatprep.subr.bf16.mxu0 0
    %4087 = vmatpush1.bf16.msra.mxu0 0
    %4088 = vmatprep.subr.bf16.mxu0 0
    %4089 = vmatpush1.bf16.msra.mxu0 0
    %4090 = vmatprep.subr.bf16.mxu0 0
    %4091 = vmatpush1.bf16.msra.mxu0 0
    %4092 = vmatprep.subr.bf16.mxu0 0
    %4093 = vmatpush1.bf16.msra.mxu0 0
    %4094 = vmatprep.subr.bf16.mxu0 0
    %4095 = vmatpush1.bf16.msra.mxu0 0
    %4096 = vmatprep.subr.bf16.mxu0 0
    %4097 = vmatpush1.bf16.msra.mxu0 0
    %4098 = vmatprep.mubr.bf16.mxu0 0
    %4099 = vmatmul.mubr.bf16.gmra.mrb[0].mxu0 %v3631
    %v4100 = vpop.f32.mrb[0].mxu0
    %v4101 = vadd.f32 0.0, %v4100
    %v4102 = vpop.f32.mrb[0].mxu0
    %v4103 = vadd.f32 0.0, %v4102
    %v4104 = vpop.f32.mrb[0].mxu0
    %v4105 = vpop.f32.mrb[0].mxu0
    %4106 = vdwg.mxu0
    %v4107 = vadd.f32 %v4021, %v4060
    %v4108 = vadd.f32 %v4022, %v4062
    %v4109 = vadd.f32 %v4023, %v4101
    %v4110 = vadd.f32 %v4024, %v4103
    %v4111 = vxor.u32 %v4107, 2147483648
    %v4112 = vmul.f32 %v4111, 1.442695
    %v4113 = vpow.pop %v4112
    %v4114 = vadd.f32 %v4113, 1.0
    %v4115 = vrcp.pop %v4114
    %v4116 = vmul.f32 1.0, %v4115
    %v4117 = vxor.u32 %v4108, 2147483648
    %v4118 = vmul.f32 %v4117, 1.442695
    %v4119 = vpow.pop %v4118
    %v4120 = vadd.f32 %v4119, 1.0
    %v4121 = vrcp.pop %v4120
    %v4122 = vmul.f32 1.0, %v4121
    %v4123 = vtanh.pop %v4109
    %v4124 = vxor.u32 %v4110, 2147483648
    %v4125 = vmul.f32 %v4124, 1.442695
    %v4126 = vpow.pop %v4125
    %v4127 = vadd.f32 %v4126, 1.0
    %v4128 = vrcp.pop %v4127
    %v4129 = vmul.f32 1.0, %v4128
    %v4130 = vmul.f32 %v4122, %v3628
    %v4131 = vmul.f32 %v4116, %v4123
    %v4132 = vadd.f32 %v4130, %v4131
    %v4133 = vtanh.pop %v4132
    %v4134 = vmul.f32 %v4129, %v4133
    %v4135 = vpack.c.bf16 %v4134, %v4134
    %4136 = vmatprep.subr.bf16.mxu0 %v1074
    %4137 = vmatpush1.bf16.msra.mxu0 %v1073
    %4138 = vmatprep.subr.bf16.mxu0 %v1078
    %4139 = vmatpush1.bf16.msra.mxu0 %v1077
    %4140 = vmatprep.subr.bf16.mxu0 %v1082
    %4141 = vmatpush1.bf16.msra.mxu0 %v1081
    %4142 = vmatprep.subr.bf16.mxu0 %v1086
    %4143 = vmatpush1.bf16.msra.mxu0 %v1085
    %4144 = vmatprep.subr.bf16.mxu0 %v1090
    %4145 = vmatpush1.bf16.msra.mxu0 %v1089
    %4146 = vmatprep.subr.bf16.mxu0 %v1094
    %4147 = vmatpush1.bf16.msra.mxu0 %v1093
    %4148 = vmatprep.subr.bf16.mxu0 %v1098
    %4149 = vmatpush1.bf16.msra.mxu0 %v1097
    %4150 = vmatprep.subr.bf16.mxu0 %v1102
    %4151 = vmatpush1.bf16.msra.mxu0 %v1101
    %4152 = vmatprep.subr.bf16.mxu0 0
    %4153 = vmatpush1.bf16.msra.mxu0 0
    %4154 = vmatprep.subr.bf16.mxu0 0
    %4155 = vmatpush1.bf16.msra.mxu0 0
    %4156 = vmatprep.subr.bf16.mxu0 0
    %4157 = vmatpush1.bf16.msra.mxu0 0
    %4158 = vmatprep.subr.bf16.mxu0 0
    %4159 = vmatpush1.bf16.msra.mxu0 0
    %4160 = vmatprep.subr.bf16.mxu0 0
    %4161 = vmatpush1.bf16.msra.mxu0 0
    %4162 = vmatprep.subr.bf16.mxu0 0
    %4163 = vmatpush1.bf16.msra.mxu0 0
    %4164 = vmatprep.subr.bf16.mxu0 0
    %4165 = vmatpush1.bf16.msra.mxu0 0
    %4166 = vmatprep.subr.bf16.mxu0 0
    %4167 = vmatpush1.bf16.msra.mxu0 0
    %4168 = vmatprep.mubr.bf16.mxu0 0
    %4169 = vmatmul.mubr.bf16.gmra.mrb[0].mxu0 %v3824
    %v4170 = vpop.f32.mrb[0].mxu0
    %v4171 = vadd.f32 0.0, %v4170
    %v4172 = vpop.f32.mrb[0].mxu0
    %v4173 = vadd.f32 0.0, %v4172
    %v4174 = vpop.f32.mrb[0].mxu0
    %v4175 = vpop.f32.mrb[0].mxu0
    %4176 = vdwg.mxu0
    %4177 = vmatprep.subr.bf16.mxu0 %v1076
    %4178 = vmatpush1.bf16.msra.mxu0 %v1075
    %4179 = vmatprep.subr.bf16.mxu0 %v1080
    %4180 = vmatpush1.bf16.msra.mxu0 %v1079
    %4181 = vmatprep.subr.bf16.mxu0 %v1084
    %4182 = vmatpush1.bf16.msra.mxu0 %v1083
    %4183 = vmatprep.subr.bf16.mxu0 %v1088
    %4184 = vmatpush1.bf16.msra.mxu0 %v1087
    %4185 = vmatprep.subr.bf16.mxu0 %v1092
    %4186 = vmatpush1.bf16.msra.mxu0 %v1091
    %4187 = vmatprep.subr.bf16.mxu0 %v1096
    %4188 = vmatpush1.bf16.msra.mxu0 %v1095
    %4189 = vmatprep.subr.bf16.mxu0 %v1100
    %4190 = vmatpush1.bf16.msra.mxu0 %v1099
    %4191 = vmatprep.subr.bf16.mxu0 %v1104
    %4192 = vmatpush1.bf16.msra.mxu0 %v1103
    %4193 = vmatprep.subr.bf16.mxu0 0
    %4194 = vmatpush1.bf16.msra.mxu0 0
    %4195 = vmatprep.subr.bf16.mxu0 0
    %4196 = vmatpush1.bf16.msra.mxu0 0
    %4197 = vmatprep.subr.bf16.mxu0 0
    %4198 = vmatpush1.bf16.msra.mxu0 0
    %4199 = vmatprep.subr.bf16.mxu0 0
    %4200 = vmatpush1.bf16.msra.mxu0 0
    %4201 = vmatprep.subr.bf16.mxu0 0
    %4202 = vmatpush1.bf16.msra.mxu0 0
    %4203 = vmatprep.subr.bf16.mxu0 0
    %4204 = vmatpush1.bf16.msra.mxu0 0
    %4205 = vmatprep.subr.bf16.mxu0 0
    %4206 = vmatpush1.bf16.msra.mxu0 0
    %4207 = vmatprep.subr.bf16.mxu0 0
    %4208 = vmatpush1.bf16.msra.mxu0 0
    %4209 = vmatprep.mubr.bf16.mxu0 0
    %4210 = vmatmul.mubr.bf16.gmra.mrb[0].mxu0 %v3824
    %v4211 = vpop.f32.mrb[0].mxu0
    %v4212 = vadd.f32 0.0, %v4211
    %v4213 = vpop.f32.mrb[0].mxu0
    %v4214 = vadd.f32 0.0, %v4213
    %v4215 = vpop.f32.mrb[0].mxu0
    %v4216 = vpop.f32.mrb[0].mxu0
    %4217 = vdwg.mxu0
    %4218 = vmatprep.subr.bf16.mxu0 %v1316
    %4219 = vmatpush1.bf16.msra.mxu0 %v1315
    %4220 = vmatprep.subr.bf16.mxu0 %v1320
    %4221 = vmatpush1.bf16.msra.mxu0 %v1319
    %4222 = vmatprep.subr.bf16.mxu0 %v1324
    %4223 = vmatpush1.bf16.msra.mxu0 %v1323
    %4224 = vmatprep.subr.bf16.mxu0 %v1328
    %4225 = vmatpush1.bf16.msra.mxu0 %v1327
    %4226 = vmatprep.subr.bf16.mxu0 %v1332
    %4227 = vmatpush1.bf16.msra.mxu0 %v1331
    %4228 = vmatprep.subr.bf16.mxu0 %v1336
    %4229 = vmatpush1.bf16.msra.mxu0 %v1335
    %4230 = vmatprep.subr.bf16.mxu0 %v1340
    %4231 = vmatpush1.bf16.msra.mxu0 %v1339
    %4232 = vmatprep.subr.bf16.mxu0 %v1344
    %4233 = vmatpush1.bf16.msra.mxu0 %v1343
    %4234 = vmatprep.subr.bf16.mxu0 0
    %4235 = vmatpush1.bf16.msra.mxu0 0
    %4236 = vmatprep.subr.bf16.mxu0 0
    %4237 = vmatpush1.bf16.msra.mxu0 0
    %4238 = vmatprep.subr.bf16.mxu0 0
    %4239 = vmatpush1.bf16.msra.mxu0 0
    %4240 = vmatprep.subr.bf16.mxu0 0
    %4241 = vmatpush1.bf16.msra.mxu0 0
    %4242 = vmatprep.subr.bf16.mxu0 0
    %4243 = vmatpush1.bf16.msra.mxu0 0
    %4244 = vmatprep.subr.bf16.mxu0 0
    %4245 = vmatpush1.bf16.msra.mxu0 0
    %4246 = vmatprep.subr.bf16.mxu0 0
    %4247 = vmatpush1.bf16.msra.mxu0 0
    %4248 = vmatprep.subr.bf16.mxu0 0
    %4249 = vmatpush1.bf16.msra.mxu0 0
    %4250 = vmatprep.mubr.bf16.mxu0 0
    %4251 = vmatmul.mubr.bf16.gmra.mrb[0].mxu0 %v4135
    %v4252 = vpop.f32.mrb[0].mxu0
    %v4253 = vadd.f32 %v4171, %v4252
    %v4254 = vpop.f32.mrb[0].mxu0
    %v4255 = vadd.f32 %v4173, %v4254
    %v4256 = vpop.f32.mrb[0].mxu0
    %v4257 = vpop.f32.mrb[0].mxu0
    %4258 = vdwg.mxu0
    %4259 = vmatprep.subr.bf16.mxu0 %v1318
    %4260 = vmatpush1.bf16.msra.mxu0 %v1317
    %4261 = vmatprep.subr.bf16.mxu0 %v1322
    %4262 = vmatpush1.bf16.msra.mxu0 %v1321
    %4263 = vmatprep.subr.bf16.mxu0 %v1326
    %4264 = vmatpush1.bf16.msra.mxu0 %v1325
    %4265 = vmatprep.subr.bf16.mxu0 %v1330
    %4266 = vmatpush1.bf16.msra.mxu0 %v1329
    %4267 = vmatprep.subr.bf16.mxu0 %v1334
    %4268 = vmatpush1.bf16.msra.mxu0 %v1333
    %4269 = vmatprep.subr.bf16.mxu0 %v1338
    %4270 = vmatpush1.bf16.msra.mxu0 %v1337
    %4271 = vmatprep.subr.bf16.mxu0 %v1342
    %4272 = vmatpush1.bf16.msra.mxu0 %v1341
    %4273 = vmatprep.subr.bf16.mxu0 %v1346
    %4274 = vmatpush1.bf16.msra.mxu0 %v1345
    %4275 = vmatprep.subr.bf16.mxu0 0
    %4276 = vmatpush1.bf16.msra.mxu0 0
    %4277 = vmatprep.subr.bf16.mxu0 0
    %4278 = vmatpush1.bf16.msra.mxu0 0
    %4279 = vmatprep.subr.bf16.mxu0 0
    %4280 = vmatpush1.bf16.msra.mxu0 0
    %4281 = vmatprep.subr.bf16.mxu0 0
    %4282 = vmatpush1.bf16.msra.mxu0 0
    %4283 = vmatprep.subr.bf16.mxu0 0
    %4284 = vmatpush1.bf16.msra.mxu0 0
    %4285 = vmatprep.subr.bf16.mxu0 0
    %4286 = vmatpush1.bf16.msra.mxu0 0
    %4287 = vmatprep.subr.bf16.mxu0 0
    %4288 = vmatpush1.bf16.msra.mxu0 0
    %4289 = vmatprep.subr.bf16.mxu0 0
    %4290 = vmatpush1.bf16.msra.mxu0 0
    %4291 = vmatprep.mubr.bf16.mxu0 0
    %4292 = vmatmul.mubr.bf16.gmra.mrb[0].mxu0 %v4135
    %v4293 = vpop.f32.mrb[0].mxu0
    %v4294 = vadd.f32 %v4212, %v4293
    %v4295 = vpop.f32.mrb[0].mxu0
    %v4296 = vadd.f32 %v4214, %v4295
    %v4297 = vpop.f32.mrb[0].mxu0
    %v4298 = vpop.f32.mrb[0].mxu0
    %4299 = vdwg.mxu0
    %v4300 = vadd.f32 %v4253, %v660
    %v4301 = vadd.f32 %v4255, %v664
    %v4302 = vadd.f32 %v4294, %v668
    %v4303 = vadd.f32 %v4296, %v672
    %v4304 = vxor.u32 %v4300, 2147483648
    %v4305 = vmul.f32 %v4304, 1.442695
    %v4306 = vpow.pop %v4305
    %v4307 = vadd.f32 %v4306, 1.0
    %v4308 = vrcp.pop %v4307
    %v4309 = vmul.f32 1.0, %v4308
    %v4310 = vxor.u32 %v4301, 2147483648
    %v4311 = vmul.f32 %v4310, 1.442695
    %v4312 = vpow.pop %v4311
    %v4313 = vadd.f32 %v4312, 1.0
    %v4314 = vrcp.pop %v4313
    %v4315 = vmul.f32 1.0, %v4314
    %v4316 = vtanh.pop %v4302
    %v4317 = vxor.u32 %v4303, 2147483648
    %v4318 = vmul.f32 %v4317, 1.442695
    %v4319 = vpow.pop %v4318
    %v4320 = vadd.f32 %v4319, 1.0
    %v4321 = vrcp.pop %v4320
    %v4322 = vmul.f32 1.0, %v4321
    %v4323 = vmul.f32 %v4315, %v3821
    %v4324 = vmul.f32 %v4309, %v4316
    %v4325 = vadd.f32 %v4323, %v4324
    %v4326 = vtanh.pop %v4325
    %v4327 = vmul.f32 %v4322, %v4326
    %v4328 = vpack.c.bf16 %v4327, %v4327
    %v4329 = vpack.c.bf16 %v4017, %v4017
    %4330 = vmatprep.subr.bf16.mxu0 %v1587
    %4331 = vmatpush1.bf16.msra.mxu0 %v1586
    %4332 = vmatprep.subr.bf16.mxu0 %v1591
    %4333 = vmatpush1.bf16.msra.mxu0 %v1590
    %4334 = vmatprep.subr.bf16.mxu0 %v1595
    %4335 = vmatpush1.bf16.msra.mxu0 %v1594
    %4336 = vmatprep.subr.bf16.mxu0 %v1599
    %4337 = vmatpush1.bf16.msra.mxu0 %v1598
    %4338 = vmatprep.subr.bf16.mxu0 %v1603
    %4339 = vmatpush1.bf16.msra.mxu0 %v1602
    %4340 = vmatprep.subr.bf16.mxu0 %v1607
    %4341 = vmatpush1.bf16.msra.mxu0 %v1606
    %4342 = vmatprep.subr.bf16.mxu0 %v1611
    %4343 = vmatpush1.bf16.msra.mxu0 %v1610
    %4344 = vmatprep.subr.bf16.mxu0 %v1615
    %4345 = vmatpush1.bf16.msra.mxu0 %v1614
    %4346 = vmatprep.subr.bf16.mxu0 0
    %4347 = vmatpush1.bf16.msra.mxu0 0
    %4348 = vmatprep.subr.bf16.mxu0 0
    %4349 = vmatpush1.bf16.msra.mxu0 0
    %4350 = vmatprep.subr.bf16.mxu0 0
    %4351 = vmatpush1.bf16.msra.mxu0 0
    %4352 = vmatprep.subr.bf16.mxu0 0
    %4353 = vmatpush1.bf16.msra.mxu0 0
    %4354 = vmatprep.subr.bf16.mxu0 0
    %4355 = vmatpush1.bf16.msra.mxu0 0
    %4356 = vmatprep.subr.bf16.mxu0 0
    %4357 = vmatpush1.bf16.msra.mxu0 0
    %4358 = vmatprep.subr.bf16.mxu0 0
    %4359 = vmatpush1.bf16.msra.mxu0 0
    %4360 = vmatprep.subr.bf16.mxu0 0
    %4361 = vmatpush1.bf16.msra.mxu0 0
    %4362 = vmatprep.mubr.bf16.mxu0 0
    %4363 = vmatmul.mubr.bf16.gmra.mrb[0].mxu0 %v4329
    %v4364 = vpop.f32.mrb[0].mxu0
    %v4365 = vadd.f32 0.0, %v4364
    %v4366 = vpop.f32.mrb[0].mxu0
    %v4367 = vadd.f32 0.0, %v4366
    %v4368 = vpop.f32.mrb[0].mxu0
    %v4369 = vpop.f32.mrb[0].mxu0
    %4370 = vdwg.mxu0
    %4371 = vmatprep.subr.bf16.mxu0 %v1589
    %4372 = vmatpush1.bf16.msra.mxu0 %v1588
    %4373 = vmatprep.subr.bf16.mxu0 %v1593
    %4374 = vmatpush1.bf16.msra.mxu0 %v1592
    %4375 = vmatprep.subr.bf16.mxu0 %v1597
    %4376 = vmatpush1.bf16.msra.mxu0 %v1596
    %4377 = vmatprep.subr.bf16.mxu0 %v1601
    %4378 = vmatpush1.bf16.msra.mxu0 %v1600
    %4379 = vmatprep.subr.bf16.mxu0 %v1605
    %4380 = vmatpush1.bf16.msra.mxu0 %v1604
    %4381 = vmatprep.subr.bf16.mxu0 %v1609
    %4382 = vmatpush1.bf16.msra.mxu0 %v1608
    %4383 = vmatprep.subr.bf16.mxu0 %v1613
    %4384 = vmatpush1.bf16.msra.mxu0 %v1612
    %4385 = vmatprep.subr.bf16.mxu0 %v1617
    %4386 = vmatpush1.bf16.msra.mxu0 %v1616
    %4387 = vmatprep.subr.bf16.mxu0 0
    %4388 = vmatpush1.bf16.msra.mxu0 0
    %4389 = vmatprep.subr.bf16.mxu0 0
    %4390 = vmatpush1.bf16.msra.mxu0 0
    %4391 = vmatprep.subr.bf16.mxu0 0
    %4392 = vmatpush1.bf16.msra.mxu0 0
    %4393 = vmatprep.subr.bf16.mxu0 0
    %4394 = vmatpush1.bf16.msra.mxu0 0
    %4395 = vmatprep.subr.bf16.mxu0 0
    %4396 = vmatpush1.bf16.msra.mxu0 0
    %4397 = vmatprep.subr.bf16.mxu0 0
    %4398 = vmatpush1.bf16.msra.mxu0 0
    %4399 = vmatprep.subr.bf16.mxu0 0
    %4400 = vmatpush1.bf16.msra.mxu0 0
    %4401 = vmatprep.subr.bf16.mxu0 0
    %4402 = vmatpush1.bf16.msra.mxu0 0
    %4403 = vmatprep.mubr.bf16.mxu0 0
    %4404 = vmatmul.mubr.bf16.gmra.mrb[0].mxu0 %v4329
    %v4405 = vpop.f32.mrb[0].mxu0
    %v4406 = vadd.f32 0.0, %v4405
    %v4407 = vpop.f32.mrb[0].mxu0
    %v4408 = vadd.f32 0.0, %v4407
    %v4409 = vpop.f32.mrb[0].mxu0
    %v4410 = vpop.f32.mrb[0].mxu0
    %4411 = vdwg.mxu0
    %4412 = vmatprep.subr.bf16.mxu0 %v1829
    %4413 = vmatpush1.bf16.msra.mxu0 %v1828
    %4414 = vmatprep.subr.bf16.mxu0 %v1833
    %4415 = vmatpush1.bf16.msra.mxu0 %v1832
    %4416 = vmatprep.subr.bf16.mxu0 %v1837
    %4417 = vmatpush1.bf16.msra.mxu0 %v1836
    %4418 = vmatprep.subr.bf16.mxu0 %v1841
    %4419 = vmatpush1.bf16.msra.mxu0 %v1840
    %4420 = vmatprep.subr.bf16.mxu0 %v1845
    %4421 = vmatpush1.bf16.msra.mxu0 %v1844
    %4422 = vmatprep.subr.bf16.mxu0 %v1849
    %4423 = vmatpush1.bf16.msra.mxu0 %v1848
    %4424 = vmatprep.subr.bf16.mxu0 %v1853
    %4425 = vmatpush1.bf16.msra.mxu0 %v1852
    %4426 = vmatprep.subr.bf16.mxu0 %v1857
    %4427 = vmatpush1.bf16.msra.mxu0 %v1856
    %4428 = vmatprep.subr.bf16.mxu0 0
    %4429 = vmatpush1.bf16.msra.mxu0 0
    %4430 = vmatprep.subr.bf16.mxu0 0
    %4431 = vmatpush1.bf16.msra.mxu0 0
    %4432 = vmatprep.subr.bf16.mxu0 0
    %4433 = vmatpush1.bf16.msra.mxu0 0
    %4434 = vmatprep.subr.bf16.mxu0 0
    %4435 = vmatpush1.bf16.msra.mxu0 0
    %4436 = vmatprep.subr.bf16.mxu0 0
    %4437 = vmatpush1.bf16.msra.mxu0 0
    %4438 = vmatprep.subr.bf16.mxu0 0
    %4439 = vmatpush1.bf16.msra.mxu0 0
    %4440 = vmatprep.subr.bf16.mxu0 0
    %4441 = vmatpush1.bf16.msra.mxu0 0
    %4442 = vmatprep.subr.bf16.mxu0 0
    %4443 = vmatpush1.bf16.msra.mxu0 0
    %4444 = vmatprep.mubr.bf16.mxu0 0
    %4445 = vmatmul.mubr.bf16.gmra.mrb[0].mxu0 %v4328
    %v4446 = vpop.f32.mrb[0].mxu0
    %v4447 = vadd.f32 %v4365, %v4446
    %v4448 = vpop.f32.mrb[0].mxu0
    %v4449 = vadd.f32 %v4367, %v4448
    %v4450 = vpop.f32.mrb[0].mxu0
    %v4451 = vpop.f32.mrb[0].mxu0
    %4452 = vdwg.mxu0
    %4453 = vmatprep.subr.bf16.mxu0 %v1831
    %4454 = vmatpush1.bf16.msra.mxu0 %v1830
    %4455 = vmatprep.subr.bf16.mxu0 %v1835
    %4456 = vmatpush1.bf16.msra.mxu0 %v1834
    %4457 = vmatprep.subr.bf16.mxu0 %v1839
    %4458 = vmatpush1.bf16.msra.mxu0 %v1838
    %4459 = vmatprep.subr.bf16.mxu0 %v1843
    %4460 = vmatpush1.bf16.msra.mxu0 %v1842
    %4461 = vmatprep.subr.bf16.mxu0 %v1847
    %4462 = vmatpush1.bf16.msra.mxu0 %v1846
    %4463 = vmatprep.subr.bf16.mxu0 %v1851
    %4464 = vmatpush1.bf16.msra.mxu0 %v1850
    %4465 = vmatprep.subr.bf16.mxu0 %v1855
    %4466 = vmatpush1.bf16.msra.mxu0 %v1854
    %4467 = vmatprep.subr.bf16.mxu0 %v1859
    %4468 = vmatpush1.bf16.msra.mxu0 %v1858
    %4469 = vmatprep.subr.bf16.mxu0 0
    %4470 = vmatpush1.bf16.msra.mxu0 0
    %4471 = vmatprep.subr.bf16.mxu0 0
    %4472 = vmatpush1.bf16.msra.mxu0 0
    %4473 = vmatprep.subr.bf16.mxu0 0
    %4474 = vmatpush1.bf16.msra.mxu0 0
    %4475 = vmatprep.subr.bf16.mxu0 0
    %4476 = vmatpush1.bf16.msra.mxu0 0
    %4477 = vmatprep.subr.bf16.mxu0 0
    %4478 = vmatpush1.bf16.msra.mxu0 0
    %4479 = vmatprep.subr.bf16.mxu0 0
    %4480 = vmatpush1.bf16.msra.mxu0 0
    %4481 = vmatprep.subr.bf16.mxu0 0
    %4482 = vmatpush1.bf16.msra.mxu0 0
    %4483 = vmatprep.subr.bf16.mxu0 0
    %4484 = vmatpush1.bf16.msra.mxu0 0
    %4485 = vmatprep.mubr.bf16.mxu0 0
    %4486 = vmatmul.mubr.bf16.gmra.mrb[0].mxu0 %v4328
    %v4487 = vpop.f32.mrb[0].mxu0
    %v4488 = vadd.f32 %v4406, %v4487
    %v4489 = vpop.f32.mrb[0].mxu0
    %v4490 = vadd.f32 %v4408, %v4489
    %v4491 = vpop.f32.mrb[0].mxu0
    %v4492 = vpop.f32.mrb[0].mxu0
    %4493 = vdwg.mxu0
    %v4494 = vadd.f32 %v4447, %v682
    %v4495 = vadd.f32 %v4449, %v686
    %v4496 = vadd.f32 %v4488, %v690
    %v4497 = vadd.f32 %v4490, %v694
    %v4498 = vxor.u32 %v4494, 2147483648
    %v4499 = vmul.f32 %v4498, 1.442695
    %v4500 = vpow.pop %v4499
    %v4501 = vadd.f32 %v4500, 1.0
    %v4502 = vrcp.pop %v4501
    %v4503 = vmul.f32 1.0, %v4502
    %v4504 = vxor.u32 %v4495, 2147483648
    %v4505 = vmul.f32 %v4504, 1.442695
    %v4506 = vpow.pop %v4505
    %v4507 = vadd.f32 %v4506, 1.0
    %v4508 = vrcp.pop %v4507
    %v4509 = vmul.f32 1.0, %v4508
    %v4510 = vtanh.pop %v4496
    %v4511 = vxor.u32 %v4497, 2147483648
    %v4512 = vmul.f32 %v4511, 1.442695
    %v4513 = vpow.pop %v4512
    %v4514 = vadd.f32 %v4513, 1.0
    %v4515 = vrcp.pop %v4514
    %v4516 = vmul.f32 1.0, %v4515
    %v4517 = vmul.f32 %v4509, %v4015
    %v4518 = vmul.f32 %v4503, %v4510
    %v4519 = vadd.f32 %v4517, %v4518
    %v4520 = vtanh.pop %v4519
    %v4521 = vmul.f32 %v4516, %v4520
    %s4522 = smul.u32 6, 4
    %s4523 = smul.addr %s4522, 8
    %s4524 = scalar_lea.vmem [#allocation2], %s4523
    %v4525 = vld [vmem:[%s4524] sm:$0xff]
    %v4526 = vld [vmem:[%s4524 + $0x8] sm:$0xff]
    %v4527 = vld [vmem:[%s4524 + $0x10] sm:$0xff]
    %v4528 = vld [vmem:[%s4524 + $0x18] sm:$0xff]
    %4529 = vmatprep.subr.bf16.mxu0 %v803
    %4530 = vmatpush1.bf16.msra.mxu0 %v802
    %4531 = vmatprep.subr.bf16.mxu0 %v807
    %4532 = vmatpush1.bf16.msra.mxu0 %v806
    %4533 = vmatprep.subr.bf16.mxu0 %v811
    %4534 = vmatpush1.bf16.msra.mxu0 %v810
    %4535 = vmatprep.subr.bf16.mxu0 %v815
    %4536 = vmatpush1.bf16.msra.mxu0 %v814
    %4537 = vmatprep.subr.bf16.mxu0 %v819
    %4538 = vmatpush1.bf16.msra.mxu0 %v818
    %4539 = vmatprep.subr.bf16.mxu0 %v823
    %4540 = vmatpush1.bf16.msra.mxu0 %v822
    %4541 = vmatprep.subr.bf16.mxu0 %v827
    %4542 = vmatpush1.bf16.msra.mxu0 %v826
    %4543 = vmatprep.subr.bf16.mxu0 %v831
    %4544 = vmatpush1.bf16.msra.mxu0 %v830
    %4545 = vmatprep.subr.bf16.mxu0 0
    %4546 = vmatpush1.bf16.msra.mxu0 0
    %4547 = vmatprep.subr.bf16.mxu0 0
    %4548 = vmatpush1.bf16.msra.mxu0 0
    %4549 = vmatprep.subr.bf16.mxu0 0
    %4550 = vmatpush1.bf16.msra.mxu0 0
    %4551 = vmatprep.subr.bf16.mxu0 0
    %4552 = vmatpush1.bf16.msra.mxu0 0
    %4553 = vmatprep.subr.bf16.mxu0 0
    %4554 = vmatpush1.bf16.msra.mxu0 0
    %4555 = vmatprep.subr.bf16.mxu0 0
    %4556 = vmatpush1.bf16.msra.mxu0 0
    %4557 = vmatprep.subr.bf16.mxu0 0
    %4558 = vmatpush1.bf16.msra.mxu0 0
    %4559 = vmatprep.subr.bf16.mxu0 0
    %4560 = vmatpush1.bf16.msra.mxu0 0
    %4561 = vmatprep.mubr.bf16.mxu0 0
    %4562 = vmatmul.mubr.bf16.gmra.mrb[0].mxu0 %v4135
    %v4563 = vpop.f32.mrb[0].mxu0
    %v4564 = vadd.f32 0.0, %v4563
    %v4565 = vpop.f32.mrb[0].mxu0
    %v4566 = vadd.f32 0.0, %v4565
    %v4567 = vpop.f32.mrb[0].mxu0
    %v4568 = vpop.f32.mrb[0].mxu0
    %4569 = vdwg.mxu0
    %4570 = vmatprep.subr.bf16.mxu0 %v805
    %4571 = vmatpush1.bf16.msra.mxu0 %v804
    %4572 = vmatprep.subr.bf16.mxu0 %v809
    %4573 = vmatpush1.bf16.msra.mxu0 %v808
    %4574 = vmatprep.subr.bf16.mxu0 %v813
    %4575 = vmatpush1.bf16.msra.mxu0 %v812
    %4576 = vmatprep.subr.bf16.mxu0 %v817
    %4577 = vmatpush1.bf16.msra.mxu0 %v816
    %4578 = vmatprep.subr.bf16.mxu0 %v821
    %4579 = vmatpush1.bf16.msra.mxu0 %v820
    %4580 = vmatprep.subr.bf16.mxu0 %v825
    %4581 = vmatpush1.bf16.msra.mxu0 %v824
    %4582 = vmatprep.subr.bf16.mxu0 %v829
    %4583 = vmatpush1.bf16.msra.mxu0 %v828
    %4584 = vmatprep.subr.bf16.mxu0 %v833
    %4585 = vmatpush1.bf16.msra.mxu0 %v832
    %4586 = vmatprep.subr.bf16.mxu0 0
    %4587 = vmatpush1.bf16.msra.mxu0 0
    %4588 = vmatprep.subr.bf16.mxu0 0
    %4589 = vmatpush1.bf16.msra.mxu0 0
    %4590 = vmatprep.subr.bf16.mxu0 0
    %4591 = vmatpush1.bf16.msra.mxu0 0
    %4592 = vmatprep.subr.bf16.mxu0 0
    %4593 = vmatpush1.bf16.msra.mxu0 0
    %4594 = vmatprep.subr.bf16.mxu0 0
    %4595 = vmatpush1.bf16.msra.mxu0 0
    %4596 = vmatprep.subr.bf16.mxu0 0
    %4597 = vmatpush1.bf16.msra.mxu0 0
    %4598 = vmatprep.subr.bf16.mxu0 0
    %4599 = vmatpush1.bf16.msra.mxu0 0
    %4600 = vmatprep.subr.bf16.mxu0 0
    %4601 = vmatpush1.bf16.msra.mxu0 0
    %4602 = vmatprep.mubr.bf16.mxu0 0
    %4603 = vmatmul.mubr.bf16.gmra.mrb[0].mxu0 %v4135
    %v4604 = vpop.f32.mrb[0].mxu0
    %v4605 = vadd.f32 0.0, %v4604
    %v4606 = vpop.f32.mrb[0].mxu0
    %v4607 = vadd.f32 0.0, %v4606
    %v4608 = vpop.f32.mrb[0].mxu0
    %v4609 = vpop.f32.mrb[0].mxu0
    %4610 = vdwg.mxu0
    %v4611 = vadd.f32 %v4525, %v4564
    %v4612 = vadd.f32 %v4526, %v4566
    %v4613 = vadd.f32 %v4527, %v4605
    %v4614 = vadd.f32 %v4528, %v4607
    %v4615 = vxor.u32 %v4611, 2147483648
    %v4616 = vmul.f32 %v4615, 1.442695
    %v4617 = vpow.pop %v4616
    %v4618 = vadd.f32 %v4617, 1.0
    %v4619 = vrcp.pop %v4618
    %v4620 = vmul.f32 1.0, %v4619
    %v4621 = vxor.u32 %v4612, 2147483648
    %v4622 = vmul.f32 %v4621, 1.442695
    %v4623 = vpow.pop %v4622
    %v4624 = vadd.f32 %v4623, 1.0
    %v4625 = vrcp.pop %v4624
    %v4626 = vmul.f32 1.0, %v4625
    %v4627 = vtanh.pop %v4613
    %v4628 = vxor.u32 %v4614, 2147483648
    %v4629 = vmul.f32 %v4628, 1.442695
    %v4630 = vpow.pop %v4629
    %v4631 = vadd.f32 %v4630, 1.0
    %v4632 = vrcp.pop %v4631
    %v4633 = vmul.f32 1.0, %v4632
    %v4634 = vmul.f32 %v4626, %v4132
    %v4635 = vmul.f32 %v4620, %v4627
    %v4636 = vadd.f32 %v4634, %v4635
    %v4637 = vtanh.pop %v4636
    %v4638 = vmul.f32 %v4633, %v4637
    %v4639 = vpack.c.bf16 %v4638, %v4638
    %4640 = vmatprep.subr.bf16.mxu0 %v1074
    %4641 = vmatpush1.bf16.msra.mxu0 %v1073
    %4642 = vmatprep.subr.bf16.mxu0 %v1078
    %4643 = vmatpush1.bf16.msra.mxu0 %v1077
    %4644 = vmatprep.subr.bf16.mxu0 %v1082
    %4645 = vmatpush1.bf16.msra.mxu0 %v1081
    %4646 = vmatprep.subr.bf16.mxu0 %v1086
    %4647 = vmatpush1.bf16.msra.mxu0 %v1085
    %4648 = vmatprep.subr.bf16.mxu0 %v1090
    %4649 = vmatpush1.bf16.msra.mxu0 %v1089
    %4650 = vmatprep.subr.bf16.mxu0 %v1094
    %4651 = vmatpush1.bf16.msra.mxu0 %v1093
    %4652 = vmatprep.subr.bf16.mxu0 %v1098
    %4653 = vmatpush1.bf16.msra.mxu0 %v1097
    %4654 = vmatprep.subr.bf16.mxu0 %v1102
    %4655 = vmatpush1.bf16.msra.mxu0 %v1101
    %4656 = vmatprep.subr.bf16.mxu0 0
    %4657 = vmatpush1.bf16.msra.mxu0 0
    %4658 = vmatprep.subr.bf16.mxu0 0
    %4659 = vmatpush1.bf16.msra.mxu0 0
    %4660 = vmatprep.subr.bf16.mxu0 0
    %4661 = vmatpush1.bf16.msra.mxu0 0
    %4662 = vmatprep.subr.bf16.mxu0 0
    %4663 = vmatpush1.bf16.msra.mxu0 0
    %4664 = vmatprep.subr.bf16.mxu0 0
    %4665 = vmatpush1.bf16.msra.mxu0 0
    %4666 = vmatprep.subr.bf16.mxu0 0
    %4667 = vmatpush1.bf16.msra.mxu0 0
    %4668 = vmatprep.subr.bf16.mxu0 0
    %4669 = vmatpush1.bf16.msra.mxu0 0
    %4670 = vmatprep.subr.bf16.mxu0 0
    %4671 = vmatpush1.bf16.msra.mxu0 0
    %4672 = vmatprep.mubr.bf16.mxu0 0
    %4673 = vmatmul.mubr.bf16.gmra.mrb[0].mxu0 %v4328
    %v4674 = vpop.f32.mrb[0].mxu0
    %v4675 = vadd.f32 0.0, %v4674
    %v4676 = vpop.f32.mrb[0].mxu0
    %v4677 = vadd.f32 0.0, %v4676
    %v4678 = vpop.f32.mrb[0].mxu0
    %v4679 = vpop.f32.mrb[0].mxu0
    %4680 = vdwg.mxu0
    %4681 = vmatprep.subr.bf16.mxu0 %v1076
    %4682 = vmatpush1.bf16.msra.mxu0 %v1075
    %4683 = vmatprep.subr.bf16.mxu0 %v1080
    %4684 = vmatpush1.bf16.msra.mxu0 %v1079
    %4685 = vmatprep.subr.bf16.mxu0 %v1084
    %4686 = vmatpush1.bf16.msra.mxu0 %v1083
    %4687 = vmatprep.subr.bf16.mxu0 %v1088
    %4688 = vmatpush1.bf16.msra.mxu0 %v1087
    %4689 = vmatprep.subr.bf16.mxu0 %v1092
    %4690 = vmatpush1.bf16.msra.mxu0 %v1091
    %4691 = vmatprep.subr.bf16.mxu0 %v1096
    %4692 = vmatpush1.bf16.msra.mxu0 %v1095
    %4693 = vmatprep.subr.bf16.mxu0 %v1100
    %4694 = vmatpush1.bf16.msra.mxu0 %v1099
    %4695 = vmatprep.subr.bf16.mxu0 %v1104
    %4696 = vmatpush1.bf16.msra.mxu0 %v1103
    %4697 = vmatprep.subr.bf16.mxu0 0
    %4698 = vmatpush1.bf16.msra.mxu0 0
    %4699 = vmatprep.subr.bf16.mxu0 0
    %4700 = vmatpush1.bf16.msra.mxu0 0
    %4701 = vmatprep.subr.bf16.mxu0 0
    %4702 = vmatpush1.bf16.msra.mxu0 0
    %4703 = vmatprep.subr.bf16.mxu0 0
    %4704 = vmatpush1.bf16.msra.mxu0 0
    %4705 = vmatprep.subr.bf16.mxu0 0
    %4706 = vmatpush1.bf16.msra.mxu0 0
    %4707 = vmatprep.subr.bf16.mxu0 0
    %4708 = vmatpush1.bf16.msra.mxu0 0
    %4709 = vmatprep.subr.bf16.mxu0 0
    %4710 = vmatpush1.bf16.msra.mxu0 0
    %4711 = vmatprep.subr.bf16.mxu0 0
    %4712 = vmatpush1.bf16.msra.mxu0 0
    %4713 = vmatprep.mubr.bf16.mxu0 0
    %4714 = vmatmul.mubr.bf16.gmra.mrb[0].mxu0 %v4328
    %v4715 = vpop.f32.mrb[0].mxu0
    %v4716 = vadd.f32 0.0, %v4715
    %v4717 = vpop.f32.mrb[0].mxu0
    %v4718 = vadd.f32 0.0, %v4717
    %v4719 = vpop.f32.mrb[0].mxu0
    %v4720 = vpop.f32.mrb[0].mxu0
    %4721 = vdwg.mxu0
    %4722 = vmatprep.subr.bf16.mxu0 %v1316
    %4723 = vmatpush1.bf16.msra.mxu0 %v1315
    %4724 = vmatprep.subr.bf16.mxu0 %v1320
    %4725 = vmatpush1.bf16.msra.mxu0 %v1319
    %4726 = vmatprep.subr.bf16.mxu0 %v1324
    %4727 = vmatpush1.bf16.msra.mxu0 %v1323
    %4728 = vmatprep.subr.bf16.mxu0 %v1328
    %4729 = vmatpush1.bf16.msra.mxu0 %v1327
    %4730 = vmatprep.subr.bf16.mxu0 %v1332
    %4731 = vmatpush1.bf16.msra.mxu0 %v1331
    %4732 = vmatprep.subr.bf16.mxu0 %v1336
    %4733 = vmatpush1.bf16.msra.mxu0 %v1335
    %4734 = vmatprep.subr.bf16.mxu0 %v1340
    %4735 = vmatpush1.bf16.msra.mxu0 %v1339
    %4736 = vmatprep.subr.bf16.mxu0 %v1344
    %4737 = vmatpush1.bf16.msra.mxu0 %v1343
    %4738 = vmatprep.subr.bf16.mxu0 0
    %4739 = vmatpush1.bf16.msra.mxu0 0
    %4740 = vmatprep.subr.bf16.mxu0 0
    %4741 = vmatpush1.bf16.msra.mxu0 0
    %4742 = vmatprep.subr.bf16.mxu0 0
    %4743 = vmatpush1.bf16.msra.mxu0 0
    %4744 = vmatprep.subr.bf16.mxu0 0
    %4745 = vmatpush1.bf16.msra.mxu0 0
    %4746 = vmatprep.subr.bf16.mxu0 0
    %4747 = vmatpush1.bf16.msra.mxu0 0
    %4748 = vmatprep.subr.bf16.mxu0 0
    %4749 = vmatpush1.bf16.msra.mxu0 0
    %4750 = vmatprep.subr.bf16.mxu0 0
    %4751 = vmatpush1.bf16.msra.mxu0 0
    %4752 = vmatprep.subr.bf16.mxu0 0
    %4753 = vmatpush1.bf16.msra.mxu0 0
    %4754 = vmatprep.mubr.bf16.mxu0 0
    %4755 = vmatmul.mubr.bf16.gmra.mrb[0].mxu0 %v4639
    %v4756 = vpop.f32.mrb[0].mxu0
    %v4757 = vadd.f32 %v4675, %v4756
    %v4758 = vpop.f32.mrb[0].mxu0
    %v4759 = vadd.f32 %v4677, %v4758
    %v4760 = vpop.f32.mrb[0].mxu0
    %v4761 = vpop.f32.mrb[0].mxu0
    %4762 = vdwg.mxu0
    %4763 = vmatprep.subr.bf16.mxu0 %v1318
    %4764 = vmatpush1.bf16.msra.mxu0 %v1317
    %4765 = vmatprep.subr.bf16.mxu0 %v1322
    %4766 = vmatpush1.bf16.msra.mxu0 %v1321
    %4767 = vmatprep.subr.bf16.mxu0 %v1326
    %4768 = vmatpush1.bf16.msra.mxu0 %v1325
    %4769 = vmatprep.subr.bf16.mxu0 %v1330
    %4770 = vmatpush1.bf16.msra.mxu0 %v1329
    %4771 = vmatprep.subr.bf16.mxu0 %v1334
    %4772 = vmatpush1.bf16.msra.mxu0 %v1333
    %4773 = vmatprep.subr.bf16.mxu0 %v1338
    %4774 = vmatpush1.bf16.msra.mxu0 %v1337
    %4775 = vmatprep.subr.bf16.mxu0 %v1342
    %4776 = vmatpush1.bf16.msra.mxu0 %v1341
    %4777 = vmatprep.subr.bf16.mxu0 %v1346
    %4778 = vmatpush1.bf16.msra.mxu0 %v1345
    %4779 = vmatprep.subr.bf16.mxu0 0
    %4780 = vmatpush1.bf16.msra.mxu0 0
    %4781 = vmatprep.subr.bf16.mxu0 0
    %4782 = vmatpush1.bf16.msra.mxu0 0
    %4783 = vmatprep.subr.bf16.mxu0 0
    %4784 = vmatpush1.bf16.msra.mxu0 0
    %4785 = vmatprep.subr.bf16.mxu0 0
    %4786 = vmatpush1.bf16.msra.mxu0 0
    %4787 = vmatprep.subr.bf16.mxu0 0
    %4788 = vmatpush1.bf16.msra.mxu0 0
    %4789 = vmatprep.subr.bf16.mxu0 0
    %4790 = vmatpush1.bf16.msra.mxu0 0
    %4791 = vmatprep.subr.bf16.mxu0 0
    %4792 = vmatpush1.bf16.msra.mxu0 0
    %4793 = vmatprep.subr.bf16.mxu0 0
    %4794 = vmatpush1.bf16.msra.mxu0 0
    %4795 = vmatprep.mubr.bf16.mxu0 0
    %4796 = vmatmul.mubr.bf16.gmra.mrb[0].mxu0 %v4639
    %v4797 = vpop.f32.mrb[0].mxu0
    %v4798 = vadd.f32 %v4716, %v4797
    %v4799 = vpop.f32.mrb[0].mxu0
    %v4800 = vadd.f32 %v4718, %v4799
    %v4801 = vpop.f32.mrb[0].mxu0
    %v4802 = vpop.f32.mrb[0].mxu0
    %4803 = vdwg.mxu0
    %v4804 = vadd.f32 %v4757, %v660
    %v4805 = vadd.f32 %v4759, %v664
    %v4806 = vadd.f32 %v4798, %v668
    %v4807 = vadd.f32 %v4800, %v672
    %v4808 = vxor.u32 %v4804, 2147483648
    %v4809 = vmul.f32 %v4808, 1.442695
    %v4810 = vpow.pop %v4809
    %v4811 = vadd.f32 %v4810, 1.0
    %v4812 = vrcp.pop %v4811
    %v4813 = vmul.f32 1.0, %v4812
    %v4814 = vxor.u32 %v4805, 2147483648
    %v4815 = vmul.f32 %v4814, 1.442695
    %v4816 = vpow.pop %v4815
    %v4817 = vadd.f32 %v4816, 1.0
    %v4818 = vrcp.pop %v4817
    %v4819 = vmul.f32 1.0, %v4818
    %v4820 = vtanh.pop %v4806
    %v4821 = vxor.u32 %v4807, 2147483648
    %v4822 = vmul.f32 %v4821, 1.442695
    %v4823 = vpow.pop %v4822
    %v4824 = vadd.f32 %v4823, 1.0
    %v4825 = vrcp.pop %v4824
    %v4826 = vmul.f32 1.0, %v4825
    %v4827 = vmul.f32 %v4819, %v4325
    %v4828 = vmul.f32 %v4813, %v4820
    %v4829 = vadd.f32 %v4827, %v4828
    %v4830 = vtanh.pop %v4829
    %v4831 = vmul.f32 %v4826, %v4830
    %v4832 = vpack.c.bf16 %v4831, %v4831
    %v4833 = vpack.c.bf16 %v4521, %v4521
    %4834 = vmatprep.subr.bf16.mxu0 %v1587
    %4835 = vmatpush1.bf16.msra.mxu0 %v1586
    %4836 = vmatprep.subr.bf16.mxu0 %v1591
    %4837 = vmatpush1.bf16.msra.mxu0 %v1590
    %4838 = vmatprep.subr.bf16.mxu0 %v1595
    %4839 = vmatpush1.bf16.msra.mxu0 %v1594
    %4840 = vmatprep.subr.bf16.mxu0 %v1599
    %4841 = vmatpush1.bf16.msra.mxu0 %v1598
    %4842 = vmatprep.subr.bf16.mxu0 %v1603
    %4843 = vmatpush1.bf16.msra.mxu0 %v1602
    %4844 = vmatprep.subr.bf16.mxu0 %v1607
    %4845 = vmatpush1.bf16.msra.mxu0 %v1606
    %4846 = vmatprep.subr.bf16.mxu0 %v1611
    %4847 = vmatpush1.bf16.msra.mxu0 %v1610
    %4848 = vmatprep.subr.bf16.mxu0 %v1615
    %4849 = vmatpush1.bf16.msra.mxu0 %v1614
    %4850 = vmatprep.subr.bf16.mxu0 0
    %4851 = vmatpush1.bf16.msra.mxu0 0
    %4852 = vmatprep.subr.bf16.mxu0 0
    %4853 = vmatpush1.bf16.msra.mxu0 0
    %4854 = vmatprep.subr.bf16.mxu0 0
    %4855 = vmatpush1.bf16.msra.mxu0 0
    %4856 = vmatprep.subr.bf16.mxu0 0
    %4857 = vmatpush1.bf16.msra.mxu0 0
    %4858 = vmatprep.subr.bf16.mxu0 0
    %4859 = vmatpush1.bf16.msra.mxu0 0
    %4860 = vmatprep.subr.bf16.mxu0 0
    %4861 = vmatpush1.bf16.msra.mxu0 0
    %4862 = vmatprep.subr.bf16.mxu0 0
    %4863 = vmatpush1.bf16.msra.mxu0 0
    %4864 = vmatprep.subr.bf16.mxu0 0
    %4865 = vmatpush1.bf16.msra.mxu0 0
    %4866 = vmatprep.mubr.bf16.mxu0 0
    %4867 = vmatmul.mubr.bf16.gmra.mrb[0].mxu0 %v4833
    %v4868 = vpop.f32.mrb[0].mxu0
    %v4869 = vadd.f32 0.0, %v4868
    %v4870 = vpop.f32.mrb[0].mxu0
    %v4871 = vadd.f32 0.0, %v4870
    %v4872 = vpop.f32.mrb[0].mxu0
    %v4873 = vpop.f32.mrb[0].mxu0
    %4874 = vdwg.mxu0
    %4875 = vmatprep.subr.bf16.mxu0 %v1589
    %4876 = vmatpush1.bf16.msra.mxu0 %v1588
    %4877 = vmatprep.subr.bf16.mxu0 %v1593
    %4878 = vmatpush1.bf16.msra.mxu0 %v1592
    %4879 = vmatprep.subr.bf16.mxu0 %v1597
    %4880 = vmatpush1.bf16.msra.mxu0 %v1596
    %4881 = vmatprep.subr.bf16.mxu0 %v1601
    %4882 = vmatpush1.bf16.msra.mxu0 %v1600
    %4883 = vmatprep.subr.bf16.mxu0 %v1605
    %4884 = vmatpush1.bf16.msra.mxu0 %v1604
    %4885 = vmatprep.subr.bf16.mxu0 %v1609
    %4886 = vmatpush1.bf16.msra.mxu0 %v1608
    %4887 = vmatprep.subr.bf16.mxu0 %v1613
    %4888 = vmatpush1.bf16.msra.mxu0 %v1612
    %4889 = vmatprep.subr.bf16.mxu0 %v1617
    %4890 = vmatpush1.bf16.msra.mxu0 %v1616
    %4891 = vmatprep.subr.bf16.mxu0 0
    %4892 = vmatpush1.bf16.msra.mxu0 0
    %4893 = vmatprep.subr.bf16.mxu0 0
    %4894 = vmatpush1.bf16.msra.mxu0 0
    %4895 = vmatprep.subr.bf16.mxu0 0
    %4896 = vmatpush1.bf16.msra.mxu0 0
    %4897 = vmatprep.subr.bf16.mxu0 0
    %4898 = vmatpush1.bf16.msra.mxu0 0
    %4899 = vmatprep.subr.bf16.mxu0 0
    %4900 = vmatpush1.bf16.msra.mxu0 0
    %4901 = vmatprep.subr.bf16.mxu0 0
    %4902 = vmatpush1.bf16.msra.mxu0 0
    %4903 = vmatprep.subr.bf16.mxu0 0
    %4904 = vmatpush1.bf16.msra.mxu0 0
    %4905 = vmatprep.subr.bf16.mxu0 0
    %4906 = vmatpush1.bf16.msra.mxu0 0
    %4907 = vmatprep.mubr.bf16.mxu0 0
    %4908 = vmatmul.mubr.bf16.gmra.mrb[0].mxu0 %v4833
    %v4909 = vpop.f32.mrb[0].mxu0
    %v4910 = vadd.f32 0.0, %v4909
    %v4911 = vpop.f32.mrb[0].mxu0
    %v4912 = vadd.f32 0.0, %v4911
    %v4913 = vpop.f32.mrb[0].mxu0
    %v4914 = vpop.f32.mrb[0].mxu0
    %4915 = vdwg.mxu0
    %4916 = vmatprep.subr.bf16.mxu0 %v1829
    %4917 = vmatpush1.bf16.msra.mxu0 %v1828
    %4918 = vmatprep.subr.bf16.mxu0 %v1833
    %4919 = vmatpush1.bf16.msra.mxu0 %v1832
    %4920 = vmatprep.subr.bf16.mxu0 %v1837
    %4921 = vmatpush1.bf16.msra.mxu0 %v1836
    %4922 = vmatprep.subr.bf16.mxu0 %v1841
    %4923 = vmatpush1.bf16.msra.mxu0 %v1840
    %4924 = vmatprep.subr.bf16.mxu0 %v1845
    %4925 = vmatpush1.bf16.msra.mxu0 %v1844
    %4926 = vmatprep.subr.bf16.mxu0 %v1849
    %4927 = vmatpush1.bf16.msra.mxu0 %v1848
    %4928 = vmatprep.subr.bf16.mxu0 %v1853
    %4929 = vmatpush1.bf16.msra.mxu0 %v1852
    %4930 = vmatprep.subr.bf16.mxu0 %v1857
    %4931 = vmatpush1.bf16.msra.mxu0 %v1856
    %4932 = vmatprep.subr.bf16.mxu0 0
    %4933 = vmatpush1.bf16.msra.mxu0 0
    %4934 = vmatprep.subr.bf16.mxu0 0
    %4935 = vmatpush1.bf16.msra.mxu0 0
    %4936 = vmatprep.subr.bf16.mxu0 0
    %4937 = vmatpush1.bf16.msra.mxu0 0
    %4938 = vmatprep.subr.bf16.mxu0 0
    %4939 = vmatpush1.bf16.msra.mxu0 0
    %4940 = vmatprep.subr.bf16.mxu0 0
    %4941 = vmatpush1.bf16.msra.mxu0 0
    %4942 = vmatprep.subr.bf16.mxu0 0
    %4943 = vmatpush1.bf16.msra.mxu0 0
    %4944 = vmatprep.subr.bf16.mxu0 0
    %4945 = vmatpush1.bf16.msra.mxu0 0
    %4946 = vmatprep.subr.bf16.mxu0 0
    %4947 = vmatpush1.bf16.msra.mxu0 0
    %4948 = vmatprep.mubr.bf16.mxu0 0
    %4949 = vmatmul.mubr.bf16.gmra.mrb[0].mxu0 %v4832
    %v4950 = vpop.f32.mrb[0].mxu0
    %v4951 = vadd.f32 %v4869, %v4950
    %v4952 = vpop.f32.mrb[0].mxu0
    %v4953 = vadd.f32 %v4871, %v4952
    %v4954 = vpop.f32.mrb[0].mxu0
    %v4955 = vpop.f32.mrb[0].mxu0
    %4956 = vdwg.mxu0
    %4957 = vmatprep.subr.bf16.mxu0 %v1831
    %4958 = vmatpush1.bf16.msra.mxu0 %v1830
    %4959 = vmatprep.subr.bf16.mxu0 %v1835
    %4960 = vmatpush1.bf16.msra.mxu0 %v1834
    %4961 = vmatprep.subr.bf16.mxu0 %v1839
    %4962 = vmatpush1.bf16.msra.mxu0 %v1838
    %4963 = vmatprep.subr.bf16.mxu0 %v1843
    %4964 = vmatpush1.bf16.msra.mxu0 %v1842
    %4965 = vmatprep.subr.bf16.mxu0 %v1847
    %4966 = vmatpush1.bf16.msra.mxu0 %v1846
    %4967 = vmatprep.subr.bf16.mxu0 %v1851
    %4968 = vmatpush1.bf16.msra.mxu0 %v1850
    %4969 = vmatprep.subr.bf16.mxu0 %v1855
    %4970 = vmatpush1.bf16.msra.mxu0 %v1854
    %4971 = vmatprep.subr.bf16.mxu0 %v1859
    %4972 = vmatpush1.bf16.msra.mxu0 %v1858
    %4973 = vmatprep.subr.bf16.mxu0 0
    %4974 = vmatpush1.bf16.msra.mxu0 0
    %4975 = vmatprep.subr.bf16.mxu0 0
    %4976 = vmatpush1.bf16.msra.mxu0 0
    %4977 = vmatprep.subr.bf16.mxu0 0
    %4978 = vmatpush1.bf16.msra.mxu0 0
    %4979 = vmatprep.subr.bf16.mxu0 0
    %4980 = vmatpush1.bf16.msra.mxu0 0
    %4981 = vmatprep.subr.bf16.mxu0 0
    %4982 = vmatpush1.bf16.msra.mxu0 0
    %4983 = vmatprep.subr.bf16.mxu0 0
    %4984 = vmatpush1.bf16.msra.mxu0 0
    %4985 = vmatprep.subr.bf16.mxu0 0
    %4986 = vmatpush1.bf16.msra.mxu0 0
    %4987 = vmatprep.subr.bf16.mxu0 0
    %4988 = vmatpush1.bf16.msra.mxu0 0
    %4989 = vmatprep.mubr.bf16.mxu0 0
    %4990 = vmatmul.mubr.bf16.gmra.mrb[0].mxu0 %v4832
    %v4991 = vpop.f32.mrb[0].mxu0
    %v4992 = vadd.f32 %v4910, %v4991
    %v4993 = vpop.f32.mrb[0].mxu0
    %v4994 = vadd.f32 %v4912, %v4993
    %v4995 = vpop.f32.mrb[0].mxu0
    %v4996 = vpop.f32.mrb[0].mxu0
    %4997 = vdwg.mxu0
    %v4998 = vadd.f32 %v4951, %v682
    %v4999 = vadd.f32 %v4953, %v686
    %v5000 = vadd.f32 %v4992, %v690
    %v5001 = vadd.f32 %v4994, %v694
    %v5002 = vxor.u32 %v4998, 2147483648
    %v5003 = vmul.f32 %v5002, 1.442695
    %v5004 = vpow.pop %v5003
    %v5005 = vadd.f32 %v5004, 1.0
    %v5006 = vrcp.pop %v5005
    %v5007 = vmul.f32 1.0, %v5006
    %v5008 = vxor.u32 %v4999, 2147483648
    %v5009 = vmul.f32 %v5008, 1.442695
    %v5010 = vpow.pop %v5009
    %v5011 = vadd.f32 %v5010, 1.0
    %v5012 = vrcp.pop %v5011
    %v5013 = vmul.f32 1.0, %v5012
    %v5014 = vtanh.pop %v5000
    %v5015 = vxor.u32 %v5001, 2147483648
    %v5016 = vmul.f32 %v5015, 1.442695
    %v5017 = vpow.pop %v5016
    %v5018 = vadd.f32 %v5017, 1.0
    %v5019 = vrcp.pop %v5018
    %v5020 = vmul.f32 1.0, %v5019
    %v5021 = vmul.f32 %v5013, %v4519
    %v5022 = vmul.f32 %v5007, %v5014
    %v5023 = vadd.f32 %v5021, %v5022
    %v5024 = vtanh.pop %v5023
    %v5025 = vmul.f32 %v5020, %v5024
    %s5026 = smul.u32 7, 4
    %s5027 = smul.addr %s5026, 8
    %s5028 = scalar_lea.vmem [#allocation2], %s5027
    %v5029 = vld [vmem:[%s5028] sm:$0xff]
    %v5030 = vld [vmem:[%s5028 + $0x8] sm:$0xff]
    %v5031 = vld [vmem:[%s5028 + $0x10] sm:$0xff]
    %v5032 = vld [vmem:[%s5028 + $0x18] sm:$0xff]
    %5033 = vmatprep.subr.bf16.mxu0 %v803
    %5034 = vmatpush1.bf16.msra.mxu0 %v802
    %5035 = vmatprep.subr.bf16.mxu0 %v807
    %5036 = vmatpush1.bf16.msra.mxu0 %v806
    %5037 = vmatprep.subr.bf16.mxu0 %v811
    %5038 = vmatpush1.bf16.msra.mxu0 %v810
    %5039 = vmatprep.subr.bf16.mxu0 %v815
    %5040 = vmatpush1.bf16.msra.mxu0 %v814
    %5041 = vmatprep.subr.bf16.mxu0 %v819
    %5042 = vmatpush1.bf16.msra.mxu0 %v818
    %5043 = vmatprep.subr.bf16.mxu0 %v823
    %5044 = vmatpush1.bf16.msra.mxu0 %v822
    %5045 = vmatprep.subr.bf16.mxu0 %v827
    %5046 = vmatpush1.bf16.msra.mxu0 %v826
    %5047 = vmatprep.subr.bf16.mxu0 %v831
    %5048 = vmatpush1.bf16.msra.mxu0 %v830
    %5049 = vmatprep.subr.bf16.mxu0 0
    %5050 = vmatpush1.bf16.msra.mxu0 0
    %5051 = vmatprep.subr.bf16.mxu0 0
    %5052 = vmatpush1.bf16.msra.mxu0 0
    %5053 = vmatprep.subr.bf16.mxu0 0
    %5054 = vmatpush1.bf16.msra.mxu0 0
    %5055 = vmatprep.subr.bf16.mxu0 0
    %5056 = vmatpush1.bf16.msra.mxu0 0
    %5057 = vmatprep.subr.bf16.mxu0 0
    %5058 = vmatpush1.bf16.msra.mxu0 0
    %5059 = vmatprep.subr.bf16.mxu0 0
    %5060 = vmatpush1.bf16.msra.mxu0 0
    %5061 = vmatprep.subr.bf16.mxu0 0
    %5062 = vmatpush1.bf16.msra.mxu0 0
    %5063 = vmatprep.subr.bf16.mxu0 0
    %5064 = vmatpush1.bf16.msra.mxu0 0
    %5065 = vmatprep.mubr.bf16.mxu0 0
    %5066 = vmatmul.mubr.bf16.gmra.mrb[0].mxu0 %v4639
    %v5067 = vpop.f32.mrb[0].mxu0
    %v5068 = vadd.f32 0.0, %v5067
    %v5069 = vpop.f32.mrb[0].mxu0
    %v5070 = vadd.f32 0.0, %v5069
    %v5071 = vpop.f32.mrb[0].mxu0
    %v5072 = vpop.f32.mrb[0].mxu0
    %5073 = vdwg.mxu0
    %5074 = vmatprep.subr.bf16.mxu0 %v805
    %5075 = vmatpush1.bf16.msra.mxu0 %v804
    %5076 = vmatprep.subr.bf16.mxu0 %v809
    %5077 = vmatpush1.bf16.msra.mxu0 %v808
    %5078 = vmatprep.subr.bf16.mxu0 %v813
    %5079 = vmatpush1.bf16.msra.mxu0 %v812
    %5080 = vmatprep.subr.bf16.mxu0 %v817
    %5081 = vmatpush1.bf16.msra.mxu0 %v816
    %5082 = vmatprep.subr.bf16.mxu0 %v821
    %5083 = vmatpush1.bf16.msra.mxu0 %v820
    %5084 = vmatprep.subr.bf16.mxu0 %v825
    %5085 = vmatpush1.bf16.msra.mxu0 %v824
    %5086 = vmatprep.subr.bf16.mxu0 %v829
    %5087 = vmatpush1.bf16.msra.mxu0 %v828
    %5088 = vmatprep.subr.bf16.mxu0 %v833
    %5089 = vmatpush1.bf16.msra.mxu0 %v832
    %5090 = vmatprep.subr.bf16.mxu0 0
    %5091 = vmatpush1.bf16.msra.mxu0 0
    %5092 = vmatprep.subr.bf16.mxu0 0
    %5093 = vmatpush1.bf16.msra.mxu0 0
    %5094 = vmatprep.subr.bf16.mxu0 0
    %5095 = vmatpush1.bf16.msra.mxu0 0
    %5096 = vmatprep.subr.bf16.mxu0 0
    %5097 = vmatpush1.bf16.msra.mxu0 0
    %5098 = vmatprep.subr.bf16.mxu0 0
    %5099 = vmatpush1.bf16.msra.mxu0 0
    %5100 = vmatprep.subr.bf16.mxu0 0
    %5101 = vmatpush1.bf16.msra.mxu0 0
    %5102 = vmatprep.subr.bf16.mxu0 0
    %5103 = vmatpush1.bf16.msra.mxu0 0
    %5104 = vmatprep.subr.bf16.mxu0 0
    %5105 = vmatpush1.bf16.msra.mxu0 0
    %5106 = vmatprep.mubr.bf16.mxu0 0
    %5107 = vmatmul.mubr.bf16.gmra.mrb[0].mxu0 %v4639
    %v5108 = vpop.f32.mrb[0].mxu0
    %v5109 = vadd.f32 0.0, %v5108
    %v5110 = vpop.f32.mrb[0].mxu0
    %v5111 = vadd.f32 0.0, %v5110
    %v5112 = vpop.f32.mrb[0].mxu0
    %v5113 = vpop.f32.mrb[0].mxu0
    %5114 = vdwg.mxu0
    %v5115 = vadd.f32 %v5029, %v5068
    %v5116 = vadd.f32 %v5030, %v5070
    %v5117 = vadd.f32 %v5031, %v5109
    %v5118 = vadd.f32 %v5032, %v5111
    %v5119 = vxor.u32 %v5115, 2147483648
    %v5120 = vmul.f32 %v5119, 1.442695
    %v5121 = vpow.pop %v5120
    %v5122 = vadd.f32 %v5121, 1.0
    %v5123 = vrcp.pop %v5122
    %v5124 = vmul.f32 1.0, %v5123
    %v5125 = vxor.u32 %v5116, 2147483648
    %v5126 = vmul.f32 %v5125, 1.442695
    %v5127 = vpow.pop %v5126
    %v5128 = vadd.f32 %v5127, 1.0
    %v5129 = vrcp.pop %v5128
    %v5130 = vmul.f32 1.0, %v5129
    %v5131 = vtanh.pop %v5117
    %v5132 = vxor.u32 %v5118, 2147483648
    %v5133 = vmul.f32 %v5132, 1.442695
    %v5134 = vpow.pop %v5133
    %v5135 = vadd.f32 %v5134, 1.0
    %v5136 = vrcp.pop %v5135
    %v5137 = vmul.f32 1.0, %v5136
    %v5138 = vmul.f32 %v5130, %v4636
    %v5139 = vmul.f32 %v5124, %v5131
    %v5140 = vadd.f32 %v5138, %v5139
    %v5141 = vtanh.pop %v5140
    %v5142 = vmul.f32 %v5137, %v5141
    %v5143 = vpack.c.bf16 %v5142, %v5142
    %5144 = vmatprep.subr.bf16.mxu0 %v1074
    %5145 = vmatpush1.bf16.msra.mxu0 %v1073
    %5146 = vmatprep.subr.bf16.mxu0 %v1078
    %5147 = vmatpush1.bf16.msra.mxu0 %v1077
    %5148 = vmatprep.subr.bf16.mxu0 %v1082
    %5149 = vmatpush1.bf16.msra.mxu0 %v1081
    %5150 = vmatprep.subr.bf16.mxu0 %v1086
    %5151 = vmatpush1.bf16.msra.mxu0 %v1085
    %5152 = vmatprep.subr.bf16.mxu0 %v1090
    %5153 = vmatpush1.bf16.msra.mxu0 %v1089
    %5154 = vmatprep.subr.bf16.mxu0 %v1094
    %5155 = vmatpush1.bf16.msra.mxu0 %v1093
    %5156 = vmatprep.subr.bf16.mxu0 %v1098
    %5157 = vmatpush1.bf16.msra.mxu0 %v1097
    %5158 = vmatprep.subr.bf16.mxu0 %v1102
    %5159 = vmatpush1.bf16.msra.mxu0 %v1101
    %5160 = vmatprep.subr.bf16.mxu0 0
    %5161 = vmatpush1.bf16.msra.mxu0 0
    %5162 = vmatprep.subr.bf16.mxu0 0
    %5163 = vmatpush1.bf16.msra.mxu0 0
    %5164 = vmatprep.subr.bf16.mxu0 0
    %5165 = vmatpush1.bf16.msra.mxu0 0
    %5166 = vmatprep.subr.bf16.mxu0 0
    %5167 = vmatpush1.bf16.msra.mxu0 0
    %5168 = vmatprep.subr.bf16.mxu0 0
    %5169 = vmatpush1.bf16.msra.mxu0 0
    %5170 = vmatprep.subr.bf16.mxu0 0
    %5171 = vmatpush1.bf16.msra.mxu0 0
    %5172 = vmatprep.subr.bf16.mxu0 0
    %5173 = vmatpush1.bf16.msra.mxu0 0
    %5174 = vmatprep.subr.bf16.mxu0 0
    %5175 = vmatpush1.bf16.msra.mxu0 0
    %5176 = vmatprep.mubr.bf16.mxu0 0
    %5177 = vmatmul.mubr.bf16.gmra.mrb[0].mxu0 %v4832
    %v5178 = vpop.f32.mrb[0].mxu0
    %v5179 = vadd.f32 0.0, %v5178
    %v5180 = vpop.f32.mrb[0].mxu0
    %v5181 = vadd.f32 0.0, %v5180
    %v5182 = vpop.f32.mrb[0].mxu0
    %v5183 = vpop.f32.mrb[0].mxu0
    %5184 = vdwg.mxu0
    %5185 = vmatprep.subr.bf16.mxu0 %v1076
    %5186 = vmatpush1.bf16.msra.mxu0 %v1075
    %5187 = vmatprep.subr.bf16.mxu0 %v1080
    %5188 = vmatpush1.bf16.msra.mxu0 %v1079
    %5189 = vmatprep.subr.bf16.mxu0 %v1084
    %5190 = vmatpush1.bf16.msra.mxu0 %v1083
    %5191 = vmatprep.subr.bf16.mxu0 %v1088
    %5192 = vmatpush1.bf16.msra.mxu0 %v1087
    %5193 = vmatprep.subr.bf16.mxu0 %v1092
    %5194 = vmatpush1.bf16.msra.mxu0 %v1091
    %5195 = vmatprep.subr.bf16.mxu0 %v1096
    %5196 = vmatpush1.bf16.msra.mxu0 %v1095
    %5197 = vmatprep.subr.bf16.mxu0 %v1100
    %5198 = vmatpush1.bf16.msra.mxu0 %v1099
    %5199 = vmatprep.subr.bf16.mxu0 %v1104
    %5200 = vmatpush1.bf16.msra.mxu0 %v1103
    %5201 = vmatprep.subr.bf16.mxu0 0
    %5202 = vmatpush1.bf16.msra.mxu0 0
    %5203 = vmatprep.subr.bf16.mxu0 0
    %5204 = vmatpush1.bf16.msra.mxu0 0
    %5205 = vmatprep.subr.bf16.mxu0 0
    %5206 = vmatpush1.bf16.msra.mxu0 0
    %5207 = vmatprep.subr.bf16.mxu0 0
    %5208 = vmatpush1.bf16.msra.mxu0 0
    %5209 = vmatprep.subr.bf16.mxu0 0
    %5210 = vmatpush1.bf16.msra.mxu0 0
    %5211 = vmatprep.subr.bf16.mxu0 0
    %5212 = vmatpush1.bf16.msra.mxu0 0
    %5213 = vmatprep.subr.bf16.mxu0 0
    %5214 = vmatpush1.bf16.msra.mxu0 0
    %5215 = vmatprep.subr.bf16.mxu0 0
    %5216 = vmatpush1.bf16.msra.mxu0 0
    %5217 = vmatprep.mubr.bf16.mxu0 0
    %5218 = vmatmul.mubr.bf16.gmra.mrb[0].mxu0 %v4832
    %v5219 = vpop.f32.mrb[0].mxu0
    %v5220 = vadd.f32 0.0, %v5219
    %v5221 = vpop.f32.mrb[0].mxu0
    %v5222 = vadd.f32 0.0, %v5221
    %v5223 = vpop.f32.mrb[0].mxu0
    %v5224 = vpop.f32.mrb[0].mxu0
    %5225 = vdwg.mxu0
    %5226 = vmatprep.subr.bf16.mxu0 %v1316
    %5227 = vmatpush1.bf16.msra.mxu0 %v1315
    %5228 = vmatprep.subr.bf16.mxu0 %v1320
    %5229 = vmatpush1.bf16.msra.mxu0 %v1319
    %5230 = vmatprep.subr.bf16.mxu0 %v1324
    %5231 = vmatpush1.bf16.msra.mxu0 %v1323
    %5232 = vmatprep.subr.bf16.mxu0 %v1328
    %5233 = vmatpush1.bf16.msra.mxu0 %v1327
    %5234 = vmatprep.subr.bf16.mxu0 %v1332
    %5235 = vmatpush1.bf16.msra.mxu0 %v1331
    %5236 = vmatprep.subr.bf16.mxu0 %v1336
    %5237 = vmatpush1.bf16.msra.mxu0 %v1335
    %5238 = vmatprep.subr.bf16.mxu0 %v1340
    %5239 = vmatpush1.bf16.msra.mxu0 %v1339
    %5240 = vmatprep.subr.bf16.mxu0 %v1344
    %5241 = vmatpush1.bf16.msra.mxu0 %v1343
    %5242 = vmatprep.subr.bf16.mxu0 0
    %5243 = vmatpush1.bf16.msra.mxu0 0
    %5244 = vmatprep.subr.bf16.mxu0 0
    %5245 = vmatpush1.bf16.msra.mxu0 0
    %5246 = vmatprep.subr.bf16.mxu0 0
    %5247 = vmatpush1.bf16.msra.mxu0 0
    %5248 = vmatprep.subr.bf16.mxu0 0
    %5249 = vmatpush1.bf16.msra.mxu0 0
    %5250 = vmatprep.subr.bf16.mxu0 0
    %5251 = vmatpush1.bf16.msra.mxu0 0
    %5252 = vmatprep.subr.bf16.mxu0 0
    %5253 = vmatpush1.bf16.msra.mxu0 0
    %5254 = vmatprep.subr.bf16.mxu0 0
    %5255 = vmatpush1.bf16.msra.mxu0 0
    %5256 = vmatprep.subr.bf16.mxu0 0
    %5257 = vmatpush1.bf16.msra.mxu0 0
    %5258 = vmatprep.mubr.bf16.mxu0 0
    %5259 = vmatmul.mubr.bf16.gmra.mrb[0].mxu0 %v5143
    %v5260 = vpop.f32.mrb[0].mxu0
    %v5261 = vadd.f32 %v5179, %v5260
    %v5262 = vpop.f32.mrb[0].mxu0
    %v5263 = vadd.f32 %v5181, %v5262
    %v5264 = vpop.f32.mrb[0].mxu0
    %v5265 = vpop.f32.mrb[0].mxu0
    %5266 = vdwg.mxu0
    %5267 = vmatprep.subr.bf16.mxu0 %v1318
    %5268 = vmatpush1.bf16.msra.mxu0 %v1317
    %5269 = vmatprep.subr.bf16.mxu0 %v1322
    %5270 = vmatpush1.bf16.msra.mxu0 %v1321
    %5271 = vmatprep.subr.bf16.mxu0 %v1326
    %5272 = vmatpush1.bf16.msra.mxu0 %v1325
    %5273 = vmatprep.subr.bf16.mxu0 %v1330
    %5274 = vmatpush1.bf16.msra.mxu0 %v1329
    %5275 = vmatprep.subr.bf16.mxu0 %v1334
    %5276 = vmatpush1.bf16.msra.mxu0 %v1333
    %5277 = vmatprep.subr.bf16.mxu0 %v1338
    %5278 = vmatpush1.bf16.msra.mxu0 %v1337
    %5279 = vmatprep.subr.bf16.mxu0 %v1342
    %5280 = vmatpush1.bf16.msra.mxu0 %v1341
    %5281 = vmatprep.subr.bf16.mxu0 %v1346
    %5282 = vmatpush1.bf16.msra.mxu0 %v1345
    %5283 = vmatprep.subr.bf16.mxu0 0
    %5284 = vmatpush1.bf16.msra.mxu0 0
    %5285 = vmatprep.subr.bf16.mxu0 0
    %5286 = vmatpush1.bf16.msra.mxu0 0
    %5287 = vmatprep.subr.bf16.mxu0 0
    %5288 = vmatpush1.bf16.msra.mxu0 0
    %5289 = vmatprep.subr.bf16.mxu0 0
    %5290 = vmatpush1.bf16.msra.mxu0 0
    %5291 = vmatprep.subr.bf16.mxu0 0
    %5292 = vmatpush1.bf16.msra.mxu0 0
    %5293 = vmatprep.subr.bf16.mxu0 0
    %5294 = vmatpush1.bf16.msra.mxu0 0
    %5295 = vmatprep.subr.bf16.mxu0 0
    %5296 = vmatpush1.bf16.msra.mxu0 0
    %5297 = vmatprep.subr.bf16.mxu0 0
    %5298 = vmatpush1.bf16.msra.mxu0 0
    %5299 = vmatprep.mubr.bf16.mxu0 0
    %5300 = vmatmul.mubr.bf16.gmra.mrb[0].mxu0 %v5143
    %v5301 = vpop.f32.mrb[0].mxu0
    %v5302 = vadd.f32 %v5220, %v5301
    %v5303 = vpop.f32.mrb[0].mxu0
    %v5304 = vadd.f32 %v5222, %v5303
    %v5305 = vpop.f32.mrb[0].mxu0
    %v5306 = vpop.f32.mrb[0].mxu0
    %5307 = vdwg.mxu0
    %v5308 = vadd.f32 %v5261, %v660
    %v5309 = vadd.f32 %v5263, %v664
    %v5310 = vadd.f32 %v5302, %v668
    %v5311 = vadd.f32 %v5304, %v672
    %v5312 = vxor.u32 %v5308, 2147483648
    %v5313 = vmul.f32 %v5312, 1.442695
    %v5314 = vpow.pop %v5313
    %v5315 = vadd.f32 %v5314, 1.0
    %v5316 = vrcp.pop %v5315
    %v5317 = vmul.f32 1.0, %v5316
    %v5318 = vxor.u32 %v5309, 2147483648
    %v5319 = vmul.f32 %v5318, 1.442695
    %v5320 = vpow.pop %v5319
    %v5321 = vadd.f32 %v5320, 1.0
    %v5322 = vrcp.pop %v5321
    %v5323 = vmul.f32 1.0, %v5322
    %v5324 = vtanh.pop %v5310
    %v5325 = vxor.u32 %v5311, 2147483648
    %v5326 = vmul.f32 %v5325, 1.442695
    %v5327 = vpow.pop %v5326
    %v5328 = vadd.f32 %v5327, 1.0
    %v5329 = vrcp.pop %v5328
    %v5330 = vmul.f32 1.0, %v5329
    %v5331 = vmul.f32 %v5323, %v4829
    %v5332 = vmul.f32 %v5317, %v5324
    %v5333 = vadd.f32 %v5331, %v5332
    %v5334 = vtanh.pop %v5333
    %v5335 = vmul.f32 %v5330, %v5334
    %v5336 = vpack.c.bf16 %v5335, %v5335
    %v5337 = vpack.c.bf16 %v5025, %v5025
    %5338 = vmatprep.subr.bf16.mxu0 %v1587
    %5339 = vmatpush1.bf16.msra.mxu0 %v1586
    %5340 = vmatprep.subr.bf16.mxu0 %v1591
    %5341 = vmatpush1.bf16.msra.mxu0 %v1590
    %5342 = vmatprep.subr.bf16.mxu0 %v1595
    %5343 = vmatpush1.bf16.msra.mxu0 %v1594
    %5344 = vmatprep.subr.bf16.mxu0 %v1599
    %5345 = vmatpush1.bf16.msra.mxu0 %v1598
    %5346 = vmatprep.subr.bf16.mxu0 %v1603
    %5347 = vmatpush1.bf16.msra.mxu0 %v1602
    %5348 = vmatprep.subr.bf16.mxu0 %v1607
    %5349 = vmatpush1.bf16.msra.mxu0 %v1606
    %5350 = vmatprep.subr.bf16.mxu0 %v1611
    %5351 = vmatpush1.bf16.msra.mxu0 %v1610
    %5352 = vmatprep.subr.bf16.mxu0 %v1615
    %5353 = vmatpush1.bf16.msra.mxu0 %v1614
    %5354 = vmatprep.subr.bf16.mxu0 0
    %5355 = vmatpush1.bf16.msra.mxu0 0
    %5356 = vmatprep.subr.bf16.mxu0 0
    %5357 = vmatpush1.bf16.msra.mxu0 0
    %5358 = vmatprep.subr.bf16.mxu0 0
    %5359 = vmatpush1.bf16.msra.mxu0 0
    %5360 = vmatprep.subr.bf16.mxu0 0
    %5361 = vmatpush1.bf16.msra.mxu0 0
    %5362 = vmatprep.subr.bf16.mxu0 0
    %5363 = vmatpush1.bf16.msra.mxu0 0
    %5364 = vmatprep.subr.bf16.mxu0 0
    %5365 = vmatpush1.bf16.msra.mxu0 0
    %5366 = vmatprep.subr.bf16.mxu0 0
    %5367 = vmatpush1.bf16.msra.mxu0 0
    %5368 = vmatprep.subr.bf16.mxu0 0
    %5369 = vmatpush1.bf16.msra.mxu0 0
    %5370 = vmatprep.mubr.bf16.mxu0 0
    %5371 = vmatmul.mubr.bf16.gmra.mrb[0].mxu0 %v5337
    %v5372 = vpop.f32.mrb[0].mxu0
    %v5373 = vadd.f32 0.0, %v5372
    %v5374 = vpop.f32.mrb[0].mxu0
    %v5375 = vadd.f32 0.0, %v5374
    %v5376 = vpop.f32.mrb[0].mxu0
    %v5377 = vpop.f32.mrb[0].mxu0
    %5378 = vdwg.mxu0
    %5379 = vmatprep.subr.bf16.mxu0 %v1589
    %5380 = vmatpush1.bf16.msra.mxu0 %v1588
    %5381 = vmatprep.subr.bf16.mxu0 %v1593
    %5382 = vmatpush1.bf16.msra.mxu0 %v1592
    %5383 = vmatprep.subr.bf16.mxu0 %v1597
    %5384 = vmatpush1.bf16.msra.mxu0 %v1596
    %5385 = vmatprep.subr.bf16.mxu0 %v1601
    %5386 = vmatpush1.bf16.msra.mxu0 %v1600
    %5387 = vmatprep.subr.bf16.mxu0 %v1605
    %5388 = vmatpush1.bf16.msra.mxu0 %v1604
    %5389 = vmatprep.subr.bf16.mxu0 %v1609
    %5390 = vmatpush1.bf16.msra.mxu0 %v1608
    %5391 = vmatprep.subr.bf16.mxu0 %v1613
    %5392 = vmatpush1.bf16.msra.mxu0 %v1612
    %5393 = vmatprep.subr.bf16.mxu0 %v1617
    %5394 = vmatpush1.bf16.msra.mxu0 %v1616
    %5395 = vmatprep.subr.bf16.mxu0 0
    %5396 = vmatpush1.bf16.msra.mxu0 0
    %5397 = vmatprep.subr.bf16.mxu0 0
    %5398 = vmatpush1.bf16.msra.mxu0 0
    %5399 = vmatprep.subr.bf16.mxu0 0
    %5400 = vmatpush1.bf16.msra.mxu0 0
    %5401 = vmatprep.subr.bf16.mxu0 0
    %5402 = vmatpush1.bf16.msra.mxu0 0
    %5403 = vmatprep.subr.bf16.mxu0 0
    %5404 = vmatpush1.bf16.msra.mxu0 0
    %5405 = vmatprep.subr.bf16.mxu0 0
    %5406 = vmatpush1.bf16.msra.mxu0 0
    %5407 = vmatprep.subr.bf16.mxu0 0
    %5408 = vmatpush1.bf16.msra.mxu0 0
    %5409 = vmatprep.subr.bf16.mxu0 0
    %5410 = vmatpush1.bf16.msra.mxu0 0
    %5411 = vmatprep.mubr.bf16.mxu0 0
    %5412 = vmatmul.mubr.bf16.gmra.mrb[0].mxu0 %v5337
    %v5413 = vpop.f32.mrb[0].mxu0
    %v5414 = vadd.f32 0.0, %v5413
    %v5415 = vpop.f32.mrb[0].mxu0
    %v5416 = vadd.f32 0.0, %v5415
    %v5417 = vpop.f32.mrb[0].mxu0
    %v5418 = vpop.f32.mrb[0].mxu0
    %5419 = vdwg.mxu0
    %5420 = vmatprep.subr.bf16.mxu0 %v1829
    %5421 = vmatpush1.bf16.msra.mxu0 %v1828
    %5422 = vmatprep.subr.bf16.mxu0 %v1833
    %5423 = vmatpush1.bf16.msra.mxu0 %v1832
    %5424 = vmatprep.subr.bf16.mxu0 %v1837
    %5425 = vmatpush1.bf16.msra.mxu0 %v1836
    %5426 = vmatprep.subr.bf16.mxu0 %v1841
    %5427 = vmatpush1.bf16.msra.mxu0 %v1840
    %5428 = vmatprep.subr.bf16.mxu0 %v1845
    %5429 = vmatpush1.bf16.msra.mxu0 %v1844
    %5430 = vmatprep.subr.bf16.mxu0 %v1849
    %5431 = vmatpush1.bf16.msra.mxu0 %v1848
    %5432 = vmatprep.subr.bf16.mxu0 %v1853
    %5433 = vmatpush1.bf16.msra.mxu0 %v1852
    %5434 = vmatprep.subr.bf16.mxu0 %v1857
    %5435 = vmatpush1.bf16.msra.mxu0 %v1856
    %5436 = vmatprep.subr.bf16.mxu0 0
    %5437 = vmatpush1.bf16.msra.mxu0 0
    %5438 = vmatprep.subr.bf16.mxu0 0
    %5439 = vmatpush1.bf16.msra.mxu0 0
    %5440 = vmatprep.subr.bf16.mxu0 0
    %5441 = vmatpush1.bf16.msra.mxu0 0
    %5442 = vmatprep.subr.bf16.mxu0 0
    %5443 = vmatpush1.bf16.msra.mxu0 0
    %5444 = vmatprep.subr.bf16.mxu0 0
    %5445 = vmatpush1.bf16.msra.mxu0 0
    %5446 = vmatprep.subr.bf16.mxu0 0
    %5447 = vmatpush1.bf16.msra.mxu0 0
    %5448 = vmatprep.subr.bf16.mxu0 0
    %5449 = vmatpush1.bf16.msra.mxu0 0
    %5450 = vmatprep.subr.bf16.mxu0 0
    %5451 = vmatpush1.bf16.msra.mxu0 0
    %5452 = vmatprep.mubr.bf16.mxu0 0
    %5453 = vmatmul.mubr.bf16.gmra.mrb[0].mxu0 %v5336
    %v5454 = vpop.f32.mrb[0].mxu0
    %v5455 = vadd.f32 %v5373, %v5454
    %v5456 = vpop.f32.mrb[0].mxu0
    %v5457 = vadd.f32 %v5375, %v5456
    %v5458 = vpop.f32.mrb[0].mxu0
    %v5459 = vpop.f32.mrb[0].mxu0
    %5460 = vdwg.mxu0
    %5461 = vmatprep.subr.bf16.mxu0 %v1831
    %5462 = vmatpush1.bf16.msra.mxu0 %v1830
    %5463 = vmatprep.subr.bf16.mxu0 %v1835
    %5464 = vmatpush1.bf16.msra.mxu0 %v1834
    %5465 = vmatprep.subr.bf16.mxu0 %v1839
    %5466 = vmatpush1.bf16.msra.mxu0 %v1838
    %5467 = vmatprep.subr.bf16.mxu0 %v1843
    %5468 = vmatpush1.bf16.msra.mxu0 %v1842
    %5469 = vmatprep.subr.bf16.mxu0 %v1847
    %5470 = vmatpush1.bf16.msra.mxu0 %v1846
    %5471 = vmatprep.subr.bf16.mxu0 %v1851
    %5472 = vmatpush1.bf16.msra.mxu0 %v1850
    %5473 = vmatprep.subr.bf16.mxu0 %v1855
    %5474 = vmatpush1.bf16.msra.mxu0 %v1854
    %5475 = vmatprep.subr.bf16.mxu0 %v1859
    %5476 = vmatpush1.bf16.msra.mxu0 %v1858
    %5477 = vmatprep.subr.bf16.mxu0 0
    %5478 = vmatpush1.bf16.msra.mxu0 0
    %5479 = vmatprep.subr.bf16.mxu0 0
    %5480 = vmatpush1.bf16.msra.mxu0 0
    %5481 = vmatprep.subr.bf16.mxu0 0
    %5482 = vmatpush1.bf16.msra.mxu0 0
    %5483 = vmatprep.subr.bf16.mxu0 0
    %5484 = vmatpush1.bf16.msra.mxu0 0
    %5485 = vmatprep.subr.bf16.mxu0 0
    %5486 = vmatpush1.bf16.msra.mxu0 0
    %5487 = vmatprep.subr.bf16.mxu0 0
    %5488 = vmatpush1.bf16.msra.mxu0 0
    %5489 = vmatprep.subr.bf16.mxu0 0
    %5490 = vmatpush1.bf16.msra.mxu0 0
    %5491 = vmatprep.subr.bf16.mxu0 0
    %5492 = vmatpush1.bf16.msra.mxu0 0
    %5493 = vmatprep.mubr.bf16.mxu0 0
    %5494 = vmatmul.mubr.bf16.gmra.mrb[0].mxu0 %v5336
    %v5495 = vpop.f32.mrb[0].mxu0
    %v5496 = vadd.f32 %v5414, %v5495
    %v5497 = vpop.f32.mrb[0].mxu0
    %v5498 = vadd.f32 %v5416, %v5497
    %v5499 = vpop.f32.mrb[0].mxu0
    %v5500 = vpop.f32.mrb[0].mxu0
    %5501 = vdwg.mxu0
    %v5502 = vadd.f32 %v5455, %v682
    %v5503 = vadd.f32 %v5457, %v686
    %v5504 = vadd.f32 %v5496, %v690
    %v5505 = vadd.f32 %v5498, %v694
    %v5506 = vxor.u32 %v5502, 2147483648
    %v5507 = vmul.f32 %v5506, 1.442695
    %v5508 = vpow.pop %v5507
    %v5509 = vadd.f32 %v5508, 1.0
    %v5510 = vrcp.pop %v5509
    %v5511 = vmul.f32 1.0, %v5510
    %v5512 = vxor.u32 %v5503, 2147483648
    %v5513 = vmul.f32 %v5512, 1.442695
    %v5514 = vpow.pop %v5513
    %v5515 = vadd.f32 %v5514, 1.0
    %v5516 = vrcp.pop %v5515
    %v5517 = vmul.f32 1.0, %v5516
    %v5518 = vtanh.pop %v5504
    %v5519 = vxor.u32 %v5505, 2147483648
    %v5520 = vmul.f32 %v5519, 1.442695
    %v5521 = vpow.pop %v5520
    %v5522 = vadd.f32 %v5521, 1.0
    %v5523 = vrcp.pop %v5522
    %v5524 = vmul.f32 1.0, %v5523
    %v5525 = vmul.f32 %v5517, %v5023
    %v5526 = vmul.f32 %v5511, %v5518
    %v5527 = vadd.f32 %v5525, %v5526
    %v5528 = vtanh.pop %v5527
    %v5529 = vmul.f32 %v5524, %v5528
    %v5530 = vld [vmem:[#allocation13] sm:$0xff]
    %v5531 = vld [vmem:[#allocation13 + $0x8] sm:$0xff]
    %v5532 = vld [vmem:[#allocation13 + $0x10] sm:$0xff]
    %v5533 = vld [vmem:[#allocation13 + $0x18] sm:$0xff]
    %v5534 = vld [vmem:[#allocation13 + $0x20] sm:$0xff]
    %v5535 = vld [vmem:[#allocation13 + $0x28] sm:$0xff]
    %v5536 = vld [vmem:[#allocation13 + $0x30] sm:$0xff]
    %v5537 = vld [vmem:[#allocation13 + $0x38] sm:$0xff]
    %v5538 = vld [vmem:[#allocation13 + $0x40] sm:$0xff]
    %v5539 = vld [vmem:[#allocation13 + $0x48] sm:$0xff]
    %v5540 = vld [vmem:[#allocation13 + $0x50] sm:$0xff]
    %v5541 = vld [vmem:[#allocation13 + $0x58] sm:$0xff]
    %v5542 = vld [vmem:[#allocation13 + $0x60] sm:$0xff]
    %v5543 = vld [vmem:[#allocation13 + $0x68] sm:$0xff]
    %v5544 = vld [vmem:[#allocation13 + $0x70] sm:$0xff]
    %v5545 = vld [vmem:[#allocation13 + $0x78] sm:$0xff]
    %v5546 = vld [vmem:[%s11] sm:$0x1]
    %v5548 = vlaneseq
    %v5549 = vshrl.u32 %v5548, 7
    %v5550 = vsub.s32 0, %v5549
    %v5551 = vrot.slane %v5546, %v5550
    %5553 = vmatprep.subr.mxu0 0.0
    %5554 = vmatpush1.msra.mxu0 %v5530
    %5555 = vmatprep.subr.mxu0 0.0
    %5556 = vmatpush1.msra.mxu0 %v5531
    %5557 = vmatprep.subr.mxu0 0.0
    %5558 = vmatpush1.msra.mxu0 %v5532
    %5559 = vmatprep.subr.mxu0 0.0
    %5560 = vmatpush1.msra.mxu0 %v5533
    %5561 = vmatprep.subr.mxu0 0.0
    %5562 = vmatpush1.msra.mxu0 %v5534
    %5563 = vmatprep.subr.mxu0 0.0
    %5564 = vmatpush1.msra.mxu0 %v5535
    %5565 = vmatprep.subr.mxu0 0.0
    %5566 = vmatpush1.msra.mxu0 %v5536
    %5567 = vmatprep.subr.mxu0 0.0
    %5568 = vmatpush1.msra.mxu0 %v5537
    %5569 = vmatprep.subr.mxu0 0.0
    %5570 = vmatpush1.msra.mxu0 %v5538
    %5571 = vmatprep.subr.mxu0 0.0
    %5572 = vmatpush1.msra.mxu0 %v5539
    %5573 = vmatprep.subr.mxu0 0.0
    %5574 = vmatpush1.msra.mxu0 %v5540
    %5575 = vmatprep.subr.mxu0 0.0
    %5576 = vmatpush1.msra.mxu0 %v5541
    %5577 = vmatprep.subr.mxu0 0.0
    %5578 = vmatpush1.msra.mxu0 %v5542
    %5579 = vmatprep.subr.mxu0 0.0
    %5580 = vmatpush1.msra.mxu0 %v5543
    %5581 = vmatprep.subr.mxu0 0.0
    %5582 = vmatpush1.msra.mxu0 %v5544
    %5583 = vmatprep.subr.mxu0 0.0
    %5584 = vmatpush1.msra.mxu0 %v5545
    %5585 = vmatprep.subr.mxu0 0.0
    %5586 = vmatpush1.msra.mxu0 0.0
    %5587 = vmatprep.subr.mxu0 0.0
    %5588 = vmatpush1.msra.mxu0 0.0
    %5589 = vmatprep.subr.mxu0 0.0
    %5590 = vmatpush1.msra.mxu0 0.0
    %5591 = vmatprep.subr.mxu0 0.0
    %5592 = vmatpush1.msra.mxu0 0.0
    %5593 = vmatprep.subr.mxu0 0.0
    %5594 = vmatpush1.msra.mxu0 0.0
    %5595 = vmatprep.subr.mxu0 0.0
    %5596 = vmatpush1.msra.mxu0 0.0
    %5597 = vmatprep.subr.mxu0 0.0
    %5598 = vmatpush1.msra.mxu0 0.0
    %5599 = vmatprep.subr.mxu0 0.0
    %5600 = vmatpush1.msra.mxu0 0.0
    %5601 = vmatprep.subr.mxu0 0.0
    %5602 = vmatpush1.msra.mxu0 0.0
    %5603 = vmatprep.subr.mxu0 0.0
    %5604 = vmatpush1.msra.mxu0 0.0
    %5605 = vmatprep.subr.mxu0 0.0
    %5606 = vmatpush1.msra.mxu0 0.0
    %5607 = vmatprep.subr.mxu0 0.0
    %5608 = vmatpush1.msra.mxu0 0.0
    %5609 = vmatprep.subr.mxu0 0.0
    %5610 = vmatpush1.msra.mxu0 0.0
    %5611 = vmatprep.subr.mxu0 0.0
    %5612 = vmatpush1.msra.mxu0 0.0
    %5613 = vmatprep.subr.mxu0 0.0
    %5614 = vmatpush1.msra.mxu0 0.0
    %5615 = vmatprep.subr.mxu0 0.0
    %5616 = vmatpush1.msra.mxu0 0.0
    %5617 = vmatprep.mubr.f32.mxu0 0.0
    %5618 = vmatmul.mubr.f32.gmra.mrb[0].mxu0 %v5529
    %v5619 = vpop.f32.mrb[0].mxu0
    %v5620 = vadd.f32 %v5551, %v5619
    %v5621 = vpop.f32.mrb[0].mxu0
    %5622 = vdwg.mxu0
    %v5623 = vmax.f32 %v5620, 0.0
    %v5624 = vld [vmem:[%s12] sm:$0xff]
    %v5625 = vld [vmem:[%s12 + $0x8] sm:$0xff]
    %v5626 = vld [vmem:[%s12 + $0x10] sm:$0xff]
    %v5627 = vld [vmem:[%s12 + $0x18] sm:$0xff]
    %v5628 = vld [vmem:[%s12 + $0x20] sm:$0xff]
    %v5629 = vld [vmem:[%s12 + $0x28] sm:$0xff]
    %v5630 = vld [vmem:[%s12 + $0x30] sm:$0xff]
    %v5631 = vld [vmem:[%s12 + $0x38] sm:$0xff]
    %v5632 = vld [vmem:[%s12 + $0x40] sm:$0xff]
    %v5633 = vld [vmem:[%s12 + $0x48] sm:$0xff]
    %v5634 = vld [vmem:[%s12 + $0x50] sm:$0xff]
    %v5635 = vld [vmem:[%s12 + $0x58] sm:$0xff]
    %v5636 = vld [vmem:[%s12 + $0x60] sm:$0xff]
    %v5637 = vld [vmem:[%s12 + $0x68] sm:$0xff]
    %v5638 = vld [vmem:[%s12 + $0x70] sm:$0xff]
    %v5639 = vld [vmem:[%s12 + $0x78] sm:$0xff]
    %v5640 = vld [vmem:[%s13] sm:$0x1]
    %v5642 = vlaneseq
    %v5643 = vshrl.u32 %v5642, 7
    %v5644 = vsub.s32 0, %v5643
    %v5645 = vrot.slane %v5640, %v5644
    %5647 = vmatprep.subr.mxu0 0.0
    %5648 = vmatpush1.msra.mxu0 %v5624
    %5649 = vmatprep.subr.mxu0 0.0
    %5650 = vmatpush1.msra.mxu0 %v5625
    %5651 = vmatprep.subr.mxu0 0.0
    %5652 = vmatpush1.msra.mxu0 %v5626
    %5653 = vmatprep.subr.mxu0 0.0
    %5654 = vmatpush1.msra.mxu0 %v5627
    %5655 = vmatprep.subr.mxu0 0.0
    %5656 = vmatpush1.msra.mxu0 %v5628
    %5657 = vmatprep.subr.mxu0 0.0
    %5658 = vmatpush1.msra.mxu0 %v5629
    %5659 = vmatprep.subr.mxu0 0.0
    %5660 = vmatpush1.msra.mxu0 %v5630
    %5661 = vmatprep.subr.mxu0 0.0
    %5662 = vmatpush1.msra.mxu0 %v5631
    %5663 = vmatprep.subr.mxu0 0.0
    %5664 = vmatpush1.msra.mxu0 %v5632
    %5665 = vmatprep.subr.mxu0 0.0
    %5666 = vmatpush1.msra.mxu0 %v5633
    %5667 = vmatprep.subr.mxu0 0.0
    %5668 = vmatpush1.msra.mxu0 %v5634
    %5669 = vmatprep.subr.mxu0 0.0
    %5670 = vmatpush1.msra.mxu0 %v5635
    %5671 = vmatprep.subr.mxu0 0.0
    %5672 = vmatpush1.msra.mxu0 %v5636
    %5673 = vmatprep.subr.mxu0 0.0
    %5674 = vmatpush1.msra.mxu0 %v5637
    %5675 = vmatprep.subr.mxu0 0.0
    %5676 = vmatpush1.msra.mxu0 %v5638
    %5677 = vmatprep.subr.mxu0 0.0
    %5678 = vmatpush1.msra.mxu0 %v5639
    %5679 = vmatprep.subr.mxu0 0.0
    %5680 = vmatpush1.msra.mxu0 0.0
    %5681 = vmatprep.subr.mxu0 0.0
    %5682 = vmatpush1.msra.mxu0 0.0
    %5683 = vmatprep.subr.mxu0 0.0
    %5684 = vmatpush1.msra.mxu0 0.0
    %5685 = vmatprep.subr.mxu0 0.0
    %5686 = vmatpush1.msra.mxu0 0.0
    %5687 = vmatprep.subr.mxu0 0.0
    %5688 = vmatpush1.msra.mxu0 0.0
    %5689 = vmatprep.subr.mxu0 0.0
    %5690 = vmatpush1.msra.mxu0 0.0
    %5691 = vmatprep.subr.mxu0 0.0
    %5692 = vmatpush1.msra.mxu0 0.0
    %5693 = vmatprep.subr.mxu0 0.0
    %5694 = vmatpush1.msra.mxu0 0.0
    %5695 = vmatprep.subr.mxu0 0.0
    %5696 = vmatpush1.msra.mxu0 0.0
    %5697 = vmatprep.subr.mxu0 0.0
    %5698 = vmatpush1.msra.mxu0 0.0
    %5699 = vmatprep.subr.mxu0 0.0
    %5700 = vmatpush1.msra.mxu0 0.0
    %5701 = vmatprep.subr.mxu0 0.0
    %5702 = vmatpush1.msra.mxu0 0.0
    %5703 = vmatprep.subr.mxu0 0.0
    %5704 = vmatpush1.msra.mxu0 0.0
    %5705 = vmatprep.subr.mxu0 0.0
    %5706 = vmatpush1.msra.mxu0 0.0
    %5707 = vmatprep.subr.mxu0 0.0
    %5708 = vmatpush1.msra.mxu0 0.0
    %5709 = vmatprep.subr.mxu0 0.0
    %5710 = vmatpush1.msra.mxu0 0.0
    %5711 = vmatprep.mubr.f32.mxu0 0.0
    %5712 = vmatmul.mubr.f32.gmra.mrb[0].mxu0 %v5623
    %v5713 = vpop.f32.mrb[0].mxu0
    %v5714 = vadd.f32 %v5645, %v5713
    %v5715 = vpop.f32.mrb[0].mxu0
    %5716 = vdwg.mxu0
    %5717 = vst [vmem:[%s14] sm:$0xff] %v5714
    // Predicated region
    $region86: #{rnn_forward.1} parent=1 // pred_check
      _
    $region87: #{rnn_forward.1} parent=1 // pred_check_branch
      %5719 = sbr.rel (0) target = $region89
    $region88: #{rnn_forward.1} parent=1 // pred_region
      _
    $region89: #{rnn_forward.1} parent=1 // pred_fallthru
      _
    // Predicated region
    $region90: #{rnn_forward.1} parent=1 // pred_check
      _
    $region91: #{rnn_forward.1} parent=1 // pred_check_branch
      %5721 = sbr.rel (0) target = $region93
    $region92: #{rnn_forward.1} parent=1 // pred_region
      _
    $region93: #{rnn_forward.1} parent=1 // pred_fallthru
      _
    %5722 = vsyncpa [#allocation4], 1
    %5723 = vsyncpa [#allocation6], 1
    %5724 = vsyncpa [#allocation9], 1
    %5725 = vsyncpa [#allocation12], 1

</llo_original>
